<compile_context>
chip_gen: v5e
topology: v5e:2x2
jax: 0.10.0
libtpu: 0.0.40
codegen_flags: <defaults>
</compile_context>

<pallas_src>
import functools
import numpy as np

import jax
import jax.numpy as jnp
from jax.experimental import pallas as pl
from jax.experimental.pallas import tpu as pltpu


TK2 = 512          # hidden-chunk size along the fc_expand reduction axis


# ---------------------------------------------------------------------------
# small helpers
# ---------------------------------------------------------------------------
def _round_up(x, m):
    return (x + m - 1) // m * m


def _vmem_limit(est_bytes):
    cap = 48 << 20                       # safe on v7x (64 MiB physical VMEM)
    try:
        cap = max(cap, int(0.75 * pltpu.get_tpu_info().vmem_capacity_bytes))
    except Exception:                    # best-effort hardware query
        pass
    return int(min(cap, max(32 << 20, 2 * est_bytes + (8 << 20))))


def _choose_tm(M, tm_max):
    """Row tile: multiple of 16 (bf16 packing); >=2 tiles when M allows (megacore)."""
    Mr = _round_up(max(M, 1), 16)
    if Mr <= 16:
        return 16
    return min(_round_up((Mr + 1) // 2, 16), tm_max)


def _layernorm(y, g, b, eps, n_valid):
    """Row-wise LayerNorm over the last dim; stats restricted to n_valid cols."""
    n = y.shape[-1]
    if n_valid == n:
        mean = jnp.mean(y, axis=-1, keepdims=True)
        var = jnp.mean(jnp.square(y - mean), axis=-1, keepdims=True)
    else:
        lane = jax.lax.broadcasted_iota(jnp.int32, y.shape, y.ndim - 1)
        mask = lane < n_valid
        inv_n = 1.0 / float(n_valid)
        mean = jnp.sum(jnp.where(mask, y, 0.0), axis=-1, keepdims=True) * inv_n
        d = jnp.where(mask, y - mean, 0.0)
        var = jnp.sum(d * d, axis=-1, keepdims=True) * inv_n
    return (y - mean) * jax.lax.rsqrt(var + eps) * g + b


# ---------------------------------------------------------------------------
# Kernel 1: fully fused fc_expand + fc_mlp head.
#   grid = (M tiles [parallel], hidden chunks [arbitrary])
#   step 0      : raw fc1 for every chunk (fori_loop, bounded live ranges)
#                 + LayerNorm-1 sum / sum-of-squares.
#   every step k: LN1 + SiLU lazily on chunk k, fc2 partial matmul into an
#                 f32 accumulator scratch.
#   last step   : bias + LN2 + SiLU; emit conv part in bf16 and the fused
#                 (Linear + LayerNorm) mlp head output.
# ---------------------------------------------------------------------------
def _fc_expand_head_kernel(x_ref, w1_ref, b1_ref, g1_ref, be1_ref,
                           w2_ref, b2_ref, g2_ref, be2_ref,
                           wm_ref, bm_ref, gm_ref, bem_ref,
                           conv_ref, mlp_ref,
                           h_ref, mean_ref, rstd_ref, acc_ref,
                           *, eps1, eps2, epsm, conv_cols, mlp_valid):
    k = pl.program_id(1)
    nk = pl.num_programs(1)
    tm = x_ref.shape[0]
    tk = w2_ref.shape[0]
    hidden = h_ref.shape[0] * tk

    @pl.when(k == 0)
    def _():
        def body(j, carry):
            s, ss = carry
            hp = jnp.dot(x_ref[...], w1_ref[j],
                         preferred_element_type=jnp.float32)
            hp = hp + b1_ref[j]
            h_ref[j] = hp
            s = s + jnp.sum(hp, axis=-1, keepdims=True)
            ss = ss + jnp.sum(hp * hp, axis=-1, keepdims=True)
            return s, ss
        zero = jnp.zeros((tm, 1), jnp.float32)
        s, ss = jax.lax.fori_loop(0, nk, body, (zero, zero))
        mean = s * (1.0 / hidden)
        var = ss * (1.0 / hidden) - mean * mean
        mean_ref[...] = mean
        rstd_ref[...] = jax.lax.rsqrt(var + eps1)

    # LN1 + SiLU on chunk k (lazy), then fc2 partial matmul.
    hk = (h_ref[k] - mean_ref[...]) * rstd_ref[...] * g1_ref[...] + be1_ref[...]
    hk = hk * jax.nn.sigmoid(hk)
    part = jnp.dot(hk.astype(jnp.bfloat16), w2_ref[...],
                   preferred_element_type=jnp.float32)

    @pl.when(k == 0)
    def _():
        acc_ref[...] = part

    @pl.when(k > 0)
    def _():
        acc_ref[...] += part

    @pl.when(k == nk - 1)
    def _():
        y = acc_ref[...] + b2_ref[...]
        y = _layernorm(y, g2_ref[...], be2_ref[...], eps2, y.shape[-1])
        y = y * jax.nn.sigmoid(y)
        # conv branch consumer is bf16 -> emit bf16 directly
        conv_ref[...] = y[:, :conv_cols].astype(conv_ref.dtype)
        # fused fc_mlp head: Linear(mlp_units -> od) + LayerNorm(od)
        zm = jnp.dot(y[:, conv_cols:].astype(jnp.bfloat16), wm_ref[...],
                     preferred_element_type=jnp.float32) + bm_ref[...]
        zm = _layernorm(zm, gm_ref[...], bem_ref[...], epsm, mlp_valid)
        lane = jax.lax.broadcasted_iota(jnp.int32, zm.shape, 1)
        mlp_ref[...] = jnp.where(lane < mlp_valid, zm, 0.0)   # zero pad lanes


def fused_fc_expand_head(x, prep, *, conv_cols, mlp_valid,
                         eps1=1e-5, eps2=1e-5, epsm=1e-5, tm_max=256):
    M, D = x.shape
    nk, D1, tk = prep['w1'].shape
    assert D == D1
    N2 = prep['w2'].shape[1]
    mlp_in = N2 - conv_cols
    odp = prep['wm'].shape[1]
    assert conv_cols % 128 == 0 and mlp_in % 128 == 0 and N2 % 128 == 0

    tm = _choose_tm(M, tm_max)
    Mp = _round_up(M, tm)
    if Mp != M:
        x = jnp.pad(x, ((0, Mp - M), (0, 0)))
    xb = x.astype(jnp.bfloat16)

    est = (2 * tm * D * 2 + 2 * nk * D1 * tk * 2 + nk * tk * 4
           + 4 * tk * 4 + 2 * tk * N2 * 2 + 6 * N2 * 4
           + 2 * mlp_in * odp * 2 + 6 * odp * 4
           + 2 * tm * conv_cols * 2 + 2 * tm * odp * 4
           + nk * tm * tk * 4 + tm * N2 * 4 + 8 * tm)

    kernel = functools.partial(_fc_expand_head_kernel, eps1=eps1, eps2=eps2,
                               epsm=epsm, conv_cols=conv_cols,
                               mlp_valid=mlp_valid)
    conv_out, mlp_out = pl.pallas_call(
        kernel,
        out_shape=(jax.ShapeDtypeStruct((Mp, conv_cols), jnp.bfloat16),
                   jax.ShapeDtypeStruct((Mp, odp), jnp.float32)),
        grid_spec=pltpu.PrefetchScalarGridSpec(
            num_scalar_prefetch=0,
            grid=(Mp // tm, nk),
            in_specs=[
                pl.BlockSpec((tm, D), lambda m, k: (m, 0)),           # x
                pl.BlockSpec((nk, D1, tk), lambda m, k: (0, 0, 0)),   # w1 (all chunks)
                pl.BlockSpec((nk, 1, tk), lambda m, k: (0, 0, 0)),    # b1
                pl.BlockSpec((1, tk), lambda m, k: (0, k)),           # ln1 gamma chunk
                pl.BlockSpec((1, tk), lambda m, k: (0, k)),           # ln1 beta chunk
                pl.BlockSpec((tk, N2), lambda m, k: (k, 0)),          # w2 chunk
                pl.BlockSpec((1, N2), lambda m, k: (0, 0)),           # b2
                pl.BlockSpec((1, N2), lambda m, k: (0, 0)),           # ln2 gamma
                pl.BlockSpec((1, N2), lambda m, k: (0, 0)),           # ln2 beta
                pl.BlockSpec((mlp_in, odp), lambda m, k: (0, 0)),     # mlp head weight
                pl.BlockSpec((1, odp), lambda m, k: (0, 0)),          # mlp head bias
                pl.BlockSpec((1, odp), lambda m, k: (0, 0)),          # mlp ln gamma
                pl.BlockSpec((1, odp), lambda m, k: (0, 0)),          # mlp ln beta
            ],
            out_specs=[pl.BlockSpec((tm, conv_cols), lambda m, k: (m, 0)),
                       pl.BlockSpec((tm, odp), lambda m, k: (m, 0))],
            scratch_shapes=[pltpu.VMEM((nk, tm, tk), jnp.float32),    # raw fc1
                            pltpu.VMEM((tm, 1), jnp.float32),         # ln1 mean
                            pltpu.VMEM((tm, 1), jnp.float32),         # ln1 rstd
                            pltpu.VMEM((tm, N2), jnp.float32)],       # fc2 accum
        ),
        compiler_params=pltpu.CompilerParams(
            dimension_semantics=("parallel", "arbitrary"),
            vmem_limit_bytes=_vmem_limit(est)),
    )(xb, prep['w1'], prep['b1'], prep['g1'], prep['be1'],
      prep['w2'], prep['b2'], prep['g2'], prep['be2'],
      prep['wm'], prep['bm'], prep['gm'], prep['bem'])
    return conv_out[:M], mlp_out[:M, :mlp_valid]


# ---------------------------------------------------------------------------
# Kernel 2: sub-pixel-phase ConvTranspose2d(k=4, s=2, p=1) matmul with a fused
# (bias / ChLayerNorm / SiLU) epilogue.  grid = (phase [parallel], row tiles
# [parallel]); K = 4*Cin fits one step (no reduction grid).
# ---------------------------------------------------------------------------
def _convt_phase_kernel(*refs, has_bias, has_ln, has_silu, eps, n_valid):
    x_ref, w_ref = refs[0], refs[1]
    idx = 2
    b_ref = g_ref = be_ref = None
    if has_bias:
        b_ref = refs[idx]
        idx += 1
    if has_ln:
        g_ref, be_ref = refs[idx], refs[idx + 1]
        idx += 2
    o_ref = refs[idx]

    y = jnp.dot(x_ref[...], w_ref[...], preferred_element_type=jnp.float32)
    if has_bias:
        y = y + b_ref[...]
    if has_ln:
        y = _layernorm(y, g_ref[...], be_ref[...], eps, n_valid)
    if has_silu:
        y = y * jax.nn.sigmoid(y)
    if n_valid < y.shape[-1]:
        lane = jax.lax.broadcasted_iota(jnp.int32, y.shape, 1)
        y = jnp.where(lane < n_valid, y, 0.0)       # zero padded channels
    o_ref[...] = y.astype(o_ref.dtype)


def convt_phase_matmul(patches, w_phase, bias=None, gamma=None, beta=None, *,
                       ln=False, silu=False, eps=1e-3, n_valid, out_dtype,
                       tr_max=256):
    P, R, K = patches.shape
    P2, K2, Np = w_phase.shape
    assert P == 4 and P2 == 4 and K == K2

    tr = min(tr_max, _round_up(R, 16))
    Rp = _round_up(R, tr)
    if Rp != R:
        patches = jnp.pad(patches, ((0, 0), (0, Rp - R), (0, 0)))

    operands = [patches, w_phase]
    in_specs = [pl.BlockSpec((None, tr, K), lambda p, r: (p, r, 0)),
                pl.BlockSpec((None, K, Np), lambda p, r: (p, 0, 0))]
    if bias is not None:
        operands.append(bias)
        in_specs.append(pl.BlockSpec((1, Np), lambda p, r: (0, 0)))
    if ln:
        operands += [gamma, beta]
        in_specs += [pl.BlockSpec((1, Np), lambda p, r: (0, 0))] * 2

    est = 2 * (tr * K * 2 + K * Np * 2 + tr * Np * 4) + 6 * Np * 4
    kernel = functools.partial(_convt_phase_kernel, has_bias=bias is not None,
                               has_ln=ln, has_silu=silu, eps=eps,
                               n_valid=n_valid)
    out = pl.pallas_call(
        kernel,
        out_shape=jax.ShapeDtypeStruct((P, Rp, Np), out_dtype),
        grid_spec=pltpu.PrefetchScalarGridSpec(
            num_scalar_prefetch=0,
            grid=(P, Rp // tr),
            in_specs=in_specs,
            out_specs=pl.BlockSpec((None, tr, Np), lambda p, r: (p, r, 0)),
        ),
        compiler_params=pltpu.CompilerParams(
            dimension_semantics=("parallel", "parallel"),
            vmem_limit_bytes=_vmem_limit(est)),
    )(*operands)
    return out[:, :R, :]


# ---------------------------------------------------------------------------
# Sub-pixel-phase decomposition of ConvTranspose2d(k=4, s=2, p=1).
# Output (2m+ph, 2n+pw) only sees a 2x2 input window, so each of the 4 output
# phases is one matmul with K = 4*Cin (no zero-dilation, 4x fewer FLOPs than
# full im2col).  Validated against a scatter-add torch-semantics reference.
# ---------------------------------------------------------------------------
_KTAP = ((3, 1), (2, 0))      # kernel taps per output parity (even, odd)


def subpixel_patches(x_nhwc):
    """(N,H,W,C) -> (4 phases, N*H*W, 4*C) patches."""
    n, h, w, c = x_nhwc.shape
    xp = jnp.pad(x_nhwc, ((0, 0), (1, 1), (1, 1), (0, 0)))
    phases = []
    for ph in (0, 1):
        for pw in (0, 1):
            taps = [xp[:, ph + a:ph + a + h, pw + b:pw + b + w, :]
                    for a in (0, 1) for b in (0, 1)]
            phases.append(jnp.concatenate(taps, axis=-1).reshape(n * h * w, 4 * c))
    return jnp.stack(phases, axis=0)


def convT_phase_weights(w, cin_pad=None, cout_pad=None):
    """torch ConvTranspose2d weight (Cin,Cout,4,4) -> (4, 4*Cin', Cout')."""
    w = jnp.asarray(w, jnp.float32)
    cin, cout = w.shape[0], w.shape[1]
    if cin_pad is not None and cin_pad != cin:
        w = jnp.pad(w, ((0, cin_pad - cin), (0, 0), (0, 0), (0, 0)))
    mats = []
    for ph in (0, 1):
        for pw in (0, 1):
            rows = [w[:, :, _KTAP[ph][a], _KTAP[pw][b]]
                    for a in (0, 1) for b in (0, 1)]
            mats.append(jnp.concatenate(rows, axis=0))
    m = jnp.stack(mats, axis=0)
    if cout_pad is not None and cout_pad != cout:
        m = jnp.pad(m, ((0, 0), (0, 0), (0, cout_pad - cout)))
    return m


def assemble_phases(phase_out, n, h, w):
    """(4, n*h*w, C) phase outputs -> (n, 2h, 2w, C) NHWC."""
    c = phase_out.shape[-1]
    o = phase_out.reshape(2, 2, n, h, w, c)
    return o.transpose(2, 3, 0, 4, 1, 5).reshape(n, 2 * h, 2 * w, c)


def convT_scatter_ref(x, w, b=None, s=2, p=1):
    """Direct scatter-add ConvTranspose2d (PyTorch semantics), numpy, tiny sizes."""
    x = np.asarray(x, np.float32)
    w = np.asarray(w, np.float32)
    n, cin, hh, ww = x.shape
    _, cout, kk, _ = w.shape
    oh = (hh - 1) * s - 2 * p + kk
    ow = (ww - 1) * s - 2 * p + kk
    out = np.zeros((n, cout, oh, ow), np.float32)
    for ni in range(n):
        for iy in range(hh):
            for ix in range(ww):
                for kh in range(kk):
                    for kw in range(kk):
                        oy, ox = s * iy - p + kh, s * ix - p + kw
                        if 0 <= oy < oh and 0 <= ox < ow:
                            out[ni, :, oy, ox] += w[:, :, kh, kw].T @ x[ni, :, iy, ix]
    if b is not None:
        out += np.asarray(b, np.float32).reshape(1, -1, 1, 1)
    return out


# ---------------------------------------------------------------------------
# One-time weight prep (outside the jit): bf16 cast, padding, chunking, and
# NHWC column permutation of the fc2 output.
# ---------------------------------------------------------------------------
def prepare_params(params, *, cnn_outshape, mlp_units, scalar_dim,
                   step_embedding_dim, original_ch, tk=TK2):
    c, h, w = cnn_outshape
    cnn_outdim = c * h * w
    f32, bf16 = jnp.float32, jnp.bfloat16
    row = lambda v: jnp.asarray(v, f32).reshape(1, -1)
    pad1 = lambda v, n, cv=0.0: jnp.pad(jnp.asarray(v, f32),
                                        (0, n - np.shape(v)[0]),
                                        constant_values=cv)
    p = params
    D, hidden = p['fc1_w'].shape
    assert hidden % tk == 0
    nk = hidden // tk

    prep = {}
    prep['w1'] = jnp.asarray(p['fc1_w'], bf16).reshape(D, nk, tk).transpose(1, 0, 2)
    prep['b1'] = jnp.asarray(p['fc1_b'], f32).reshape(nk, 1, tk)
    prep['g1'] = row(p['ln1_g'])
    prep['be1'] = row(p['ln1_b'])

    # Permute the conv part of fc2's output columns from (c,h,w) to (h,w,c) so
    # the conv branch is NHWC with no transpose kernel (LN stats are
    # permutation-invariant, so this is pure layout plumbing).
    perm_conv = np.arange(cnn_outdim).reshape(c, h, w).transpose(1, 2, 0).reshape(-1)
    perm = np.concatenate([perm_conv,
                           np.arange(cnn_outdim, cnn_outdim + mlp_units)])
    prep['w2'] = jnp.asarray(p['fc2_w'], f32)[:, perm].astype(bf16)
    prep['b2'] = row(jnp.asarray(p['fc2_b'], f32)[perm])
    prep['g2'] = row(jnp.asarray(p['ln2_g'], f32)[perm])
    prep['be2'] = row(jnp.asarray(p['ln2_b'], f32)[perm])

    od = scalar_dim + step_embedding_dim
    odp = _round_up(od, 128)
    prep['wm'] = jnp.pad(jnp.asarray(p['fcm_w'], f32),
                         ((0, 0), (0, odp - od))).astype(bf16)
    prep['bm'] = row(pad1(p['fcm_b'], odp))
    prep['gm'] = row(pad1(p['lnm_g'], odp, 1.0))
    prep['bem'] = row(pad1(p['lnm_b'], odp))

    # deconv layer 1: ConvT(c -> 96, bias=False) + ChLayerNorm(96, 1e-3) + SiLU
    c1_out = p['ct1_w'].shape[1]
    c1_pad = _round_up(c1_out, 128)
    prep['ct1_wp'] = convT_phase_weights(p['ct1_w'], cout_pad=c1_pad).astype(bf16)
    prep['chln1_g'] = row(pad1(p['chln1_g'], c1_pad, 1.0))
    prep['chln1_b'] = row(pad1(p['chln1_b'], c1_pad))
    # deconv layer 2: ConvT(96 -> original_ch, bias=True); input channels padded
    # to match layer 1's zero-padded 128-channel output.
    c2_pad = _round_up(original_ch, 128)
    prep['ct2_wp'] = convT_phase_weights(p['ct2_w'], cin_pad=c1_pad,
                                         cout_pad=c2_pad).astype(bf16)
    prep['ct2_b'] = row(pad1(p['ct2_b'], c2_pad))
    return prep


# ---------------------------------------------------------------------------
# Decoder forward (mirrors the PyTorch module exactly)
# ---------------------------------------------------------------------------
def decoder_forward(prep, latent, *, cnn_outshape, scalar_dim,
                    step_embedding_dim, original_ch):
    c, h, w = cnn_outshape
    cnn_outdim = c * h * w
    B, T, D = latent.shape
    M = B * T
    od = scalar_dim + step_embedding_dim

    x = latent.reshape(M, D)
    # fc_expand + fc_mlp head in one fused pallas_call
    conv_flat, mlp_out = fused_fc_expand_head(x, prep, conv_cols=cnn_outdim,
                                              mlp_valid=od)

    # ---- conv branch (NHWC end-to-end) ----
    xh = conv_flat.reshape(M, h, w, c)                          # bf16 NHWC
    c1_out = cnn_outdim // (h * w) // 2                         # layer-0 out_dim (96)

    p1 = subpixel_patches(xh)                                   # (4, M*h*w, 4c)
    y1 = convt_phase_matmul(p1, prep['ct1_wp'], gamma=prep['chln1_g'],
                            beta=prep['chln1_b'], ln=True, silu=True, eps=1e-3,
                            n_valid=c1_out, out_dtype=jnp.bfloat16)
    y1 = assemble_phases(y1, M, h, w)                           # (M,2h,2w,128) pad=0

    p2 = subpixel_patches(y1)                                   # (4, M*4hw, 4*128)
    y2 = convt_phase_matmul(p2, prep['ct2_wp'], bias=prep['ct2_b'], ln=False,
                            silu=False, n_valid=original_ch,
                            out_dtype=jnp.float32)
    img = assemble_phases(y2, M, 2 * h, 2 * w)[..., :original_ch]
    img = img.transpose(0, 3, 1, 2)                             # NCHW like torch

    mlp_out = mlp_out.reshape(B, T, od)
    return {'image': img,
            'scalars': mlp_out[:, :, :scalar_dim],
            'step_embedding': mlp_out[:, :, scalar_dim:]}


# ---------------------------------------------------------------------------
# Pure-JAX reference of the same bf16-MXU math (independent conv algorithm).
# ---------------------------------------------------------------------------
def _ref_ln(y, g, b, eps):
    mean = y.mean(-1, keepdims=True)
    var = jnp.square(y - mean).mean(-1, keepdims=True)
    return (y - mean) * jax.lax.rsqrt(var + eps) * g + b


def _ref_linear(x, w, b=None):
    y = jnp.dot(x.astype(jnp.bfloat16), w.astype(jnp.bfloat16),
                preferred_element_type=jnp.float32)
    return y if b is None else y + b


def ref_convT(x_nchw, w, b=None):
    """ConvTranspose2d(k=4,s=2,p=1) via input-dilated conv (torch semantics)."""
    wf = jnp.asarray(w, jnp.float32)[:, :, ::-1, ::-1].transpose(1, 0, 2, 3)
    y = jax.lax.conv_general_dilated(
        x_nchw.astype(jnp.bfloat16), wf.astype(jnp.bfloat16),
        window_strides=(1, 1), padding=((2, 2), (2, 2)), lhs_dilation=(2, 2),
        dimension_numbers=('NCHW', 'OIHW', 'NCHW'),
        preferred_element_type=jnp.float32)
    if b is not None:
        y = y + jnp.asarray(b, jnp.float32).reshape(1, -1, 1, 1)
    return y


def ref_decoder_forward(p, latent, *, cnn_outshape, scalar_dim,
                        step_embedding_dim):
    c, h, w = cnn_outshape
    cnn_outdim = c * h * w
    B, T, D = latent.shape
    x = latent.reshape(B * T, D)
    h1 = _ref_linear(x, p['fc1_w'], p['fc1_b'])
    h1 = _ref_ln(h1, p['ln1_g'], p['ln1_b'], 1e-5)
    h1 = h1 * jax.nn.sigmoid(h1)
    x2 = _ref_linear(h1, p['fc2_w'], p['fc2_b'])
    x2 = _ref_ln(x2, p['ln2_g'], p['ln2_b'], 1e-5)
    x2 = x2 * jax.nn.sigmoid(x2)

    conv_x = x2[:, :cnn_outdim].reshape(-1, c, h, w)
    y = ref_convT(conv_x, p['ct1_w'])
    y = jnp.transpose(y, (0, 2, 3, 1))
    y = _ref_ln(y, p['chln1_g'], p['chln1_b'], 1e-3)
    y = y * jax.nn.sigmoid(y)
    y = jnp.transpose(y, (0, 3, 1, 2)).astype(jnp.bfloat16)
    img = ref_convT(y, p['ct2_w'], p['ct2_b'])

    z = _ref_linear(x2[:, cnn_outdim:], p['fcm_w'], p['fcm_b'])
    z = _ref_ln(z, p['lnm_g'], p['lnm_b'], 1e-5)
    z = z.reshape(B, T, -1)
    return {'image': img, 'scalars': z[:, :, :scalar_dim],
            'step_embedding': z[:, :, scalar_dim:]}


# ---------------------------------------------------------------------------
# Deterministic parameter init (torch-layout shapes follow Decoder.__init__)
# ---------------------------------------------------------------------------
def init_params(key, latent_dim, cnn_outshape, mlp_units, scalar_dim,
                step_embedding_dim, original_ch):
    c, h, w = cnn_outshape
    cnn_outdim = c * h * w
    ks = jax.random.split(key, 16)

    def nrm(k, shape, scale=0.02):
        return jax.random.normal(k, shape, jnp.float32) * scale

    p = {}
    p['fc1_w'] = nrm(ks[0], (latent_dim, 4096))
    p['fc1_b'] = nrm(ks[1], (4096,))
    p['ln1_g'] = 1.0 + nrm(ks[2], (4096,))
    p['ln1_b'] = nrm(ks[3], (4096,))
    d2 = mlp_units + cnn_outdim
    p['fc2_w'] = nrm(ks[4], (4096, d2))
    p['fc2_b'] = nrm(ks[5], (d2,))
    p['ln2_g'] = 1.0 + nrm(ks[6], (d2,))
    p['ln2_b'] = nrm(ks[7], (d2,))
    out1 = cnn_outdim // (h * w) // 2                 # = 96
    p['ct1_w'] = nrm(ks[8], (c, out1, 4, 4), 0.05)    # torch [Cin, Cout, K, K]
    p['chln1_g'] = 1.0 + nrm(ks[9], (out1,))
    p['chln1_b'] = nrm(ks[10], (out1,))
    p['ct2_w'] = nrm(ks[11], (out1, original_ch, 4, 4), 0.05)
    p['ct2_b'] = nrm(ks[12], (original_ch,))
    od = scalar_dim + step_embedding_dim
    p['fcm_w'] = nrm(ks[13], (mlp_units, od))
    p['fcm_b'] = nrm(ks[14], (od,))
    p['lnm_g'] = 1.0 + nrm(ks[15], (od,))
    p['lnm_b'] = jnp.zeros((od,), jnp.float32)
    return p


if __name__ == "__main__":
    # config consistent with the module's hard-coded depth=96 / layer_num=2:
    # cnn_outshape channels must equal 2*depth = 192 for the deconv stack.
    config = dict(latent_dim=32, step_embedding_dim=24, scalar_dim=8,
                  image_size=(3, 8, 8))
    cnn_outshape = (192, 2, 2)
    mlp_units = 1024
    B, T = 2, 2

    key = jax.random.PRNGKey(0)
    kp, kx, kc = jax.random.split(key, 3)
    params = init_params(kp, config['latent_dim'], cnn_outshape, mlp_units,
                         config['scalar_dim'], config['step_embedding_dim'],
                         config['image_size'][0])
    latent = jax.random.normal(kx, (B, T, config['latent_dim']), jnp.float32)

    # 0) validate the sub-pixel-phase ConvTranspose2d decomposition against a
    #    direct scatter-add reference of torch.nn.ConvTranspose2d semantics.
    kc1, kc2, kc3 = jax.random.split(kc, 3)
    xs = jax.random.normal(kc1, (2, 3, 2, 2), jnp.float32)
    ws = jax.random.normal(kc2, (3, 2, 4, 4), jnp.float32) * 0.1
    bs = jax.random.normal(kc3, (2,), jnp.float32)
    pat = np.asarray(subpixel_patches(jnp.transpose(xs, (0, 2, 3, 1))))
    wp = np.asarray(convT_phase_weights(ws))
    ph_out = np.einsum('prk,pkn->prn', pat, wp) + np.asarray(bs)
    got = np.asarray(assemble_phases(jnp.asarray(ph_out), 2, 2, 2))
    np.testing.assert_allclose(got.transpose(0, 3, 1, 2),
                               convT_scatter_ref(xs, ws, bs),
                               rtol=1e-4, atol=1e-4)

    # 1) one-time weight prep (bf16 cast / pad / chunk / NHWC permute)
    prep = prepare_params(params, cnn_outshape=cnn_outshape,
                          mlp_units=mlp_units,
                          scalar_dim=config['scalar_dim'],
                          step_embedding_dim=config['step_embedding_dim'],
                          original_ch=config['image_size'][0])
    prep = jax.device_put(prep)

    # 2) Pallas decoder forward
    run = jax.jit(functools.partial(
        decoder_forward, cnn_outshape=cnn_outshape,
        scalar_dim=config['scalar_dim'],
        step_embedding_dim=config['step_embedding_dim'],
        original_ch=config['image_size'][0]))
    out = jax.block_until_ready(run(prep, latent))

    # shape checks (PyTorch semantics: image is [B*T, C, H, W], scalars [B, T, ...])
    assert out['image'].shape == (B * T, 3, 8, 8)
    assert out['scalars'].shape == (B, T, config['scalar_dim'])
    assert out['step_embedding'].shape == (B, T, config['step_embedding_dim'])

    # 3) numeric check vs a pure-JAX reference of the same bf16-MXU math
    ref = ref_decoder_forward(params, latent, cnn_outshape=cnn_outshape,
                              scalar_dim=config['scalar_dim'],
                              step_embedding_dim=config['step_embedding_dim'])
    for name in out:
        np.testing.assert_allclose(np.asarray(out[name]), np.asarray(ref[name]),
                                   rtol=3e-2, atol=3e-2)

    print("KERNEL_OK")
</pallas_src>

<mosaic_0001>
module attributes {stable_mosaic.version = 11 : i64} {
  func.func @_fc_expand_head_kernel(%arg0: i32, %arg1: i32, %arg2: memref<16x32xbf16, #tpu.memory_space<vmem>>, %arg3: memref<8x32x512xbf16, #tpu.memory_space<vmem>>, %arg4: memref<8x1x512xf32, #tpu.memory_space<vmem>>, %arg5: memref<1x512xf32, #tpu.memory_space<vmem>>, %arg6: memref<1x512xf32, #tpu.memory_space<vmem>>, %arg7: memref<512x1792xbf16, #tpu.memory_space<vmem>>, %arg8: memref<1x1792xf32, #tpu.memory_space<vmem>>, %arg9: memref<1x1792xf32, #tpu.memory_space<vmem>>, %arg10: memref<1x1792xf32, #tpu.memory_space<vmem>>, %arg11: memref<1024x128xbf16, #tpu.memory_space<vmem>>, %arg12: memref<1x128xf32, #tpu.memory_space<vmem>>, %arg13: memref<1x128xf32, #tpu.memory_space<vmem>>, %arg14: memref<1x128xf32, #tpu.memory_space<vmem>>, %arg15: memref<16x768xbf16, #tpu.memory_space<vmem>>, %arg16: memref<16x128xf32, #tpu.memory_space<vmem>>, %arg17: memref<8x16x512xf32, #tpu.memory_space<vmem>>, %arg18: memref<16x1xf32, #tpu.memory_space<vmem>>, %arg19: memref<16x1xf32, #tpu.memory_space<vmem>>, %arg20: memref<16x1792xf32, #tpu.memory_space<vmem>>) attributes {dimension_semantics = [#tpu.dimension_semantics<parallel>, #tpu.dimension_semantics<arbitrary>], iteration_bounds = array<i64: 1, 8>, scalar_prefetch = 0 : i64, scratch_operands = 4 : i64, tpu.core_type = #tpu.core_type<tc>, window_params = [{transform_indices = @transform_0, window_bounds = array<i64: 16, 32>}, {pipeline_mode = #tpu.pipeline_mode<synchronous>, transform_indices = @transform_1, window_bounds = array<i64: 8, 32, 512>}, {pipeline_mode = #tpu.pipeline_mode<synchronous>, transform_indices = @transform_2, window_bounds = array<i64: 8, 1, 512>}, {transform_indices = @transform_3, window_bounds = array<i64: 1, 512>}, {transform_indices = @transform_4, window_bounds = array<i64: 1, 512>}, {transform_indices = @transform_5, window_bounds = array<i64: 512, 1792>}, {pipeline_mode = #tpu.pipeline_mode<synchronous>, transform_indices = @transform_6, window_bounds = array<i64: 1, 1792>}, {pipeline_mode = #tpu.pipeline_mode<synchronous>, transform_indices = @transform_7, window_bounds = array<i64: 1, 1792>}, {pipeline_mode = #tpu.pipeline_mode<synchronous>, transform_indices = @transform_8, window_bounds = array<i64: 1, 1792>}, {pipeline_mode = #tpu.pipeline_mode<synchronous>, transform_indices = @transform_9, window_bounds = array<i64: 1024, 128>}, {pipeline_mode = #tpu.pipeline_mode<synchronous>, transform_indices = @transform_10, window_bounds = array<i64: 1, 128>}, {pipeline_mode = #tpu.pipeline_mode<synchronous>, transform_indices = @transform_11, window_bounds = array<i64: 1, 128>}, {pipeline_mode = #tpu.pipeline_mode<synchronous>, transform_indices = @transform_12, window_bounds = array<i64: 1, 128>}, {transform_indices = @transform_13, window_bounds = array<i64: 16, 768>}, {transform_indices = @transform_14, window_bounds = array<i64: 16, 128>}]} {
    %c0_i32 = arith.constant 0 : i32
    %0 = arith.cmpi eq, %arg1, %c0_i32 : i32
    %1 = arith.extui %0 : i1 to i32
    %c0_i32_0 = arith.constant 0 : i32
    %2 = arith.cmpi ne, %1, %c0_i32_0 : i32
    scf.if %2 {
      %cst_18 = arith.constant 0.000000e+00 : f32
      %36 = vector.broadcast %cst_18 : f32 to vector<16x1xf32>
      %c0_i32_19 = arith.constant 0 : i32
      %c8_i32 = arith.constant 8 : i32
      %37 = arith.addi %c0_i32_19, %c8_i32 : i32
      %c1_i32 = arith.constant 1 : i32
      %38:2 = scf.for %arg21 = %c0_i32_19 to %37 step %c1_i32 iter_args(%arg22 = %36, %arg23 = %36) -> (vector<16x1xf32>, vector<16x1xf32>)  : i32 {
        %c0_28 = arith.constant 0 : index
        %c0_29 = arith.constant 0 : index
        %50 = vector.load %arg2[%c0_28, %c0_29] : memref<16x32xbf16, #tpu.memory_space<vmem>>, vector<16x32xbf16>
        %51 = arith.index_cast %arg21 : i32 to index
        %c0_30 = arith.constant 0 : index
        %c0_31 = arith.constant 0 : index
        %52 = vector.load %arg3[%51, %c0_30, %c0_31] : memref<8x32x512xbf16, #tpu.memory_space<vmem>>, vector<1x32x512xbf16>
        %53 = vector.shape_cast %52 : vector<1x32x512xbf16> to vector<32x512xbf16>
        %cst_32 = arith.constant dense<0.000000e+00> : vector<16x512xf32>
        %54 = tpu.matmul %50, %53, %cst_32 {dimension_numbers = #tpu.dot_dimension_numbers<[1], [0], [0], [1], [0, 0, 1, 1], [], []>} : vector<16x32xbf16>, vector<32x512xbf16>, vector<16x512xf32> -> vector<16x512xf32>
        %55 = arith.index_cast %arg21 : i32 to index
        %c0_33 = arith.constant 0 : index
        %c0_34 = arith.constant 0 : index
        %56 = vector.load %arg4[%55, %c0_33, %c0_34] : memref<8x1x512xf32, #tpu.memory_space<vmem>>, vector<1x1x512xf32>
        %57 = vector.shape_cast %56 : vector<1x1x512xf32> to vector<1x512xf32>
        %58 = vector.broadcast %57 : vector<1x512xf32> to vector<16x512xf32>
        %59 = arith.addf %54, %58 : vector<16x512xf32>
        %60 = arith.index_cast %arg21 : i32 to index
        %c0_35 = arith.constant 0 : index
        %c0_36 = arith.constant 0 : index
        %61 = vector.load %arg17[%60, %c0_35, %c0_36] : memref<8x16x512xf32, #tpu.memory_space<vmem>>, vector<1x16x512xf32>
        %62 = vector.shape_cast %61 : vector<1x16x512xf32> to vector<16x512xf32>
        %63 = vector.shape_cast %59 : vector<16x512xf32> to vector<1x16x512xf32>
        tpu.vector_store %arg17[%60, %c0_35, %c0_36], %63 {strides = array<i32>} : memref<8x16x512xf32, #tpu.memory_space<vmem>>, vector<1x16x512xf32>,
        %cst_37 = arith.constant dense<0.000000e+00> : vector<16xf32>
        %64 = vector.multi_reduction <add>, %59, %cst_37 [1] : vector<16x512xf32> to vector<16xf32>
        %65 = vector.shape_cast %64 : vector<16xf32> to vector<16x1xf32>
        %66 = arith.addf %arg22, %65 : vector<16x1xf32>
        %67 = arith.mulf %59, %59 : vector<16x512xf32>
        %cst_38 = arith.constant dense<0.000000e+00> : vector<16xf32>
        %68 = vector.multi_reduction <add>, %67, %cst_38 [1] : vector<16x512xf32> to vector<16xf32>
        %69 = vector.shape_cast %68 : vector<16xf32> to vector<16x1xf32>
        %70 = arith.addf %arg23, %69 : vector<16x1xf32>
        scf.yield %66, %70 : vector<16x1xf32>, vector<16x1xf32>
      }
      %c8_i32_20 = arith.constant 8 : i32
      %cst_21 = arith.constant 2.44140625E-4 : f32
      %39 = vector.broadcast %cst_21 : f32 to vector<16x1xf32>
      %40 = arith.mulf %38#0, %39 : vector<16x1xf32>
      %cst_22 = arith.constant 2.44140625E-4 : f32
      %41 = vector.broadcast %cst_22 : f32 to vector<16x1xf32>
      %42 = arith.mulf %38#1, %41 : vector<16x1xf32>
      %43 = arith.mulf %40, %40 : vector<16x1xf32>
      %44 = arith.subf %42, %43 : vector<16x1xf32>
      %c0_23 = arith.constant 0 : index
      %c0_24 = arith.constant 0 : index
      %45 = vector.load %arg18[%c0_23, %c0_24] : memref<16x1xf32, #tpu.memory_space<vmem>>, vector<16x1xf32>
      tpu.vector_store %arg18[%c0_23, %c0_24], %40 {strides = array<i32>} : memref<16x1xf32, #tpu.memory_space<vmem>>, vector<16x1xf32>,
      %cst_25 = arith.constant 9.99999974E-6 : f32
      %46 = vector.broadcast %cst_25 : f32 to vector<16x1xf32>
      %47 = arith.addf %44, %46 : vector<16x1xf32>
      %48 = math.rsqrt %47 : vector<16x1xf32>
      %c0_26 = arith.constant 0 : index
      %c0_27 = arith.constant 0 : index
      %49 = vector.load %arg19[%c0_26, %c0_27] : memref<16x1xf32, #tpu.memory_space<vmem>>, vector<16x1xf32>
      tpu.vector_store %arg19[%c0_26, %c0_27], %48 {strides = array<i32>} : memref<16x1xf32, #tpu.memory_space<vmem>>, vector<16x1xf32>,
    } else {
    }
    %3 = arith.index_cast %arg1 : i32 to index
    %c0 = arith.constant 0 : index
    %c0_1 = arith.constant 0 : index
    %4 = vector.load %arg17[%3, %c0, %c0_1] : memref<8x16x512xf32, #tpu.memory_space<vmem>>, vector<1x16x512xf32>
    %5 = vector.shape_cast %4 : vector<1x16x512xf32> to vector<16x512xf32>
    %c0_2 = arith.constant 0 : index
    %c0_3 = arith.constant 0 : index
    %6 = vector.load %arg18[%c0_2, %c0_3] : memref<16x1xf32, #tpu.memory_space<vmem>>, vector<16x1xf32>
    %7 = vector.broadcast %6 : vector<16x1xf32> to vector<16x512xf32>
    %8 = arith.subf %5, %7 : vector<16x512xf32>
    %c0_4 = arith.constant 0 : index
    %c0_5 = arith.constant 0 : index
    %9 = vector.load %arg19[%c0_4, %c0_5] : memref<16x1xf32, #tpu.memory_space<vmem>>, vector<16x1xf32>
    %10 = vector.broadcast %9 : vector<16x1xf32> to vector<16x512xf32>
    %11 = arith.mulf %8, %10 : vector<16x512xf32>
    %c0_6 = arith.constant 0 : index
    %c0_7 = arith.constant 0 : index
    %12 = vector.load %arg5[%c0_6, %c0_7] : memref<1x512xf32, #tpu.memory_space<vmem>>, vector<1x512xf32>
    %13 = vector.broadcast %12 : vector<1x512xf32> to vector<16x512xf32>
    %14 = arith.mulf %11, %13 : vector<16x512xf32>
    %c0_8 = arith.constant 0 : index
    %c0_9 = arith.constant 0 : index
    %15 = vector.load %arg6[%c0_8, %c0_9] : memref<1x512xf32, #tpu.memory_space<vmem>>, vector<1x512xf32>
    %16 = vector.broadcast %15 : vector<1x512xf32> to vector<16x512xf32>
    %17 = arith.addf %14, %16 : vector<16x512xf32>
    %18 = arith.negf %17 : vector<16x512xf32>
    %19 = math.exp %18 : vector<16x512xf32>
    %cst = arith.constant 1.000000e+00 : f32
    %20 = vector.broadcast %cst : f32 to vector<16x512xf32>
    %21 = arith.addf %20, %19 : vector<16x512xf32>
    %22 = arith.divf %20, %21 : vector<16x512xf32>
    %23 = arith.mulf %17, %22 : vector<16x512xf32>
    %24 = arith.truncf %23 : vector<16x512xf32> to vector<16x512xbf16>
    %c0_10 = arith.constant 0 : index
    %c0_11 = arith.constant 0 : index
    %25 = vector.load %arg7[%c0_10, %c0_11] : memref<512x1792xbf16, #tpu.memory_space<vmem>>, vector<512x1792xbf16>
    %cst_12 = arith.constant dense<0.000000e+00> : vector<16x1792xf32>
    %26 = tpu.matmul %24, %25, %cst_12 {dimension_numbers = #tpu.dot_dimension_numbers<[1], [0], [0], [1], [0, 0, 1, 1], [], []>} : vector<16x512xbf16>, vector<512x1792xbf16>, vector<16x1792xf32> -> vector<16x1792xf32>
    %c0_i32_13 = arith.constant 0 : i32
    %27 = arith.cmpi eq, %arg1, %c0_i32_13 : i32
    %28 = arith.extui %27 : i1 to i32
    %c0_i32_14 = arith.constant 0 : i32
    %29 = arith.cmpi ne, %28, %c0_i32_14 : i32
    scf.if %29 {
      %c0_18 = arith.constant 0 : index
      %c0_19 = arith.constant 0 : index
      %36 = vector.load %arg20[%c0_18, %c0_19] : memref<16x1792xf32, #tpu.memory_space<vmem>>, vector<16x1792xf32>
      tpu.vector_store %arg20[%c0_18, %c0_19], %26 {strides = array<i32>} : memref<16x1792xf32, #tpu.memory_space<vmem>>, vector<16x1792xf32>,
    } else {
    }
    %c0_i32_15 = arith.constant 0 : i32
    %30 = arith.cmpi sgt, %arg1, %c0_i32_15 : i32
    %31 = arith.extui %30 : i1 to i32
    %c0_i32_16 = arith.constant 0 : i32
    %32 = arith.cmpi ne, %31, %c0_i32_16 : i32
    scf.if %32 {
      %c0_18 = arith.constant 0 : index
      %c0_19 = arith.constant 0 : index
      %36 = vector.load %arg20[%c0_18, %c0_19] : memref<16x1792xf32, #tpu.memory_space<vmem>>, vector<16x1792xf32>
      %37 = arith.addf %36, %26 : vector<16x1792xf32>
      %c0_20 = arith.constant 0 : index
      %c0_21 = arith.constant 0 : index
      %38 = vector.load %arg20[%c0_20, %c0_21] : memref<16x1792xf32, #tpu.memory_space<vmem>>, vector<16x1792xf32>
      tpu.vector_store %arg20[%c0_20, %c0_21], %37 {strides = array<i32>} : memref<16x1792xf32, #tpu.memory_space<vmem>>, vector<16x1792xf32>,
    } else {
    }
    %c7_i32 = arith.constant 7 : i32
    %33 = arith.cmpi eq, %arg1, %c7_i32 : i32
    %34 = arith.extui %33 : i1 to i32
    %c0_i32_17 = arith.constant 0 : i32
    %35 = arith.cmpi ne, %34, %c0_i32_17 : i32
    scf.if %35 {
      %c0_18 = arith.constant 0 : index
      %c0_19 = arith.constant 0 : index
      %36 = vector.load %arg20[%c0_18, %c0_19] : memref<16x1792xf32, #tpu.memory_space<vmem>>, vector<16x1792xf32>
      %c0_20 = arith.constant 0 : index
      %c0_21 = arith.constant 0 : index
      %37 = vector.load %arg8[%c0_20, %c0_21] : memref<1x1792xf32, #tpu.memory_space<vmem>>, vector<1x1792xf32>
      %38 = vector.broadcast %37 : vector<1x1792xf32> to vector<16x1792xf32>
      %39 = arith.addf %36, %38 : vector<16x1792xf32>
      %c0_22 = arith.constant 0 : index
      %c0_23 = arith.constant 0 : index
      %40 = vector.load %arg9[%c0_22, %c0_23] : memref<1x1792xf32, #tpu.memory_space<vmem>>, vector<1x1792xf32>
      %c0_24 = arith.constant 0 : index
      %c0_25 = arith.constant 0 : index
      %41 = vector.load %arg10[%c0_24, %c0_25] : memref<1x1792xf32, #tpu.memory_space<vmem>>, vector<1x1792xf32>
      %cst_26 = arith.constant dense<0.000000e+00> : vector<16xf32>
      %42 = vector.multi_reduction <add>, %39, %cst_26 [1] : vector<16x1792xf32> to vector<16xf32>
      %43 = vector.shape_cast %42 : vector<16xf32> to vector<16x1xf32>
      %cst_27 = arith.constant 1.792000e+03 : f32
      %44 = vector.broadcast %cst_27 : f32 to vector<16x1xf32>
      %45 = arith.divf %43, %44 : vector<16x1xf32>
      %46 = vector.broadcast %45 : vector<16x1xf32> to vector<16x1792xf32>
      %47 = arith.subf %39, %46 : vector<16x1792xf32>
      %48 = arith.mulf %47, %47 : vector<16x1792xf32>
      %cst_28 = arith.constant dense<0.000000e+00> : vector<16xf32>
      %49 = vector.multi_reduction <add>, %48, %cst_28 [1] : vector<16x1792xf32> to vector<16xf32>
      %50 = vector.shape_cast %49 : vector<16xf32> to vector<16x1xf32>
      %cst_29 = arith.constant 1.792000e+03 : f32
      %51 = vector.broadcast %cst_29 : f32 to vector<16x1xf32>
      %52 = arith.divf %50, %51 : vector<16x1xf32>
      %53 = vector.broadcast %45 : vector<16x1xf32> to vector<16x1792xf32>
      %54 = arith.subf %39, %53 : vector<16x1792xf32>
      %cst_30 = arith.constant 9.99999974E-6 : f32
      %55 = vector.broadcast %cst_30 : f32 to vector<16x1xf32>
      %56 = arith.addf %52, %55 : vector<16x1xf32>
      %57 = math.rsqrt %56 : vector<16x1xf32>
      %58 = vector.broadcast %57 : vector<16x1xf32> to vector<16x1792xf32>
      %59 = arith.mulf %54, %58 : vector<16x1792xf32>
      %60 = vector.broadcast %40 : vector<1x1792xf32> to vector<16x1792xf32>
      %61 = arith.mulf %59, %60 : vector<16x1792xf32>
      %62 = vector.broadcast %41 : vector<1x1792xf32> to vector<16x1792xf32>
      %63 = arith.addf %61, %62 : vector<16x1792xf32>
      %64 = arith.negf %63 : vector<16x1792xf32>
      %65 = math.exp %64 : vector<16x1792xf32>
      %cst_31 = arith.constant 1.000000e+00 : f32
      %66 = vector.broadcast %cst_31 : f32 to vector<16x1792xf32>
      %67 = arith.addf %66, %65 : vector<16x1792xf32>
      %68 = arith.divf %66, %67 : vector<16x1792xf32>
      %69 = arith.mulf %63, %68 : vector<16x1792xf32>
      %70 = vector.extract_strided_slice %69 {offsets = [0, 0], sizes = [16, 768], strides = [1, 1]} : vector<16x1792xf32> to vector<16x768xf32>
      %71 = arith.truncf %70 : vector<16x768xf32> to vector<16x768xbf16>
      %c0_32 = arith.constant 0 : index
      %c0_33 = arith.constant 0 : index
      %72 = vector.load %arg15[%c0_32, %c0_33] : memref<16x768xbf16, #tpu.memory_space<vmem>>, vector<16x768xbf16>
      tpu.vector_store %arg15[%c0_32, %c0_33], %71 {strides = array<i32>} : memref<16x768xbf16, #tpu.memory_space<vmem>>, vector<16x768xbf16>,
      %73 = vector.extract_strided_slice %69 {offsets = [0, 768], sizes = [16, 1024], strides = [1, 1]} : vector<16x1792xf32> to vector<16x1024xf32>
      %74 = arith.truncf %73 : vector<16x1024xf32> to vector<16x1024xbf16>
      %c0_34 = arith.constant 0 : index
      %c0_35 = arith.constant 0 : index
      %75 = vector.load %arg11[%c0_34, %c0_35] : memref<1024x128xbf16, #tpu.memory_space<vmem>>, vector<1024x128xbf16>
      %cst_36 = arith.constant dense<0.000000e+00> : vector<16x128xf32>
      %76 = tpu.matmul %74, %75, %cst_36 {dimension_numbers = #tpu.dot_dimension_numbers<[1], [0], [0], [1], [0, 0, 1, 1], [], []>} : vector<16x1024xbf16>, vector<1024x128xbf16>, vector<16x128xf32> -> vector<16x128xf32>
      %c0_37 = arith.constant 0 : index
      %c0_38 = arith.constant 0 : index
      %77 = vector.load %arg12[%c0_37, %c0_38] : memref<1x128xf32, #tpu.memory_space<vmem>>, vector<1x128xf32>
      %78 = vector.broadcast %77 : vector<1x128xf32> to vector<16x128xf32>
      %79 = arith.addf %76, %78 : vector<16x128xf32>
      %c0_39 = arith.constant 0 : index
      %c0_40 = arith.constant 0 : index
      %80 = vector.load %arg13[%c0_39, %c0_40] : memref<1x128xf32, #tpu.memory_space<vmem>>, vector<1x128xf32>
      %c0_41 = arith.constant 0 : index
      %c0_42 = arith.constant 0 : index
      %81 = vector.load %arg14[%c0_41, %c0_42] : memref<1x128xf32, #tpu.memory_space<vmem>>, vector<1x128xf32>
      %82 = tpu.iota {dimensions = array<i32: 1>} : vector<16x128xi32>
      %c32_i32 = arith.constant 32 : i32
      %83 = vector.broadcast %c32_i32 : i32 to vector<16x128xi32>
      %84 = arith.cmpi slt, %82, %83 : vector<16x128xi32>
      %cst_43 = arith.constant 0.000000e+00 : f32
      %85 = vector.broadcast %cst_43 : f32 to vector<16x128xf32>
      %86 = arith.select %84, %79, %85 : vector<16x128xi1>, vector<16x128xf32>
      %cst_44 = arith.constant dense<0.000000e+00> : vector<16xf32>
      %87 = vector.multi_reduction <add>, %86, %cst_44 [1] : vector<16x128xf32> to vector<16xf32>
      %88 = vector.shape_cast %87 : vector<16xf32> to vector<16x1xf32>
      %cst_45 = arith.constant 3.125000e-02 : f32
      %89 = vector.broadcast %cst_45 : f32 to vector<16x1xf32>
      %90 = arith.mulf %88, %89 : vector<16x1xf32>
      %91 = vector.broadcast %90 : vector<16x1xf32> to vector<16x128xf32>
      %92 = arith.subf %79, %91 : vector<16x128xf32>
      %cst_46 = arith.constant 0.000000e+00 : f32
      %93 = vector.broadcast %cst_46 : f32 to vector<16x128xf32>
      %94 = arith.select %84, %92, %93 : vector<16x128xi1>, vector<16x128xf32>
      %95 = arith.mulf %94, %94 : vector<16x128xf32>
      %cst_47 = arith.constant dense<0.000000e+00> : vector<16xf32>
      %96 = vector.multi_reduction <add>, %95, %cst_47 [1] : vector<16x128xf32> to vector<16xf32>
      %97 = vector.shape_cast %96 : vector<16xf32> to vector<16x1xf32>
      %cst_48 = arith.constant 3.125000e-02 : f32
      %98 = vector.broadcast %cst_48 : f32 to vector<16x1xf32>
      %99 = arith.mulf %97, %98 : vector<16x1xf32>
      %100 = vector.broadcast %90 : vector<16x1xf32> to vector<16x128xf32>
      %101 = arith.subf %79, %100 : vector<16x128xf32>
      %cst_49 = arith.constant 9.99999974E-6 : f32
      %102 = vector.broadcast %cst_49 : f32 to vector<16x1xf32>
      %103 = arith.addf %99, %102 : vector<16x1xf32>
      %104 = math.rsqrt %103 : vector<16x1xf32>
      %105 = vector.broadcast %104 : vector<16x1xf32> to vector<16x128xf32>
      %106 = arith.mulf %101, %105 : vector<16x128xf32>
      %107 = vector.broadcast %80 : vector<1x128xf32> to vector<16x128xf32>
      %108 = arith.mulf %106, %107 : vector<16x128xf32>
      %109 = vector.broadcast %81 : vector<1x128xf32> to vector<16x128xf32>
      %110 = arith.addf %108, %109 : vector<16x128xf32>
      %111 = tpu.iota {dimensions = array<i32: 1>} : vector<16x128xi32>
      %c32_i32_50 = arith.constant 32 : i32
      %112 = vector.broadcast %c32_i32_50 : i32 to vector<16x128xi32>
      %113 = arith.cmpi slt, %111, %112 : vector<16x128xi32>
      %cst_51 = arith.constant 0.000000e+00 : f32
      %114 = vector.broadcast %cst_51 : f32 to vector<16x128xf32>
      %115 = arith.select %113, %110, %114 : vector<16x128xi1>, vector<16x128xf32>
      %c0_52 = arith.constant 0 : index
      %c0_53 = arith.constant 0 : index
      %116 = vector.load %arg16[%c0_52, %c0_53] : memref<16x128xf32, #tpu.memory_space<vmem>>, vector<16x128xf32>
      tpu.vector_store %arg16[%c0_52, %c0_53], %115 {strides = array<i32>} : memref<16x128xf32, #tpu.memory_space<vmem>>, vector<16x128xf32>,
    } else {
    }
    return
  }
  func.func @transform_0(%arg0: i32, %arg1: i32) -> (i32, i32) {
    %c0_i32 = arith.constant 0 : i32
    %c0_i32_0 = arith.constant 0 : i32
    return %arg0, %c0_i32 : i32, i32
  }
  func.func @transform_1(%arg0: i32, %arg1: i32) -> (i32, i32, i32) {
    %c0_i32 = arith.constant 0 : i32
    %c0_i32_0 = arith.constant 0 : i32
    %c0_i32_1 = arith.constant 0 : i32
    %c0_i32_2 = arith.constant 0 : i32
    return %c0_i32, %c0_i32_0, %c0_i32_1 : i32, i32, i32
  }
  func.func @transform_2(%arg0: i32, %arg1: i32) -> (i32, i32, i32) {
    %c0_i32 = arith.constant 0 : i32
    %c0_i32_0 = arith.constant 0 : i32
    %c0_i32_1 = arith.constant 0 : i32
    %c0_i32_2 = arith.constant 0 : i32
    return %c0_i32, %c0_i32_0, %c0_i32_1 : i32, i32, i32
  }
  func.func @transform_3(%arg0: i32, %arg1: i32) -> (i32, i32) {
    %c0_i32 = arith.constant 0 : i32
    %c0_i32_0 = arith.constant 0 : i32
    return %c0_i32, %arg1 : i32, i32
  }
  func.func @transform_4(%arg0: i32, %arg1: i32) -> (i32, i32) {
    %c0_i32 = arith.constant 0 : i32
    %c0_i32_0 = arith.constant 0 : i32
    return %c0_i32, %arg1 : i32, i32
  }
  func.func @transform_5(%arg0: i32, %arg1: i32) -> (i32, i32) {
    %c0_i32 = arith.constant 0 : i32
    %c0_i32_0 = arith.constant 0 : i32
    return %arg1, %c0_i32 : i32, i32
  }
  func.func @transform_6(%arg0: i32, %arg1: i32) -> (i32, i32) {
    %c0_i32 = arith.constant 0 : i32
    %c0_i32_0 = arith.constant 0 : i32
    %c0_i32_1 = arith.constant 0 : i32
    return %c0_i32, %c0_i32_0 : i32, i32
  }
  func.func @transform_7(%arg0: i32, %arg1: i32) -> (i32, i32) {
    %c0_i32 = arith.constant 0 : i32
    %c0_i32_0 = arith.constant 0 : i32
    %c0_i32_1 = arith.constant 0 : i32
    return %c0_i32, %c0_i32_0 : i32, i32
  }
  func.func @transform_8(%arg0: i32, %arg1: i32) -> (i32, i32) {
    %c0_i32 = arith.constant 0 : i32
    %c0_i32_0 = arith.constant 0 : i32
    %c0_i32_1 = arith.constant 0 : i32
    return %c0_i32, %c0_i32_0 : i32, i32
  }
  func.func @transform_9(%arg0: i32, %arg1: i32) -> (i32, i32) {
    %c0_i32 = arith.constant 0 : i32
    %c0_i32_0 = arith.constant 0 : i32
    %c0_i32_1 = arith.constant 0 : i32
    return %c0_i32, %c0_i32_0 : i32, i32
  }
  func.func @transform_10(%arg0: i32, %arg1: i32) -> (i32, i32) {
    %c0_i32 = arith.constant 0 : i32
    %c0_i32_0 = arith.constant 0 : i32
    %c0_i32_1 = arith.constant 0 : i32
    return %c0_i32, %c0_i32_0 : i32, i32
  }
  func.func @transform_11(%arg0: i32, %arg1: i32) -> (i32, i32) {
    %c0_i32 = arith.constant 0 : i32
    %c0_i32_0 = arith.constant 0 : i32
    %c0_i32_1 = arith.constant 0 : i32
    return %c0_i32, %c0_i32_0 : i32, i32
  }
  func.func @transform_12(%arg0: i32, %arg1: i32) -> (i32, i32) {
    %c0_i32 = arith.constant 0 : i32
    %c0_i32_0 = arith.constant 0 : i32
    %c0_i32_1 = arith.constant 0 : i32
    return %c0_i32, %c0_i32_0 : i32, i32
  }
  func.func @transform_13(%arg0: i32, %arg1: i32) -> (i32, i32) {
    %c0_i32 = arith.constant 0 : i32
    %c0_i32_0 = arith.constant 0 : i32
    return %arg0, %c0_i32 : i32, i32
  }
  func.func @transform_14(%arg0: i32, %arg1: i32) -> (i32, i32) {
    %c0_i32 = arith.constant 0 : i32
    %c0_i32_0 = arith.constant 0 : i32
    return %arg0, %c0_i32 : i32, i32
  }
}

module attributes {stable_mosaic.version = 11 : i64} {
  func.func @_convt_phase_kernel(%arg0: i32, %arg1: i32, %arg2: memref<1x16x768xbf16, #tpu.memory_space<vmem>>, %arg3: memref<1x768x128xbf16, #tpu.memory_space<vmem>>, %arg4: memref<1x128xf32, #tpu.memory_space<vmem>>, %arg5: memref<1x128xf32, #tpu.memory_space<vmem>>, %arg6: memref<1x16x128xbf16, #tpu.memory_space<vmem>>) attributes {dimension_semantics = [#tpu.dimension_semantics<parallel>, #tpu.dimension_semantics<parallel>], iteration_bounds = array<i64: 4, 1>, scalar_prefetch = 0 : i64, scratch_operands = 0 : i64, tpu.core_type = #tpu.core_type<tc>, window_params = [{transform_indices = @transform_0, window_bounds = array<i64: 1, 16, 768>}, {transform_indices = @transform_1, window_bounds = array<i64: 1, 768, 128>}, {pipeline_mode = #tpu.pipeline_mode<synchronous>, transform_indices = @transform_2, window_bounds = array<i64: 1, 128>}, {pipeline_mode = #tpu.pipeline_mode<synchronous>, transform_indices = @transform_3, window_bounds = array<i64: 1, 128>}, {transform_indices = @transform_4, window_bounds = array<i64: 1, 16, 128>}]} {
    %c0 = arith.constant 0 : index
    %c0_0 = arith.constant 0 : index
    %c0_1 = arith.constant 0 : index
    %0 = vector.load %arg2[%c0, %c0_0, %c0_1] : memref<1x16x768xbf16, #tpu.memory_space<vmem>>, vector<1x16x768xbf16>
    %1 = vector.shape_cast %0 : vector<1x16x768xbf16> to vector<16x768xbf16>
    %c0_2 = arith.constant 0 : index
    %c0_3 = arith.constant 0 : index
    %c0_4 = arith.constant 0 : index
    %2 = vector.load %arg3[%c0_2, %c0_3, %c0_4] : memref<1x768x128xbf16, #tpu.memory_space<vmem>>, vector<1x768x128xbf16>
    %3 = vector.shape_cast %2 : vector<1x768x128xbf16> to vector<768x128xbf16>
    %cst = arith.constant dense<0.000000e+00> : vector<16x128xf32>
    %4 = tpu.matmul %1, %3, %cst {dimension_numbers = #tpu.dot_dimension_numbers<[1], [0], [0], [1], [0, 0, 1, 1], [], []>} : vector<16x768xbf16>, vector<768x128xbf16>, vector<16x128xf32> -> vector<16x128xf32>
    %c0_5 = arith.constant 0 : index
    %c0_6 = arith.constant 0 : index
    %5 = vector.load %arg4[%c0_5, %c0_6] : memref<1x128xf32, #tpu.memory_space<vmem>>, vector<1x128xf32>
    %c0_7 = arith.constant 0 : index
    %c0_8 = arith.constant 0 : index
    %6 = vector.load %arg5[%c0_7, %c0_8] : memref<1x128xf32, #tpu.memory_space<vmem>>, vector<1x128xf32>
    %7 = tpu.iota {dimensions = array<i32: 1>} : vector<16x128xi32>
    %c96_i32 = arith.constant 96 : i32
    %8 = vector.broadcast %c96_i32 : i32 to vector<16x128xi32>
    %9 = arith.cmpi slt, %7, %8 : vector<16x128xi32>
    %cst_9 = arith.constant 0.000000e+00 : f32
    %10 = vector.broadcast %cst_9 : f32 to vector<16x128xf32>
    %11 = arith.select %9, %4, %10 : vector<16x128xi1>, vector<16x128xf32>
    %cst_10 = arith.constant dense<0.000000e+00> : vector<16xf32>
    %12 = vector.multi_reduction <add>, %11, %cst_10 [1] : vector<16x128xf32> to vector<16xf32>
    %13 = vector.shape_cast %12 : vector<16xf32> to vector<16x1xf32>
    %cst_11 = arith.constant 0.010416667 : f32
    %14 = vector.broadcast %cst_11 : f32 to vector<16x1xf32>
    %15 = arith.mulf %13, %14 : vector<16x1xf32>
    %16 = vector.broadcast %15 : vector<16x1xf32> to vector<16x128xf32>
    %17 = arith.subf %4, %16 : vector<16x128xf32>
    %cst_12 = arith.constant 0.000000e+00 : f32
    %18 = vector.broadcast %cst_12 : f32 to vector<16x128xf32>
    %19 = arith.select %9, %17, %18 : vector<16x128xi1>, vector<16x128xf32>
    %20 = arith.mulf %19, %19 : vector<16x128xf32>
    %cst_13 = arith.constant dense<0.000000e+00> : vector<16xf32>
    %21 = vector.multi_reduction <add>, %20, %cst_13 [1] : vector<16x128xf32> to vector<16xf32>
    %22 = vector.shape_cast %21 : vector<16xf32> to vector<16x1xf32>
    %cst_14 = arith.constant 0.010416667 : f32
    %23 = vector.broadcast %cst_14 : f32 to vector<16x1xf32>
    %24 = arith.mulf %22, %23 : vector<16x1xf32>
    %25 = vector.broadcast %15 : vector<16x1xf32> to vector<16x128xf32>
    %26 = arith.subf %4, %25 : vector<16x128xf32>
    %cst_15 = arith.constant 1.000000e-03 : f32
    %27 = vector.broadcast %cst_15 : f32 to vector<16x1xf32>
    %28 = arith.addf %24, %27 : vector<16x1xf32>
    %29 = math.rsqrt %28 : vector<16x1xf32>
    %30 = vector.broadcast %29 : vector<16x1xf32> to vector<16x128xf32>
    %31 = arith.mulf %26, %30 : vector<16x128xf32>
    %32 = vector.broadcast %5 : vector<1x128xf32> to vector<16x128xf32>
    %33 = arith.mulf %31, %32 : vector<16x128xf32>
    %34 = vector.broadcast %6 : vector<1x128xf32> to vector<16x128xf32>
    %35 = arith.addf %33, %34 : vector<16x128xf32>
    %36 = arith.negf %35 : vector<16x128xf32>
    %37 = math.exp %36 : vector<16x128xf32>
    %cst_16 = arith.constant 1.000000e+00 : f32
    %38 = vector.broadcast %cst_16 : f32 to vector<16x128xf32>
    %39 = arith.addf %38, %37 : vector<16x128xf32>
    %40 = arith.divf %38, %39 : vector<16x128xf32>
    %41 = arith.mulf %35, %40 : vector<16x128xf32>
    %42 = tpu.iota {dimensions = array<i32: 1>} : vector<16x128xi32>
    %c96_i32_17 = arith.constant 96 : i32
    %43 = vector.broadcast %c96_i32_17 : i32 to vector<16x128xi32>
    %44 = arith.cmpi slt, %42, %43 : vector<16x128xi32>
    %cst_18 = arith.constant 0.000000e+00 : f32
    %45 = vector.broadcast %cst_18 : f32 to vector<16x128xf32>
    %46 = arith.select %44, %41, %45 : vector<16x128xi1>, vector<16x128xf32>
    %47 = arith.truncf %46 : vector<16x128xf32> to vector<16x128xbf16>
    %c0_19 = arith.constant 0 : index
    %c0_20 = arith.constant 0 : index
    %c0_21 = arith.constant 0 : index
    %48 = vector.load %arg6[%c0_19, %c0_20, %c0_21] : memref<1x16x128xbf16, #tpu.memory_space<vmem>>, vector<1x16x128xbf16>
    %49 = vector.shape_cast %48 : vector<1x16x128xbf16> to vector<16x128xbf16>
    %50 = vector.shape_cast %47 : vector<16x128xbf16> to vector<1x16x128xbf16>
    tpu.vector_store %arg6[%c0_19, %c0_20, %c0_21], %50 {strides = array<i32>} : memref<1x16x128xbf16, #tpu.memory_space<vmem>>, vector<1x16x128xbf16>,
    return
  }
  func.func @transform_0(%arg0: i32, %arg1: i32) -> (i32, i32, i32) {
    %c0_i32 = arith.constant 0 : i32
    %c0_i32_0 = arith.constant 0 : i32
    return %arg0, %arg1, %c0_i32 : i32, i32, i32
  }
  func.func @transform_1(%arg0: i32, %arg1: i32) -> (i32, i32, i32) {
    %c0_i32 = arith.constant 0 : i32
    %c0_i32_0 = arith.constant 0 : i32
    %c0_i32_1 = arith.constant 0 : i32
    return %arg0, %c0_i32, %c0_i32_0 : i32, i32, i32
  }
  func.func @transform_2(%arg0: i32, %arg1: i32) -> (i32, i32) {
    %c0_i32 = arith.constant 0 : i32
    %c0_i32_0 = arith.constant 0 : i32
    %c0_i32_1 = arith.constant 0 : i32
    return %c0_i32, %c0_i32_0 : i32, i32
  }
  func.func @transform_3(%arg0: i32, %arg1: i32) -> (i32, i32) {
    %c0_i32 = arith.constant 0 : i32
    %c0_i32_0 = arith.constant 0 : i32
    %c0_i32_1 = arith.constant 0 : i32
    return %c0_i32, %c0_i32_0 : i32, i32
  }
  func.func @transform_4(%arg0: i32, %arg1: i32) -> (i32, i32, i32) {
    %c0_i32 = arith.constant 0 : i32
    %c0_i32_0 = arith.constant 0 : i32
    return %arg0, %arg1, %c0_i32 : i32, i32, i32
  }
}

module attributes {stable_mosaic.version = 11 : i64} {
  func.func @_convt_phase_kernel(%arg0: i32, %arg1: i32, %arg2: memref<1x64x512xbf16, #tpu.memory_space<vmem>>, %arg3: memref<1x512x128xbf16, #tpu.memory_space<vmem>>, %arg4: memref<1x128xf32, #tpu.memory_space<vmem>>, %arg5: memref<1x64x128xf32, #tpu.memory_space<vmem>>) attributes {dimension_semantics = [#tpu.dimension_semantics<parallel>, #tpu.dimension_semantics<parallel>], iteration_bounds = array<i64: 4, 1>, scalar_prefetch = 0 : i64, scratch_operands = 0 : i64, tpu.core_type = #tpu.core_type<tc>, window_params = [{transform_indices = @transform_0, window_bounds = array<i64: 1, 64, 512>}, {transform_indices = @transform_1, window_bounds = array<i64: 1, 512, 128>}, {pipeline_mode = #tpu.pipeline_mode<synchronous>, transform_indices = @transform_2, window_bounds = array<i64: 1, 128>}, {transform_indices = @transform_3, window_bounds = array<i64: 1, 64, 128>}]} {
    %c0 = arith.constant 0 : index
    %c0_0 = arith.constant 0 : index
    %c0_1 = arith.constant 0 : index
    %0 = vector.load %arg2[%c0, %c0_0, %c0_1] : memref<1x64x512xbf16, #tpu.memory_space<vmem>>, vector<1x64x512xbf16>
    %1 = vector.shape_cast %0 : vector<1x64x512xbf16> to vector<64x512xbf16>
    %c0_2 = arith.constant 0 : index
    %c0_3 = arith.constant 0 : index
    %c0_4 = arith.constant 0 : index
    %2 = vector.load %arg3[%c0_2, %c0_3, %c0_4] : memref<1x512x128xbf16, #tpu.memory_space<vmem>>, vector<1x512x128xbf16>
    %3 = vector.shape_cast %2 : vector<1x512x128xbf16> to vector<512x128xbf16>
    %cst = arith.constant dense<0.000000e+00> : vector<64x128xf32>
    %4 = tpu.matmul %1, %3, %cst {dimension_numbers = #tpu.dot_dimension_numbers<[1], [0], [0], [1], [0, 0, 1, 1], [], []>} : vector<64x512xbf16>, vector<512x128xbf16>, vector<64x128xf32> -> vector<64x128xf32>
    %c0_5 = arith.constant 0 : index
    %c0_6 = arith.constant 0 : index
    %5 = vector.load %arg4[%c0_5, %c0_6] : memref<1x128xf32, #tpu.memory_space<vmem>>, vector<1x128xf32>
    %6 = vector.broadcast %5 : vector<1x128xf32> to vector<64x128xf32>
    %7 = arith.addf %4, %6 : vector<64x128xf32>
    %8 = tpu.iota {dimensions = array<i32: 1>} : vector<64x128xi32>
    %c3_i32 = arith.constant 3 : i32
    %9 = vector.broadcast %c3_i32 : i32 to vector<64x128xi32>
    %10 = arith.cmpi slt, %8, %9 : vector<64x128xi32>
    %cst_7 = arith.constant 0.000000e+00 : f32
    %11 = vector.broadcast %cst_7 : f32 to vector<64x128xf32>
    %12 = arith.select %10, %7, %11 : vector<64x128xi1>, vector<64x128xf32>
    %c0_8 = arith.constant 0 : index
    %c0_9 = arith.constant 0 : index
    %c0_10 = arith.constant 0 : index
    %13 = vector.load %arg5[%c0_8, %c0_9, %c0_10] : memref<1x64x128xf32, #tpu.memory_space<vmem>>, vector<1x64x128xf32>
    %14 = vector.shape_cast %13 : vector<1x64x128xf32> to vector<64x128xf32>
    %15 = vector.shape_cast %12 : vector<64x128xf32> to vector<1x64x128xf32>
    tpu.vector_store %arg5[%c0_8, %c0_9, %c0_10], %15 {strides = array<i32>} : memref<1x64x128xf32, #tpu.memory_space<vmem>>, vector<1x64x128xf32>,
    return
  }
  func.func @transform_0(%arg0: i32, %arg1: i32) -> (i32, i32, i32) {
    %c0_i32 = arith.constant 0 : i32
    %c0_i32_0 = arith.constant 0 : i32
    return %arg0, %arg1, %c0_i32 : i32, i32, i32
  }
  func.func @transform_1(%arg0: i32, %arg1: i32) -> (i32, i32, i32) {
    %c0_i32 = arith.constant 0 : i32
    %c0_i32_0 = arith.constant 0 : i32
    %c0_i32_1 = arith.constant 0 : i32
    return %arg0, %c0_i32, %c0_i32_0 : i32, i32, i32
  }
  func.func @transform_2(%arg0: i32, %arg1: i32) -> (i32, i32) {
    %c0_i32 = arith.constant 0 : i32
    %c0_i32_0 = arith.constant 0 : i32
    %c0_i32_1 = arith.constant 0 : i32
    return %c0_i32, %c0_i32_0 : i32, i32
  }
  func.func @transform_3(%arg0: i32, %arg1: i32) -> (i32, i32, i32) {
    %c0_i32 = arith.constant 0 : i32
    %c0_i32_0 = arith.constant 0 : i32
    return %arg0, %arg1, %c0_i32 : i32, i32, i32
  }
}

</mosaic_0001>

<llo_original>
// kernel: decoder_forward.4
$region0: #{decoder_forward.4}
  #allocation0 [shape = 'u32[]', space=smem, size = 0x4, offset = 0x4, fixed_abs, tag = 'smem constant byte address 0x4 - core index']
  #allocation1 [shape = 'u32[72,128]{1,0:T(1,128)}', space=vmem, size = 0x9000, scoped, tag = 'internal scratch']
  %s0 = inlined_call_operand.vmem [shape: bf16[4,16,768], index: 0, kind: input, shape index: {}]
  %s1 = inlined_call_operand.hbm [shape: bf16[4,768,128], index: 1, kind: input, shape index: {}]
  %s2 = inlined_call_operand.hbm [shape: f32[1,128], index: 2, kind: input, shape index: {}]
  %s3 = inlined_call_operand.hbm [shape: f32[1,128], index: 3, kind: input, shape index: {}]
  %s4 = inlined_call_operand.vmem [shape: bf16[4,16,128], index: 4, kind: output, shape index: {}]
  %s5 = sld [smem:[#allocation0]]
  $region61: #{decoder_forward.4} parent=0
    _
  %s7 = ssub.s32 1, %s5
  %s8 = scalar_select 0, %s7, %s5
  $region1: #{decoder_forward.4} parent=0
    #allocation2 [shape = 'u8[393216]{0}', space=vmem, size = 0x60000, scoped, tag = 'input window, operand 1']
    #allocation3 [shape = 's32[2]{0}', space=sflag, size = 0x8, scoped, tag = 'scoped memory for decoder_forward.4']
    #allocation4 [shape = 'u8[512]{0}', space=vmem, size = 0x400, scoped, tag = 'input window, operand 2, single buffered']
    #allocation5 [shape = 's32[1]{0}', space=sflag, size = 0x4, scoped, tag = 'scoped memory for decoder_forward.4']
    #allocation6 [shape = 'u8[512]{0}', space=vmem, size = 0x400, scoped, tag = 'input window, operand 3, single buffered']
    %9 = vsyncpa [#allocation3], 0
    %s10 = scalar_lea.sflag [#allocation3], 1
    %11 = vsyncpa %s10, 0
    %12 = vsyncpa [#allocation5], 0
    loop: start=0, step=1, limit=6
    $region2: #{decoder_forward.4} parent=1 // loop_pre_header
      _
    $region3: #{decoder_forward.4} parent=1 // loop_header
      %s14 = sphi 0, %s18
      %p15 = scmp.ge.s32.totalorder %s14, 6
      %s21 = sphi 0, %s33
      %s22 = sphi 0, %s29
      %s23 = sphi 0, %s21
      %s24 = sphi 0, %s22
      %s25 = sphi 0, %s23
      %s26 = sphi 0, %s24
      %s38 = sphi 0, %s40
      %s41 = sphi 0, %s38
      %s42 = sphi 0, %s41
      %s58 = sphi 0, %s42
      %s64 = sphi 0, %s66
      %s67 = sphi 0, %s64
      %s68 = sphi 0, %s67
      %s84 = sphi 0, %s68
      %s88 = sphi 0, %s88
      %s90 = sphi 0, %s88
      %s91 = sphi 0, %s90
      %s105 = sphi 0, %s91
      %s109 = sphi 0, %s109
      %s111 = sphi 0, %s109
      %s112 = sphi 0, %s111
      %s126 = sphi 0, %s112
      %s134 = sphi 0, %s136
      %s137 = sphi 0, %s134
      %s138 = sphi 0, %s137
      %s154 = sphi 0, %s138
    $region4: #{decoder_forward.4} parent=1 // loop_header_branch
      %17 = sbr.rel (%p15) target = $region8
    $region5: #{decoder_forward.4} parent=1 // loop_body
      %s19 = ssub.s32 %s14, 1
      %s20 = ssub.s32 %s14, 2
      %s27 = sadd.s32 1, %s22
      %p28 = scmp.ge.s32.totalorder %s27, 1
      %s29 = scalar_select %p28, 0, %s27
      %s30 = sadd.s32 1, %s21
      %s31 = scalar_select %p28, %s30, %s21
      %p32 = scmp.ge.s32.totalorder %s31, 4
      %s33 = scalar_select %p32, 0, %s31
      %s34 = ssub.s32 %s21, %s33
      %s35 = ssub.s32 %s22, %s29
      %s36 = sor.u32 %s34, %s35
      %p37 = scmp.eq.s32.totalorder %s36, 0
      %s39 = sadd.s32 %s38, 1
      %s40 = scalar_select %p37, %s38, %s39
      %p43 = pneg %p37
      %p44 = scmp.eq.s32.totalorder %s14, 3
      %p45 = por %p43, %p44
      %p46 = scmp.ne.s32.totalorder %s38, %s41
      %p47 = scmp.eq.s32.totalorder %s14, 0
      %p48 = por %p46, %p47
      %p49 = scmp.ne.s32.totalorder %s38, %s41
      %p50 = scmp.eq.s32.totalorder %s19, 3
      %p51 = por %p49, %p50
      %p52 = scmp.ne.s32.totalorder %s41, %s42
      %p53 = scmp.eq.s32.totalorder %s19, 0
      %p54 = por %p52, %p53
      %p55 = scmp.ne.s32.totalorder %s41, %s42
      %p56 = scmp.eq.s32.totalorder %s20, 3
      %p57 = por %p55, %p56
      %p59 = scmp.ne.s32.totalorder %s42, %s58
      %p60 = scmp.eq.s32.totalorder %s20, 0
      %p61 = por %p59, %p60
      %s62 = ssub.s32 %s21, %s33
      %p63 = scmp.eq.s32.totalorder %s62, 0
      %s65 = sadd.s32 %s64, 1
      %s66 = scalar_select %p63, %s64, %s65
      %p69 = pneg %p63
      %p70 = scmp.eq.s32.totalorder %s14, 3
      %p71 = por %p69, %p70
      %p72 = scmp.ne.s32.totalorder %s64, %s67
      %p73 = scmp.eq.s32.totalorder %s14, 0
      %p74 = por %p72, %p73
      %p75 = scmp.ne.s32.totalorder %s64, %s67
      %p76 = scmp.eq.s32.totalorder %s19, 3
      %p77 = por %p75, %p76
      %p78 = scmp.ne.s32.totalorder %s67, %s68
      %p79 = scmp.eq.s32.totalorder %s19, 0
      %p80 = por %p78, %p79
      %p81 = scmp.ne.s32.totalorder %s67, %s68
      %p82 = scmp.eq.s32.totalorder %s20, 3
      %p83 = por %p81, %p82
      %p85 = scmp.ne.s32.totalorder %s68, %s84
      %p86 = scmp.eq.s32.totalorder %s20, 0
      %p87 = por %p85, %p86
      %s89 = sadd.s32 %s88, 1
      %p92 = scmp.eq.s32.totalorder %s14, 3
      %p93 = scmp.ne.s32.totalorder %s88, %s90
      %p94 = scmp.eq.s32.totalorder %s14, 0
      %p95 = por %p93, %p94
      %p96 = scmp.ne.s32.totalorder %s88, %s90
      %p97 = scmp.eq.s32.totalorder %s19, 3
      %p98 = por %p96, %p97
      %p99 = scmp.ne.s32.totalorder %s90, %s91
      %p100 = scmp.eq.s32.totalorder %s19, 0
      %p101 = por %p99, %p100
      %p102 = scmp.ne.s32.totalorder %s90, %s91
      %p103 = scmp.eq.s32.totalorder %s20, 3
      %p104 = por %p102, %p103
      %p106 = scmp.ne.s32.totalorder %s91, %s105
      %p107 = scmp.eq.s32.totalorder %s20, 0
      %p108 = por %p106, %p107
      %s110 = sadd.s32 %s109, 1
      %p113 = scmp.eq.s32.totalorder %s14, 3
      %p114 = scmp.ne.s32.totalorder %s109, %s111
      %p115 = scmp.eq.s32.totalorder %s14, 0
      %p116 = por %p114, %p115
      %p117 = scmp.ne.s32.totalorder %s109, %s111
      %p118 = scmp.eq.s32.totalorder %s19, 3
      %p119 = por %p117, %p118
      %p120 = scmp.ne.s32.totalorder %s111, %s112
      %p121 = scmp.eq.s32.totalorder %s19, 0
      %p122 = por %p120, %p121
      %p123 = scmp.ne.s32.totalorder %s111, %s112
      %p124 = scmp.eq.s32.totalorder %s20, 3
      %p125 = por %p123, %p124
      %p127 = scmp.ne.s32.totalorder %s112, %s126
      %p128 = scmp.eq.s32.totalorder %s20, 0
      %p129 = por %p127, %p128
      %s130 = ssub.s32 %s21, %s33
      %s131 = ssub.s32 %s22, %s29
      %s132 = sor.u32 %s130, %s131
      %p133 = scmp.eq.s32.totalorder %s132, 0
      %s135 = sadd.s32 %s134, 1
      %s136 = scalar_select %p133, %s134, %s135
      %p139 = pneg %p133
      %p140 = scmp.eq.s32.totalorder %s14, 3
      %p141 = por %p139, %p140
      %p142 = scmp.ne.s32.totalorder %s134, %s137
      %p143 = scmp.eq.s32.totalorder %s14, 0
      %p144 = por %p142, %p143
      %p145 = scmp.ne.s32.totalorder %s134, %s137
      %p146 = scmp.eq.s32.totalorder %s19, 3
      %p147 = por %p145, %p146
      %p148 = scmp.ne.s32.totalorder %s137, %s138
      %p149 = scmp.eq.s32.totalorder %s19, 0
      %p150 = por %p148, %p149
      %p151 = scmp.ne.s32.totalorder %s137, %s138
      %p152 = scmp.eq.s32.totalorder %s20, 3
      %p153 = por %p151, %p152
      %p155 = scmp.ne.s32.totalorder %s138, %s154
      %p156 = scmp.eq.s32.totalorder %s20, 0
      %p157 = por %p155, %p156
      %p158 = scmp.le.s32.totalorder 1, %s14
      %p159 = scmp.lt.s32.totalorder %s14, 5
      %p160 = pnand %p158, %p159
      %p161 = pneg %p160
      // Predicated region
      $region9: #{decoder_forward.4} parent=5 // pred_check
        _
      $region10: #{decoder_forward.4} parent=5 // pred_check_branch
        %163 = sbr.rel (%p160) target = $region12
      $region11: #{decoder_forward.4} parent=5 // pred_region
        %s164 = ssub.s32 %s14, 1
        // Predicated region
        $region13: #{decoder_forward.4} parent=11 // pred_check
          %p165 = pneg %p101
        $region14: #{decoder_forward.4} parent=11 // pred_check_branch
          %167 = sbr.rel (%p165) target = $region16
        $region15: #{decoder_forward.4} parent=11 // pred_region
          %169 = vsyncadd [#allocation5], 0
          %s171 = sshll.u32 %s2, 4
          %s172 = int_to_ptr.hbm [resolvable:$true] %s171
          %s173 = sshll.u32 [#allocation4], 4
          %s174 = int_to_ptr.vmem [resolvable:$true] %s173
          %176 = dma.hbm_to_vmem [thread:$0]  %s172, 16, %s174, [#allocation5]
        $region16: #{decoder_forward.4} parent=11 // pred_fallthru
          _
        // Predicated region
        $region17: #{decoder_forward.4} parent=11 // pred_check
          %p177 = pneg %p122
        $region18: #{decoder_forward.4} parent=11 // pred_check_branch
          %179 = sbr.rel (%p177) target = $region20
        $region19: #{decoder_forward.4} parent=11 // pred_region
          %181 = vsyncadd [#allocation5], 0
          %s183 = sshll.u32 %s3, 4
          %s184 = int_to_ptr.hbm [resolvable:$true] %s183
          %s185 = sshll.u32 [#allocation6], 4
          %s186 = int_to_ptr.vmem [resolvable:$true] %s185
          %188 = dma.hbm_to_vmem [thread:$0]  %s184, 16, %s186, [#allocation5]
        $region20: #{decoder_forward.4} parent=11 // pred_fallthru
          _
      $region12: #{decoder_forward.4} parent=5 // pred_fallthru
        _
      %p189 = scmp.lt.s32.totalorder %s14, 4
      // Predicated region
      $region21: #{decoder_forward.4} parent=5 // pred_check
        %p190 = pneg %p189
      $region22: #{decoder_forward.4} parent=5 // pred_check_branch
        %192 = sbr.rel (%p190) target = $region24
      $region23: #{decoder_forward.4} parent=5 // pred_region
        // Predicated region
        $region25: #{decoder_forward.4} parent=23 // pred_check
          %p193 = pneg %p48
        $region26: #{decoder_forward.4} parent=23 // pred_check_branch
          %195 = sbr.rel (%p193) target = $region28
        $region27: #{decoder_forward.4} parent=23 // pred_region
          %s196 = smul.u32 2, %s22
          %p197 = scmp.lt.s32.totalorder %s21, 3
          %s198 = scalar_select %p197, %s21, 3
          %p199 = scmp.lt.s32.totalorder %s196, 1
          %s200 = scalar_select %p199, %s196, 1
          %s201 = smul.addr %s200, 6
          %s202 = smul.addr %s198, 12
          %s203 = sadd.s32 %s201, %s202
          %s204 = smul.addr %s203, 4
          %s205 = scalar_lea.vmem %s0, %s204
          %s206 = smul.u32 2, %s22
        $region28: #{decoder_forward.4} parent=23 // pred_fallthru
          _
        // Predicated region
        $region29: #{decoder_forward.4} parent=23 // pred_check
          %p207 = pneg %p74
        $region30: #{decoder_forward.4} parent=23 // pred_check_branch
          %209 = sbr.rel (%p207) target = $region32
        $region31: #{decoder_forward.4} parent=23 // pred_region
          %s210 = sand.u32 %s64, 1
          %s211 = scalar_lea.sflag [#allocation3], %s210
          %s212 = sand.u32 %s64, 1
          %s213 = smul.addr %s212, 384
          %s214 = scalar_lea.vmem [#allocation2], %s213
          %216 = vsyncadd %s211, 0
          %s217 = smul.addr %s21, 96
          %s218 = smul.addr %s217, 4
          %s219 = scalar_lea.hbm %s1, %s218
          %s220 = sshll.u32 %s219, 4
          %s221 = int_to_ptr.hbm [resolvable:$true] %s220
          %s222 = sshll.u32 %s214, 4
          %s223 = int_to_ptr.vmem [resolvable:$true] %s222
          %228 = dma.hbm_to_vmem [thread:$0]  %s221, 6144, %s223, %s211, 64, 64, 4
        $region32: #{decoder_forward.4} parent=23 // pred_fallthru
          _
      $region24: #{decoder_forward.4} parent=5 // pred_fallthru
        _
      %p229 = scmp.le.s32.totalorder 1, %s14
      %p230 = scmp.lt.s32.totalorder %s14, 5
      %p231 = pnand %p229, %p230
      %p232 = pneg %p231
      // Predicated region
      $region33: #{decoder_forward.4} parent=5 // pred_check
        _
      $region34: #{decoder_forward.4} parent=5 // pred_check_branch
        %234 = sbr.rel (%p231) target = $region36
      $region35: #{decoder_forward.4} parent=5 // pred_region
        %s235 = ssub.s32 %s14, 1
        %s236 = sand.u32 %s67, 1
        %s237 = scalar_lea.sflag [#allocation3], %s236
        %s238 = sand.u32 %s67, 1
        %s239 = smul.addr %s238, 384
        %s240 = scalar_lea.vmem [#allocation2], %s239
        // Predicated region
        $region37: #{decoder_forward.4} parent=35 // pred_check
          %p241 = pneg %p80
        $region38: #{decoder_forward.4} parent=35 // pred_check_branch
          %243 = sbr.rel (%p241) target = $region40
        $region39: #{decoder_forward.4} parent=35 // pred_region
          %245 = dma.done %s237, 6144
        $region40: #{decoder_forward.4} parent=35 // pred_fallthru
          _
        // Predicated region
        $region41: #{decoder_forward.4} parent=35 // pred_check
          %p246 = pneg %p101
        $region42: #{decoder_forward.4} parent=35 // pred_check_branch
          %248 = sbr.rel (%p246) target = $region44
        $region43: #{decoder_forward.4} parent=35 // pred_region
          %250 = dma.done [#allocation5], 16
        $region44: #{decoder_forward.4} parent=35 // pred_fallthru
          _
        // Predicated region
        $region45: #{decoder_forward.4} parent=35 // pred_check
          %p251 = pneg %p122
        $region46: #{decoder_forward.4} parent=35 // pred_check_branch
          %253 = sbr.rel (%p251) target = $region48
        $region47: #{decoder_forward.4} parent=35 // pred_region
          %255 = dma.done [#allocation5], 16
        $region48: #{decoder_forward.4} parent=35 // pred_fallthru
          _
        %s256 = smul.u32 2, %s24
        %p257 = scmp.lt.s32.totalorder %s23, 3
        %s258 = scalar_select %p257, %s23, 3
        %p259 = scmp.lt.s32.totalorder %s256, 1
        %s260 = scalar_select %p259, %s256, 1
        %s261 = smul.addr %s260, 6
        %s262 = smul.addr %s258, 12
        %s263 = sadd.s32 %s261, %s262
        %s264 = smul.addr %s263, 4
        %s265 = scalar_lea.vmem %s0, %s264
        %p266 = pneg %p54
        %p267 = pneg %p51
        %s268 = sand.u32 %s67, 1
        %s269 = scalar_lea.sflag [#allocation3], %s268
        %s270 = sand.u32 %s67, 1
        %s271 = smul.addr %s270, 384
        %s272 = scalar_lea.vmem [#allocation2], %s271
        %p273 = pneg %p80
        %p274 = pneg %p77
        %p275 = pneg %p101
        %p276 = pneg %p98
        %p277 = pneg %p122
        %p278 = pneg %p119
        %p279 = pneg %p150
        %p280 = pneg %p147
        %s281 = smul.u32 2, %s24
        %p282 = scmp.lt.s32.totalorder %s23, 3
        %s283 = scalar_select %p282, %s23, 3
        %p284 = scmp.lt.s32.totalorder %s281, 1
        %s285 = scalar_select %p284, %s281, 1
        %s286 = smul.addr %s283, 2
        %s287 = sadd.s32 %s285, %s286
        %s288 = smul.addr %s287, 4
        %s289 = scalar_lea.vmem %s4, %s288
        %s290 = smul.u32 2, %s24
        %p291 = scmp.lt.s32.totalorder %s23, 3
        %s292 = scalar_select %p291, %s23, 3
        %p293 = scmp.lt.s32.totalorder %s290, 1
        %s294 = scalar_select %p293, %s290, 1
        %s295 = smul.addr %s294, 6
        %s296 = smul.addr %s292, 12
        %s297 = sadd.s32 %s295, %s296
        %s298 = smul.addr %s297, 4
        %s299 = scalar_lea.vmem %s0, %s298
        %s300 = smul.u32 2, %s24
        %s301 = smul.u32 2, %s24
        %p302 = scmp.lt.s32.totalorder %s23, 3
        %s303 = scalar_select %p302, %s23, 3
        %p304 = scmp.lt.s32.totalorder %s301, 1
        %s305 = scalar_select %p304, %s301, 1
        %s306 = smul.addr %s303, 2
        %s307 = sadd.s32 %s305, %s306
        %s308 = smul.addr %s307, 4
        %s309 = scalar_lea.vmem %s4, %s308
        %s310 = smul.u32 2, %s24
        %v311 = vld [vmem:[%s299] sm:$0xff]
        %v312 = vld [vmem:[%s299 + $0x8] sm:$0xff]
        %v313 = vld [vmem:[%s299 + $0x10] sm:$0xff]
        %v314 = vld [vmem:[%s299 + $0x18] sm:$0xff]
        %v315 = vld [vmem:[%s299 + $0x20] sm:$0xff]
        %v316 = vld [vmem:[%s299 + $0x28] sm:$0xff]
        %v317 = vld [vmem:[%s240] sm:$0xf]
        %v318 = vld [vmem:[%s240 + $0x4] sm:$0xf]
        %v319 = vld [vmem:[%s240 + $0x8] sm:$0xf]
        %v320 = vld [vmem:[%s240 + $0xc] sm:$0xf]
        %v321 = vld [vmem:[%s240 + $0x10] sm:$0xf]
        %v322 = vld [vmem:[%s240 + $0x14] sm:$0xf]
        %v323 = vld [vmem:[%s240 + $0x18] sm:$0xf]
        %v324 = vld [vmem:[%s240 + $0x1c] sm:$0xf]
        %v325 = vld [vmem:[%s240 + $0x20] sm:$0xf]
        %v326 = vld [vmem:[%s240 + $0x24] sm:$0xf]
        %v327 = vld [vmem:[%s240 + $0x28] sm:$0xf]
        %v328 = vld [vmem:[%s240 + $0x2c] sm:$0xf]
        %v329 = vld [vmem:[%s240 + $0x30] sm:$0xf]
        %v330 = vld [vmem:[%s240 + $0x34] sm:$0xf]
        %v331 = vld [vmem:[%s240 + $0x38] sm:$0xf]
        %v332 = vld [vmem:[%s240 + $0x3c] sm:$0xf]
        %v333 = vld [vmem:[%s240 + $0x40] sm:$0xf]
        %v334 = vld [vmem:[%s240 + $0x44] sm:$0xf]
        %v335 = vld [vmem:[%s240 + $0x48] sm:$0xf]
        %v336 = vld [vmem:[%s240 + $0x4c] sm:$0xf]
        %v337 = vld [vmem:[%s240 + $0x50] sm:$0xf]
        %v338 = vld [vmem:[%s240 + $0x54] sm:$0xf]
        %v339 = vld [vmem:[%s240 + $0x58] sm:$0xf]
        %v340 = vld [vmem:[%s240 + $0x5c] sm:$0xf]
        %v341 = vld [vmem:[%s240 + $0x60] sm:$0xf]
        %v342 = vld [vmem:[%s240 + $0x64] sm:$0xf]
        %v343 = vld [vmem:[%s240 + $0x68] sm:$0xf]
        %v344 = vld [vmem:[%s240 + $0x6c] sm:$0xf]
        %v345 = vld [vmem:[%s240 + $0x70] sm:$0xf]
        %v346 = vld [vmem:[%s240 + $0x74] sm:$0xf]
        %v347 = vld [vmem:[%s240 + $0x78] sm:$0xf]
        %v348 = vld [vmem:[%s240 + $0x7c] sm:$0xf]
        %v349 = vld [vmem:[%s240 + $0x80] sm:$0xf]
        %v350 = vld [vmem:[%s240 + $0x84] sm:$0xf]
        %v351 = vld [vmem:[%s240 + $0x88] sm:$0xf]
        %v352 = vld [vmem:[%s240 + $0x8c] sm:$0xf]
        %v353 = vld [vmem:[%s240 + $0x90] sm:$0xf]
        %v354 = vld [vmem:[%s240 + $0x94] sm:$0xf]
        %v355 = vld [vmem:[%s240 + $0x98] sm:$0xf]
        %v356 = vld [vmem:[%s240 + $0x9c] sm:$0xf]
        %v357 = vld [vmem:[%s240 + $0xa0] sm:$0xf]
        %v358 = vld [vmem:[%s240 + $0xa4] sm:$0xf]
        %v359 = vld [vmem:[%s240 + $0xa8] sm:$0xf]
        %v360 = vld [vmem:[%s240 + $0xac] sm:$0xf]
        %v361 = vld [vmem:[%s240 + $0xb0] sm:$0xf]
        %v362 = vld [vmem:[%s240 + $0xb4] sm:$0xf]
        %v363 = vld [vmem:[%s240 + $0xb8] sm:$0xf]
        %v364 = vld [vmem:[%s240 + $0xbc] sm:$0xf]
        %v365 = vld [vmem:[%s240 + $0xc0] sm:$0xf]
        %v366 = vld [vmem:[%s240 + $0xc4] sm:$0xf]
        %v367 = vld [vmem:[%s240 + $0xc8] sm:$0xf]
        %v368 = vld [vmem:[%s240 + $0xcc] sm:$0xf]
        %v369 = vld [vmem:[%s240 + $0xd0] sm:$0xf]
        %v370 = vld [vmem:[%s240 + $0xd4] sm:$0xf]
        %v371 = vld [vmem:[%s240 + $0xd8] sm:$0xf]
        %v372 = vld [vmem:[%s240 + $0xdc] sm:$0xf]
        %v373 = vld [vmem:[%s240 + $0xe0] sm:$0xf]
        %v374 = vld [vmem:[%s240 + $0xe4] sm:$0xf]
        %v375 = vld [vmem:[%s240 + $0xe8] sm:$0xf]
        %v376 = vld [vmem:[%s240 + $0xec] sm:$0xf]
        %v377 = vld [vmem:[%s240 + $0xf0] sm:$0xf]
        %v378 = vld [vmem:[%s240 + $0xf4] sm:$0xf]
        %v379 = vld [vmem:[%s240 + $0xf8] sm:$0xf]
        %v380 = vld [vmem:[%s240 + $0xfc] sm:$0xf]
        %v381 = vld [vmem:[%s240 + $0x100] sm:$0xf]
        %v382 = vld [vmem:[%s240 + $0x104] sm:$0xf]
        %v383 = vld [vmem:[%s240 + $0x108] sm:$0xf]
        %v384 = vld [vmem:[%s240 + $0x10c] sm:$0xf]
        %v385 = vld [vmem:[%s240 + $0x110] sm:$0xf]
        %v386 = vld [vmem:[%s240 + $0x114] sm:$0xf]
        %v387 = vld [vmem:[%s240 + $0x118] sm:$0xf]
        %v388 = vld [vmem:[%s240 + $0x11c] sm:$0xf]
        %v389 = vld [vmem:[%s240 + $0x120] sm:$0xf]
        %v390 = vld [vmem:[%s240 + $0x124] sm:$0xf]
        %v391 = vld [vmem:[%s240 + $0x128] sm:$0xf]
        %v392 = vld [vmem:[%s240 + $0x12c] sm:$0xf]
        %v393 = vld [vmem:[%s240 + $0x130] sm:$0xf]
        %v394 = vld [vmem:[%s240 + $0x134] sm:$0xf]
        %v395 = vld [vmem:[%s240 + $0x138] sm:$0xf]
        %v396 = vld [vmem:[%s240 + $0x13c] sm:$0xf]
        %v397 = vld [vmem:[%s240 + $0x140] sm:$0xf]
        %v398 = vld [vmem:[%s240 + $0x144] sm:$0xf]
        %v399 = vld [vmem:[%s240 + $0x148] sm:$0xf]
        %v400 = vld [vmem:[%s240 + $0x14c] sm:$0xf]
        %v401 = vld [vmem:[%s240 + $0x150] sm:$0xf]
        %v402 = vld [vmem:[%s240 + $0x154] sm:$0xf]
        %v403 = vld [vmem:[%s240 + $0x158] sm:$0xf]
        %v404 = vld [vmem:[%s240 + $0x15c] sm:$0xf]
        %v405 = vld [vmem:[%s240 + $0x160] sm:$0xf]
        %v406 = vld [vmem:[%s240 + $0x164] sm:$0xf]
        %v407 = vld [vmem:[%s240 + $0x168] sm:$0xf]
        %v408 = vld [vmem:[%s240 + $0x16c] sm:$0xf]
        %v409 = vld [vmem:[%s240 + $0x170] sm:$0xf]
        %v410 = vld [vmem:[%s240 + $0x174] sm:$0xf]
        %v411 = vld [vmem:[%s240 + $0x178] sm:$0xf]
        %v412 = vld [vmem:[%s240 + $0x17c] sm:$0xf]
        %v419 = vunpack.c.l.b16 %v311
        %v420 = vunpack.c.h.b16 %v311
        %v421 = vunpack.c.l.b16 %v312
        %v422 = vunpack.c.h.b16 %v312
        %v423 = vunpack.c.l.b16 %v313
        %v424 = vunpack.c.h.b16 %v313
        %v425 = vunpack.c.l.b16 %v314
        %v426 = vunpack.c.h.b16 %v314
        %v427 = vunpack.c.l.b16 %v315
        %v428 = vunpack.c.h.b16 %v315
        %v429 = vunpack.c.l.b16 %v316
        %v430 = vunpack.c.h.b16 %v316
        %v431 = vpack.c.b16 %v425, %v419
        %v432 = vpack.c.b16 %v426, %v420
        %v433 = vpack.c.b16 %v427, %v421
        %v434 = vpack.c.b16 %v428, %v422
        %v435 = vpack.c.b16 %v429, %v423
        %v436 = vpack.c.b16 %v430, %v424
        %v539 = vunpack.c.l.b16 %v317
        %v540 = vunpack.c.l.b16 %v318
        %v541 = vunpack.c.l.b16 %v319
        %v542 = vunpack.c.l.b16 %v320
        %v543 = vunpack.c.l.b16 %v321
        %v544 = vunpack.c.l.b16 %v322
        %v545 = vunpack.c.l.b16 %v323
        %v546 = vunpack.c.l.b16 %v324
        %v547 = vunpack.c.l.b16 %v325
        %v548 = vunpack.c.l.b16 %v326
        %v549 = vunpack.c.l.b16 %v327
        %v550 = vunpack.c.l.b16 %v328
        %v551 = vunpack.c.l.b16 %v329
        %v552 = vunpack.c.l.b16 %v330
        %v553 = vunpack.c.l.b16 %v331
        %v554 = vunpack.c.l.b16 %v332
        %v555 = vunpack.c.l.b16 %v333
        %v556 = vunpack.c.l.b16 %v334
        %v557 = vunpack.c.l.b16 %v335
        %v558 = vunpack.c.l.b16 %v336
        %v559 = vunpack.c.l.b16 %v337
        %v560 = vunpack.c.l.b16 %v338
        %v561 = vunpack.c.l.b16 %v339
        %v562 = vunpack.c.l.b16 %v340
        %v563 = vunpack.c.l.b16 %v341
        %v564 = vunpack.c.l.b16 %v342
        %v565 = vunpack.c.l.b16 %v343
        %v566 = vunpack.c.l.b16 %v344
        %v567 = vunpack.c.l.b16 %v345
        %v568 = vunpack.c.l.b16 %v346
        %v569 = vunpack.c.l.b16 %v347
        %v570 = vunpack.c.l.b16 %v348
        %v571 = vunpack.c.l.b16 %v349
        %v572 = vunpack.c.l.b16 %v350
        %v573 = vunpack.c.l.b16 %v351
        %v574 = vunpack.c.l.b16 %v352
        %v575 = vunpack.c.l.b16 %v353
        %v576 = vunpack.c.l.b16 %v354
        %v577 = vunpack.c.l.b16 %v355
        %v578 = vunpack.c.l.b16 %v356
        %v579 = vunpack.c.l.b16 %v357
        %v580 = vunpack.c.l.b16 %v358
        %v581 = vunpack.c.l.b16 %v359
        %v582 = vunpack.c.l.b16 %v360
        %v583 = vunpack.c.l.b16 %v361
        %v584 = vunpack.c.l.b16 %v362
        %v585 = vunpack.c.l.b16 %v363
        %v586 = vunpack.c.l.b16 %v364
        %v587 = vunpack.c.l.b16 %v365
        %v588 = vunpack.c.l.b16 %v366
        %v589 = vunpack.c.l.b16 %v367
        %v590 = vunpack.c.l.b16 %v368
        %v591 = vunpack.c.l.b16 %v369
        %v592 = vunpack.c.l.b16 %v370
        %v593 = vunpack.c.l.b16 %v371
        %v594 = vunpack.c.l.b16 %v372
        %v595 = vunpack.c.l.b16 %v373
        %v596 = vunpack.c.l.b16 %v374
        %v597 = vunpack.c.l.b16 %v375
        %v598 = vunpack.c.l.b16 %v376
        %v599 = vunpack.c.l.b16 %v377
        %v600 = vunpack.c.l.b16 %v378
        %v601 = vunpack.c.l.b16 %v379
        %v602 = vunpack.c.l.b16 %v380
        %v603 = vunpack.c.l.b16 %v381
        %v604 = vunpack.c.l.b16 %v382
        %v605 = vunpack.c.l.b16 %v383
        %v606 = vunpack.c.l.b16 %v384
        %v607 = vunpack.c.l.b16 %v385
        %v608 = vunpack.c.l.b16 %v386
        %v609 = vunpack.c.l.b16 %v387
        %v610 = vunpack.c.l.b16 %v388
        %v611 = vunpack.c.l.b16 %v389
        %v612 = vunpack.c.l.b16 %v390
        %v613 = vunpack.c.l.b16 %v391
        %v614 = vunpack.c.l.b16 %v392
        %v615 = vunpack.c.l.b16 %v393
        %v616 = vunpack.c.l.b16 %v394
        %v617 = vunpack.c.l.b16 %v395
        %v618 = vunpack.c.l.b16 %v396
        %v619 = vunpack.c.l.b16 %v397
        %v620 = vunpack.c.l.b16 %v398
        %v621 = vunpack.c.l.b16 %v399
        %v622 = vunpack.c.l.b16 %v400
        %v623 = vunpack.c.l.b16 %v401
        %v624 = vunpack.c.l.b16 %v402
        %v625 = vunpack.c.l.b16 %v403
        %v626 = vunpack.c.l.b16 %v404
        %v627 = vunpack.c.l.b16 %v405
        %v628 = vunpack.c.l.b16 %v406
        %v629 = vunpack.c.l.b16 %v407
        %v630 = vunpack.c.l.b16 %v408
        %v631 = vunpack.c.l.b16 %v409
        %v632 = vunpack.c.l.b16 %v410
        %v633 = vunpack.c.l.b16 %v411
        %v634 = vunpack.c.l.b16 %v412
        %v635 = vpack.c.b16 %v540, %v539
        %v636 = vpack.c.b16 %v542, %v541
        %v637 = vpack.c.b16 %v544, %v543
        %v638 = vpack.c.b16 %v546, %v545
        %v639 = vpack.c.b16 %v548, %v547
        %v640 = vpack.c.b16 %v550, %v549
        %v641 = vpack.c.b16 %v552, %v551
        %v642 = vpack.c.b16 %v554, %v553
        %v643 = vpack.c.b16 %v556, %v555
        %v644 = vpack.c.b16 %v558, %v557
        %v645 = vpack.c.b16 %v560, %v559
        %v646 = vpack.c.b16 %v562, %v561
        %v647 = vpack.c.b16 %v564, %v563
        %v648 = vpack.c.b16 %v566, %v565
        %v649 = vpack.c.b16 %v568, %v567
        %v650 = vpack.c.b16 %v570, %v569
        %v651 = vpack.c.b16 %v572, %v571
        %v652 = vpack.c.b16 %v574, %v573
        %v653 = vpack.c.b16 %v576, %v575
        %v654 = vpack.c.b16 %v578, %v577
        %v655 = vpack.c.b16 %v580, %v579
        %v656 = vpack.c.b16 %v582, %v581
        %v657 = vpack.c.b16 %v584, %v583
        %v658 = vpack.c.b16 %v586, %v585
        %v659 = vpack.c.b16 %v588, %v587
        %v660 = vpack.c.b16 %v590, %v589
        %v661 = vpack.c.b16 %v592, %v591
        %v662 = vpack.c.b16 %v594, %v593
        %v663 = vpack.c.b16 %v596, %v595
        %v664 = vpack.c.b16 %v598, %v597
        %v665 = vpack.c.b16 %v600, %v599
        %v666 = vpack.c.b16 %v602, %v601
        %v667 = vpack.c.b16 %v604, %v603
        %v668 = vpack.c.b16 %v606, %v605
        %v669 = vpack.c.b16 %v608, %v607
        %v670 = vpack.c.b16 %v610, %v609
        %v671 = vpack.c.b16 %v612, %v611
        %v672 = vpack.c.b16 %v614, %v613
        %v673 = vpack.c.b16 %v616, %v615
        %v674 = vpack.c.b16 %v618, %v617
        %v675 = vpack.c.b16 %v620, %v619
        %v676 = vpack.c.b16 %v622, %v621
        %v677 = vpack.c.b16 %v624, %v623
        %v678 = vpack.c.b16 %v626, %v625
        %v679 = vpack.c.b16 %v628, %v627
        %v680 = vpack.c.b16 %v630, %v629
        %v681 = vpack.c.b16 %v632, %v631
        %v682 = vpack.c.b16 %v634, %v633
        %731 = vmatpush.bf16.msra.mxu0 %v642
        %732 = vmatpush.bf16.msra.mxu0 %v641
        %733 = vmatpush.bf16.msra.mxu0 %v640
        %734 = vmatpush.bf16.msra.mxu0 %v639
        %735 = vmatpush.bf16.msra.mxu0 %v638
        %736 = vmatpush.bf16.msra.mxu0 %v637
        %737 = vmatpush.bf16.msra.mxu0 %v636
        %738 = vmatpush.bf16.msra.mxu0 %v635
        %739 = vmatmul.bf16.gmra.mxu0 %v431
        %v740 = vpop.f32.mrf.mxu0
        %v741 = vadd.f32 0.0, %v740
        %v742 = vpop.f32.mrf.mxu0
        %v743 = vadd.f32 0.0, %v742
        %744 = vdwg.mxu0
        %745 = vmatpush.bf16.msra.mxu0 %v650
        %746 = vmatpush.bf16.msra.mxu0 %v649
        %747 = vmatpush.bf16.msra.mxu0 %v648
        %748 = vmatpush.bf16.msra.mxu0 %v647
        %749 = vmatpush.bf16.msra.mxu0 %v646
        %750 = vmatpush.bf16.msra.mxu0 %v645
        %751 = vmatpush.bf16.msra.mxu0 %v644
        %752 = vmatpush.bf16.msra.mxu0 %v643
        %753 = vmatmul.bf16.gmra.mxu0 %v432
        %v754 = vpop.f32.mrf.mxu0
        %v755 = vadd.f32 %v741, %v754
        %v756 = vpop.f32.mrf.mxu0
        %v757 = vadd.f32 %v743, %v756
        %758 = vdwg.mxu0
        %759 = vmatpush.bf16.msra.mxu0 %v658
        %760 = vmatpush.bf16.msra.mxu0 %v657
        %761 = vmatpush.bf16.msra.mxu0 %v656
        %762 = vmatpush.bf16.msra.mxu0 %v655
        %763 = vmatpush.bf16.msra.mxu0 %v654
        %764 = vmatpush.bf16.msra.mxu0 %v653
        %765 = vmatpush.bf16.msra.mxu0 %v652
        %766 = vmatpush.bf16.msra.mxu0 %v651
        %767 = vmatmul.bf16.gmra.mxu0 %v433
        %v768 = vpop.f32.mrf.mxu0
        %v769 = vadd.f32 %v755, %v768
        %v770 = vpop.f32.mrf.mxu0
        %v771 = vadd.f32 %v757, %v770
        %772 = vdwg.mxu0
        %773 = vmatpush.bf16.msra.mxu0 %v666
        %774 = vmatpush.bf16.msra.mxu0 %v665
        %775 = vmatpush.bf16.msra.mxu0 %v664
        %776 = vmatpush.bf16.msra.mxu0 %v663
        %777 = vmatpush.bf16.msra.mxu0 %v662
        %778 = vmatpush.bf16.msra.mxu0 %v661
        %779 = vmatpush.bf16.msra.mxu0 %v660
        %780 = vmatpush.bf16.msra.mxu0 %v659
        %781 = vmatmul.bf16.gmra.mxu0 %v434
        %v782 = vpop.f32.mrf.mxu0
        %v783 = vadd.f32 %v769, %v782
        %v784 = vpop.f32.mrf.mxu0
        %v785 = vadd.f32 %v771, %v784
        %786 = vdwg.mxu0
        %787 = vmatpush.bf16.msra.mxu0 %v674
        %788 = vmatpush.bf16.msra.mxu0 %v673
        %789 = vmatpush.bf16.msra.mxu0 %v672
        %790 = vmatpush.bf16.msra.mxu0 %v671
        %791 = vmatpush.bf16.msra.mxu0 %v670
        %792 = vmatpush.bf16.msra.mxu0 %v669
        %793 = vmatpush.bf16.msra.mxu0 %v668
        %794 = vmatpush.bf16.msra.mxu0 %v667
        %795 = vmatmul.bf16.gmra.mxu0 %v435
        %v796 = vpop.f32.mrf.mxu0
        %v797 = vadd.f32 %v783, %v796
        %v798 = vpop.f32.mrf.mxu0
        %v799 = vadd.f32 %v785, %v798
        %800 = vdwg.mxu0
        %801 = vmatpush.bf16.msra.mxu0 %v682
        %802 = vmatpush.bf16.msra.mxu0 %v681
        %803 = vmatpush.bf16.msra.mxu0 %v680
        %804 = vmatpush.bf16.msra.mxu0 %v679
        %805 = vmatpush.bf16.msra.mxu0 %v678
        %806 = vmatpush.bf16.msra.mxu0 %v677
        %807 = vmatpush.bf16.msra.mxu0 %v676
        %808 = vmatpush.bf16.msra.mxu0 %v675
        %809 = vmatmul.bf16.gmra.mxu0 %v436
        %v810 = vpop.f32.mrf.mxu0
        %v811 = vadd.f32 %v797, %v810
        %v812 = vpop.f32.mrf.mxu0
        %v813 = vadd.f32 %v799, %v812
        %814 = vdwg.mxu0
        %v815 = vld [vmem:[#allocation4] sm:$0x1]
        %v816 = vld [vmem:[#allocation6] sm:$0x1]
        %v817 = vlaneseq
        %v818 = vand.u32 %v817, 127
        %vm819 = vcmp.lt.s32.totalorder %v818, 96
        %v820 = vsel %vm819, %v811, 0.0
        %v821 = vsel %vm819, %v813, 0.0
        %822 = vadd.xlane.f32.xlu0 %v820
        %v823 = vpop.xlane.xlu0 %822
        %824 = vadd.xlane.f32.xlu0 %v821
        %v825 = vpop.xlane.xlu0 %824
        %v826 = vmul.f32 %v823, 0.010416667
        %v827 = vmul.f32 %v825, 0.010416667
        %v828 = vsub.f32 %v811, %v826
        %v829 = vsub.f32 %v813, %v827
        %v830 = vsel %vm819, %v828, 0.0
        %v831 = vsel %vm819, %v829, 0.0
        %v832 = vmul.f32 %v830, %v830
        %v833 = vmul.f32 %v831, %v831
        %834 = vadd.xlane.f32.xlu0 %v832
        %v835 = vpop.xlane.xlu0 %834
        %836 = vadd.xlane.f32.xlu0 %v833
        %v837 = vpop.xlane.xlu0 %836
        %v838 = vmul.f32 %v835, 0.010416667
        %v839 = vmul.f32 %v837, 0.010416667
        %v840 = vadd.f32 %v838, 0.001
        %v841 = vadd.f32 %v839, 0.001
        %v842 = vrsqrt.pop %v840
        %v843 = vmul.f32 %v842, %v840
        %v844 = vmul.f32 %v843, %v842
        %v845 = vmul.f32 0.5, %v844
        %v846 = vsub.f32 1.5, %v845
        %v847 = vmul.f32 %v842, %v846
        %vm848 = vweird.f32 %v840
        %vm849 = vweird.f32 %v842
        %vm850 = vmor %vm848, %vm849
        %v851 = vsel %vm850, %v842, %v847
        %v852 = vrsqrt.pop %v841
        %v853 = vmul.f32 %v852, %v841
        %v854 = vmul.f32 %v853, %v852
        %v855 = vmul.f32 0.5, %v854
        %v856 = vsub.f32 1.5, %v855
        %v857 = vmul.f32 %v852, %v856
        %vm858 = vweird.f32 %v841
        %vm859 = vweird.f32 %v852
        %vm860 = vmor %vm858, %vm859
        %v861 = vsel %vm860, %v852, %v857
        %v862 = vmul.f32 %v828, %v851
        %v863 = vmul.f32 %v829, %v861
        %v865 = vperm.slane %v815, 0
        %v867 = vmul.f32 %v862, %v865
        %v868 = vmul.f32 %v863, %v865
        %v870 = vperm.slane %v816, 0
        %v872 = vadd.f32 %v867, %v870
        %v873 = vadd.f32 %v868, %v870
        %v874 = vxor.u32 %v872, 2147483648
        %v875 = vxor.u32 %v873, 2147483648
        %v876 = vmul.f32 %v874, 1.442695
        %v877 = vpow.pop %v876
        %v878 = vmul.f32 %v875, 1.442695
        %v879 = vpow.pop %v878
        %v880 = vadd.f32 %v877, 1.0
        %v881 = vadd.f32 %v879, 1.0
        %v882 = vrcp.pop %v880
        %v883 = vmul.f32 %v880, %v882
        %v884 = vsub.f32 1.0, %v883
        %v885 = vmul.f32 %v882, %v884
        %v886 = vadd.f32 %v882, %v885
        %vm887 = vweird.f32 %v880
        %vm888 = vweird.f32 %v882
        %vm889 = vmor %vm887, %vm888
        %v890 = vsel %vm889, %v882, %v886
        %v891 = vand.u32 2147483647, %v880
        %vm892 = vcmp.eq.f32.partialorder %v891, 8.507059e+37
        %v893 = vand.u32 %v880, 2147483648
        %v894 = vor.u32 1.1754944e-38, %v893
        %v895 = vsel %vm892, %v894, %v890
        %v896 = vmul.f32 1.0, %v895
        %v897 = vrcp.pop %v881
        %v898 = vmul.f32 %v881, %v897
        %v899 = vsub.f32 1.0, %v898
        %v900 = vmul.f32 %v897, %v899
        %v901 = vadd.f32 %v897, %v900
        %vm902 = vweird.f32 %v881
        %vm903 = vweird.f32 %v897
        %vm904 = vmor %vm902, %vm903
        %v905 = vsel %vm904, %v897, %v901
        %v906 = vand.u32 2147483647, %v881
        %vm907 = vcmp.eq.f32.partialorder %v906, 8.507059e+37
        %v908 = vand.u32 %v881, 2147483648
        %v909 = vor.u32 1.1754944e-38, %v908
        %v910 = vsel %vm907, %v909, %v905
        %v911 = vmul.f32 1.0, %v910
        %v912 = vmul.f32 %v872, %v896
        %v913 = vmul.f32 %v873, %v911
        %v914 = vsel %vm819, %v912, 0.0
        %v915 = vsel %vm819, %v913, 0.0
        %v916 = vpack.c.bf16 %v914, %v914
        %v917 = vpack.c.bf16 %v915, %v915
        %918 = vst [vmem:[%s309] sm:$0xf] %v916
        %919 = vst [vmem:[%s309 + $0x4] sm:$0xf] %v917
        %s920 = smul.u32 2, %s24
        %p921 = scmp.lt.s32.totalorder %s23, 3
        %s922 = scalar_select %p921, %s23, 3
        %p923 = scmp.lt.s32.totalorder %s920, 1
        %s924 = scalar_select %p923, %s920, 1
        %s925 = smul.addr %s922, 2
        %s926 = sadd.s32 %s924, %s925
        %s927 = smul.addr %s926, 4
        %s928 = scalar_lea.vmem %s4, %s927
        // Predicated region
        $region49: #{decoder_forward.4} parent=35 // pred_check
          %p929 = pneg %p147
        $region50: #{decoder_forward.4} parent=35 // pred_check_branch
          %931 = sbr.rel (%p929) target = $region52
        $region51: #{decoder_forward.4} parent=35 // pred_region
          %s932 = smul.u32 2, %s24
        $region52: #{decoder_forward.4} parent=35 // pred_fallthru
          _
      $region36: #{decoder_forward.4} parent=5 // pred_fallthru
        _
      %p933 = scmp.le.s32.totalorder 2, %s14
      // Predicated region
      $region53: #{decoder_forward.4} parent=5 // pred_check
        %p934 = pneg %p933
      $region54: #{decoder_forward.4} parent=5 // pred_check_branch
        %936 = sbr.rel (%p934) target = $region56
      $region55: #{decoder_forward.4} parent=5 // pred_region
        %s937 = ssub.s32 %s14, 2
        // Predicated region
        $region57: #{decoder_forward.4} parent=55 // pred_check
          %p938 = pneg %p153
        $region58: #{decoder_forward.4} parent=55 // pred_check_branch
          %940 = sbr.rel (%p938) target = $region60
        $region59: #{decoder_forward.4} parent=55 // pred_region
          %s941 = smul.u32 2, %s26
          %p942 = scmp.lt.s32.totalorder %s25, 3
          %s943 = scalar_select %p942, %s25, 3
          %p944 = scmp.lt.s32.totalorder %s941, 1
          %s945 = scalar_select %p944, %s941, 1
          %s946 = smul.addr %s943, 2
          %s947 = sadd.s32 %s945, %s946
          %s948 = smul.addr %s947, 4
          %s949 = scalar_lea.vmem %s4, %s948
        $region60: #{decoder_forward.4} parent=55 // pred_fallthru
          _
      $region56: #{decoder_forward.4} parent=5 // pred_fallthru
        _
    $region6: #{decoder_forward.4} parent=1 // loop_footer
      %s18 = sadd.s32 1, %s14
    $region7: #{decoder_forward.4} parent=1 // loop_footer_branch
      %13 = sbr.rel target = $region3
    $region8: #{decoder_forward.4} parent=1 // loop_exit
      _
    %950 = vsyncpa [#allocation3], 1
    %s951 = scalar_lea.sflag [#allocation3], 1
    %952 = vsyncpa %s951, 1
    %953 = vsyncpa [#allocation5], 1

// kernel: decoder_forward.5
$region0: #{decoder_forward.5}
  #allocation0 [shape = 'u32[]', space=smem, size = 0x4, offset = 0x4, fixed_abs, tag = 'smem constant byte address 0x4 - core index']
  #allocation1 [shape = 'u32[72,128]{1,0:T(1,128)}', space=vmem, size = 0x9000, scoped, tag = 'internal scratch']
  %s0 = inlined_call_operand.vmem [shape: bf16[4,64,512], index: 0, kind: input, shape index: {}]
  %s1 = inlined_call_operand.hbm [shape: bf16[4,512,128], index: 1, kind: input, shape index: {}]
  %s2 = inlined_call_operand.hbm [shape: f32[1,128], index: 2, kind: input, shape index: {}]
  %s3 = inlined_call_operand.vmem [shape: f32[4,64,128], index: 3, kind: output, shape index: {}]
  %s4 = sld [smem:[#allocation0]]
  $region53: #{decoder_forward.5} parent=0
    _
  %s6 = ssub.s32 1, %s4
  %s7 = scalar_select 0, %s6, %s4
  $region1: #{decoder_forward.5} parent=0
    #allocation2 [shape = 'u8[262144]{0}', space=vmem, size = 0x40000, scoped, tag = 'input window, operand 1']
    #allocation3 [shape = 's32[2]{0}', space=sflag, size = 0x8, scoped, tag = 'scoped memory for decoder_forward.5']
    #allocation4 [shape = 'u8[512]{0}', space=vmem, size = 0x400, scoped, tag = 'input window, operand 2, single buffered']
    #allocation5 [shape = 's32[1]{0}', space=sflag, size = 0x4, scoped, tag = 'scoped memory for decoder_forward.5']
    %8 = vsyncpa [#allocation3], 0
    %s9 = scalar_lea.sflag [#allocation3], 1
    %10 = vsyncpa %s9, 0
    %11 = vsyncpa [#allocation5], 0
    loop: start=0, step=1, limit=6
    $region2: #{decoder_forward.5} parent=1 // loop_pre_header
      _
    $region3: #{decoder_forward.5} parent=1 // loop_header
      %s13 = sphi 0, %s17
      %p14 = scmp.ge.s32.totalorder %s13, 6
      %s20 = sphi 0, %s32
      %s21 = sphi 0, %s28
      %s22 = sphi 0, %s20
      %s23 = sphi 0, %s21
      %s24 = sphi 0, %s22
      %s25 = sphi 0, %s23
      %s37 = sphi 0, %s39
      %s40 = sphi 0, %s37
      %s41 = sphi 0, %s40
      %s57 = sphi 0, %s41
      %s63 = sphi 0, %s65
      %s66 = sphi 0, %s63
      %s67 = sphi 0, %s66
      %s83 = sphi 0, %s67
      %s87 = sphi 0, %s87
      %s89 = sphi 0, %s87
      %s90 = sphi 0, %s89
      %s104 = sphi 0, %s90
      %s112 = sphi 0, %s114
      %s115 = sphi 0, %s112
      %s116 = sphi 0, %s115
      %s132 = sphi 0, %s116
    $region4: #{decoder_forward.5} parent=1 // loop_header_branch
      %16 = sbr.rel (%p14) target = $region8
    $region5: #{decoder_forward.5} parent=1 // loop_body
      %s18 = ssub.s32 %s13, 1
      %s19 = ssub.s32 %s13, 2
      %s26 = sadd.s32 1, %s21
      %p27 = scmp.ge.s32.totalorder %s26, 1
      %s28 = scalar_select %p27, 0, %s26
      %s29 = sadd.s32 1, %s20
      %s30 = scalar_select %p27, %s29, %s20
      %p31 = scmp.ge.s32.totalorder %s30, 4
      %s32 = scalar_select %p31, 0, %s30
      %s33 = ssub.s32 %s20, %s32
      %s34 = ssub.s32 %s21, %s28
      %s35 = sor.u32 %s33, %s34
      %p36 = scmp.eq.s32.totalorder %s35, 0
      %s38 = sadd.s32 %s37, 1
      %s39 = scalar_select %p36, %s37, %s38
      %p42 = pneg %p36
      %p43 = scmp.eq.s32.totalorder %s13, 3
      %p44 = por %p42, %p43
      %p45 = scmp.ne.s32.totalorder %s37, %s40
      %p46 = scmp.eq.s32.totalorder %s13, 0
      %p47 = por %p45, %p46
      %p48 = scmp.ne.s32.totalorder %s37, %s40
      %p49 = scmp.eq.s32.totalorder %s18, 3
      %p50 = por %p48, %p49
      %p51 = scmp.ne.s32.totalorder %s40, %s41
      %p52 = scmp.eq.s32.totalorder %s18, 0
      %p53 = por %p51, %p52
      %p54 = scmp.ne.s32.totalorder %s40, %s41
      %p55 = scmp.eq.s32.totalorder %s19, 3
      %p56 = por %p54, %p55
      %p58 = scmp.ne.s32.totalorder %s41, %s57
      %p59 = scmp.eq.s32.totalorder %s19, 0
      %p60 = por %p58, %p59
      %s61 = ssub.s32 %s20, %s32
      %p62 = scmp.eq.s32.totalorder %s61, 0
      %s64 = sadd.s32 %s63, 1
      %s65 = scalar_select %p62, %s63, %s64
      %p68 = pneg %p62
      %p69 = scmp.eq.s32.totalorder %s13, 3
      %p70 = por %p68, %p69
      %p71 = scmp.ne.s32.totalorder %s63, %s66
      %p72 = scmp.eq.s32.totalorder %s13, 0
      %p73 = por %p71, %p72
      %p74 = scmp.ne.s32.totalorder %s63, %s66
      %p75 = scmp.eq.s32.totalorder %s18, 3
      %p76 = por %p74, %p75
      %p77 = scmp.ne.s32.totalorder %s66, %s67
      %p78 = scmp.eq.s32.totalorder %s18, 0
      %p79 = por %p77, %p78
      %p80 = scmp.ne.s32.totalorder %s66, %s67
      %p81 = scmp.eq.s32.totalorder %s19, 3
      %p82 = por %p80, %p81
      %p84 = scmp.ne.s32.totalorder %s67, %s83
      %p85 = scmp.eq.s32.totalorder %s19, 0
      %p86 = por %p84, %p85
      %s88 = sadd.s32 %s87, 1
      %p91 = scmp.eq.s32.totalorder %s13, 3
      %p92 = scmp.ne.s32.totalorder %s87, %s89
      %p93 = scmp.eq.s32.totalorder %s13, 0
      %p94 = por %p92, %p93
      %p95 = scmp.ne.s32.totalorder %s87, %s89
      %p96 = scmp.eq.s32.totalorder %s18, 3
      %p97 = por %p95, %p96
      %p98 = scmp.ne.s32.totalorder %s89, %s90
      %p99 = scmp.eq.s32.totalorder %s18, 0
      %p100 = por %p98, %p99
      %p101 = scmp.ne.s32.totalorder %s89, %s90
      %p102 = scmp.eq.s32.totalorder %s19, 3
      %p103 = por %p101, %p102
      %p105 = scmp.ne.s32.totalorder %s90, %s104
      %p106 = scmp.eq.s32.totalorder %s19, 0
      %p107 = por %p105, %p106
      %s108 = ssub.s32 %s20, %s32
      %s109 = ssub.s32 %s21, %s28
      %s110 = sor.u32 %s108, %s109
      %p111 = scmp.eq.s32.totalorder %s110, 0
      %s113 = sadd.s32 %s112, 1
      %s114 = scalar_select %p111, %s112, %s113
      %p117 = pneg %p111
      %p118 = scmp.eq.s32.totalorder %s13, 3
      %p119 = por %p117, %p118
      %p120 = scmp.ne.s32.totalorder %s112, %s115
      %p121 = scmp.eq.s32.totalorder %s13, 0
      %p122 = por %p120, %p121
      %p123 = scmp.ne.s32.totalorder %s112, %s115
      %p124 = scmp.eq.s32.totalorder %s18, 3
      %p125 = por %p123, %p124
      %p126 = scmp.ne.s32.totalorder %s115, %s116
      %p127 = scmp.eq.s32.totalorder %s18, 0
      %p128 = por %p126, %p127
      %p129 = scmp.ne.s32.totalorder %s115, %s116
      %p130 = scmp.eq.s32.totalorder %s19, 3
      %p131 = por %p129, %p130
      %p133 = scmp.ne.s32.totalorder %s116, %s132
      %p134 = scmp.eq.s32.totalorder %s19, 0
      %p135 = por %p133, %p134
      %p136 = scmp.le.s32.totalorder 1, %s13
      %p137 = scmp.lt.s32.totalorder %s13, 5
      %p138 = pnand %p136, %p137
      %p139 = pneg %p138
      // Predicated region
      $region9: #{decoder_forward.5} parent=5 // pred_check
        _
      $region10: #{decoder_forward.5} parent=5 // pred_check_branch
        %141 = sbr.rel (%p138) target = $region12
      $region11: #{decoder_forward.5} parent=5 // pred_region
        %s142 = ssub.s32 %s13, 1
        // Predicated region
        $region13: #{decoder_forward.5} parent=11 // pred_check
          %p143 = pneg %p100
        $region14: #{decoder_forward.5} parent=11 // pred_check_branch
          %145 = sbr.rel (%p143) target = $region16
        $region15: #{decoder_forward.5} parent=11 // pred_region
          %147 = vsyncadd [#allocation5], 0
          %s149 = sshll.u32 %s2, 4
          %s150 = int_to_ptr.hbm [resolvable:$true] %s149
          %s151 = sshll.u32 [#allocation4], 4
          %s152 = int_to_ptr.vmem [resolvable:$true] %s151
          %154 = dma.hbm_to_vmem [thread:$0]  %s150, 16, %s152, [#allocation5]
        $region16: #{decoder_forward.5} parent=11 // pred_fallthru
          _
      $region12: #{decoder_forward.5} parent=5 // pred_fallthru
        _
      %p155 = scmp.lt.s32.totalorder %s13, 4
      // Predicated region
      $region17: #{decoder_forward.5} parent=5 // pred_check
        %p156 = pneg %p155
      $region18: #{decoder_forward.5} parent=5 // pred_check_branch
        %158 = sbr.rel (%p156) target = $region20
      $region19: #{decoder_forward.5} parent=5 // pred_region
        // Predicated region
        $region21: #{decoder_forward.5} parent=19 // pred_check
          %p159 = pneg %p47
        $region22: #{decoder_forward.5} parent=19 // pred_check_branch
          %161 = sbr.rel (%p159) target = $region24
        $region23: #{decoder_forward.5} parent=19 // pred_region
          %s162 = smul.u32 8, %s21
          %p163 = scmp.lt.s32.totalorder %s20, 3
          %s164 = scalar_select %p163, %s20, 3
          %p165 = scmp.lt.s32.totalorder %s162, 7
          %s166 = scalar_select %p165, %s162, 7
          %s167 = smul.addr %s166, 4
          %s168 = smul.addr %s164, 32
          %s169 = sadd.s32 %s167, %s168
          %s170 = smul.addr %s169, 4
          %s171 = scalar_lea.vmem %s0, %s170
          %s172 = smul.u32 8, %s21
        $region24: #{decoder_forward.5} parent=19 // pred_fallthru
          _
        // Predicated region
        $region25: #{decoder_forward.5} parent=19 // pred_check
          %p173 = pneg %p73
        $region26: #{decoder_forward.5} parent=19 // pred_check_branch
          %175 = sbr.rel (%p173) target = $region28
        $region27: #{decoder_forward.5} parent=19 // pred_region
          %s176 = sand.u32 %s63, 1
          %s177 = scalar_lea.sflag [#allocation3], %s176
          %s178 = sand.u32 %s63, 1
          %s179 = smul.addr %s178, 256
          %s180 = scalar_lea.vmem [#allocation2], %s179
          %182 = vsyncadd %s177, 0
          %s183 = smul.addr %s20, 64
          %s184 = smul.addr %s183, 4
          %s185 = scalar_lea.hbm %s1, %s184
          %s186 = sshll.u32 %s185, 4
          %s187 = int_to_ptr.hbm [resolvable:$true] %s186
          %s188 = sshll.u32 %s180, 4
          %s189 = int_to_ptr.vmem [resolvable:$true] %s188
          %194 = dma.hbm_to_vmem [thread:$0]  %s187, 4096, %s189, %s177, 64, 64, 4
        $region28: #{decoder_forward.5} parent=19 // pred_fallthru
          _
      $region20: #{decoder_forward.5} parent=5 // pred_fallthru
        _
      %p195 = scmp.le.s32.totalorder 1, %s13
      %p196 = scmp.lt.s32.totalorder %s13, 5
      %p197 = pnand %p195, %p196
      %p198 = pneg %p197
      // Predicated region
      $region29: #{decoder_forward.5} parent=5 // pred_check
        _
      $region30: #{decoder_forward.5} parent=5 // pred_check_branch
        %200 = sbr.rel (%p197) target = $region32
      $region31: #{decoder_forward.5} parent=5 // pred_region
        %s201 = ssub.s32 %s13, 1
        %s202 = sand.u32 %s66, 1
        %s203 = scalar_lea.sflag [#allocation3], %s202
        %s204 = sand.u32 %s66, 1
        %s205 = smul.addr %s204, 256
        %s206 = scalar_lea.vmem [#allocation2], %s205
        // Predicated region
        $region33: #{decoder_forward.5} parent=31 // pred_check
          %p207 = pneg %p79
        $region34: #{decoder_forward.5} parent=31 // pred_check_branch
          %209 = sbr.rel (%p207) target = $region36
        $region35: #{decoder_forward.5} parent=31 // pred_region
          %211 = dma.done %s203, 4096
        $region36: #{decoder_forward.5} parent=31 // pred_fallthru
          _
        // Predicated region
        $region37: #{decoder_forward.5} parent=31 // pred_check
          %p212 = pneg %p100
        $region38: #{decoder_forward.5} parent=31 // pred_check_branch
          %214 = sbr.rel (%p212) target = $region40
        $region39: #{decoder_forward.5} parent=31 // pred_region
          %216 = dma.done [#allocation5], 16
        $region40: #{decoder_forward.5} parent=31 // pred_fallthru
          _
        %s217 = smul.u32 8, %s23
        %p218 = scmp.lt.s32.totalorder %s22, 3
        %s219 = scalar_select %p218, %s22, 3
        %p220 = scmp.lt.s32.totalorder %s217, 7
        %s221 = scalar_select %p220, %s217, 7
        %s222 = smul.addr %s221, 4
        %s223 = smul.addr %s219, 32
        %s224 = sadd.s32 %s222, %s223
        %s225 = smul.addr %s224, 4
        %s226 = scalar_lea.vmem %s0, %s225
        %p227 = pneg %p53
        %p228 = pneg %p50
        %s229 = sand.u32 %s66, 1
        %s230 = scalar_lea.sflag [#allocation3], %s229
        %s231 = sand.u32 %s66, 1
        %s232 = smul.addr %s231, 256
        %s233 = scalar_lea.vmem [#allocation2], %s232
        %p234 = pneg %p79
        %p235 = pneg %p76
        %p236 = pneg %p100
        %p237 = pneg %p97
        %p238 = pneg %p128
        %p239 = pneg %p125
        %s240 = smul.u32 8, %s23
        %p241 = scmp.lt.s32.totalorder %s22, 3
        %s242 = scalar_select %p241, %s22, 3
        %p243 = scmp.lt.s32.totalorder %s240, 7
        %s244 = scalar_select %p243, %s240, 7
        %s245 = smul.addr %s242, 8
        %s246 = sadd.s32 %s244, %s245
        %s247 = smul.addr %s246, 8
        %s248 = scalar_lea.vmem %s3, %s247
        %s249 = smul.u32 8, %s23
        %p250 = scmp.lt.s32.totalorder %s22, 3
        %s251 = scalar_select %p250, %s22, 3
        %p252 = scmp.lt.s32.totalorder %s249, 7
        %s253 = scalar_select %p252, %s249, 7
        %s254 = smul.addr %s253, 4
        %s255 = smul.addr %s251, 32
        %s256 = sadd.s32 %s254, %s255
        %s257 = smul.addr %s256, 4
        %s258 = scalar_lea.vmem %s0, %s257
        %s259 = smul.u32 8, %s23
        %s260 = smul.u32 8, %s23
        %p261 = scmp.lt.s32.totalorder %s22, 3
        %s262 = scalar_select %p261, %s22, 3
        %p263 = scmp.lt.s32.totalorder %s260, 7
        %s264 = scalar_select %p263, %s260, 7
        %s265 = smul.addr %s262, 8
        %s266 = sadd.s32 %s264, %s265
        %s267 = smul.addr %s266, 8
        %s268 = scalar_lea.vmem %s3, %s267
        %s269 = smul.u32 8, %s23
        %v270 = vld [vmem:[%s258] sm:$0xff]
        %v271 = vld [vmem:[%s258 + $0x8] sm:$0xff]
        %v272 = vld [vmem:[%s258 + $0x10] sm:$0xff]
        %v273 = vld [vmem:[%s258 + $0x18] sm:$0xff]
        %v274 = vld [vmem:[%s258 + $0x20] sm:$0xff]
        %v275 = vld [vmem:[%s258 + $0x28] sm:$0xff]
        %v276 = vld [vmem:[%s258 + $0x30] sm:$0xff]
        %v277 = vld [vmem:[%s258 + $0x38] sm:$0xff]
        %v278 = vld [vmem:[%s258 + $0x40] sm:$0xff]
        %v279 = vld [vmem:[%s258 + $0x48] sm:$0xff]
        %v280 = vld [vmem:[%s258 + $0x50] sm:$0xff]
        %v281 = vld [vmem:[%s258 + $0x58] sm:$0xff]
        %v282 = vld [vmem:[%s258 + $0x60] sm:$0xff]
        %v283 = vld [vmem:[%s258 + $0x68] sm:$0xff]
        %v284 = vld [vmem:[%s258 + $0x70] sm:$0xff]
        %v285 = vld [vmem:[%s258 + $0x78] sm:$0xff]
        %v286 = vld [vmem:[%s206] sm:$0xf]
        %v287 = vld [vmem:[%s206 + $0x4] sm:$0xf]
        %v288 = vld [vmem:[%s206 + $0x8] sm:$0xf]
        %v289 = vld [vmem:[%s206 + $0xc] sm:$0xf]
        %v290 = vld [vmem:[%s206 + $0x10] sm:$0xf]
        %v291 = vld [vmem:[%s206 + $0x14] sm:$0xf]
        %v292 = vld [vmem:[%s206 + $0x18] sm:$0xf]
        %v293 = vld [vmem:[%s206 + $0x1c] sm:$0xf]
        %v294 = vld [vmem:[%s206 + $0x20] sm:$0xf]
        %v295 = vld [vmem:[%s206 + $0x24] sm:$0xf]
        %v296 = vld [vmem:[%s206 + $0x28] sm:$0xf]
        %v297 = vld [vmem:[%s206 + $0x2c] sm:$0xf]
        %v298 = vld [vmem:[%s206 + $0x30] sm:$0xf]
        %v299 = vld [vmem:[%s206 + $0x34] sm:$0xf]
        %v300 = vld [vmem:[%s206 + $0x38] sm:$0xf]
        %v301 = vld [vmem:[%s206 + $0x3c] sm:$0xf]
        %v302 = vld [vmem:[%s206 + $0x40] sm:$0xf]
        %v303 = vld [vmem:[%s206 + $0x44] sm:$0xf]
        %v304 = vld [vmem:[%s206 + $0x48] sm:$0xf]
        %v305 = vld [vmem:[%s206 + $0x4c] sm:$0xf]
        %v306 = vld [vmem:[%s206 + $0x50] sm:$0xf]
        %v307 = vld [vmem:[%s206 + $0x54] sm:$0xf]
        %v308 = vld [vmem:[%s206 + $0x58] sm:$0xf]
        %v309 = vld [vmem:[%s206 + $0x5c] sm:$0xf]
        %v310 = vld [vmem:[%s206 + $0x60] sm:$0xf]
        %v311 = vld [vmem:[%s206 + $0x64] sm:$0xf]
        %v312 = vld [vmem:[%s206 + $0x68] sm:$0xf]
        %v313 = vld [vmem:[%s206 + $0x6c] sm:$0xf]
        %v314 = vld [vmem:[%s206 + $0x70] sm:$0xf]
        %v315 = vld [vmem:[%s206 + $0x74] sm:$0xf]
        %v316 = vld [vmem:[%s206 + $0x78] sm:$0xf]
        %v317 = vld [vmem:[%s206 + $0x7c] sm:$0xf]
        %v318 = vld [vmem:[%s206 + $0x80] sm:$0xf]
        %v319 = vld [vmem:[%s206 + $0x84] sm:$0xf]
        %v320 = vld [vmem:[%s206 + $0x88] sm:$0xf]
        %v321 = vld [vmem:[%s206 + $0x8c] sm:$0xf]
        %v322 = vld [vmem:[%s206 + $0x90] sm:$0xf]
        %v323 = vld [vmem:[%s206 + $0x94] sm:$0xf]
        %v324 = vld [vmem:[%s206 + $0x98] sm:$0xf]
        %v325 = vld [vmem:[%s206 + $0x9c] sm:$0xf]
        %v326 = vld [vmem:[%s206 + $0xa0] sm:$0xf]
        %v327 = vld [vmem:[%s206 + $0xa4] sm:$0xf]
        %v328 = vld [vmem:[%s206 + $0xa8] sm:$0xf]
        %v329 = vld [vmem:[%s206 + $0xac] sm:$0xf]
        %v330 = vld [vmem:[%s206 + $0xb0] sm:$0xf]
        %v331 = vld [vmem:[%s206 + $0xb4] sm:$0xf]
        %v332 = vld [vmem:[%s206 + $0xb8] sm:$0xf]
        %v333 = vld [vmem:[%s206 + $0xbc] sm:$0xf]
        %v334 = vld [vmem:[%s206 + $0xc0] sm:$0xf]
        %v335 = vld [vmem:[%s206 + $0xc4] sm:$0xf]
        %v336 = vld [vmem:[%s206 + $0xc8] sm:$0xf]
        %v337 = vld [vmem:[%s206 + $0xcc] sm:$0xf]
        %v338 = vld [vmem:[%s206 + $0xd0] sm:$0xf]
        %v339 = vld [vmem:[%s206 + $0xd4] sm:$0xf]
        %v340 = vld [vmem:[%s206 + $0xd8] sm:$0xf]
        %v341 = vld [vmem:[%s206 + $0xdc] sm:$0xf]
        %v342 = vld [vmem:[%s206 + $0xe0] sm:$0xf]
        %v343 = vld [vmem:[%s206 + $0xe4] sm:$0xf]
        %v344 = vld [vmem:[%s206 + $0xe8] sm:$0xf]
        %v345 = vld [vmem:[%s206 + $0xec] sm:$0xf]
        %v346 = vld [vmem:[%s206 + $0xf0] sm:$0xf]
        %v347 = vld [vmem:[%s206 + $0xf4] sm:$0xf]
        %v348 = vld [vmem:[%s206 + $0xf8] sm:$0xf]
        %v349 = vld [vmem:[%s206 + $0xfc] sm:$0xf]
        %v350 = vld [vmem:[#allocation4] sm:$0x1]
        %v352 = vperm.slane %v350, 0
        %v370 = vunpack.c.l.b16 %v270
        %v371 = vunpack.c.h.b16 %v270
        %v372 = vunpack.c.l.b16 %v271
        %v373 = vunpack.c.h.b16 %v271
        %v374 = vunpack.c.l.b16 %v272
        %v375 = vunpack.c.h.b16 %v272
        %v376 = vunpack.c.l.b16 %v273
        %v377 = vunpack.c.h.b16 %v273
        %v378 = vunpack.c.l.b16 %v274
        %v379 = vunpack.c.h.b16 %v274
        %v380 = vunpack.c.l.b16 %v275
        %v381 = vunpack.c.h.b16 %v275
        %v382 = vunpack.c.l.b16 %v276
        %v383 = vunpack.c.h.b16 %v276
        %v384 = vunpack.c.l.b16 %v277
        %v385 = vunpack.c.h.b16 %v277
        %v386 = vunpack.c.l.b16 %v278
        %v387 = vunpack.c.h.b16 %v278
        %v388 = vunpack.c.l.b16 %v279
        %v389 = vunpack.c.h.b16 %v279
        %v390 = vunpack.c.l.b16 %v280
        %v391 = vunpack.c.h.b16 %v280
        %v392 = vunpack.c.l.b16 %v281
        %v393 = vunpack.c.h.b16 %v281
        %v394 = vunpack.c.l.b16 %v282
        %v395 = vunpack.c.h.b16 %v282
        %v396 = vunpack.c.l.b16 %v283
        %v397 = vunpack.c.h.b16 %v283
        %v398 = vunpack.c.l.b16 %v284
        %v399 = vunpack.c.h.b16 %v284
        %v400 = vunpack.c.l.b16 %v285
        %v401 = vunpack.c.h.b16 %v285
        %v402 = vpack.c.b16 %v374, %v370
        %v403 = vpack.c.b16 %v375, %v371
        %v404 = vpack.c.b16 %v376, %v372
        %v405 = vpack.c.b16 %v377, %v373
        %v406 = vpack.c.b16 %v382, %v378
        %v407 = vpack.c.b16 %v383, %v379
        %v408 = vpack.c.b16 %v384, %v380
        %v409 = vpack.c.b16 %v385, %v381
        %v410 = vpack.c.b16 %v390, %v386
        %v411 = vpack.c.b16 %v391, %v387
        %v412 = vpack.c.b16 %v392, %v388
        %v413 = vpack.c.b16 %v393, %v389
        %v414 = vpack.c.b16 %v398, %v394
        %v415 = vpack.c.b16 %v399, %v395
        %v416 = vpack.c.b16 %v400, %v396
        %v417 = vpack.c.b16 %v401, %v397
        %v498 = vunpack.c.l.b16 %v286
        %v499 = vunpack.c.l.b16 %v287
        %v500 = vunpack.c.l.b16 %v288
        %v501 = vunpack.c.l.b16 %v289
        %v502 = vunpack.c.l.b16 %v290
        %v503 = vunpack.c.l.b16 %v291
        %v504 = vunpack.c.l.b16 %v292
        %v505 = vunpack.c.l.b16 %v293
        %v506 = vunpack.c.l.b16 %v294
        %v507 = vunpack.c.l.b16 %v295
        %v508 = vunpack.c.l.b16 %v296
        %v509 = vunpack.c.l.b16 %v297
        %v510 = vunpack.c.l.b16 %v298
        %v511 = vunpack.c.l.b16 %v299
        %v512 = vunpack.c.l.b16 %v300
        %v513 = vunpack.c.l.b16 %v301
        %v514 = vunpack.c.l.b16 %v302
        %v515 = vunpack.c.l.b16 %v303
        %v516 = vunpack.c.l.b16 %v304
        %v517 = vunpack.c.l.b16 %v305
        %v518 = vunpack.c.l.b16 %v306
        %v519 = vunpack.c.l.b16 %v307
        %v520 = vunpack.c.l.b16 %v308
        %v521 = vunpack.c.l.b16 %v309
        %v522 = vunpack.c.l.b16 %v310
        %v523 = vunpack.c.l.b16 %v311
        %v524 = vunpack.c.l.b16 %v312
        %v525 = vunpack.c.l.b16 %v313
        %v526 = vunpack.c.l.b16 %v314
        %v527 = vunpack.c.l.b16 %v315
        %v528 = vunpack.c.l.b16 %v316
        %v529 = vunpack.c.l.b16 %v317
        %v530 = vunpack.c.l.b16 %v318
        %v531 = vunpack.c.l.b16 %v319
        %v532 = vunpack.c.l.b16 %v320
        %v533 = vunpack.c.l.b16 %v321
        %v534 = vunpack.c.l.b16 %v322
        %v535 = vunpack.c.l.b16 %v323
        %v536 = vunpack.c.l.b16 %v324
        %v537 = vunpack.c.l.b16 %v325
        %v538 = vunpack.c.l.b16 %v326
        %v539 = vunpack.c.l.b16 %v327
        %v540 = vunpack.c.l.b16 %v328
        %v541 = vunpack.c.l.b16 %v329
        %v542 = vunpack.c.l.b16 %v330
        %v543 = vunpack.c.l.b16 %v331
        %v544 = vunpack.c.l.b16 %v332
        %v545 = vunpack.c.l.b16 %v333
        %v546 = vunpack.c.l.b16 %v334
        %v547 = vunpack.c.l.b16 %v335
        %v548 = vunpack.c.l.b16 %v336
        %v549 = vunpack.c.l.b16 %v337
        %v550 = vunpack.c.l.b16 %v338
        %v551 = vunpack.c.l.b16 %v339
        %v552 = vunpack.c.l.b16 %v340
        %v553 = vunpack.c.l.b16 %v341
        %v554 = vunpack.c.l.b16 %v342
        %v555 = vunpack.c.l.b16 %v343
        %v556 = vunpack.c.l.b16 %v344
        %v557 = vunpack.c.l.b16 %v345
        %v558 = vunpack.c.l.b16 %v346
        %v559 = vunpack.c.l.b16 %v347
        %v560 = vunpack.c.l.b16 %v348
        %v561 = vunpack.c.l.b16 %v349
        %v562 = vpack.c.b16 %v499, %v498
        %v563 = vpack.c.b16 %v501, %v500
        %v564 = vpack.c.b16 %v503, %v502
        %v565 = vpack.c.b16 %v505, %v504
        %v566 = vpack.c.b16 %v507, %v506
        %v567 = vpack.c.b16 %v509, %v508
        %v568 = vpack.c.b16 %v511, %v510
        %v569 = vpack.c.b16 %v513, %v512
        %v570 = vpack.c.b16 %v515, %v514
        %v571 = vpack.c.b16 %v517, %v516
        %v572 = vpack.c.b16 %v519, %v518
        %v573 = vpack.c.b16 %v521, %v520
        %v574 = vpack.c.b16 %v523, %v522
        %v575 = vpack.c.b16 %v525, %v524
        %v576 = vpack.c.b16 %v527, %v526
        %v577 = vpack.c.b16 %v529, %v528
        %v578 = vpack.c.b16 %v531, %v530
        %v579 = vpack.c.b16 %v533, %v532
        %v580 = vpack.c.b16 %v535, %v534
        %v581 = vpack.c.b16 %v537, %v536
        %v582 = vpack.c.b16 %v539, %v538
        %v583 = vpack.c.b16 %v541, %v540
        %v584 = vpack.c.b16 %v543, %v542
        %v585 = vpack.c.b16 %v545, %v544
        %v586 = vpack.c.b16 %v547, %v546
        %v587 = vpack.c.b16 %v549, %v548
        %v588 = vpack.c.b16 %v551, %v550
        %v589 = vpack.c.b16 %v553, %v552
        %v590 = vpack.c.b16 %v555, %v554
        %v591 = vpack.c.b16 %v557, %v556
        %v592 = vpack.c.b16 %v559, %v558
        %v593 = vpack.c.b16 %v561, %v560
        %626 = vmatpush.bf16.msra.mxu0 %v569
        %627 = vmatpush.bf16.msra.mxu0 %v568
        %628 = vmatpush.bf16.msra.mxu0 %v567
        %629 = vmatpush.bf16.msra.mxu0 %v566
        %630 = vmatpush.bf16.msra.mxu0 %v565
        %631 = vmatpush.bf16.msra.mxu0 %v564
        %632 = vmatpush.bf16.msra.mxu0 %v563
        %633 = vmatpush.bf16.msra.mxu0 %v562
        %634 = vmatmul.bf16.gmra.mxu0 %v402
        %v635 = vpop.f32.mrf.mxu0
        %v636 = vadd.f32 %v352, %v635
        %v637 = vpop.f32.mrf.mxu0
        %v638 = vadd.f32 %v352, %v637
        %639 = vmatmul.bf16.gmra.mxu0 %v406
        %v640 = vpop.f32.mrf.mxu0
        %v641 = vadd.f32 %v352, %v640
        %v642 = vpop.f32.mrf.mxu0
        %v643 = vadd.f32 %v352, %v642
        %644 = vmatmul.bf16.gmra.mxu0 %v410
        %v645 = vpop.f32.mrf.mxu0
        %v646 = vadd.f32 %v352, %v645
        %v647 = vpop.f32.mrf.mxu0
        %v648 = vadd.f32 %v352, %v647
        %649 = vmatmul.bf16.gmra.mxu0 %v414
        %v650 = vpop.f32.mrf.mxu0
        %v651 = vadd.f32 %v352, %v650
        %v652 = vpop.f32.mrf.mxu0
        %v653 = vadd.f32 %v352, %v652
        %654 = vdwg.mxu0
        %655 = vmatpush.bf16.msra.mxu0 %v577
        %656 = vmatpush.bf16.msra.mxu0 %v576
        %657 = vmatpush.bf16.msra.mxu0 %v575
        %658 = vmatpush.bf16.msra.mxu0 %v574
        %659 = vmatpush.bf16.msra.mxu0 %v573
        %660 = vmatpush.bf16.msra.mxu0 %v572
        %661 = vmatpush.bf16.msra.mxu0 %v571
        %662 = vmatpush.bf16.msra.mxu0 %v570
        %663 = vmatmul.bf16.gmra.mxu0 %v403
        %v664 = vpop.f32.mrf.mxu0
        %v665 = vadd.f32 %v636, %v664
        %v666 = vpop.f32.mrf.mxu0
        %v667 = vadd.f32 %v638, %v666
        %668 = vmatmul.bf16.gmra.mxu0 %v407
        %v669 = vpop.f32.mrf.mxu0
        %v670 = vadd.f32 %v641, %v669
        %v671 = vpop.f32.mrf.mxu0
        %v672 = vadd.f32 %v643, %v671
        %673 = vmatmul.bf16.gmra.mxu0 %v411
        %v674 = vpop.f32.mrf.mxu0
        %v675 = vadd.f32 %v646, %v674
        %v676 = vpop.f32.mrf.mxu0
        %v677 = vadd.f32 %v648, %v676
        %678 = vmatmul.bf16.gmra.mxu0 %v415
        %v679 = vpop.f32.mrf.mxu0
        %v680 = vadd.f32 %v651, %v679
        %v681 = vpop.f32.mrf.mxu0
        %v682 = vadd.f32 %v653, %v681
        %683 = vdwg.mxu0
        %684 = vmatpush.bf16.msra.mxu0 %v585
        %685 = vmatpush.bf16.msra.mxu0 %v584
        %686 = vmatpush.bf16.msra.mxu0 %v583
        %687 = vmatpush.bf16.msra.mxu0 %v582
        %688 = vmatpush.bf16.msra.mxu0 %v581
        %689 = vmatpush.bf16.msra.mxu0 %v580
        %690 = vmatpush.bf16.msra.mxu0 %v579
        %691 = vmatpush.bf16.msra.mxu0 %v578
        %692 = vmatmul.bf16.gmra.mxu0 %v404
        %v693 = vpop.f32.mrf.mxu0
        %v694 = vadd.f32 %v665, %v693
        %v695 = vpop.f32.mrf.mxu0
        %v696 = vadd.f32 %v667, %v695
        %697 = vmatmul.bf16.gmra.mxu0 %v408
        %v698 = vpop.f32.mrf.mxu0
        %v699 = vadd.f32 %v670, %v698
        %v700 = vpop.f32.mrf.mxu0
        %v701 = vadd.f32 %v672, %v700
        %702 = vmatmul.bf16.gmra.mxu0 %v412
        %v703 = vpop.f32.mrf.mxu0
        %v704 = vadd.f32 %v675, %v703
        %v705 = vpop.f32.mrf.mxu0
        %v706 = vadd.f32 %v677, %v705
        %707 = vmatmul.bf16.gmra.mxu0 %v416
        %v708 = vpop.f32.mrf.mxu0
        %v709 = vadd.f32 %v680, %v708
        %v710 = vpop.f32.mrf.mxu0
        %v711 = vadd.f32 %v682, %v710
        %712 = vdwg.mxu0
        %713 = vmatpush.bf16.msra.mxu0 %v593
        %714 = vmatpush.bf16.msra.mxu0 %v592
        %715 = vmatpush.bf16.msra.mxu0 %v591
        %716 = vmatpush.bf16.msra.mxu0 %v590
        %717 = vmatpush.bf16.msra.mxu0 %v589
        %718 = vmatpush.bf16.msra.mxu0 %v588
        %719 = vmatpush.bf16.msra.mxu0 %v587
        %720 = vmatpush.bf16.msra.mxu0 %v586
        %721 = vmatmul.bf16.gmra.mxu0 %v405
        %v722 = vpop.f32.mrf.mxu0
        %v723 = vadd.f32 %v694, %v722
        %v724 = vpop.f32.mrf.mxu0
        %v725 = vadd.f32 %v696, %v724
        %726 = vmatmul.bf16.gmra.mxu0 %v409
        %v727 = vpop.f32.mrf.mxu0
        %v728 = vadd.f32 %v699, %v727
        %v729 = vpop.f32.mrf.mxu0
        %v730 = vadd.f32 %v701, %v729
        %731 = vmatmul.bf16.gmra.mxu0 %v413
        %v732 = vpop.f32.mrf.mxu0
        %v733 = vadd.f32 %v704, %v732
        %v734 = vpop.f32.mrf.mxu0
        %v735 = vadd.f32 %v706, %v734
        %736 = vmatmul.bf16.gmra.mxu0 %v417
        %v737 = vpop.f32.mrf.mxu0
        %v738 = vadd.f32 %v709, %v737
        %v739 = vpop.f32.mrf.mxu0
        %v740 = vadd.f32 %v711, %v739
        %741 = vdwg.mxu0
        %v742 = vlaneseq
        %v743 = vand.u32 %v742, 127
        %vm744 = vcmp.lt.s32.totalorder %v743, 3
        %v745 = vsel %vm744, %v723, 0.0
        %v746 = vsel %vm744, %v725, 0.0
        %v747 = vsel %vm744, %v728, 0.0
        %v748 = vsel %vm744, %v730, 0.0
        %v749 = vsel %vm744, %v733, 0.0
        %v750 = vsel %vm744, %v735, 0.0
        %v751 = vsel %vm744, %v738, 0.0
        %v752 = vsel %vm744, %v740, 0.0
        %753 = vst [vmem:[%s268] sm:$0xff] %v745
        %754 = vst [vmem:[%s268 + $0x8] sm:$0xff] %v746
        %755 = vst [vmem:[%s268 + $0x10] sm:$0xff] %v747
        %756 = vst [vmem:[%s268 + $0x18] sm:$0xff] %v748
        %757 = vst [vmem:[%s268 + $0x20] sm:$0xff] %v749
        %758 = vst [vmem:[%s268 + $0x28] sm:$0xff] %v750
        %759 = vst [vmem:[%s268 + $0x30] sm:$0xff] %v751
        %760 = vst [vmem:[%s268 + $0x38] sm:$0xff] %v752
        %s761 = smul.u32 8, %s23
        %p762 = scmp.lt.s32.totalorder %s22, 3
        %s763 = scalar_select %p762, %s22, 3
        %p764 = scmp.lt.s32.totalorder %s761, 7
        %s765 = scalar_select %p764, %s761, 7
        %s766 = smul.addr %s763, 8
        %s767 = sadd.s32 %s765, %s766
        %s768 = smul.addr %s767, 8
        %s769 = scalar_lea.vmem %s3, %s768
        // Predicated region
        $region41: #{decoder_forward.5} parent=31 // pred_check
          %p770 = pneg %p125
        $region42: #{decoder_forward.5} parent=31 // pred_check_branch
          %772 = sbr.rel (%p770) target = $region44
        $region43: #{decoder_forward.5} parent=31 // pred_region
          %s773 = smul.u32 8, %s23
        $region44: #{decoder_forward.5} parent=31 // pred_fallthru
          _
      $region32: #{decoder_forward.5} parent=5 // pred_fallthru
        _
      %p774 = scmp.le.s32.totalorder 2, %s13
      // Predicated region
      $region45: #{decoder_forward.5} parent=5 // pred_check
        %p775 = pneg %p774
      $region46: #{decoder_forward.5} parent=5 // pred_check_branch
        %777 = sbr.rel (%p775) target = $region48
      $region47: #{decoder_forward.5} parent=5 // pred_region
        %s778 = ssub.s32 %s13, 2
        // Predicated region
        $region49: #{decoder_forward.5} parent=47 // pred_check
          %p779 = pneg %p131
        $region50: #{decoder_forward.5} parent=47 // pred_check_branch
          %781 = sbr.rel (%p779) target = $region52
        $region51: #{decoder_forward.5} parent=47 // pred_region
          %s782 = smul.u32 8, %s25
          %p783 = scmp.lt.s32.totalorder %s24, 3
          %s784 = scalar_select %p783, %s24, 3
          %p785 = scmp.lt.s32.totalorder %s782, 7
          %s786 = scalar_select %p785, %s782, 7
          %s787 = smul.addr %s784, 8
          %s788 = sadd.s32 %s786, %s787
          %s789 = smul.addr %s788, 8
          %s790 = scalar_lea.vmem %s3, %s789
        $region52: #{decoder_forward.5} parent=47 // pred_fallthru
          _
      $region48: #{decoder_forward.5} parent=5 // pred_fallthru
        _
    $region6: #{decoder_forward.5} parent=1 // loop_footer
      %s17 = sadd.s32 1, %s13
    $region7: #{decoder_forward.5} parent=1 // loop_footer_branch
      %12 = sbr.rel target = $region3
    $region8: #{decoder_forward.5} parent=1 // loop_exit
      _
    %791 = vsyncpa [#allocation3], 1
    %s792 = scalar_lea.sflag [#allocation3], 1
    %793 = vsyncpa %s792, 1
    %794 = vsyncpa [#allocation5], 1

// kernel: decoder_forward.3
$region0: #{decoder_forward.3}
  #allocation0 [shape = 'u32[]', space=smem, size = 0x4, offset = 0x4, fixed_abs, tag = 'smem constant byte address 0x4 - core index']
  #allocation1 [shape = 'u32[72,128]{1,0:T(1,128)}', space=vmem, size = 0x9000, scoped, tag = 'internal scratch']
  #allocation2 [shape = 'f32[8,16,512]{2,1,0:T(8,128)}', space=vmem, size = 0x40000, scoped, tag = 'scratch operand']
  #allocation3 [shape = 'f32[16,1]{1,0:T(8,128)}', space=vmem, size = 0x2000, scoped, tag = 'scratch operand']
  #allocation4 [shape = 'f32[16,1]{1,0:T(8,128)}', space=vmem, size = 0x2000, scoped, tag = 'scratch operand']
  #allocation5 [shape = 'f32[16,1792]{1,0:T(8,128)}', space=vmem, size = 0x1c000, scoped, tag = 'scratch operand']
  %s0 = inlined_call_operand.vmem [shape: bf16[16,32], index: 0, kind: input, shape index: {}]
  %s1 = inlined_call_operand.hbm [shape: bf16[8,32,512], index: 1, kind: input, shape index: {}]
  %s2 = inlined_call_operand.hbm [shape: f32[8,1,512], index: 2, kind: input, shape index: {}]
  %s3 = inlined_call_operand.hbm [shape: f32[1,4096], index: 3, kind: input, shape index: {}]
  %s4 = inlined_call_operand.hbm [shape: f32[1,4096], index: 4, kind: input, shape index: {}]
  %s5 = inlined_call_operand.hbm [shape: bf16[4096,1792], index: 5, kind: input, shape index: {}]
  %s6 = inlined_call_operand.hbm [shape: f32[1,1792], index: 6, kind: input, shape index: {}]
  %s7 = inlined_call_operand.hbm [shape: f32[1,1792], index: 7, kind: input, shape index: {}]
  %s8 = inlined_call_operand.hbm [shape: f32[1,1792], index: 8, kind: input, shape index: {}]
  %s9 = inlined_call_operand.hbm [shape: bf16[1024,128], index: 9, kind: input, shape index: {}]
  %s10 = inlined_call_operand.hbm [shape: f32[1,128], index: 10, kind: input, shape index: {}]
  %s11 = inlined_call_operand.hbm [shape: f32[1,128], index: 11, kind: input, shape index: {}]
  %s12 = inlined_call_operand.hbm [shape: f32[1,128], index: 12, kind: input, shape index: {}]
  %s13 = inlined_call_operand.vmem [shape: bf16[16,768], index: 13, kind: output, shape index: {0}]
  %s14 = inlined_call_operand.vmem [shape: f32[16,128], index: 14, kind: output, shape index: {1}]
  %15 = xla_tuple %s13, %s14
  %s16 = sld [smem:[#allocation0]]
  $region164: #{decoder_forward.3} parent=0
    _
  %s18 = ssub.s32 1, %s16
  %s19 = scalar_select 0, %s18, %s16
  $region1: #{decoder_forward.3} parent=0
    #allocation6 [shape = 'u8[262144]{0}', space=vmem, size = 0x40000, scoped, tag = 'input window, operand 1, single buffered']
    #allocation7 [shape = 's32[2]{0}', space=sflag, size = 0x8, scoped, tag = 'scoped memory for decoder_forward.3']
    #allocation8 [shape = 'u8[16384]{0}', space=vmem, size = 0x4000, scoped, tag = 'input window, operand 2, single buffered']
    #allocation9 [shape = 's32[1]{0}', space=sflag, size = 0x4, scoped, tag = 'scoped memory for decoder_forward.3']
    #allocation10 [shape = 'u8[4096]{0}', space=vmem, size = 0x1000, scoped, tag = 'input window, operand 3']
    #allocation11 [shape = 'u8[4096]{0}', space=vmem, size = 0x1000, scoped, tag = 'input window, operand 4']
    #allocation12 [shape = 'u8[3670016]{0}', space=vmem, size = 0x380000, scoped, tag = 'input window, operand 5']
    #allocation13 [shape = 'u8[7168]{0}', space=vmem, size = 0x1c00, scoped, tag = 'input window, operand 6, single buffered']
    #allocation14 [shape = 'u8[7168]{0}', space=vmem, size = 0x1c00, scoped, tag = 'input window, operand 7, single buffered']
    #allocation15 [shape = 's32[1]{0}', space=sflag, size = 0x4, scoped, tag = 'scoped memory for decoder_forward.3']
    #allocation16 [shape = 'u8[7168]{0}', space=vmem, size = 0x1c00, scoped, tag = 'input window, operand 8, single buffered']
    #allocation17 [shape = 'u8[262144]{0}', space=vmem, size = 0x40000, scoped, tag = 'input window, operand 9, single buffered']
    #allocation18 [shape = 's32[1]{0}', space=sflag, size = 0x4, scoped, tag = 'scoped memory for decoder_forward.3']
    #allocation19 [shape = 'u8[512]{0}', space=vmem, size = 0x400, scoped, tag = 'input window, operand 10, single buffered']
    #allocation20 [shape = 'u8[512]{0}', space=vmem, size = 0x400, scoped, tag = 'input window, operand 11, single buffered']
    #allocation21 [shape = 's32[1]{0}', space=sflag, size = 0x4, scoped, tag = 'scoped memory for decoder_forward.3']
    #allocation22 [shape = 'u8[512]{0}', space=vmem, size = 0x400, scoped, tag = 'input window, operand 12, single buffered']
    %20 = vsyncpa [#allocation7], 0
    %21 = vsyncpa [#allocation9], 0
    %22 = vsyncpa [#allocation15], 0
    %23 = vsyncpa [#allocation18], 0
    %24 = vsyncpa [#allocation21], 0
    loop: start=0, step=1, limit=10
    $region2: #{decoder_forward.3} parent=1 // loop_pre_header
      _
    $region3: #{decoder_forward.3} parent=1 // loop_header
      %s26 = sphi 0, %s30
      %p27 = scmp.ge.s32.totalorder %s26, 10
      %s33 = sphi 0, %s45
      %s34 = sphi 0, %s41
      %s35 = sphi 0, %s33
      %s36 = sphi 0, %s34
      %s37 = sphi 0, %s35
      %s38 = sphi 0, %s36
      %s48 = sphi 0, %s50
      %s51 = sphi 0, %s48
      %s52 = sphi 0, %s51
      %s68 = sphi 0, %s52
      %s72 = sphi 0, %s72
      %s74 = sphi 0, %s72
      %s75 = sphi 0, %s74
      %s89 = sphi 0, %s75
      %s93 = sphi 0, %s93
      %s95 = sphi 0, %s93
      %s96 = sphi 0, %s95
      %s110 = sphi 0, %s96
      %s116 = sphi 0, %s118
      %s119 = sphi 0, %s116
      %s120 = sphi 0, %s119
      %s136 = sphi 0, %s120
      %s142 = sphi 0, %s144
      %s145 = sphi 0, %s142
      %s146 = sphi 0, %s145
      %s162 = sphi 0, %s146
      %s168 = sphi 0, %s170
      %s171 = sphi 0, %s168
      %s172 = sphi 0, %s171
      %s188 = sphi 0, %s172
      %s192 = sphi 0, %s192
      %s194 = sphi 0, %s192
      %s195 = sphi 0, %s194
      %s209 = sphi 0, %s195
      %s213 = sphi 0, %s213
      %s215 = sphi 0, %s213
      %s216 = sphi 0, %s215
      %s230 = sphi 0, %s216
      %s234 = sphi 0, %s234
      %s236 = sphi 0, %s234
      %s237 = sphi 0, %s236
      %s251 = sphi 0, %s237
      %s255 = sphi 0, %s255
      %s257 = sphi 0, %s255
      %s258 = sphi 0, %s257
      %s272 = sphi 0, %s258
      %s276 = sphi 0, %s276
      %s278 = sphi 0, %s276
      %s279 = sphi 0, %s278
      %s293 = sphi 0, %s279
      %s297 = sphi 0, %s297
      %s299 = sphi 0, %s297
      %s300 = sphi 0, %s299
      %s314 = sphi 0, %s300
      %s318 = sphi 0, %s318
      %s320 = sphi 0, %s318
      %s321 = sphi 0, %s320
      %s335 = sphi 0, %s321
      %s341 = sphi 0, %s343
      %s344 = sphi 0, %s341
      %s345 = sphi 0, %s344
      %s361 = sphi 0, %s345
      %s367 = sphi 0, %s369
      %s370 = sphi 0, %s367
      %s371 = sphi 0, %s370
      %s387 = sphi 0, %s371
    $region4: #{decoder_forward.3} parent=1 // loop_header_branch
      %29 = sbr.rel (%p27) target = $region8
    $region5: #{decoder_forward.3} parent=1 // loop_body
      %s31 = ssub.s32 %s26, 1
      %s32 = ssub.s32 %s26, 2
      %s39 = sadd.s32 1, %s34
      %p40 = scmp.ge.s32.totalorder %s39, 8
      %s41 = scalar_select %p40, 0, %s39
      %s42 = sadd.s32 1, %s33
      %s43 = scalar_select %p40, %s42, %s33
      %p44 = scmp.ge.s32.totalorder %s43, 1
      %s45 = scalar_select %p44, 0, %s43
      %s46 = ssub.s32 %s33, %s45
      %p47 = scmp.eq.s32.totalorder %s46, 0
      %s49 = sadd.s32 %s48, 1
      %s50 = scalar_select %p47, %s48, %s49
      %p53 = pneg %p47
      %p54 = scmp.eq.s32.totalorder %s26, 7
      %p55 = por %p53, %p54
      %p56 = scmp.ne.s32.totalorder %s48, %s51
      %p57 = scmp.eq.s32.totalorder %s26, 0
      %p58 = por %p56, %p57
      %p59 = scmp.ne.s32.totalorder %s48, %s51
      %p60 = scmp.eq.s32.totalorder %s31, 7
      %p61 = por %p59, %p60
      %p62 = scmp.ne.s32.totalorder %s51, %s52
      %p63 = scmp.eq.s32.totalorder %s31, 0
      %p64 = por %p62, %p63
      %p65 = scmp.ne.s32.totalorder %s51, %s52
      %p66 = scmp.eq.s32.totalorder %s32, 7
      %p67 = por %p65, %p66
      %p69 = scmp.ne.s32.totalorder %s52, %s68
      %p70 = scmp.eq.s32.totalorder %s32, 0
      %p71 = por %p69, %p70
      %s73 = sadd.s32 %s72, 1
      %p76 = scmp.eq.s32.totalorder %s26, 7
      %p77 = scmp.ne.s32.totalorder %s72, %s74
      %p78 = scmp.eq.s32.totalorder %s26, 0
      %p79 = por %p77, %p78
      %p80 = scmp.ne.s32.totalorder %s72, %s74
      %p81 = scmp.eq.s32.totalorder %s31, 7
      %p82 = por %p80, %p81
      %p83 = scmp.ne.s32.totalorder %s74, %s75
      %p84 = scmp.eq.s32.totalorder %s31, 0
      %p85 = por %p83, %p84
      %p86 = scmp.ne.s32.totalorder %s74, %s75
      %p87 = scmp.eq.s32.totalorder %s32, 7
      %p88 = por %p86, %p87
      %p90 = scmp.ne.s32.totalorder %s75, %s89
      %p91 = scmp.eq.s32.totalorder %s32, 0
      %p92 = por %p90, %p91
      %s94 = sadd.s32 %s93, 1
      %p97 = scmp.eq.s32.totalorder %s26, 7
      %p98 = scmp.ne.s32.totalorder %s93, %s95
      %p99 = scmp.eq.s32.totalorder %s26, 0
      %p100 = por %p98, %p99
      %p101 = scmp.ne.s32.totalorder %s93, %s95
      %p102 = scmp.eq.s32.totalorder %s31, 7
      %p103 = por %p101, %p102
      %p104 = scmp.ne.s32.totalorder %s95, %s96
      %p105 = scmp.eq.s32.totalorder %s31, 0
      %p106 = por %p104, %p105
      %p107 = scmp.ne.s32.totalorder %s95, %s96
      %p108 = scmp.eq.s32.totalorder %s32, 7
      %p109 = por %p107, %p108
      %p111 = scmp.ne.s32.totalorder %s96, %s110
      %p112 = scmp.eq.s32.totalorder %s32, 0
      %p113 = por %p111, %p112
      %s114 = ssub.s32 %s34, %s41
      %p115 = scmp.eq.s32.totalorder %s114, 0
      %s117 = sadd.s32 %s116, 1
      %s118 = scalar_select %p115, %s116, %s117
      %p121 = pneg %p115
      %p122 = scmp.eq.s32.totalorder %s26, 7
      %p123 = por %p121, %p122
      %p124 = scmp.ne.s32.totalorder %s116, %s119
      %p125 = scmp.eq.s32.totalorder %s26, 0
      %p126 = por %p124, %p125
      %p127 = scmp.ne.s32.totalorder %s116, %s119
      %p128 = scmp.eq.s32.totalorder %s31, 7
      %p129 = por %p127, %p128
      %p130 = scmp.ne.s32.totalorder %s119, %s120
      %p131 = scmp.eq.s32.totalorder %s31, 0
      %p132 = por %p130, %p131
      %p133 = scmp.ne.s32.totalorder %s119, %s120
      %p134 = scmp.eq.s32.totalorder %s32, 7
      %p135 = por %p133, %p134
      %p137 = scmp.ne.s32.totalorder %s120, %s136
      %p138 = scmp.eq.s32.totalorder %s32, 0
      %p139 = por %p137, %p138
      %s140 = ssub.s32 %s34, %s41
      %p141 = scmp.eq.s32.totalorder %s140, 0
      %s143 = sadd.s32 %s142, 1
      %s144 = scalar_select %p141, %s142, %s143
      %p147 = pneg %p141
      %p148 = scmp.eq.s32.totalorder %s26, 7
      %p149 = por %p147, %p148
      %p150 = scmp.ne.s32.totalorder %s142, %s145
      %p151 = scmp.eq.s32.totalorder %s26, 0
      %p152 = por %p150, %p151
      %p153 = scmp.ne.s32.totalorder %s142, %s145
      %p154 = scmp.eq.s32.totalorder %s31, 7
      %p155 = por %p153, %p154
      %p156 = scmp.ne.s32.totalorder %s145, %s146
      %p157 = scmp.eq.s32.totalorder %s31, 0
      %p158 = por %p156, %p157
      %p159 = scmp.ne.s32.totalorder %s145, %s146
      %p160 = scmp.eq.s32.totalorder %s32, 7
      %p161 = por %p159, %p160
      %p163 = scmp.ne.s32.totalorder %s146, %s162
      %p164 = scmp.eq.s32.totalorder %s32, 0
      %p165 = por %p163, %p164
      %s166 = ssub.s32 %s34, %s41
      %p167 = scmp.eq.s32.totalorder %s166, 0
      %s169 = sadd.s32 %s168, 1
      %s170 = scalar_select %p167, %s168, %s169
      %p173 = pneg %p167
      %p174 = scmp.eq.s32.totalorder %s26, 7
      %p175 = por %p173, %p174
      %p176 = scmp.ne.s32.totalorder %s168, %s171
      %p177 = scmp.eq.s32.totalorder %s26, 0
      %p178 = por %p176, %p177
      %p179 = scmp.ne.s32.totalorder %s168, %s171
      %p180 = scmp.eq.s32.totalorder %s31, 7
      %p181 = por %p179, %p180
      %p182 = scmp.ne.s32.totalorder %s171, %s172
      %p183 = scmp.eq.s32.totalorder %s31, 0
      %p184 = por %p182, %p183
      %p185 = scmp.ne.s32.totalorder %s171, %s172
      %p186 = scmp.eq.s32.totalorder %s32, 7
      %p187 = por %p185, %p186
      %p189 = scmp.ne.s32.totalorder %s172, %s188
      %p190 = scmp.eq.s32.totalorder %s32, 0
      %p191 = por %p189, %p190
      %s193 = sadd.s32 %s192, 1
      %p196 = scmp.eq.s32.totalorder %s26, 7
      %p197 = scmp.ne.s32.totalorder %s192, %s194
      %p198 = scmp.eq.s32.totalorder %s26, 0
      %p199 = por %p197, %p198
      %p200 = scmp.ne.s32.totalorder %s192, %s194
      %p201 = scmp.eq.s32.totalorder %s31, 7
      %p202 = por %p200, %p201
      %p203 = scmp.ne.s32.totalorder %s194, %s195
      %p204 = scmp.eq.s32.totalorder %s31, 0
      %p205 = por %p203, %p204
      %p206 = scmp.ne.s32.totalorder %s194, %s195
      %p207 = scmp.eq.s32.totalorder %s32, 7
      %p208 = por %p206, %p207
      %p210 = scmp.ne.s32.totalorder %s195, %s209
      %p211 = scmp.eq.s32.totalorder %s32, 0
      %p212 = por %p210, %p211
      %s214 = sadd.s32 %s213, 1
      %p217 = scmp.eq.s32.totalorder %s26, 7
      %p218 = scmp.ne.s32.totalorder %s213, %s215
      %p219 = scmp.eq.s32.totalorder %s26, 0
      %p220 = por %p218, %p219
      %p221 = scmp.ne.s32.totalorder %s213, %s215
      %p222 = scmp.eq.s32.totalorder %s31, 7
      %p223 = por %p221, %p222
      %p224 = scmp.ne.s32.totalorder %s215, %s216
      %p225 = scmp.eq.s32.totalorder %s31, 0
      %p226 = por %p224, %p225
      %p227 = scmp.ne.s32.totalorder %s215, %s216
      %p228 = scmp.eq.s32.totalorder %s32, 7
      %p229 = por %p227, %p228
      %p231 = scmp.ne.s32.totalorder %s216, %s230
      %p232 = scmp.eq.s32.totalorder %s32, 0
      %p233 = por %p231, %p232
      %s235 = sadd.s32 %s234, 1
      %p238 = scmp.eq.s32.totalorder %s26, 7
      %p239 = scmp.ne.s32.totalorder %s234, %s236
      %p240 = scmp.eq.s32.totalorder %s26, 0
      %p241 = por %p239, %p240
      %p242 = scmp.ne.s32.totalorder %s234, %s236
      %p243 = scmp.eq.s32.totalorder %s31, 7
      %p244 = por %p242, %p243
      %p245 = scmp.ne.s32.totalorder %s236, %s237
      %p246 = scmp.eq.s32.totalorder %s31, 0
      %p247 = por %p245, %p246
      %p248 = scmp.ne.s32.totalorder %s236, %s237
      %p249 = scmp.eq.s32.totalorder %s32, 7
      %p250 = por %p248, %p249
      %p252 = scmp.ne.s32.totalorder %s237, %s251
      %p253 = scmp.eq.s32.totalorder %s32, 0
      %p254 = por %p252, %p253
      %s256 = sadd.s32 %s255, 1
      %p259 = scmp.eq.s32.totalorder %s26, 7
      %p260 = scmp.ne.s32.totalorder %s255, %s257
      %p261 = scmp.eq.s32.totalorder %s26, 0
      %p262 = por %p260, %p261
      %p263 = scmp.ne.s32.totalorder %s255, %s257
      %p264 = scmp.eq.s32.totalorder %s31, 7
      %p265 = por %p263, %p264
      %p266 = scmp.ne.s32.totalorder %s257, %s258
      %p267 = scmp.eq.s32.totalorder %s31, 0
      %p268 = por %p266, %p267
      %p269 = scmp.ne.s32.totalorder %s257, %s258
      %p270 = scmp.eq.s32.totalorder %s32, 7
      %p271 = por %p269, %p270
      %p273 = scmp.ne.s32.totalorder %s258, %s272
      %p274 = scmp.eq.s32.totalorder %s32, 0
      %p275 = por %p273, %p274
      %s277 = sadd.s32 %s276, 1
      %p280 = scmp.eq.s32.totalorder %s26, 7
      %p281 = scmp.ne.s32.totalorder %s276, %s278
      %p282 = scmp.eq.s32.totalorder %s26, 0
      %p283 = por %p281, %p282
      %p284 = scmp.ne.s32.totalorder %s276, %s278
      %p285 = scmp.eq.s32.totalorder %s31, 7
      %p286 = por %p284, %p285
      %p287 = scmp.ne.s32.totalorder %s278, %s279
      %p288 = scmp.eq.s32.totalorder %s31, 0
      %p289 = por %p287, %p288
      %p290 = scmp.ne.s32.totalorder %s278, %s279
      %p291 = scmp.eq.s32.totalorder %s32, 7
      %p292 = por %p290, %p291
      %p294 = scmp.ne.s32.totalorder %s279, %s293
      %p295 = scmp.eq.s32.totalorder %s32, 0
      %p296 = por %p294, %p295
      %s298 = sadd.s32 %s297, 1
      %p301 = scmp.eq.s32.totalorder %s26, 7
      %p302 = scmp.ne.s32.totalorder %s297, %s299
      %p303 = scmp.eq.s32.totalorder %s26, 0
      %p304 = por %p302, %p303
      %p305 = scmp.ne.s32.totalorder %s297, %s299
      %p306 = scmp.eq.s32.totalorder %s31, 7
      %p307 = por %p305, %p306
      %p308 = scmp.ne.s32.totalorder %s299, %s300
      %p309 = scmp.eq.s32.totalorder %s31, 0
      %p310 = por %p308, %p309
      %p311 = scmp.ne.s32.totalorder %s299, %s300
      %p312 = scmp.eq.s32.totalorder %s32, 7
      %p313 = por %p311, %p312
      %p315 = scmp.ne.s32.totalorder %s300, %s314
      %p316 = scmp.eq.s32.totalorder %s32, 0
      %p317 = por %p315, %p316
      %s319 = sadd.s32 %s318, 1
      %p322 = scmp.eq.s32.totalorder %s26, 7
      %p323 = scmp.ne.s32.totalorder %s318, %s320
      %p324 = scmp.eq.s32.totalorder %s26, 0
      %p325 = por %p323, %p324
      %p326 = scmp.ne.s32.totalorder %s318, %s320
      %p327 = scmp.eq.s32.totalorder %s31, 7
      %p328 = por %p326, %p327
      %p329 = scmp.ne.s32.totalorder %s320, %s321
      %p330 = scmp.eq.s32.totalorder %s31, 0
      %p331 = por %p329, %p330
      %p332 = scmp.ne.s32.totalorder %s320, %s321
      %p333 = scmp.eq.s32.totalorder %s32, 7
      %p334 = por %p332, %p333
      %p336 = scmp.ne.s32.totalorder %s321, %s335
      %p337 = scmp.eq.s32.totalorder %s32, 0
      %p338 = por %p336, %p337
      %s339 = ssub.s32 %s33, %s45
      %p340 = scmp.eq.s32.totalorder %s339, 0
      %s342 = sadd.s32 %s341, 1
      %s343 = scalar_select %p340, %s341, %s342
      %p346 = pneg %p340
      %p347 = scmp.eq.s32.totalorder %s26, 7
      %p348 = por %p346, %p347
      %p349 = scmp.ne.s32.totalorder %s341, %s344
      %p350 = scmp.eq.s32.totalorder %s26, 0
      %p351 = por %p349, %p350
      %p352 = scmp.ne.s32.totalorder %s341, %s344
      %p353 = scmp.eq.s32.totalorder %s31, 7
      %p354 = por %p352, %p353
      %p355 = scmp.ne.s32.totalorder %s344, %s345
      %p356 = scmp.eq.s32.totalorder %s31, 0
      %p357 = por %p355, %p356
      %p358 = scmp.ne.s32.totalorder %s344, %s345
      %p359 = scmp.eq.s32.totalorder %s32, 7
      %p360 = por %p358, %p359
      %p362 = scmp.ne.s32.totalorder %s345, %s361
      %p363 = scmp.eq.s32.totalorder %s32, 0
      %p364 = por %p362, %p363
      %s365 = ssub.s32 %s33, %s45
      %p366 = scmp.eq.s32.totalorder %s365, 0
      %s368 = sadd.s32 %s367, 1
      %s369 = scalar_select %p366, %s367, %s368
      %p372 = pneg %p366
      %p373 = scmp.eq.s32.totalorder %s26, 7
      %p374 = por %p372, %p373
      %p375 = scmp.ne.s32.totalorder %s367, %s370
      %p376 = scmp.eq.s32.totalorder %s26, 0
      %p377 = por %p375, %p376
      %p378 = scmp.ne.s32.totalorder %s367, %s370
      %p379 = scmp.eq.s32.totalorder %s31, 7
      %p380 = por %p378, %p379
      %p381 = scmp.ne.s32.totalorder %s370, %s371
      %p382 = scmp.eq.s32.totalorder %s31, 0
      %p383 = por %p381, %p382
      %p384 = scmp.ne.s32.totalorder %s370, %s371
      %p385 = scmp.eq.s32.totalorder %s32, 7
      %p386 = por %p384, %p385
      %p388 = scmp.ne.s32.totalorder %s371, %s387
      %p389 = scmp.eq.s32.totalorder %s32, 0
      %p390 = por %p388, %p389
      %p391 = scmp.le.s32.totalorder 1, %s26
      %p392 = scmp.lt.s32.totalorder %s26, 9
      %p393 = pnand %p391, %p392
      %p394 = pneg %p393
      // Predicated region
      $region9: #{decoder_forward.3} parent=5 // pred_check
        _
      $region10: #{decoder_forward.3} parent=5 // pred_check_branch
        %396 = sbr.rel (%p393) target = $region12
      $region11: #{decoder_forward.3} parent=5 // pred_region
        %s397 = ssub.s32 %s26, 1
        // Predicated region
        $region13: #{decoder_forward.3} parent=11 // pred_check
          %p398 = pneg %p64
        $region14: #{decoder_forward.3} parent=11 // pred_check_branch
          %400 = sbr.rel (%p398) target = $region16
        $region15: #{decoder_forward.3} parent=11 // pred_region
          %s401 = smul.u32 2, %s35
          %p402 = scmp.lt.s32.totalorder %s401, 1
          %s403 = scalar_select %p402, %s401, 1
          %s404 = smul.addr %s403, 4
          %s405 = scalar_lea.vmem %s0, %s404
          %s406 = smul.u32 2, %s35
        $region16: #{decoder_forward.3} parent=11 // pred_fallthru
          _
        // Predicated region
        $region17: #{decoder_forward.3} parent=11 // pred_check
          %p407 = pneg %p85
        $region18: #{decoder_forward.3} parent=11 // pred_check_branch
          %409 = sbr.rel (%p407) target = $region20
        $region19: #{decoder_forward.3} parent=11 // pred_region
          %411 = vsyncadd [#allocation7], 0
          %s412 = sshll.u32 %s1, 4
          %s413 = int_to_ptr.hbm [resolvable:$true] %s412
          %s414 = sshll.u32 [#allocation6], 4
          %s415 = int_to_ptr.vmem [resolvable:$true] %s414
          %420 = dma.hbm_to_vmem [thread:$0]  %s413, 8192, %s415, [#allocation7], 256, 256, 16
        $region20: #{decoder_forward.3} parent=11 // pred_fallthru
          _
        // Predicated region
        $region21: #{decoder_forward.3} parent=11 // pred_check
          %p421 = pneg %p106
        $region22: #{decoder_forward.3} parent=11 // pred_check_branch
          %423 = sbr.rel (%p421) target = $region24
        $region23: #{decoder_forward.3} parent=11 // pred_region
          %425 = vsyncadd [#allocation9], 0
          %s426 = sshll.u32 %s2, 4
          %s427 = int_to_ptr.hbm [resolvable:$true] %s426
          %s428 = sshll.u32 [#allocation8], 4
          %s429 = int_to_ptr.vmem [resolvable:$true] %s428
          %434 = dma.hbm_to_vmem [thread:$0]  %s427, 512, %s429, [#allocation9], 64, 64, 4
        $region24: #{decoder_forward.3} parent=11 // pred_fallthru
          _
        // Predicated region
        $region25: #{decoder_forward.3} parent=11 // pred_check
          %p435 = pneg %p205
        $region26: #{decoder_forward.3} parent=11 // pred_check_branch
          %437 = sbr.rel (%p435) target = $region28
        $region27: #{decoder_forward.3} parent=11 // pred_region
          %439 = vsyncadd [#allocation9], 0
          %s441 = sshll.u32 %s6, 4
          %s442 = int_to_ptr.hbm [resolvable:$true] %s441
          %s443 = sshll.u32 [#allocation13], 4
          %s444 = int_to_ptr.vmem [resolvable:$true] %s443
          %446 = dma.hbm_to_vmem [thread:$0]  %s442, 224, %s444, [#allocation9]
        $region28: #{decoder_forward.3} parent=11 // pred_fallthru
          _
        // Predicated region
        $region29: #{decoder_forward.3} parent=11 // pred_check
          %p447 = pneg %p226
        $region30: #{decoder_forward.3} parent=11 // pred_check_branch
          %449 = sbr.rel (%p447) target = $region32
        $region31: #{decoder_forward.3} parent=11 // pred_region
          %451 = vsyncadd [#allocation15], 0
          %s453 = sshll.u32 %s7, 4
          %s454 = int_to_ptr.hbm [resolvable:$true] %s453
          %s455 = sshll.u32 [#allocation14], 4
          %s456 = int_to_ptr.vmem [resolvable:$true] %s455
          %458 = dma.hbm_to_vmem [thread:$0]  %s454, 224, %s456, [#allocation15]
        $region32: #{decoder_forward.3} parent=11 // pred_fallthru
          _
        // Predicated region
        $region33: #{decoder_forward.3} parent=11 // pred_check
          %p459 = pneg %p247
        $region34: #{decoder_forward.3} parent=11 // pred_check_branch
          %461 = sbr.rel (%p459) target = $region36
        $region35: #{decoder_forward.3} parent=11 // pred_region
          %463 = vsyncadd [#allocation15], 0
          %s465 = sshll.u32 %s8, 4
          %s466 = int_to_ptr.hbm [resolvable:$true] %s465
          %s467 = sshll.u32 [#allocation16], 4
          %s468 = int_to_ptr.vmem [resolvable:$true] %s467
          %470 = dma.hbm_to_vmem [thread:$0]  %s466, 224, %s468, [#allocation15]
        $region36: #{decoder_forward.3} parent=11 // pred_fallthru
          _
        // Predicated region
        $region37: #{decoder_forward.3} parent=11 // pred_check
          %p471 = pneg %p268
        $region38: #{decoder_forward.3} parent=11 // pred_check_branch
          %473 = sbr.rel (%p471) target = $region40
        $region39: #{decoder_forward.3} parent=11 // pred_region
          %475 = vsyncadd [#allocation18], 0
          %s476 = sshll.u32 %s9, 4
          %s477 = int_to_ptr.hbm [resolvable:$true] %s476
          %s478 = sshll.u32 [#allocation17], 4
          %s479 = int_to_ptr.vmem [resolvable:$true] %s478
          %484 = dma.hbm_to_vmem [thread:$0]  %s477, 8192, %s479, [#allocation18], 64, 64, 4
        $region40: #{decoder_forward.3} parent=11 // pred_fallthru
          _
        // Predicated region
        $region41: #{decoder_forward.3} parent=11 // pred_check
          %p485 = pneg %p289
        $region42: #{decoder_forward.3} parent=11 // pred_check_branch
          %487 = sbr.rel (%p485) target = $region44
        $region43: #{decoder_forward.3} parent=11 // pred_region
          %489 = vsyncadd [#allocation18], 0
          %s491 = sshll.u32 %s10, 4
          %s492 = int_to_ptr.hbm [resolvable:$true] %s491
          %s493 = sshll.u32 [#allocation19], 4
          %s494 = int_to_ptr.vmem [resolvable:$true] %s493
          %496 = dma.hbm_to_vmem [thread:$0]  %s492, 16, %s494, [#allocation18]
        $region44: #{decoder_forward.3} parent=11 // pred_fallthru
          _
        // Predicated region
        $region45: #{decoder_forward.3} parent=11 // pred_check
          %p497 = pneg %p310
        $region46: #{decoder_forward.3} parent=11 // pred_check_branch
          %499 = sbr.rel (%p497) target = $region48
        $region47: #{decoder_forward.3} parent=11 // pred_region
          %501 = vsyncadd [#allocation21], 0
          %s503 = sshll.u32 %s11, 4
          %s504 = int_to_ptr.hbm [resolvable:$true] %s503
          %s505 = sshll.u32 [#allocation20], 4
          %s506 = int_to_ptr.vmem [resolvable:$true] %s505
          %508 = dma.hbm_to_vmem [thread:$0]  %s504, 16, %s506, [#allocation21]
        $region48: #{decoder_forward.3} parent=11 // pred_fallthru
          _
        // Predicated region
        $region49: #{decoder_forward.3} parent=11 // pred_check
          %p509 = pneg %p331
        $region50: #{decoder_forward.3} parent=11 // pred_check_branch
          %511 = sbr.rel (%p509) target = $region52
        $region51: #{decoder_forward.3} parent=11 // pred_region
          %513 = vsyncadd [#allocation21], 0
          %s515 = sshll.u32 %s12, 4
          %s516 = int_to_ptr.hbm [resolvable:$true] %s515
          %s517 = sshll.u32 [#allocation22], 4
          %s518 = int_to_ptr.vmem [resolvable:$true] %s517
          %520 = dma.hbm_to_vmem [thread:$0]  %s516, 16, %s518, [#allocation21]
        $region52: #{decoder_forward.3} parent=11 // pred_fallthru
          _
      $region12: #{decoder_forward.3} parent=5 // pred_fallthru
        _
      %p521 = scmp.lt.s32.totalorder %s26, 8
      // Predicated region
      $region53: #{decoder_forward.3} parent=5 // pred_check
        %p522 = pneg %p521
      $region54: #{decoder_forward.3} parent=5 // pred_check_branch
        %524 = sbr.rel (%p522) target = $region56
      $region55: #{decoder_forward.3} parent=5 // pred_region
        // Predicated region
        $region57: #{decoder_forward.3} parent=55 // pred_check
          %p525 = pneg %p126
        $region58: #{decoder_forward.3} parent=55 // pred_check_branch
          %527 = sbr.rel (%p525) target = $region60
        $region59: #{decoder_forward.3} parent=55 // pred_region
          %s528 = sand.u32 %s26, 1
          %s529 = scalar_lea.sflag [#allocation7], %s528
          %s530 = sand.u32 %s116, 1
          %s531 = smul.addr %s530, 4
          %s532 = scalar_lea.vmem [#allocation10], %s531
          %s533 = smul.u32 4, %s34
          %535 = vsyncadd %s529, 0
          %s536 = scalar_lea.hbm %s3, %s533
          %s538 = sshll.u32 %s536, 4
          %s539 = int_to_ptr.hbm [resolvable:$true] %s538
          %s540 = sshll.u32 %s532, 4
          %s541 = int_to_ptr.vmem [resolvable:$true] %s540
          %543 = dma.hbm_to_vmem [thread:$0]  %s539, 64, %s541, %s529
        $region60: #{decoder_forward.3} parent=55 // pred_fallthru
          _
        // Predicated region
        $region61: #{decoder_forward.3} parent=55 // pred_check
          %p544 = pneg %p152
        $region62: #{decoder_forward.3} parent=55 // pred_check_branch
          %546 = sbr.rel (%p544) target = $region64
        $region63: #{decoder_forward.3} parent=55 // pred_region
          %s547 = sand.u32 %s26, 1
          %s548 = scalar_lea.sflag [#allocation7], %s547
          %s549 = sand.u32 %s142, 1
          %s550 = smul.addr %s549, 4
          %s551 = scalar_lea.vmem [#allocation11], %s550
          %s552 = smul.u32 4, %s34
          %554 = vsyncadd %s548, 0
          %s555 = scalar_lea.hbm %s4, %s552
          %s557 = sshll.u32 %s555, 4
          %s558 = int_to_ptr.hbm [resolvable:$true] %s557
          %s559 = sshll.u32 %s551, 4
          %s560 = int_to_ptr.vmem [resolvable:$true] %s559
          %562 = dma.hbm_to_vmem [thread:$0]  %s558, 64, %s560, %s548
        $region64: #{decoder_forward.3} parent=55 // pred_fallthru
          _
        // Predicated region
        $region65: #{decoder_forward.3} parent=55 // pred_check
          %p563 = pneg %p178
        $region66: #{decoder_forward.3} parent=55 // pred_check_branch
          %565 = sbr.rel (%p563) target = $region68
        $region67: #{decoder_forward.3} parent=55 // pred_region
          %s566 = sand.u32 %s26, 1
          %s567 = scalar_lea.sflag [#allocation7], %s566
          %s568 = sand.u32 %s168, 1
          %s569 = smul.addr %s568, 3584
          %s570 = scalar_lea.vmem [#allocation12], %s569
          %s571 = smul.u32 64, %s34
          %573 = vsyncadd %s567, 0
          %s574 = smul.addr %s571, 14
          %s575 = smul.addr %s574, 4
          %s576 = scalar_lea.hbm %s5, %s575
          %s577 = sshll.u32 %s576, 4
          %s578 = int_to_ptr.hbm [resolvable:$true] %s577
          %s579 = sshll.u32 %s570, 4
          %s580 = int_to_ptr.vmem [resolvable:$true] %s579
          %585 = dma.hbm_to_vmem [thread:$0]  %s578, 57344, %s580, %s567, 896, 896, 56
        $region68: #{decoder_forward.3} parent=55 // pred_fallthru
          _
      $region56: #{decoder_forward.3} parent=5 // pred_fallthru
        _
      %p586 = scmp.le.s32.totalorder 1, %s26
      %p587 = scmp.lt.s32.totalorder %s26, 9
      %p588 = pnand %p586, %p587
      %p589 = pneg %p588
      // Predicated region
      $region69: #{decoder_forward.3} parent=5 // pred_check
        _
      $region70: #{decoder_forward.3} parent=5 // pred_check_branch
        %591 = sbr.rel (%p588) target = $region72
      $region71: #{decoder_forward.3} parent=5 // pred_region
        %s592 = ssub.s32 %s26, 1
        // Predicated region
        $region73: #{decoder_forward.3} parent=71 // pred_check
          %p593 = pneg %p85
        $region74: #{decoder_forward.3} parent=71 // pred_check_branch
          %595 = sbr.rel (%p593) target = $region76
        $region75: #{decoder_forward.3} parent=71 // pred_region
          %597 = dma.done [#allocation7], 8192
        $region76: #{decoder_forward.3} parent=71 // pred_fallthru
          _
        // Predicated region
        $region77: #{decoder_forward.3} parent=71 // pred_check
          %p598 = pneg %p106
        $region78: #{decoder_forward.3} parent=71 // pred_check_branch
          %600 = sbr.rel (%p598) target = $region80
        $region79: #{decoder_forward.3} parent=71 // pred_region
          %602 = dma.done [#allocation9], 512
        $region80: #{decoder_forward.3} parent=71 // pred_fallthru
          _
        %s603 = sand.u32 %s31, 1
        %s604 = scalar_lea.sflag [#allocation7], %s603
        %s605 = sand.u32 %s119, 1
        %s606 = smul.addr %s605, 4
        %s607 = scalar_lea.vmem [#allocation10], %s606
        // Predicated region
        $region81: #{decoder_forward.3} parent=71 // pred_check
          %p608 = pneg %p132
        $region82: #{decoder_forward.3} parent=71 // pred_check_branch
          %610 = sbr.rel (%p608) target = $region84
        $region83: #{decoder_forward.3} parent=71 // pred_region
          %612 = dma.done %s604, 64
        $region84: #{decoder_forward.3} parent=71 // pred_fallthru
          _
        %s613 = sand.u32 %s31, 1
        %s614 = scalar_lea.sflag [#allocation7], %s613
        %s615 = sand.u32 %s145, 1
        %s616 = smul.addr %s615, 4
        %s617 = scalar_lea.vmem [#allocation11], %s616
        // Predicated region
        $region85: #{decoder_forward.3} parent=71 // pred_check
          %p618 = pneg %p158
        $region86: #{decoder_forward.3} parent=71 // pred_check_branch
          %620 = sbr.rel (%p618) target = $region88
        $region87: #{decoder_forward.3} parent=71 // pred_region
          %622 = dma.done %s614, 64
        $region88: #{decoder_forward.3} parent=71 // pred_fallthru
          _
        %s623 = sand.u32 %s31, 1
        %s624 = scalar_lea.sflag [#allocation7], %s623
        %s625 = sand.u32 %s171, 1
        %s626 = smul.addr %s625, 3584
        %s627 = scalar_lea.vmem [#allocation12], %s626
        // Predicated region
        $region89: #{decoder_forward.3} parent=71 // pred_check
          %p628 = pneg %p184
        $region90: #{decoder_forward.3} parent=71 // pred_check_branch
          %630 = sbr.rel (%p628) target = $region92
        $region91: #{decoder_forward.3} parent=71 // pred_region
          %632 = dma.done %s624, 57344
        $region92: #{decoder_forward.3} parent=71 // pred_fallthru
          _
        // Predicated region
        $region93: #{decoder_forward.3} parent=71 // pred_check
          %p633 = pneg %p205
        $region94: #{decoder_forward.3} parent=71 // pred_check_branch
          %635 = sbr.rel (%p633) target = $region96
        $region95: #{decoder_forward.3} parent=71 // pred_region
          %637 = dma.done [#allocation9], 224
        $region96: #{decoder_forward.3} parent=71 // pred_fallthru
          _
        // Predicated region
        $region97: #{decoder_forward.3} parent=71 // pred_check
          %p638 = pneg %p226
        $region98: #{decoder_forward.3} parent=71 // pred_check_branch
          %640 = sbr.rel (%p638) target = $region100
        $region99: #{decoder_forward.3} parent=71 // pred_region
          %642 = dma.done [#allocation15], 224
        $region100: #{decoder_forward.3} parent=71 // pred_fallthru
          _
        // Predicated region
        $region101: #{decoder_forward.3} parent=71 // pred_check
          %p643 = pneg %p247
        $region102: #{decoder_forward.3} parent=71 // pred_check_branch
          %645 = sbr.rel (%p643) target = $region104
        $region103: #{decoder_forward.3} parent=71 // pred_region
          %647 = dma.done [#allocation15], 224
        $region104: #{decoder_forward.3} parent=71 // pred_fallthru
          _
        // Predicated region
        $region105: #{decoder_forward.3} parent=71 // pred_check
          %p648 = pneg %p268
        $region106: #{decoder_forward.3} parent=71 // pred_check_branch
          %650 = sbr.rel (%p648) target = $region108
        $region107: #{decoder_forward.3} parent=71 // pred_region
          %652 = dma.done [#allocation18], 8192
        $region108: #{decoder_forward.3} parent=71 // pred_fallthru
          _
        // Predicated region
        $region109: #{decoder_forward.3} parent=71 // pred_check
          %p653 = pneg %p289
        $region110: #{decoder_forward.3} parent=71 // pred_check_branch
          %655 = sbr.rel (%p653) target = $region112
        $region111: #{decoder_forward.3} parent=71 // pred_region
          %657 = dma.done [#allocation18], 16
        $region112: #{decoder_forward.3} parent=71 // pred_fallthru
          _
        // Predicated region
        $region113: #{decoder_forward.3} parent=71 // pred_check
          %p658 = pneg %p310
        $region114: #{decoder_forward.3} parent=71 // pred_check_branch
          %660 = sbr.rel (%p658) target = $region116
        $region115: #{decoder_forward.3} parent=71 // pred_region
          %662 = dma.done [#allocation21], 16
        $region116: #{decoder_forward.3} parent=71 // pred_fallthru
          _
        // Predicated region
        $region117: #{decoder_forward.3} parent=71 // pred_check
          %p663 = pneg %p331
        $region118: #{decoder_forward.3} parent=71 // pred_check_branch
          %665 = sbr.rel (%p663) target = $region120
        $region119: #{decoder_forward.3} parent=71 // pred_region
          %667 = dma.done [#allocation21], 16
        $region120: #{decoder_forward.3} parent=71 // pred_fallthru
          _
        %s668 = smul.u32 2, %s35
        %p669 = scmp.lt.s32.totalorder %s668, 1
        %s670 = scalar_select %p669, %s668, 1
        %s671 = smul.addr %s670, 4
        %s672 = scalar_lea.vmem %s0, %s671
        %p673 = pneg %p64
        %p674 = pneg %p61
        %p675 = pneg %p85
        %p676 = pneg %p82
        %p677 = pneg %p106
        %p678 = pneg %p103
        %s679 = sand.u32 %s31, 1
        %s680 = scalar_lea.sflag [#allocation7], %s679
        %s681 = sand.u32 %s119, 1
        %s682 = smul.addr %s681, 4
        %s683 = scalar_lea.vmem [#allocation10], %s682
        %p684 = pneg %p132
        %p685 = pneg %p129
        %s686 = sand.u32 %s31, 1
        %s687 = scalar_lea.sflag [#allocation7], %s686
        %s688 = sand.u32 %s145, 1
        %s689 = smul.addr %s688, 4
        %s690 = scalar_lea.vmem [#allocation11], %s689
        %p691 = pneg %p158
        %p692 = pneg %p155
        %s693 = sand.u32 %s31, 1
        %s694 = scalar_lea.sflag [#allocation7], %s693
        %s695 = sand.u32 %s171, 1
        %s696 = smul.addr %s695, 3584
        %s697 = scalar_lea.vmem [#allocation12], %s696
        %p698 = pneg %p184
        %p699 = pneg %p181
        %p700 = pneg %p205
        %p701 = pneg %p202
        %p702 = pneg %p226
        %p703 = pneg %p223
        %p704 = pneg %p247
        %p705 = pneg %p244
        %p706 = pneg %p268
        %p707 = pneg %p265
        %p708 = pneg %p289
        %p709 = pneg %p286
        %p710 = pneg %p310
        %p711 = pneg %p307
        %p712 = pneg %p331
        %p713 = pneg %p328
        %p714 = pneg %p357
        %p715 = pneg %p354
        %s716 = smul.u32 2, %s35
        %p717 = scmp.lt.s32.totalorder %s716, 1
        %s718 = scalar_select %p717, %s716, 1
        %s719 = smul.addr %s718, 6
        %s720 = smul.addr %s719, 4
        %s721 = scalar_lea.vmem %s13, %s720
        %p722 = pneg %p383
        %p723 = pneg %p380
        %s724 = smul.u32 2, %s35
        %p725 = scmp.lt.s32.totalorder %s724, 1
        %s726 = scalar_select %p725, %s724, 1
        %s727 = smul.addr %s726, 8
        %s728 = scalar_lea.vmem %s14, %s727
        %s729 = smul.u32 2, %s35
        %p730 = scmp.lt.s32.totalorder %s729, 1
        %s731 = scalar_select %p730, %s729, 1
        %s732 = smul.addr %s731, 4
        %s733 = scalar_lea.vmem %s0, %s732
        %s734 = smul.u32 2, %s35
        %s735 = smul.u32 4, %s36
        %s736 = smul.u32 4, %s36
        %s737 = smul.u32 64, %s36
        %s738 = smul.u32 2, %s35
        %p739 = scmp.lt.s32.totalorder %s738, 1
        %s740 = scalar_select %p739, %s738, 1
        %s741 = smul.addr %s740, 6
        %s742 = smul.addr %s741, 4
        %s743 = scalar_lea.vmem %s13, %s742
        %s744 = smul.u32 2, %s35
        %s745 = smul.u32 2, %s35
        %p746 = scmp.lt.s32.totalorder %s745, 1
        %s747 = scalar_select %p746, %s745, 1
        %s748 = smul.addr %s747, 8
        %s749 = scalar_lea.vmem %s14, %s748
        %s750 = smul.u32 2, %s35
        %p752 = scmp.eq.s32.totalorder %s36, 0
        // Predicated region
        $region121: #{decoder_forward.3} parent=71 // pred_check
          %p753 = pneg %p752
        $region122: #{decoder_forward.3} parent=71 // pred_check_branch
          %755 = sbr.rel (%p753) target = $region124
        $region123: #{decoder_forward.3} parent=71 // pred_region
          loop: start=0, step=1, limit=8
          $region125: #{decoder_forward.3} parent=123 // loop_pre_header
            _
          $region126: #{decoder_forward.3} parent=123 // loop_header
            %s757 = sphi 0, %s761
            %p758 = scmp.ge.s32.totalorder %s757, 8
            %v762 = vphi 0.0, %v917
            %v763 = vphi 0.0, %v918
            %v764 = vphi 0.0, %v937
            %v765 = vphi 0.0, %v938
          $region127: #{decoder_forward.3} parent=123 // loop_header_branch
            %760 = sbr.rel (%p758) target = $region131
          $region128: #{decoder_forward.3} parent=123 // loop_body
            %v766 = vld [vmem:[%s733] sm:$0xf]
            %v767 = vld [vmem:[%s733 + $0x4] sm:$0xf]
            %s768 = smul.u32 %s757, 16
            %s769 = smul.addr %s768, 4
            %s770 = scalar_lea.vmem [#allocation6], %s769
            %v771 = vld [vmem:[%s770] sm:$0xff]
            %v772 = vld [vmem:[%s770 + $0x8] sm:$0xff]
            %v773 = vld [vmem:[%s770 + $0x10] sm:$0xff]
            %v774 = vld [vmem:[%s770 + $0x18] sm:$0xff]
            %v775 = vld [vmem:[%s770 + $0x20] sm:$0xff]
            %v776 = vld [vmem:[%s770 + $0x28] sm:$0xff]
            %v777 = vld [vmem:[%s770 + $0x30] sm:$0xff]
            %v778 = vld [vmem:[%s770 + $0x38] sm:$0xff]
            %s779 = smul.u32 %s757, 4
            %s780 = scalar_lea.vmem [#allocation8], %s779
            %v781 = vld [vmem:[%s780] sm:$0xf]
            %v783 = vperm.slane %v781, 0
            %v784 = vperm.slane %v781, 1
            %v785 = vperm.slane %v781, 2
            %v786 = vperm.slane %v781, 3
            %v793 = vunpack.c.l.b16 %v766
            %v794 = vunpack.c.l.b16 %v767
            %v795 = vpack.c.b16 %v794, %v793
            %v804 = vunpack.c.l.b16 %v771
            %v805 = vunpack.c.h.b16 %v771
            %v806 = vunpack.c.l.b16 %v772
            %v807 = vunpack.c.h.b16 %v772
            %v808 = vunpack.c.l.b16 %v773
            %v809 = vunpack.c.h.b16 %v773
            %v810 = vunpack.c.l.b16 %v774
            %v811 = vunpack.c.h.b16 %v774
            %v812 = vunpack.c.l.b16 %v775
            %v813 = vunpack.c.h.b16 %v775
            %v814 = vunpack.c.l.b16 %v776
            %v815 = vunpack.c.h.b16 %v776
            %v816 = vunpack.c.l.b16 %v777
            %v817 = vunpack.c.h.b16 %v777
            %v818 = vunpack.c.l.b16 %v778
            %v819 = vunpack.c.h.b16 %v778
            %v820 = vpack.c.b16 %v808, %v804
            %v821 = vpack.c.b16 %v809, %v805
            %v822 = vpack.c.b16 %v810, %v806
            %v823 = vpack.c.b16 %v811, %v807
            %v824 = vpack.c.b16 %v816, %v812
            %v825 = vpack.c.b16 %v817, %v813
            %v826 = vpack.c.b16 %v818, %v814
            %v827 = vpack.c.b16 %v819, %v815
            %vm836 = vcmask 261120
            %v838 = vsel %vm836, %v795, 0
            %840 = vmatpush.bf16.msra.mxu0 0
            %841 = vmatpush.bf16.msra.mxu0 0
            %842 = vmatpush.bf16.msra.mxu0 0
            %843 = vmatpush.bf16.msra.mxu0 0
            %844 = vmatpush.bf16.msra.mxu0 0
            %845 = vmatpush.bf16.msra.mxu0 0
            %846 = vmatpush.bf16.msra.mxu0 %v824
            %847 = vmatpush.bf16.msra.mxu0 %v820
            %848 = vmatmul.bf16.gmra.mxu0 %v838
            %v849 = vpop.f32.mrf.mxu0
            %v850 = vadd.f32 %v783, %v849
            %v851 = vpop.f32.mrf.mxu0
            %v852 = vadd.f32 %v783, %v851
            %853 = vdwg.mxu0
            %854 = vmatpush.bf16.msra.mxu0 0
            %855 = vmatpush.bf16.msra.mxu0 0
            %856 = vmatpush.bf16.msra.mxu0 0
            %857 = vmatpush.bf16.msra.mxu0 0
            %858 = vmatpush.bf16.msra.mxu0 0
            %859 = vmatpush.bf16.msra.mxu0 0
            %860 = vmatpush.bf16.msra.mxu0 %v825
            %861 = vmatpush.bf16.msra.mxu0 %v821
            %862 = vmatmul.bf16.gmra.mxu0 %v838
            %v863 = vpop.f32.mrf.mxu0
            %v864 = vadd.f32 %v784, %v863
            %v865 = vpop.f32.mrf.mxu0
            %v866 = vadd.f32 %v784, %v865
            %867 = vdwg.mxu0
            %868 = vmatpush.bf16.msra.mxu0 0
            %869 = vmatpush.bf16.msra.mxu0 0
            %870 = vmatpush.bf16.msra.mxu0 0
            %871 = vmatpush.bf16.msra.mxu0 0
            %872 = vmatpush.bf16.msra.mxu0 0
            %873 = vmatpush.bf16.msra.mxu0 0
            %874 = vmatpush.bf16.msra.mxu0 %v826
            %875 = vmatpush.bf16.msra.mxu0 %v822
            %876 = vmatmul.bf16.gmra.mxu0 %v838
            %v877 = vpop.f32.mrf.mxu0
            %v878 = vadd.f32 %v785, %v877
            %v879 = vpop.f32.mrf.mxu0
            %v880 = vadd.f32 %v785, %v879
            %881 = vdwg.mxu0
            %882 = vmatpush.bf16.msra.mxu0 0
            %883 = vmatpush.bf16.msra.mxu0 0
            %884 = vmatpush.bf16.msra.mxu0 0
            %885 = vmatpush.bf16.msra.mxu0 0
            %886 = vmatpush.bf16.msra.mxu0 0
            %887 = vmatpush.bf16.msra.mxu0 0
            %888 = vmatpush.bf16.msra.mxu0 %v827
            %889 = vmatpush.bf16.msra.mxu0 %v823
            %890 = vmatmul.bf16.gmra.mxu0 %v838
            %v891 = vpop.f32.mrf.mxu0
            %v892 = vadd.f32 %v786, %v891
            %v893 = vpop.f32.mrf.mxu0
            %v894 = vadd.f32 %v786, %v893
            %895 = vdwg.mxu0
            %s896 = smul.u32 %s757, 8
            %s897 = smul.addr %s896, 8
            %s898 = scalar_lea.vmem [#allocation2], %s897
            %899 = vst [vmem:[%s898] sm:$0xff] %v850
            %900 = vst [vmem:[%s898 + $0x8] sm:$0xff] %v864
            %901 = vst [vmem:[%s898 + $0x10] sm:$0xff] %v878
            %902 = vst [vmem:[%s898 + $0x18] sm:$0xff] %v892
            %903 = vst [vmem:[%s898 + $0x20] sm:$0xff] %v852
            %904 = vst [vmem:[%s898 + $0x28] sm:$0xff] %v866
            %905 = vst [vmem:[%s898 + $0x30] sm:$0xff] %v880
            %906 = vst [vmem:[%s898 + $0x38] sm:$0xff] %v894
            %v907 = vadd.f32 %v850, %v864
            %v908 = vadd.f32 %v907, %v878
            %v909 = vadd.f32 %v908, %v892
            %910 = vadd.xlane.f32.xlu0 %v909
            %v911 = vpop.xlane.xlu0 %910
            %v912 = vadd.f32 %v852, %v866
            %v913 = vadd.f32 %v912, %v880
            %v914 = vadd.f32 %v913, %v894
            %915 = vadd.xlane.f32.xlu0 %v914
            %v916 = vpop.xlane.xlu0 %915
            %v917 = vadd.f32 %v762, %v911
            %v918 = vadd.f32 %v763, %v916
            %v919 = vmul.f32 %v850, %v850
            %v920 = vmul.f32 %v864, %v864
            %v921 = vmul.f32 %v878, %v878
            %v922 = vmul.f32 %v892, %v892
            %v923 = vmul.f32 %v852, %v852
            %v924 = vmul.f32 %v866, %v866
            %v925 = vmul.f32 %v880, %v880
            %v926 = vmul.f32 %v894, %v894
            %v927 = vadd.f32 %v919, %v920
            %v928 = vadd.f32 %v927, %v921
            %v929 = vadd.f32 %v928, %v922
            %930 = vadd.xlane.f32.xlu0 %v929
            %v931 = vpop.xlane.xlu0 %930
            %v932 = vadd.f32 %v923, %v924
            %v933 = vadd.f32 %v932, %v925
            %v934 = vadd.f32 %v933, %v926
            %935 = vadd.xlane.f32.xlu0 %v934
            %v936 = vpop.xlane.xlu0 %935
            %v937 = vadd.f32 %v764, %v931
            %v938 = vadd.f32 %v765, %v936
          $region129: #{decoder_forward.3} parent=123 // loop_footer
            %s761 = sadd.s32 1, %s757
          $region130: #{decoder_forward.3} parent=123 // loop_footer_branch
            %756 = sbr.rel target = $region126
          $region131: #{decoder_forward.3} parent=123 // loop_exit
            _
          %v939 = vmul.f32 %v762, 0.00024414063
          %v940 = vmul.f32 %v763, 0.00024414063
          %v941 = vmul.f32 %v764, 0.00024414063
          %v942 = vmul.f32 %v765, 0.00024414063
          %v943 = vmul.f32 %v939, %v939
          %v944 = vmul.f32 %v940, %v940
          %v945 = vsub.f32 %v941, %v943
          %v946 = vsub.f32 %v942, %v944
          %vm947 = vcmask 7168
          %948 = vst.msk [vmem:[#allocation3] sm:$0xff] %vm947, %v939
          %949 = vst.msk [vmem:[#allocation3 + $0x8] sm:$0xff] %vm947, %v940
          %v950 = vadd.f32 %v945, 1e-05
          %v951 = vadd.f32 %v946, 1e-05
          %v952 = vrsqrt.pop %v950
          %v953 = vmul.f32 %v952, %v950
          %v954 = vmul.f32 %v953, %v952
          %v955 = vmul.f32 0.5, %v954
          %v956 = vsub.f32 1.5, %v955
          %v957 = vmul.f32 %v952, %v956
          %vm958 = vweird.f32 %v950
          %vm959 = vweird.f32 %v952
          %vm960 = vmor %vm958, %vm959
          %v961 = vsel %vm960, %v952, %v957
          %v962 = vrsqrt.pop %v951
          %v963 = vmul.f32 %v962, %v951
          %v964 = vmul.f32 %v963, %v962
          %v965 = vmul.f32 0.5, %v964
          %v966 = vsub.f32 1.5, %v965
          %v967 = vmul.f32 %v962, %v966
          %vm968 = vweird.f32 %v951
          %vm969 = vweird.f32 %v962
          %vm970 = vmor %vm968, %vm969
          %v971 = vsel %vm970, %v962, %v967
          %972 = vst.msk [vmem:[#allocation4] sm:$0xff] %vm947, %v961
          %973 = vst.msk [vmem:[#allocation4 + $0x8] sm:$0xff] %vm947, %v971
        $region124: #{decoder_forward.3} parent=71 // pred_fallthru
          _
        %s974 = smul.u32 %s36, 8
        %s975 = smul.addr %s974, 8
        %s976 = scalar_lea.vmem [#allocation2], %s975
        %v977 = vld [vmem:[%s976] sm:$0xff]
        %v978 = vld [vmem:[%s976 + $0x8] sm:$0xff]
        %v979 = vld [vmem:[%s976 + $0x10] sm:$0xff]
        %v980 = vld [vmem:[%s976 + $0x18] sm:$0xff]
        %v981 = vld [vmem:[%s976 + $0x20] sm:$0xff]
        %v982 = vld [vmem:[%s976 + $0x28] sm:$0xff]
        %v983 = vld [vmem:[%s976 + $0x30] sm:$0xff]
        %v984 = vld [vmem:[%s976 + $0x38] sm:$0xff]
        %v985 = vld [vmem:[#allocation3] sm:$0xff]
        %v986 = vld [vmem:[#allocation3 + $0x8] sm:$0xff]
        %988 = vset.pattern.permute.xlu0 0
        %989 = vperm.xlu0 %988, %v985
        %v990 = vpop.permute.xlu0 %989
        %993 = vset.pattern.permute.xlu0 0
        %994 = vperm.xlu0 %993, %v986
        %v995 = vpop.permute.xlu0 %994
        %v997 = vsub.f32 %v977, %v990
        %v998 = vsub.f32 %v978, %v990
        %v999 = vsub.f32 %v979, %v990
        %v1000 = vsub.f32 %v980, %v990
        %v1001 = vsub.f32 %v981, %v995
        %v1002 = vsub.f32 %v982, %v995
        %v1003 = vsub.f32 %v983, %v995
        %v1004 = vsub.f32 %v984, %v995
        %v1005 = vld [vmem:[#allocation4] sm:$0xff]
        %v1006 = vld [vmem:[#allocation4 + $0x8] sm:$0xff]
        %1008 = vset.pattern.permute.xlu0 0
        %1009 = vperm.xlu0 %1008, %v1005
        %v1010 = vpop.permute.xlu0 %1009
        %1013 = vset.pattern.permute.xlu0 0
        %1014 = vperm.xlu0 %1013, %v1006
        %v1015 = vpop.permute.xlu0 %1014
        %v1017 = vmul.f32 %v997, %v1010
        %v1018 = vmul.f32 %v998, %v1010
        %v1019 = vmul.f32 %v999, %v1010
        %v1020 = vmul.f32 %v1000, %v1010
        %v1021 = vmul.f32 %v1001, %v1015
        %v1022 = vmul.f32 %v1002, %v1015
        %v1023 = vmul.f32 %v1003, %v1015
        %v1024 = vmul.f32 %v1004, %v1015
        %v1025 = vld [vmem:[%s607] sm:$0xf]
        %v1027 = vperm.slane %v1025, 0
        %v1028 = vperm.slane %v1025, 1
        %v1029 = vperm.slane %v1025, 2
        %v1030 = vperm.slane %v1025, 3
        %v1035 = vmul.f32 %v1017, %v1027
        %v1036 = vmul.f32 %v1018, %v1028
        %v1037 = vmul.f32 %v1019, %v1029
        %v1038 = vmul.f32 %v1020, %v1030
        %v1039 = vmul.f32 %v1021, %v1027
        %v1040 = vmul.f32 %v1022, %v1028
        %v1041 = vmul.f32 %v1023, %v1029
        %v1042 = vmul.f32 %v1024, %v1030
        %v1043 = vld [vmem:[%s617] sm:$0xf]
        %v1045 = vperm.slane %v1043, 0
        %v1046 = vperm.slane %v1043, 1
        %v1047 = vperm.slane %v1043, 2
        %v1048 = vperm.slane %v1043, 3
        %v1053 = vadd.f32 %v1035, %v1045
        %v1054 = vadd.f32 %v1036, %v1046
        %v1055 = vadd.f32 %v1037, %v1047
        %v1056 = vadd.f32 %v1038, %v1048
        %v1057 = vadd.f32 %v1039, %v1045
        %v1058 = vadd.f32 %v1040, %v1046
        %v1059 = vadd.f32 %v1041, %v1047
        %v1060 = vadd.f32 %v1042, %v1048
        %v1061 = vxor.u32 %v1053, 2147483648
        %v1062 = vxor.u32 %v1054, 2147483648
        %v1063 = vxor.u32 %v1055, 2147483648
        %v1064 = vxor.u32 %v1056, 2147483648
        %v1065 = vxor.u32 %v1057, 2147483648
        %v1066 = vxor.u32 %v1058, 2147483648
        %v1067 = vxor.u32 %v1059, 2147483648
        %v1068 = vxor.u32 %v1060, 2147483648
        %v1069 = vmul.f32 %v1061, 1.442695
        %v1070 = vpow.pop %v1069
        %v1071 = vmul.f32 %v1062, 1.442695
        %v1072 = vpow.pop %v1071
        %v1073 = vmul.f32 %v1063, 1.442695
        %v1074 = vpow.pop %v1073
        %v1075 = vmul.f32 %v1064, 1.442695
        %v1076 = vpow.pop %v1075
        %v1077 = vmul.f32 %v1065, 1.442695
        %v1078 = vpow.pop %v1077
        %v1079 = vmul.f32 %v1066, 1.442695
        %v1080 = vpow.pop %v1079
        %v1081 = vmul.f32 %v1067, 1.442695
        %v1082 = vpow.pop %v1081
        %v1083 = vmul.f32 %v1068, 1.442695
        %v1084 = vpow.pop %v1083
        %v1085 = vadd.f32 %v1070, 1.0
        %v1086 = vadd.f32 %v1072, 1.0
        %v1087 = vadd.f32 %v1074, 1.0
        %v1088 = vadd.f32 %v1076, 1.0
        %v1089 = vadd.f32 %v1078, 1.0
        %v1090 = vadd.f32 %v1080, 1.0
        %v1091 = vadd.f32 %v1082, 1.0
        %v1092 = vadd.f32 %v1084, 1.0
        %v1093 = vrcp.pop %v1085
        %v1094 = vmul.f32 %v1085, %v1093
        %v1095 = vsub.f32 1.0, %v1094
        %v1096 = vmul.f32 %v1093, %v1095
        %v1097 = vadd.f32 %v1093, %v1096
        %vm1098 = vweird.f32 %v1085
        %vm1099 = vweird.f32 %v1093
        %vm1100 = vmor %vm1098, %vm1099
        %v1101 = vsel %vm1100, %v1093, %v1097
        %v1102 = vand.u32 2147483647, %v1085
        %vm1103 = vcmp.eq.f32.partialorder %v1102, 8.507059e+37
        %v1104 = vand.u32 %v1085, 2147483648
        %v1105 = vor.u32 1.1754944e-38, %v1104
        %v1106 = vsel %vm1103, %v1105, %v1101
        %v1107 = vmul.f32 1.0, %v1106
        %v1108 = vrcp.pop %v1086
        %v1109 = vmul.f32 %v1086, %v1108
        %v1110 = vsub.f32 1.0, %v1109
        %v1111 = vmul.f32 %v1108, %v1110
        %v1112 = vadd.f32 %v1108, %v1111
        %vm1113 = vweird.f32 %v1086
        %vm1114 = vweird.f32 %v1108
        %vm1115 = vmor %vm1113, %vm1114
        %v1116 = vsel %vm1115, %v1108, %v1112
        %v1117 = vand.u32 2147483647, %v1086
        %vm1118 = vcmp.eq.f32.partialorder %v1117, 8.507059e+37
        %v1119 = vand.u32 %v1086, 2147483648
        %v1120 = vor.u32 1.1754944e-38, %v1119
        %v1121 = vsel %vm1118, %v1120, %v1116
        %v1122 = vmul.f32 1.0, %v1121
        %v1123 = vrcp.pop %v1087
        %v1124 = vmul.f32 %v1087, %v1123
        %v1125 = vsub.f32 1.0, %v1124
        %v1126 = vmul.f32 %v1123, %v1125
        %v1127 = vadd.f32 %v1123, %v1126
        %vm1128 = vweird.f32 %v1087
        %vm1129 = vweird.f32 %v1123
        %vm1130 = vmor %vm1128, %vm1129
        %v1131 = vsel %vm1130, %v1123, %v1127
        %v1132 = vand.u32 2147483647, %v1087
        %vm1133 = vcmp.eq.f32.partialorder %v1132, 8.507059e+37
        %v1134 = vand.u32 %v1087, 2147483648
        %v1135 = vor.u32 1.1754944e-38, %v1134
        %v1136 = vsel %vm1133, %v1135, %v1131
        %v1137 = vmul.f32 1.0, %v1136
        %v1138 = vrcp.pop %v1088
        %v1139 = vmul.f32 %v1088, %v1138
        %v1140 = vsub.f32 1.0, %v1139
        %v1141 = vmul.f32 %v1138, %v1140
        %v1142 = vadd.f32 %v1138, %v1141
        %vm1143 = vweird.f32 %v1088
        %vm1144 = vweird.f32 %v1138
        %vm1145 = vmor %vm1143, %vm1144
        %v1146 = vsel %vm1145, %v1138, %v1142
        %v1147 = vand.u32 2147483647, %v1088
        %vm1148 = vcmp.eq.f32.partialorder %v1147, 8.507059e+37
        %v1149 = vand.u32 %v1088, 2147483648
        %v1150 = vor.u32 1.1754944e-38, %v1149
        %v1151 = vsel %vm1148, %v1150, %v1146
        %v1152 = vmul.f32 1.0, %v1151
        %v1153 = vrcp.pop %v1089
        %v1154 = vmul.f32 %v1089, %v1153
        %v1155 = vsub.f32 1.0, %v1154
        %v1156 = vmul.f32 %v1153, %v1155
        %v1157 = vadd.f32 %v1153, %v1156
        %vm1158 = vweird.f32 %v1089
        %vm1159 = vweird.f32 %v1153
        %vm1160 = vmor %vm1158, %vm1159
        %v1161 = vsel %vm1160, %v1153, %v1157
        %v1162 = vand.u32 2147483647, %v1089
        %vm1163 = vcmp.eq.f32.partialorder %v1162, 8.507059e+37
        %v1164 = vand.u32 %v1089, 2147483648
        %v1165 = vor.u32 1.1754944e-38, %v1164
        %v1166 = vsel %vm1163, %v1165, %v1161
        %v1167 = vmul.f32 1.0, %v1166
        %v1168 = vrcp.pop %v1090
        %v1169 = vmul.f32 %v1090, %v1168
        %v1170 = vsub.f32 1.0, %v1169
        %v1171 = vmul.f32 %v1168, %v1170
        %v1172 = vadd.f32 %v1168, %v1171
        %vm1173 = vweird.f32 %v1090
        %vm1174 = vweird.f32 %v1168
        %vm1175 = vmor %vm1173, %vm1174
        %v1176 = vsel %vm1175, %v1168, %v1172
        %v1177 = vand.u32 2147483647, %v1090
        %vm1178 = vcmp.eq.f32.partialorder %v1177, 8.507059e+37
        %v1179 = vand.u32 %v1090, 2147483648
        %v1180 = vor.u32 1.1754944e-38, %v1179
        %v1181 = vsel %vm1178, %v1180, %v1176
        %v1182 = vmul.f32 1.0, %v1181
        %v1183 = vrcp.pop %v1091
        %v1184 = vmul.f32 %v1091, %v1183
        %v1185 = vsub.f32 1.0, %v1184
        %v1186 = vmul.f32 %v1183, %v1185
        %v1187 = vadd.f32 %v1183, %v1186
        %vm1188 = vweird.f32 %v1091
        %vm1189 = vweird.f32 %v1183
        %vm1190 = vmor %vm1188, %vm1189
        %v1191 = vsel %vm1190, %v1183, %v1187
        %v1192 = vand.u32 2147483647, %v1091
        %vm1193 = vcmp.eq.f32.partialorder %v1192, 8.507059e+37
        %v1194 = vand.u32 %v1091, 2147483648
        %v1195 = vor.u32 1.1754944e-38, %v1194
        %v1196 = vsel %vm1193, %v1195, %v1191
        %v1197 = vmul.f32 1.0, %v1196
        %v1198 = vrcp.pop %v1092
        %v1199 = vmul.f32 %v1092, %v1198
        %v1200 = vsub.f32 1.0, %v1199
        %v1201 = vmul.f32 %v1198, %v1200
        %v1202 = vadd.f32 %v1198, %v1201
        %vm1203 = vweird.f32 %v1092
        %vm1204 = vweird.f32 %v1198
        %vm1205 = vmor %vm1203, %vm1204
        %v1206 = vsel %vm1205, %v1198, %v1202
        %v1207 = vand.u32 2147483647, %v1092
        %vm1208 = vcmp.eq.f32.partialorder %v1207, 8.507059e+37
        %v1209 = vand.u32 %v1092, 2147483648
        %v1210 = vor.u32 1.1754944e-38, %v1209
        %v1211 = vsel %vm1208, %v1210, %v1206
        %v1212 = vmul.f32 1.0, %v1211
        %v1213 = vmul.f32 %v1053, %v1107
        %v1214 = vmul.f32 %v1054, %v1122
        %v1215 = vmul.f32 %v1055, %v1137
        %v1216 = vmul.f32 %v1056, %v1152
        %v1217 = vmul.f32 %v1057, %v1167
        %v1218 = vmul.f32 %v1058, %v1182
        %v1219 = vmul.f32 %v1059, %v1197
        %v1220 = vmul.f32 %v1060, %v1212
        %v1221 = vpack.c.bf16 %v1217, %v1213
        %v1222 = vpack.c.bf16 %v1218, %v1214
        %v1223 = vpack.c.bf16 %v1219, %v1215
        %v1224 = vpack.c.bf16 %v1220, %v1216
        %v1225 = vld [vmem:[%s627] sm:$0xff]
        %v1226 = vld [vmem:[%s627 + $0x8] sm:$0xff]
        %v1227 = vld [vmem:[%s627 + $0x10] sm:$0xff]
        %v1228 = vld [vmem:[%s627 + $0x18] sm:$0xff]
        %v1229 = vld [vmem:[%s627 + $0x20] sm:$0xff]
        %v1230 = vld [vmem:[%s627 + $0x28] sm:$0xff]
        %v1231 = vld [vmem:[%s627 + $0x30] sm:$0xff]
        %v1232 = vld [vmem:[%s627 + $0x38] sm:$0xff]
        %v1233 = vld [vmem:[%s627 + $0x40] sm:$0xff]
        %v1234 = vld [vmem:[%s627 + $0x48] sm:$0xff]
        %v1235 = vld [vmem:[%s627 + $0x50] sm:$0xff]
        %v1236 = vld [vmem:[%s627 + $0x58] sm:$0xff]
        %v1237 = vld [vmem:[%s627 + $0x60] sm:$0xff]
        %v1238 = vld [vmem:[%s627 + $0x68] sm:$0xff]
        %v1239 = vld [vmem:[%s627 + $0x70] sm:$0xff]
        %v1240 = vld [vmem:[%s627 + $0x78] sm:$0xff]
        %v1241 = vld [vmem:[%s627 + $0x80] sm:$0xff]
        %v1242 = vld [vmem:[%s627 + $0x88] sm:$0xff]
        %v1243 = vld [vmem:[%s627 + $0x90] sm:$0xff]
        %v1244 = vld [vmem:[%s627 + $0x98] sm:$0xff]
        %v1245 = vld [vmem:[%s627 + $0xa0] sm:$0xff]
        %v1246 = vld [vmem:[%s627 + $0xa8] sm:$0xff]
        %v1247 = vld [vmem:[%s627 + $0xb0] sm:$0xff]
        %v1248 = vld [vmem:[%s627 + $0xb8] sm:$0xff]
        %v1249 = vld [vmem:[%s627 + $0xc0] sm:$0xff]
        %v1250 = vld [vmem:[%s627 + $0xc8] sm:$0xff]
        %v1251 = vld [vmem:[%s627 + $0xd0] sm:$0xff]
        %v1252 = vld [vmem:[%s627 + $0xd8] sm:$0xff]
        %v1253 = vld [vmem:[%s627 + $0xe0] sm:$0xff]
        %v1254 = vld [vmem:[%s627 + $0xe8] sm:$0xff]
        %v1255 = vld [vmem:[%s627 + $0xf0] sm:$0xff]
        %v1256 = vld [vmem:[%s627 + $0xf8] sm:$0xff]
        %v1257 = vld [vmem:[%s627 + $0x100] sm:$0xff]
        %v1258 = vld [vmem:[%s627 + $0x108] sm:$0xff]
        %v1259 = vld [vmem:[%s627 + $0x110] sm:$0xff]
        %v1260 = vld [vmem:[%s627 + $0x118] sm:$0xff]
        %v1261 = vld [vmem:[%s627 + $0x120] sm:$0xff]
        %v1262 = vld [vmem:[%s627 + $0x128] sm:$0xff]
        %v1263 = vld [vmem:[%s627 + $0x130] sm:$0xff]
        %v1264 = vld [vmem:[%s627 + $0x138] sm:$0xff]
        %v1265 = vld [vmem:[%s627 + $0x140] sm:$0xff]
        %v1266 = vld [vmem:[%s627 + $0x148] sm:$0xff]
        %v1267 = vld [vmem:[%s627 + $0x150] sm:$0xff]
        %v1268 = vld [vmem:[%s627 + $0x158] sm:$0xff]
        %v1269 = vld [vmem:[%s627 + $0x160] sm:$0xff]
        %v1270 = vld [vmem:[%s627 + $0x168] sm:$0xff]
        %v1271 = vld [vmem:[%s627 + $0x170] sm:$0xff]
        %v1272 = vld [vmem:[%s627 + $0x178] sm:$0xff]
        %v1273 = vld [vmem:[%s627 + $0x180] sm:$0xff]
        %v1274 = vld [vmem:[%s627 + $0x188] sm:$0xff]
        %v1275 = vld [vmem:[%s627 + $0x190] sm:$0xff]
        %v1276 = vld [vmem:[%s627 + $0x198] sm:$0xff]
        %v1277 = vld [vmem:[%s627 + $0x1a0] sm:$0xff]
        %v1278 = vld [vmem:[%s627 + $0x1a8] sm:$0xff]
        %v1279 = vld [vmem:[%s627 + $0x1b0] sm:$0xff]
        %v1280 = vld [vmem:[%s627 + $0x1b8] sm:$0xff]
        %v1281 = vld [vmem:[%s627 + $0x1c0] sm:$0xff]
        %v1282 = vld [vmem:[%s627 + $0x1c8] sm:$0xff]
        %v1283 = vld [vmem:[%s627 + $0x1d0] sm:$0xff]
        %v1284 = vld [vmem:[%s627 + $0x1d8] sm:$0xff]
        %v1285 = vld [vmem:[%s627 + $0x1e0] sm:$0xff]
        %v1286 = vld [vmem:[%s627 + $0x1e8] sm:$0xff]
        %v1287 = vld [vmem:[%s627 + $0x1f0] sm:$0xff]
        %v1288 = vld [vmem:[%s627 + $0x1f8] sm:$0xff]
        %v1289 = vld [vmem:[%s627 + $0x200] sm:$0xff]
        %v1290 = vld [vmem:[%s627 + $0x208] sm:$0xff]
        %v1291 = vld [vmem:[%s627 + $0x210] sm:$0xff]
        %v1292 = vld [vmem:[%s627 + $0x218] sm:$0xff]
        %v1293 = vld [vmem:[%s627 + $0x220] sm:$0xff]
        %v1294 = vld [vmem:[%s627 + $0x228] sm:$0xff]
        %v1295 = vld [vmem:[%s627 + $0x230] sm:$0xff]
        %v1296 = vld [vmem:[%s627 + $0x238] sm:$0xff]
        %v1297 = vld [vmem:[%s627 + $0x240] sm:$0xff]
        %v1298 = vld [vmem:[%s627 + $0x248] sm:$0xff]
        %v1299 = vld [vmem:[%s627 + $0x250] sm:$0xff]
        %v1300 = vld [vmem:[%s627 + $0x258] sm:$0xff]
        %v1301 = vld [vmem:[%s627 + $0x260] sm:$0xff]
        %v1302 = vld [vmem:[%s627 + $0x268] sm:$0xff]
        %v1303 = vld [vmem:[%s627 + $0x270] sm:$0xff]
        %v1304 = vld [vmem:[%s627 + $0x278] sm:$0xff]
        %v1305 = vld [vmem:[%s627 + $0x280] sm:$0xff]
        %v1306 = vld [vmem:[%s627 + $0x288] sm:$0xff]
        %v1307 = vld [vmem:[%s627 + $0x290] sm:$0xff]
        %v1308 = vld [vmem:[%s627 + $0x298] sm:$0xff]
        %v1309 = vld [vmem:[%s627 + $0x2a0] sm:$0xff]
        %v1310 = vld [vmem:[%s627 + $0x2a8] sm:$0xff]
        %v1311 = vld [vmem:[%s627 + $0x2b0] sm:$0xff]
        %v1312 = vld [vmem:[%s627 + $0x2b8] sm:$0xff]
        %v1313 = vld [vmem:[%s627 + $0x2c0] sm:$0xff]
        %v1314 = vld [vmem:[%s627 + $0x2c8] sm:$0xff]
        %v1315 = vld [vmem:[%s627 + $0x2d0] sm:$0xff]
        %v1316 = vld [vmem:[%s627 + $0x2d8] sm:$0xff]
        %v1317 = vld [vmem:[%s627 + $0x2e0] sm:$0xff]
        %v1318 = vld [vmem:[%s627 + $0x2e8] sm:$0xff]
        %v1319 = vld [vmem:[%s627 + $0x2f0] sm:$0xff]
        %v1320 = vld [vmem:[%s627 + $0x2f8] sm:$0xff]
        %v1321 = vld [vmem:[%s627 + $0x300] sm:$0xff]
        %v1322 = vld [vmem:[%s627 + $0x308] sm:$0xff]
        %v1323 = vld [vmem:[%s627 + $0x310] sm:$0xff]
        %v1324 = vld [vmem:[%s627 + $0x318] sm:$0xff]
        %v1325 = vld [vmem:[%s627 + $0x320] sm:$0xff]
        %v1326 = vld [vmem:[%s627 + $0x328] sm:$0xff]
        %v1327 = vld [vmem:[%s627 + $0x330] sm:$0xff]
        %v1328 = vld [vmem:[%s627 + $0x338] sm:$0xff]
        %v1329 = vld [vmem:[%s627 + $0x340] sm:$0xff]
        %v1330 = vld [vmem:[%s627 + $0x348] sm:$0xff]
        %v1331 = vld [vmem:[%s627 + $0x350] sm:$0xff]
        %v1332 = vld [vmem:[%s627 + $0x358] sm:$0xff]
        %v1333 = vld [vmem:[%s627 + $0x360] sm:$0xff]
        %v1334 = vld [vmem:[%s627 + $0x368] sm:$0xff]
        %v1335 = vld [vmem:[%s627 + $0x370] sm:$0xff]
        %v1336 = vld [vmem:[%s627 + $0x378] sm:$0xff]
        %v1337 = vld [vmem:[%s627 + $0x380] sm:$0xff]
        %v1338 = vld [vmem:[%s627 + $0x388] sm:$0xff]
        %v1339 = vld [vmem:[%s627 + $0x390] sm:$0xff]
        %v1340 = vld [vmem:[%s627 + $0x398] sm:$0xff]
        %v1341 = vld [vmem:[%s627 + $0x3a0] sm:$0xff]
        %v1342 = vld [vmem:[%s627 + $0x3a8] sm:$0xff]
        %v1343 = vld [vmem:[%s627 + $0x3b0] sm:$0xff]
        %v1344 = vld [vmem:[%s627 + $0x3b8] sm:$0xff]
        %v1345 = vld [vmem:[%s627 + $0x3c0] sm:$0xff]
        %v1346 = vld [vmem:[%s627 + $0x3c8] sm:$0xff]
        %v1347 = vld [vmem:[%s627 + $0x3d0] sm:$0xff]
        %v1348 = vld [vmem:[%s627 + $0x3d8] sm:$0xff]
        %v1349 = vld [vmem:[%s627 + $0x3e0] sm:$0xff]
        %v1350 = vld [vmem:[%s627 + $0x3e8] sm:$0xff]
        %v1351 = vld [vmem:[%s627 + $0x3f0] sm:$0xff]
        %v1352 = vld [vmem:[%s627 + $0x3f8] sm:$0xff]
        %v1353 = vld [vmem:[%s627 + $0x400] sm:$0xff]
        %v1354 = vld [vmem:[%s627 + $0x408] sm:$0xff]
        %v1355 = vld [vmem:[%s627 + $0x410] sm:$0xff]
        %v1356 = vld [vmem:[%s627 + $0x418] sm:$0xff]
        %v1357 = vld [vmem:[%s627 + $0x420] sm:$0xff]
        %v1358 = vld [vmem:[%s627 + $0x428] sm:$0xff]
        %v1359 = vld [vmem:[%s627 + $0x430] sm:$0xff]
        %v1360 = vld [vmem:[%s627 + $0x438] sm:$0xff]
        %v1361 = vld [vmem:[%s627 + $0x440] sm:$0xff]
        %v1362 = vld [vmem:[%s627 + $0x448] sm:$0xff]
        %v1363 = vld [vmem:[%s627 + $0x450] sm:$0xff]
        %v1364 = vld [vmem:[%s627 + $0x458] sm:$0xff]
        %v1365 = vld [vmem:[%s627 + $0x460] sm:$0xff]
        %v1366 = vld [vmem:[%s627 + $0x468] sm:$0xff]
        %v1367 = vld [vmem:[%s627 + $0x470] sm:$0xff]
        %v1368 = vld [vmem:[%s627 + $0x478] sm:$0xff]
        %v1369 = vld [vmem:[%s627 + $0x480] sm:$0xff]
        %v1370 = vld [vmem:[%s627 + $0x488] sm:$0xff]
        %v1371 = vld [vmem:[%s627 + $0x490] sm:$0xff]
        %v1372 = vld [vmem:[%s627 + $0x498] sm:$0xff]
        %v1373 = vld [vmem:[%s627 + $0x4a0] sm:$0xff]
        %v1374 = vld [vmem:[%s627 + $0x4a8] sm:$0xff]
        %v1375 = vld [vmem:[%s627 + $0x4b0] sm:$0xff]
        %v1376 = vld [vmem:[%s627 + $0x4b8] sm:$0xff]
        %v1377 = vld [vmem:[%s627 + $0x4c0] sm:$0xff]
        %v1378 = vld [vmem:[%s627 + $0x4c8] sm:$0xff]
        %v1379 = vld [vmem:[%s627 + $0x4d0] sm:$0xff]
        %v1380 = vld [vmem:[%s627 + $0x4d8] sm:$0xff]
        %v1381 = vld [vmem:[%s627 + $0x4e0] sm:$0xff]
        %v1382 = vld [vmem:[%s627 + $0x4e8] sm:$0xff]
        %v1383 = vld [vmem:[%s627 + $0x4f0] sm:$0xff]
        %v1384 = vld [vmem:[%s627 + $0x4f8] sm:$0xff]
        %v1385 = vld [vmem:[%s627 + $0x500] sm:$0xff]
        %v1386 = vld [vmem:[%s627 + $0x508] sm:$0xff]
        %v1387 = vld [vmem:[%s627 + $0x510] sm:$0xff]
        %v1388 = vld [vmem:[%s627 + $0x518] sm:$0xff]
        %v1389 = vld [vmem:[%s627 + $0x520] sm:$0xff]
        %v1390 = vld [vmem:[%s627 + $0x528] sm:$0xff]
        %v1391 = vld [vmem:[%s627 + $0x530] sm:$0xff]
        %v1392 = vld [vmem:[%s627 + $0x538] sm:$0xff]
        %v1393 = vld [vmem:[%s627 + $0x540] sm:$0xff]
        %v1394 = vld [vmem:[%s627 + $0x548] sm:$0xff]
        %v1395 = vld [vmem:[%s627 + $0x550] sm:$0xff]
        %v1396 = vld [vmem:[%s627 + $0x558] sm:$0xff]
        %v1397 = vld [vmem:[%s627 + $0x560] sm:$0xff]
        %v1398 = vld [vmem:[%s627 + $0x568] sm:$0xff]
        %v1399 = vld [vmem:[%s627 + $0x570] sm:$0xff]
        %v1400 = vld [vmem:[%s627 + $0x578] sm:$0xff]
        %v1401 = vld [vmem:[%s627 + $0x580] sm:$0xff]
        %v1402 = vld [vmem:[%s627 + $0x588] sm:$0xff]
        %v1403 = vld [vmem:[%s627 + $0x590] sm:$0xff]
        %v1404 = vld [vmem:[%s627 + $0x598] sm:$0xff]
        %v1405 = vld [vmem:[%s627 + $0x5a0] sm:$0xff]
        %v1406 = vld [vmem:[%s627 + $0x5a8] sm:$0xff]
        %v1407 = vld [vmem:[%s627 + $0x5b0] sm:$0xff]
        %v1408 = vld [vmem:[%s627 + $0x5b8] sm:$0xff]
        %v1409 = vld [vmem:[%s627 + $0x5c0] sm:$0xff]
        %v1410 = vld [vmem:[%s627 + $0x5c8] sm:$0xff]
        %v1411 = vld [vmem:[%s627 + $0x5d0] sm:$0xff]
        %v1412 = vld [vmem:[%s627 + $0x5d8] sm:$0xff]
        %v1413 = vld [vmem:[%s627 + $0x5e0] sm:$0xff]
        %v1414 = vld [vmem:[%s627 + $0x5e8] sm:$0xff]
        %v1415 = vld [vmem:[%s627 + $0x5f0] sm:$0xff]
        %v1416 = vld [vmem:[%s627 + $0x5f8] sm:$0xff]
        %v1417 = vld [vmem:[%s627 + $0x600] sm:$0xff]
        %v1418 = vld [vmem:[%s627 + $0x608] sm:$0xff]
        %v1419 = vld [vmem:[%s627 + $0x610] sm:$0xff]
        %v1420 = vld [vmem:[%s627 + $0x618] sm:$0xff]
        %v1421 = vld [vmem:[%s627 + $0x620] sm:$0xff]
        %v1422 = vld [vmem:[%s627 + $0x628] sm:$0xff]
        %v1423 = vld [vmem:[%s627 + $0x630] sm:$0xff]
        %v1424 = vld [vmem:[%s627 + $0x638] sm:$0xff]
        %v1425 = vld [vmem:[%s627 + $0x640] sm:$0xff]
        %v1426 = vld [vmem:[%s627 + $0x648] sm:$0xff]
        %v1427 = vld [vmem:[%s627 + $0x650] sm:$0xff]
        %v1428 = vld [vmem:[%s627 + $0x658] sm:$0xff]
        %v1429 = vld [vmem:[%s627 + $0x660] sm:$0xff]
        %v1430 = vld [vmem:[%s627 + $0x668] sm:$0xff]
        %v1431 = vld [vmem:[%s627 + $0x670] sm:$0xff]
        %v1432 = vld [vmem:[%s627 + $0x678] sm:$0xff]
        %v1433 = vld [vmem:[%s627 + $0x680] sm:$0xff]
        %v1434 = vld [vmem:[%s627 + $0x688] sm:$0xff]
        %v1435 = vld [vmem:[%s627 + $0x690] sm:$0xff]
        %v1436 = vld [vmem:[%s627 + $0x698] sm:$0xff]
        %v1437 = vld [vmem:[%s627 + $0x6a0] sm:$0xff]
        %v1438 = vld [vmem:[%s627 + $0x6a8] sm:$0xff]
        %v1439 = vld [vmem:[%s627 + $0x6b0] sm:$0xff]
        %v1440 = vld [vmem:[%s627 + $0x6b8] sm:$0xff]
        %v1441 = vld [vmem:[%s627 + $0x6c0] sm:$0xff]
        %v1442 = vld [vmem:[%s627 + $0x6c8] sm:$0xff]
        %v1443 = vld [vmem:[%s627 + $0x6d0] sm:$0xff]
        %v1444 = vld [vmem:[%s627 + $0x6d8] sm:$0xff]
        %v1445 = vld [vmem:[%s627 + $0x6e0] sm:$0xff]
        %v1446 = vld [vmem:[%s627 + $0x6e8] sm:$0xff]
        %v1447 = vld [vmem:[%s627 + $0x6f0] sm:$0xff]
        %v1448 = vld [vmem:[%s627 + $0x6f8] sm:$0xff]
        %v1449 = vld [vmem:[%s627 + $0x700] sm:$0xff]
        %v1450 = vld [vmem:[%s627 + $0x708] sm:$0xff]
        %v1451 = vld [vmem:[%s627 + $0x710] sm:$0xff]
        %v1452 = vld [vmem:[%s627 + $0x718] sm:$0xff]
        %v1453 = vld [vmem:[%s627 + $0x720] sm:$0xff]
        %v1454 = vld [vmem:[%s627 + $0x728] sm:$0xff]
        %v1455 = vld [vmem:[%s627 + $0x730] sm:$0xff]
        %v1456 = vld [vmem:[%s627 + $0x738] sm:$0xff]
        %v1457 = vld [vmem:[%s627 + $0x740] sm:$0xff]
        %v1458 = vld [vmem:[%s627 + $0x748] sm:$0xff]
        %v1459 = vld [vmem:[%s627 + $0x750] sm:$0xff]
        %v1460 = vld [vmem:[%s627 + $0x758] sm:$0xff]
        %v1461 = vld [vmem:[%s627 + $0x760] sm:$0xff]
        %v1462 = vld [vmem:[%s627 + $0x768] sm:$0xff]
        %v1463 = vld [vmem:[%s627 + $0x770] sm:$0xff]
        %v1464 = vld [vmem:[%s627 + $0x778] sm:$0xff]
        %v1465 = vld [vmem:[%s627 + $0x780] sm:$0xff]
        %v1466 = vld [vmem:[%s627 + $0x788] sm:$0xff]
        %v1467 = vld [vmem:[%s627 + $0x790] sm:$0xff]
        %v1468 = vld [vmem:[%s627 + $0x798] sm:$0xff]
        %v1469 = vld [vmem:[%s627 + $0x7a0] sm:$0xff]
        %v1470 = vld [vmem:[%s627 + $0x7a8] sm:$0xff]
        %v1471 = vld [vmem:[%s627 + $0x7b0] sm:$0xff]
        %v1472 = vld [vmem:[%s627 + $0x7b8] sm:$0xff]
        %v1473 = vld [vmem:[%s627 + $0x7c0] sm:$0xff]
        %v1474 = vld [vmem:[%s627 + $0x7c8] sm:$0xff]
        %v1475 = vld [vmem:[%s627 + $0x7d0] sm:$0xff]
        %v1476 = vld [vmem:[%s627 + $0x7d8] sm:$0xff]
        %v1477 = vld [vmem:[%s627 + $0x7e0] sm:$0xff]
        %v1478 = vld [vmem:[%s627 + $0x7e8] sm:$0xff]
        %v1479 = vld [vmem:[%s627 + $0x7f0] sm:$0xff]
        %v1480 = vld [vmem:[%s627 + $0x7f8] sm:$0xff]
        %v1481 = vld [vmem:[%s627 + $0x800] sm:$0xff]
        %v1482 = vld [vmem:[%s627 + $0x808] sm:$0xff]
        %v1483 = vld [vmem:[%s627 + $0x810] sm:$0xff]
        %v1484 = vld [vmem:[%s627 + $0x818] sm:$0xff]
        %v1485 = vld [vmem:[%s627 + $0x820] sm:$0xff]
        %v1486 = vld [vmem:[%s627 + $0x828] sm:$0xff]
        %v1487 = vld [vmem:[%s627 + $0x830] sm:$0xff]
        %v1488 = vld [vmem:[%s627 + $0x838] sm:$0xff]
        %v1489 = vld [vmem:[%s627 + $0x840] sm:$0xff]
        %v1490 = vld [vmem:[%s627 + $0x848] sm:$0xff]
        %v1491 = vld [vmem:[%s627 + $0x850] sm:$0xff]
        %v1492 = vld [vmem:[%s627 + $0x858] sm:$0xff]
        %v1493 = vld [vmem:[%s627 + $0x860] sm:$0xff]
        %v1494 = vld [vmem:[%s627 + $0x868] sm:$0xff]
        %v1495 = vld [vmem:[%s627 + $0x870] sm:$0xff]
        %v1496 = vld [vmem:[%s627 + $0x878] sm:$0xff]
        %v1497 = vld [vmem:[%s627 + $0x880] sm:$0xff]
        %v1498 = vld [vmem:[%s627 + $0x888] sm:$0xff]
        %v1499 = vld [vmem:[%s627 + $0x890] sm:$0xff]
        %v1500 = vld [vmem:[%s627 + $0x898] sm:$0xff]
        %v1501 = vld [vmem:[%s627 + $0x8a0] sm:$0xff]
        %v1502 = vld [vmem:[%s627 + $0x8a8] sm:$0xff]
        %v1503 = vld [vmem:[%s627 + $0x8b0] sm:$0xff]
        %v1504 = vld [vmem:[%s627 + $0x8b8] sm:$0xff]
        %v1505 = vld [vmem:[%s627 + $0x8c0] sm:$0xff]
        %v1506 = vld [vmem:[%s627 + $0x8c8] sm:$0xff]
        %v1507 = vld [vmem:[%s627 + $0x8d0] sm:$0xff]
        %v1508 = vld [vmem:[%s627 + $0x8d8] sm:$0xff]
        %v1509 = vld [vmem:[%s627 + $0x8e0] sm:$0xff]
        %v1510 = vld [vmem:[%s627 + $0x8e8] sm:$0xff]
        %v1511 = vld [vmem:[%s627 + $0x8f0] sm:$0xff]
        %v1512 = vld [vmem:[%s627 + $0x8f8] sm:$0xff]
        %v1513 = vld [vmem:[%s627 + $0x900] sm:$0xff]
        %v1514 = vld [vmem:[%s627 + $0x908] sm:$0xff]
        %v1515 = vld [vmem:[%s627 + $0x910] sm:$0xff]
        %v1516 = vld [vmem:[%s627 + $0x918] sm:$0xff]
        %v1517 = vld [vmem:[%s627 + $0x920] sm:$0xff]
        %v1518 = vld [vmem:[%s627 + $0x928] sm:$0xff]
        %v1519 = vld [vmem:[%s627 + $0x930] sm:$0xff]
        %v1520 = vld [vmem:[%s627 + $0x938] sm:$0xff]
        %v1521 = vld [vmem:[%s627 + $0x940] sm:$0xff]
        %v1522 = vld [vmem:[%s627 + $0x948] sm:$0xff]
        %v1523 = vld [vmem:[%s627 + $0x950] sm:$0xff]
        %v1524 = vld [vmem:[%s627 + $0x958] sm:$0xff]
        %v1525 = vld [vmem:[%s627 + $0x960] sm:$0xff]
        %v1526 = vld [vmem:[%s627 + $0x968] sm:$0xff]
        %v1527 = vld [vmem:[%s627 + $0x970] sm:$0xff]
        %v1528 = vld [vmem:[%s627 + $0x978] sm:$0xff]
        %v1529 = vld [vmem:[%s627 + $0x980] sm:$0xff]
        %v1530 = vld [vmem:[%s627 + $0x988] sm:$0xff]
        %v1531 = vld [vmem:[%s627 + $0x990] sm:$0xff]
        %v1532 = vld [vmem:[%s627 + $0x998] sm:$0xff]
        %v1533 = vld [vmem:[%s627 + $0x9a0] sm:$0xff]
        %v1534 = vld [vmem:[%s627 + $0x9a8] sm:$0xff]
        %v1535 = vld [vmem:[%s627 + $0x9b0] sm:$0xff]
        %v1536 = vld [vmem:[%s627 + $0x9b8] sm:$0xff]
        %v1537 = vld [vmem:[%s627 + $0x9c0] sm:$0xff]
        %v1538 = vld [vmem:[%s627 + $0x9c8] sm:$0xff]
        %v1539 = vld [vmem:[%s627 + $0x9d0] sm:$0xff]
        %v1540 = vld [vmem:[%s627 + $0x9d8] sm:$0xff]
        %v1541 = vld [vmem:[%s627 + $0x9e0] sm:$0xff]
        %v1542 = vld [vmem:[%s627 + $0x9e8] sm:$0xff]
        %v1543 = vld [vmem:[%s627 + $0x9f0] sm:$0xff]
        %v1544 = vld [vmem:[%s627 + $0x9f8] sm:$0xff]
        %v1545 = vld [vmem:[%s627 + $0xa00] sm:$0xff]
        %v1546 = vld [vmem:[%s627 + $0xa08] sm:$0xff]
        %v1547 = vld [vmem:[%s627 + $0xa10] sm:$0xff]
        %v1548 = vld [vmem:[%s627 + $0xa18] sm:$0xff]
        %v1549 = vld [vmem:[%s627 + $0xa20] sm:$0xff]
        %v1550 = vld [vmem:[%s627 + $0xa28] sm:$0xff]
        %v1551 = vld [vmem:[%s627 + $0xa30] sm:$0xff]
        %v1552 = vld [vmem:[%s627 + $0xa38] sm:$0xff]
        %v1553 = vld [vmem:[%s627 + $0xa40] sm:$0xff]
        %v1554 = vld [vmem:[%s627 + $0xa48] sm:$0xff]
        %v1555 = vld [vmem:[%s627 + $0xa50] sm:$0xff]
        %v1556 = vld [vmem:[%s627 + $0xa58] sm:$0xff]
        %v1557 = vld [vmem:[%s627 + $0xa60] sm:$0xff]
        %v1558 = vld [vmem:[%s627 + $0xa68] sm:$0xff]
        %v1559 = vld [vmem:[%s627 + $0xa70] sm:$0xff]
        %v1560 = vld [vmem:[%s627 + $0xa78] sm:$0xff]
        %v1561 = vld [vmem:[%s627 + $0xa80] sm:$0xff]
        %v1562 = vld [vmem:[%s627 + $0xa88] sm:$0xff]
        %v1563 = vld [vmem:[%s627 + $0xa90] sm:$0xff]
        %v1564 = vld [vmem:[%s627 + $0xa98] sm:$0xff]
        %v1565 = vld [vmem:[%s627 + $0xaa0] sm:$0xff]
        %v1566 = vld [vmem:[%s627 + $0xaa8] sm:$0xff]
        %v1567 = vld [vmem:[%s627 + $0xab0] sm:$0xff]
        %v1568 = vld [vmem:[%s627 + $0xab8] sm:$0xff]
        %v1569 = vld [vmem:[%s627 + $0xac0] sm:$0xff]
        %v1570 = vld [vmem:[%s627 + $0xac8] sm:$0xff]
        %v1571 = vld [vmem:[%s627 + $0xad0] sm:$0xff]
        %v1572 = vld [vmem:[%s627 + $0xad8] sm:$0xff]
        %v1573 = vld [vmem:[%s627 + $0xae0] sm:$0xff]
        %v1574 = vld [vmem:[%s627 + $0xae8] sm:$0xff]
        %v1575 = vld [vmem:[%s627 + $0xaf0] sm:$0xff]
        %v1576 = vld [vmem:[%s627 + $0xaf8] sm:$0xff]
        %v1577 = vld [vmem:[%s627 + $0xb00] sm:$0xff]
        %v1578 = vld [vmem:[%s627 + $0xb08] sm:$0xff]
        %v1579 = vld [vmem:[%s627 + $0xb10] sm:$0xff]
        %v1580 = vld [vmem:[%s627 + $0xb18] sm:$0xff]
        %v1581 = vld [vmem:[%s627 + $0xb20] sm:$0xff]
        %v1582 = vld [vmem:[%s627 + $0xb28] sm:$0xff]
        %v1583 = vld [vmem:[%s627 + $0xb30] sm:$0xff]
        %v1584 = vld [vmem:[%s627 + $0xb38] sm:$0xff]
        %v1585 = vld [vmem:[%s627 + $0xb40] sm:$0xff]
        %v1586 = vld [vmem:[%s627 + $0xb48] sm:$0xff]
        %v1587 = vld [vmem:[%s627 + $0xb50] sm:$0xff]
        %v1588 = vld [vmem:[%s627 + $0xb58] sm:$0xff]
        %v1589 = vld [vmem:[%s627 + $0xb60] sm:$0xff]
        %v1590 = vld [vmem:[%s627 + $0xb68] sm:$0xff]
        %v1591 = vld [vmem:[%s627 + $0xb70] sm:$0xff]
        %v1592 = vld [vmem:[%s627 + $0xb78] sm:$0xff]
        %v1593 = vld [vmem:[%s627 + $0xb80] sm:$0xff]
        %v1594 = vld [vmem:[%s627 + $0xb88] sm:$0xff]
        %v1595 = vld [vmem:[%s627 + $0xb90] sm:$0xff]
        %v1596 = vld [vmem:[%s627 + $0xb98] sm:$0xff]
        %v1597 = vld [vmem:[%s627 + $0xba0] sm:$0xff]
        %v1598 = vld [vmem:[%s627 + $0xba8] sm:$0xff]
        %v1599 = vld [vmem:[%s627 + $0xbb0] sm:$0xff]
        %v1600 = vld [vmem:[%s627 + $0xbb8] sm:$0xff]
        %v1601 = vld [vmem:[%s627 + $0xbc0] sm:$0xff]
        %v1602 = vld [vmem:[%s627 + $0xbc8] sm:$0xff]
        %v1603 = vld [vmem:[%s627 + $0xbd0] sm:$0xff]
        %v1604 = vld [vmem:[%s627 + $0xbd8] sm:$0xff]
        %v1605 = vld [vmem:[%s627 + $0xbe0] sm:$0xff]
        %v1606 = vld [vmem:[%s627 + $0xbe8] sm:$0xff]
        %v1607 = vld [vmem:[%s627 + $0xbf0] sm:$0xff]
        %v1608 = vld [vmem:[%s627 + $0xbf8] sm:$0xff]
        %v1609 = vld [vmem:[%s627 + $0xc00] sm:$0xff]
        %v1610 = vld [vmem:[%s627 + $0xc08] sm:$0xff]
        %v1611 = vld [vmem:[%s627 + $0xc10] sm:$0xff]
        %v1612 = vld [vmem:[%s627 + $0xc18] sm:$0xff]
        %v1613 = vld [vmem:[%s627 + $0xc20] sm:$0xff]
        %v1614 = vld [vmem:[%s627 + $0xc28] sm:$0xff]
        %v1615 = vld [vmem:[%s627 + $0xc30] sm:$0xff]
        %v1616 = vld [vmem:[%s627 + $0xc38] sm:$0xff]
        %v1617 = vld [vmem:[%s627 + $0xc40] sm:$0xff]
        %v1618 = vld [vmem:[%s627 + $0xc48] sm:$0xff]
        %v1619 = vld [vmem:[%s627 + $0xc50] sm:$0xff]
        %v1620 = vld [vmem:[%s627 + $0xc58] sm:$0xff]
        %v1621 = vld [vmem:[%s627 + $0xc60] sm:$0xff]
        %v1622 = vld [vmem:[%s627 + $0xc68] sm:$0xff]
        %v1623 = vld [vmem:[%s627 + $0xc70] sm:$0xff]
        %v1624 = vld [vmem:[%s627 + $0xc78] sm:$0xff]
        %v1625 = vld [vmem:[%s627 + $0xc80] sm:$0xff]
        %v1626 = vld [vmem:[%s627 + $0xc88] sm:$0xff]
        %v1627 = vld [vmem:[%s627 + $0xc90] sm:$0xff]
        %v1628 = vld [vmem:[%s627 + $0xc98] sm:$0xff]
        %v1629 = vld [vmem:[%s627 + $0xca0] sm:$0xff]
        %v1630 = vld [vmem:[%s627 + $0xca8] sm:$0xff]
        %v1631 = vld [vmem:[%s627 + $0xcb0] sm:$0xff]
        %v1632 = vld [vmem:[%s627 + $0xcb8] sm:$0xff]
        %v1633 = vld [vmem:[%s627 + $0xcc0] sm:$0xff]
        %v1634 = vld [vmem:[%s627 + $0xcc8] sm:$0xff]
        %v1635 = vld [vmem:[%s627 + $0xcd0] sm:$0xff]
        %v1636 = vld [vmem:[%s627 + $0xcd8] sm:$0xff]
        %v1637 = vld [vmem:[%s627 + $0xce0] sm:$0xff]
        %v1638 = vld [vmem:[%s627 + $0xce8] sm:$0xff]
        %v1639 = vld [vmem:[%s627 + $0xcf0] sm:$0xff]
        %v1640 = vld [vmem:[%s627 + $0xcf8] sm:$0xff]
        %v1641 = vld [vmem:[%s627 + $0xd00] sm:$0xff]
        %v1642 = vld [vmem:[%s627 + $0xd08] sm:$0xff]
        %v1643 = vld [vmem:[%s627 + $0xd10] sm:$0xff]
        %v1644 = vld [vmem:[%s627 + $0xd18] sm:$0xff]
        %v1645 = vld [vmem:[%s627 + $0xd20] sm:$0xff]
        %v1646 = vld [vmem:[%s627 + $0xd28] sm:$0xff]
        %v1647 = vld [vmem:[%s627 + $0xd30] sm:$0xff]
        %v1648 = vld [vmem:[%s627 + $0xd38] sm:$0xff]
        %v1649 = vld [vmem:[%s627 + $0xd40] sm:$0xff]
        %v1650 = vld [vmem:[%s627 + $0xd48] sm:$0xff]
        %v1651 = vld [vmem:[%s627 + $0xd50] sm:$0xff]
        %v1652 = vld [vmem:[%s627 + $0xd58] sm:$0xff]
        %v1653 = vld [vmem:[%s627 + $0xd60] sm:$0xff]
        %v1654 = vld [vmem:[%s627 + $0xd68] sm:$0xff]
        %v1655 = vld [vmem:[%s627 + $0xd70] sm:$0xff]
        %v1656 = vld [vmem:[%s627 + $0xd78] sm:$0xff]
        %v1657 = vld [vmem:[%s627 + $0xd80] sm:$0xff]
        %v1658 = vld [vmem:[%s627 + $0xd88] sm:$0xff]
        %v1659 = vld [vmem:[%s627 + $0xd90] sm:$0xff]
        %v1660 = vld [vmem:[%s627 + $0xd98] sm:$0xff]
        %v1661 = vld [vmem:[%s627 + $0xda0] sm:$0xff]
        %v1662 = vld [vmem:[%s627 + $0xda8] sm:$0xff]
        %v1663 = vld [vmem:[%s627 + $0xdb0] sm:$0xff]
        %v1664 = vld [vmem:[%s627 + $0xdb8] sm:$0xff]
        %v1665 = vld [vmem:[%s627 + $0xdc0] sm:$0xff]
        %v1666 = vld [vmem:[%s627 + $0xdc8] sm:$0xff]
        %v1667 = vld [vmem:[%s627 + $0xdd0] sm:$0xff]
        %v1668 = vld [vmem:[%s627 + $0xdd8] sm:$0xff]
        %v1669 = vld [vmem:[%s627 + $0xde0] sm:$0xff]
        %v1670 = vld [vmem:[%s627 + $0xde8] sm:$0xff]
        %v1671 = vld [vmem:[%s627 + $0xdf0] sm:$0xff]
        %v1672 = vld [vmem:[%s627 + $0xdf8] sm:$0xff]
        %v2121 = vunpack.c.l.b16 %v1225
        %v2122 = vunpack.c.h.b16 %v1225
        %v2123 = vunpack.c.l.b16 %v1226
        %v2124 = vunpack.c.h.b16 %v1226
        %v2125 = vunpack.c.l.b16 %v1227
        %v2126 = vunpack.c.h.b16 %v1227
        %v2127 = vunpack.c.l.b16 %v1228
        %v2128 = vunpack.c.h.b16 %v1228
        %v2129 = vunpack.c.l.b16 %v1229
        %v2130 = vunpack.c.h.b16 %v1229
        %v2131 = vunpack.c.l.b16 %v1230
        %v2132 = vunpack.c.h.b16 %v1230
        %v2133 = vunpack.c.l.b16 %v1231
        %v2134 = vunpack.c.h.b16 %v1231
        %v2135 = vunpack.c.l.b16 %v1232
        %v2136 = vunpack.c.h.b16 %v1232
        %v2137 = vunpack.c.l.b16 %v1233
        %v2138 = vunpack.c.h.b16 %v1233
        %v2139 = vunpack.c.l.b16 %v1234
        %v2140 = vunpack.c.h.b16 %v1234
        %v2141 = vunpack.c.l.b16 %v1235
        %v2142 = vunpack.c.h.b16 %v1235
        %v2143 = vunpack.c.l.b16 %v1236
        %v2144 = vunpack.c.h.b16 %v1236
        %v2145 = vunpack.c.l.b16 %v1237
        %v2146 = vunpack.c.h.b16 %v1237
        %v2147 = vunpack.c.l.b16 %v1238
        %v2148 = vunpack.c.h.b16 %v1238
        %v2149 = vunpack.c.l.b16 %v1239
        %v2150 = vunpack.c.h.b16 %v1239
        %v2151 = vunpack.c.l.b16 %v1240
        %v2152 = vunpack.c.h.b16 %v1240
        %v2153 = vunpack.c.l.b16 %v1241
        %v2154 = vunpack.c.h.b16 %v1241
        %v2155 = vunpack.c.l.b16 %v1242
        %v2156 = vunpack.c.h.b16 %v1242
        %v2157 = vunpack.c.l.b16 %v1243
        %v2158 = vunpack.c.h.b16 %v1243
        %v2159 = vunpack.c.l.b16 %v1244
        %v2160 = vunpack.c.h.b16 %v1244
        %v2161 = vunpack.c.l.b16 %v1245
        %v2162 = vunpack.c.h.b16 %v1245
        %v2163 = vunpack.c.l.b16 %v1246
        %v2164 = vunpack.c.h.b16 %v1246
        %v2165 = vunpack.c.l.b16 %v1247
        %v2166 = vunpack.c.h.b16 %v1247
        %v2167 = vunpack.c.l.b16 %v1248
        %v2168 = vunpack.c.h.b16 %v1248
        %v2169 = vunpack.c.l.b16 %v1249
        %v2170 = vunpack.c.h.b16 %v1249
        %v2171 = vunpack.c.l.b16 %v1250
        %v2172 = vunpack.c.h.b16 %v1250
        %v2173 = vunpack.c.l.b16 %v1251
        %v2174 = vunpack.c.h.b16 %v1251
        %v2175 = vunpack.c.l.b16 %v1252
        %v2176 = vunpack.c.h.b16 %v1252
        %v2177 = vunpack.c.l.b16 %v1253
        %v2178 = vunpack.c.h.b16 %v1253
        %v2179 = vunpack.c.l.b16 %v1254
        %v2180 = vunpack.c.h.b16 %v1254
        %v2181 = vunpack.c.l.b16 %v1255
        %v2182 = vunpack.c.h.b16 %v1255
        %v2183 = vunpack.c.l.b16 %v1256
        %v2184 = vunpack.c.h.b16 %v1256
        %v2185 = vunpack.c.l.b16 %v1257
        %v2186 = vunpack.c.h.b16 %v1257
        %v2187 = vunpack.c.l.b16 %v1258
        %v2188 = vunpack.c.h.b16 %v1258
        %v2189 = vunpack.c.l.b16 %v1259
        %v2190 = vunpack.c.h.b16 %v1259
        %v2191 = vunpack.c.l.b16 %v1260
        %v2192 = vunpack.c.h.b16 %v1260
        %v2193 = vunpack.c.l.b16 %v1261
        %v2194 = vunpack.c.h.b16 %v1261
        %v2195 = vunpack.c.l.b16 %v1262
        %v2196 = vunpack.c.h.b16 %v1262
        %v2197 = vunpack.c.l.b16 %v1263
        %v2198 = vunpack.c.h.b16 %v1263
        %v2199 = vunpack.c.l.b16 %v1264
        %v2200 = vunpack.c.h.b16 %v1264
        %v2201 = vunpack.c.l.b16 %v1265
        %v2202 = vunpack.c.h.b16 %v1265
        %v2203 = vunpack.c.l.b16 %v1266
        %v2204 = vunpack.c.h.b16 %v1266
        %v2205 = vunpack.c.l.b16 %v1267
        %v2206 = vunpack.c.h.b16 %v1267
        %v2207 = vunpack.c.l.b16 %v1268
        %v2208 = vunpack.c.h.b16 %v1268
        %v2209 = vunpack.c.l.b16 %v1269
        %v2210 = vunpack.c.h.b16 %v1269
        %v2211 = vunpack.c.l.b16 %v1270
        %v2212 = vunpack.c.h.b16 %v1270
        %v2213 = vunpack.c.l.b16 %v1271
        %v2214 = vunpack.c.h.b16 %v1271
        %v2215 = vunpack.c.l.b16 %v1272
        %v2216 = vunpack.c.h.b16 %v1272
        %v2217 = vunpack.c.l.b16 %v1273
        %v2218 = vunpack.c.h.b16 %v1273
        %v2219 = vunpack.c.l.b16 %v1274
        %v2220 = vunpack.c.h.b16 %v1274
        %v2221 = vunpack.c.l.b16 %v1275
        %v2222 = vunpack.c.h.b16 %v1275
        %v2223 = vunpack.c.l.b16 %v1276
        %v2224 = vunpack.c.h.b16 %v1276
        %v2225 = vunpack.c.l.b16 %v1277
        %v2226 = vunpack.c.h.b16 %v1277
        %v2227 = vunpack.c.l.b16 %v1278
        %v2228 = vunpack.c.h.b16 %v1278
        %v2229 = vunpack.c.l.b16 %v1279
        %v2230 = vunpack.c.h.b16 %v1279
        %v2231 = vunpack.c.l.b16 %v1280
        %v2232 = vunpack.c.h.b16 %v1280
        %v2233 = vunpack.c.l.b16 %v1281
        %v2234 = vunpack.c.h.b16 %v1281
        %v2235 = vunpack.c.l.b16 %v1282
        %v2236 = vunpack.c.h.b16 %v1282
        %v2237 = vunpack.c.l.b16 %v1283
        %v2238 = vunpack.c.h.b16 %v1283
        %v2239 = vunpack.c.l.b16 %v1284
        %v2240 = vunpack.c.h.b16 %v1284
        %v2241 = vunpack.c.l.b16 %v1285
        %v2242 = vunpack.c.h.b16 %v1285
        %v2243 = vunpack.c.l.b16 %v1286
        %v2244 = vunpack.c.h.b16 %v1286
        %v2245 = vunpack.c.l.b16 %v1287
        %v2246 = vunpack.c.h.b16 %v1287
        %v2247 = vunpack.c.l.b16 %v1288
        %v2248 = vunpack.c.h.b16 %v1288
        %v2249 = vunpack.c.l.b16 %v1289
        %v2250 = vunpack.c.h.b16 %v1289
        %v2251 = vunpack.c.l.b16 %v1290
        %v2252 = vunpack.c.h.b16 %v1290
        %v2253 = vunpack.c.l.b16 %v1291
        %v2254 = vunpack.c.h.b16 %v1291
        %v2255 = vunpack.c.l.b16 %v1292
        %v2256 = vunpack.c.h.b16 %v1292
        %v2257 = vunpack.c.l.b16 %v1293
        %v2258 = vunpack.c.h.b16 %v1293
        %v2259 = vunpack.c.l.b16 %v1294
        %v2260 = vunpack.c.h.b16 %v1294
        %v2261 = vunpack.c.l.b16 %v1295
        %v2262 = vunpack.c.h.b16 %v1295
        %v2263 = vunpack.c.l.b16 %v1296
        %v2264 = vunpack.c.h.b16 %v1296
        %v2265 = vunpack.c.l.b16 %v1297
        %v2266 = vunpack.c.h.b16 %v1297
        %v2267 = vunpack.c.l.b16 %v1298
        %v2268 = vunpack.c.h.b16 %v1298
        %v2269 = vunpack.c.l.b16 %v1299
        %v2270 = vunpack.c.h.b16 %v1299
        %v2271 = vunpack.c.l.b16 %v1300
        %v2272 = vunpack.c.h.b16 %v1300
        %v2273 = vunpack.c.l.b16 %v1301
        %v2274 = vunpack.c.h.b16 %v1301
        %v2275 = vunpack.c.l.b16 %v1302
        %v2276 = vunpack.c.h.b16 %v1302
        %v2277 = vunpack.c.l.b16 %v1303
        %v2278 = vunpack.c.h.b16 %v1303
        %v2279 = vunpack.c.l.b16 %v1304
        %v2280 = vunpack.c.h.b16 %v1304
        %v2281 = vunpack.c.l.b16 %v1305
        %v2282 = vunpack.c.h.b16 %v1305
        %v2283 = vunpack.c.l.b16 %v1306
        %v2284 = vunpack.c.h.b16 %v1306
        %v2285 = vunpack.c.l.b16 %v1307
        %v2286 = vunpack.c.h.b16 %v1307
        %v2287 = vunpack.c.l.b16 %v1308
        %v2288 = vunpack.c.h.b16 %v1308
        %v2289 = vunpack.c.l.b16 %v1309
        %v2290 = vunpack.c.h.b16 %v1309
        %v2291 = vunpack.c.l.b16 %v1310
        %v2292 = vunpack.c.h.b16 %v1310
        %v2293 = vunpack.c.l.b16 %v1311
        %v2294 = vunpack.c.h.b16 %v1311
        %v2295 = vunpack.c.l.b16 %v1312
        %v2296 = vunpack.c.h.b16 %v1312
        %v2297 = vunpack.c.l.b16 %v1313
        %v2298 = vunpack.c.h.b16 %v1313
        %v2299 = vunpack.c.l.b16 %v1314
        %v2300 = vunpack.c.h.b16 %v1314
        %v2301 = vunpack.c.l.b16 %v1315
        %v2302 = vunpack.c.h.b16 %v1315
        %v2303 = vunpack.c.l.b16 %v1316
        %v2304 = vunpack.c.h.b16 %v1316
        %v2305 = vunpack.c.l.b16 %v1317
        %v2306 = vunpack.c.h.b16 %v1317
        %v2307 = vunpack.c.l.b16 %v1318
        %v2308 = vunpack.c.h.b16 %v1318
        %v2309 = vunpack.c.l.b16 %v1319
        %v2310 = vunpack.c.h.b16 %v1319
        %v2311 = vunpack.c.l.b16 %v1320
        %v2312 = vunpack.c.h.b16 %v1320
        %v2313 = vunpack.c.l.b16 %v1321
        %v2314 = vunpack.c.h.b16 %v1321
        %v2315 = vunpack.c.l.b16 %v1322
        %v2316 = vunpack.c.h.b16 %v1322
        %v2317 = vunpack.c.l.b16 %v1323
        %v2318 = vunpack.c.h.b16 %v1323
        %v2319 = vunpack.c.l.b16 %v1324
        %v2320 = vunpack.c.h.b16 %v1324
        %v2321 = vunpack.c.l.b16 %v1325
        %v2322 = vunpack.c.h.b16 %v1325
        %v2323 = vunpack.c.l.b16 %v1326
        %v2324 = vunpack.c.h.b16 %v1326
        %v2325 = vunpack.c.l.b16 %v1327
        %v2326 = vunpack.c.h.b16 %v1327
        %v2327 = vunpack.c.l.b16 %v1328
        %v2328 = vunpack.c.h.b16 %v1328
        %v2329 = vunpack.c.l.b16 %v1329
        %v2330 = vunpack.c.h.b16 %v1329
        %v2331 = vunpack.c.l.b16 %v1330
        %v2332 = vunpack.c.h.b16 %v1330
        %v2333 = vunpack.c.l.b16 %v1331
        %v2334 = vunpack.c.h.b16 %v1331
        %v2335 = vunpack.c.l.b16 %v1332
        %v2336 = vunpack.c.h.b16 %v1332
        %v2337 = vunpack.c.l.b16 %v1333
        %v2338 = vunpack.c.h.b16 %v1333
        %v2339 = vunpack.c.l.b16 %v1334
        %v2340 = vunpack.c.h.b16 %v1334
        %v2341 = vunpack.c.l.b16 %v1335
        %v2342 = vunpack.c.h.b16 %v1335
        %v2343 = vunpack.c.l.b16 %v1336
        %v2344 = vunpack.c.h.b16 %v1336
        %v2345 = vunpack.c.l.b16 %v1337
        %v2346 = vunpack.c.h.b16 %v1337
        %v2347 = vunpack.c.l.b16 %v1338
        %v2348 = vunpack.c.h.b16 %v1338
        %v2349 = vunpack.c.l.b16 %v1339
        %v2350 = vunpack.c.h.b16 %v1339
        %v2351 = vunpack.c.l.b16 %v1340
        %v2352 = vunpack.c.h.b16 %v1340
        %v2353 = vunpack.c.l.b16 %v1341
        %v2354 = vunpack.c.h.b16 %v1341
        %v2355 = vunpack.c.l.b16 %v1342
        %v2356 = vunpack.c.h.b16 %v1342
        %v2357 = vunpack.c.l.b16 %v1343
        %v2358 = vunpack.c.h.b16 %v1343
        %v2359 = vunpack.c.l.b16 %v1344
        %v2360 = vunpack.c.h.b16 %v1344
        %v2361 = vunpack.c.l.b16 %v1345
        %v2362 = vunpack.c.h.b16 %v1345
        %v2363 = vunpack.c.l.b16 %v1346
        %v2364 = vunpack.c.h.b16 %v1346
        %v2365 = vunpack.c.l.b16 %v1347
        %v2366 = vunpack.c.h.b16 %v1347
        %v2367 = vunpack.c.l.b16 %v1348
        %v2368 = vunpack.c.h.b16 %v1348
        %v2369 = vunpack.c.l.b16 %v1349
        %v2370 = vunpack.c.h.b16 %v1349
        %v2371 = vunpack.c.l.b16 %v1350
        %v2372 = vunpack.c.h.b16 %v1350
        %v2373 = vunpack.c.l.b16 %v1351
        %v2374 = vunpack.c.h.b16 %v1351
        %v2375 = vunpack.c.l.b16 %v1352
        %v2376 = vunpack.c.h.b16 %v1352
        %v2377 = vunpack.c.l.b16 %v1353
        %v2378 = vunpack.c.h.b16 %v1353
        %v2379 = vunpack.c.l.b16 %v1354
        %v2380 = vunpack.c.h.b16 %v1354
        %v2381 = vunpack.c.l.b16 %v1355
        %v2382 = vunpack.c.h.b16 %v1355
        %v2383 = vunpack.c.l.b16 %v1356
        %v2384 = vunpack.c.h.b16 %v1356
        %v2385 = vunpack.c.l.b16 %v1357
        %v2386 = vunpack.c.h.b16 %v1357
        %v2387 = vunpack.c.l.b16 %v1358
        %v2388 = vunpack.c.h.b16 %v1358
        %v2389 = vunpack.c.l.b16 %v1359
        %v2390 = vunpack.c.h.b16 %v1359
        %v2391 = vunpack.c.l.b16 %v1360
        %v2392 = vunpack.c.h.b16 %v1360
        %v2393 = vunpack.c.l.b16 %v1361
        %v2394 = vunpack.c.h.b16 %v1361
        %v2395 = vunpack.c.l.b16 %v1362
        %v2396 = vunpack.c.h.b16 %v1362
        %v2397 = vunpack.c.l.b16 %v1363
        %v2398 = vunpack.c.h.b16 %v1363
        %v2399 = vunpack.c.l.b16 %v1364
        %v2400 = vunpack.c.h.b16 %v1364
        %v2401 = vunpack.c.l.b16 %v1365
        %v2402 = vunpack.c.h.b16 %v1365
        %v2403 = vunpack.c.l.b16 %v1366
        %v2404 = vunpack.c.h.b16 %v1366
        %v2405 = vunpack.c.l.b16 %v1367
        %v2406 = vunpack.c.h.b16 %v1367
        %v2407 = vunpack.c.l.b16 %v1368
        %v2408 = vunpack.c.h.b16 %v1368
        %v2409 = vunpack.c.l.b16 %v1369
        %v2410 = vunpack.c.h.b16 %v1369
        %v2411 = vunpack.c.l.b16 %v1370
        %v2412 = vunpack.c.h.b16 %v1370
        %v2413 = vunpack.c.l.b16 %v1371
        %v2414 = vunpack.c.h.b16 %v1371
        %v2415 = vunpack.c.l.b16 %v1372
        %v2416 = vunpack.c.h.b16 %v1372
        %v2417 = vunpack.c.l.b16 %v1373
        %v2418 = vunpack.c.h.b16 %v1373
        %v2419 = vunpack.c.l.b16 %v1374
        %v2420 = vunpack.c.h.b16 %v1374
        %v2421 = vunpack.c.l.b16 %v1375
        %v2422 = vunpack.c.h.b16 %v1375
        %v2423 = vunpack.c.l.b16 %v1376
        %v2424 = vunpack.c.h.b16 %v1376
        %v2425 = vunpack.c.l.b16 %v1377
        %v2426 = vunpack.c.h.b16 %v1377
        %v2427 = vunpack.c.l.b16 %v1378
        %v2428 = vunpack.c.h.b16 %v1378
        %v2429 = vunpack.c.l.b16 %v1379
        %v2430 = vunpack.c.h.b16 %v1379
        %v2431 = vunpack.c.l.b16 %v1380
        %v2432 = vunpack.c.h.b16 %v1380
        %v2433 = vunpack.c.l.b16 %v1381
        %v2434 = vunpack.c.h.b16 %v1381
        %v2435 = vunpack.c.l.b16 %v1382
        %v2436 = vunpack.c.h.b16 %v1382
        %v2437 = vunpack.c.l.b16 %v1383
        %v2438 = vunpack.c.h.b16 %v1383
        %v2439 = vunpack.c.l.b16 %v1384
        %v2440 = vunpack.c.h.b16 %v1384
        %v2441 = vunpack.c.l.b16 %v1385
        %v2442 = vunpack.c.h.b16 %v1385
        %v2443 = vunpack.c.l.b16 %v1386
        %v2444 = vunpack.c.h.b16 %v1386
        %v2445 = vunpack.c.l.b16 %v1387
        %v2446 = vunpack.c.h.b16 %v1387
        %v2447 = vunpack.c.l.b16 %v1388
        %v2448 = vunpack.c.h.b16 %v1388
        %v2449 = vunpack.c.l.b16 %v1389
        %v2450 = vunpack.c.h.b16 %v1389
        %v2451 = vunpack.c.l.b16 %v1390
        %v2452 = vunpack.c.h.b16 %v1390
        %v2453 = vunpack.c.l.b16 %v1391
        %v2454 = vunpack.c.h.b16 %v1391
        %v2455 = vunpack.c.l.b16 %v1392
        %v2456 = vunpack.c.h.b16 %v1392
        %v2457 = vunpack.c.l.b16 %v1393
        %v2458 = vunpack.c.h.b16 %v1393
        %v2459 = vunpack.c.l.b16 %v1394
        %v2460 = vunpack.c.h.b16 %v1394
        %v2461 = vunpack.c.l.b16 %v1395
        %v2462 = vunpack.c.h.b16 %v1395
        %v2463 = vunpack.c.l.b16 %v1396
        %v2464 = vunpack.c.h.b16 %v1396
        %v2465 = vunpack.c.l.b16 %v1397
        %v2466 = vunpack.c.h.b16 %v1397
        %v2467 = vunpack.c.l.b16 %v1398
        %v2468 = vunpack.c.h.b16 %v1398
        %v2469 = vunpack.c.l.b16 %v1399
        %v2470 = vunpack.c.h.b16 %v1399
        %v2471 = vunpack.c.l.b16 %v1400
        %v2472 = vunpack.c.h.b16 %v1400
        %v2473 = vunpack.c.l.b16 %v1401
        %v2474 = vunpack.c.h.b16 %v1401
        %v2475 = vunpack.c.l.b16 %v1402
        %v2476 = vunpack.c.h.b16 %v1402
        %v2477 = vunpack.c.l.b16 %v1403
        %v2478 = vunpack.c.h.b16 %v1403
        %v2479 = vunpack.c.l.b16 %v1404
        %v2480 = vunpack.c.h.b16 %v1404
        %v2481 = vunpack.c.l.b16 %v1405
        %v2482 = vunpack.c.h.b16 %v1405
        %v2483 = vunpack.c.l.b16 %v1406
        %v2484 = vunpack.c.h.b16 %v1406
        %v2485 = vunpack.c.l.b16 %v1407
        %v2486 = vunpack.c.h.b16 %v1407
        %v2487 = vunpack.c.l.b16 %v1408
        %v2488 = vunpack.c.h.b16 %v1408
        %v2489 = vunpack.c.l.b16 %v1409
        %v2490 = vunpack.c.h.b16 %v1409
        %v2491 = vunpack.c.l.b16 %v1410
        %v2492 = vunpack.c.h.b16 %v1410
        %v2493 = vunpack.c.l.b16 %v1411
        %v2494 = vunpack.c.h.b16 %v1411
        %v2495 = vunpack.c.l.b16 %v1412
        %v2496 = vunpack.c.h.b16 %v1412
        %v2497 = vunpack.c.l.b16 %v1413
        %v2498 = vunpack.c.h.b16 %v1413
        %v2499 = vunpack.c.l.b16 %v1414
        %v2500 = vunpack.c.h.b16 %v1414
        %v2501 = vunpack.c.l.b16 %v1415
        %v2502 = vunpack.c.h.b16 %v1415
        %v2503 = vunpack.c.l.b16 %v1416
        %v2504 = vunpack.c.h.b16 %v1416
        %v2505 = vunpack.c.l.b16 %v1417
        %v2506 = vunpack.c.h.b16 %v1417
        %v2507 = vunpack.c.l.b16 %v1418
        %v2508 = vunpack.c.h.b16 %v1418
        %v2509 = vunpack.c.l.b16 %v1419
        %v2510 = vunpack.c.h.b16 %v1419
        %v2511 = vunpack.c.l.b16 %v1420
        %v2512 = vunpack.c.h.b16 %v1420
        %v2513 = vunpack.c.l.b16 %v1421
        %v2514 = vunpack.c.h.b16 %v1421
        %v2515 = vunpack.c.l.b16 %v1422
        %v2516 = vunpack.c.h.b16 %v1422
        %v2517 = vunpack.c.l.b16 %v1423
        %v2518 = vunpack.c.h.b16 %v1423
        %v2519 = vunpack.c.l.b16 %v1424
        %v2520 = vunpack.c.h.b16 %v1424
        %v2521 = vunpack.c.l.b16 %v1425
        %v2522 = vunpack.c.h.b16 %v1425
        %v2523 = vunpack.c.l.b16 %v1426
        %v2524 = vunpack.c.h.b16 %v1426
        %v2525 = vunpack.c.l.b16 %v1427
        %v2526 = vunpack.c.h.b16 %v1427
        %v2527 = vunpack.c.l.b16 %v1428
        %v2528 = vunpack.c.h.b16 %v1428
        %v2529 = vunpack.c.l.b16 %v1429
        %v2530 = vunpack.c.h.b16 %v1429
        %v2531 = vunpack.c.l.b16 %v1430
        %v2532 = vunpack.c.h.b16 %v1430
        %v2533 = vunpack.c.l.b16 %v1431
        %v2534 = vunpack.c.h.b16 %v1431
        %v2535 = vunpack.c.l.b16 %v1432
        %v2536 = vunpack.c.h.b16 %v1432
        %v2537 = vunpack.c.l.b16 %v1433
        %v2538 = vunpack.c.h.b16 %v1433
        %v2539 = vunpack.c.l.b16 %v1434
        %v2540 = vunpack.c.h.b16 %v1434
        %v2541 = vunpack.c.l.b16 %v1435
        %v2542 = vunpack.c.h.b16 %v1435
        %v2543 = vunpack.c.l.b16 %v1436
        %v2544 = vunpack.c.h.b16 %v1436
        %v2545 = vunpack.c.l.b16 %v1437
        %v2546 = vunpack.c.h.b16 %v1437
        %v2547 = vunpack.c.l.b16 %v1438
        %v2548 = vunpack.c.h.b16 %v1438
        %v2549 = vunpack.c.l.b16 %v1439
        %v2550 = vunpack.c.h.b16 %v1439
        %v2551 = vunpack.c.l.b16 %v1440
        %v2552 = vunpack.c.h.b16 %v1440
        %v2553 = vunpack.c.l.b16 %v1441
        %v2554 = vunpack.c.h.b16 %v1441
        %v2555 = vunpack.c.l.b16 %v1442
        %v2556 = vunpack.c.h.b16 %v1442
        %v2557 = vunpack.c.l.b16 %v1443
        %v2558 = vunpack.c.h.b16 %v1443
        %v2559 = vunpack.c.l.b16 %v1444
        %v2560 = vunpack.c.h.b16 %v1444
        %v2561 = vunpack.c.l.b16 %v1445
        %v2562 = vunpack.c.h.b16 %v1445
        %v2563 = vunpack.c.l.b16 %v1446
        %v2564 = vunpack.c.h.b16 %v1446
        %v2565 = vunpack.c.l.b16 %v1447
        %v2566 = vunpack.c.h.b16 %v1447
        %v2567 = vunpack.c.l.b16 %v1448
        %v2568 = vunpack.c.h.b16 %v1448
        %v2569 = vunpack.c.l.b16 %v1449
        %v2570 = vunpack.c.h.b16 %v1449
        %v2571 = vunpack.c.l.b16 %v1450
        %v2572 = vunpack.c.h.b16 %v1450
        %v2573 = vunpack.c.l.b16 %v1451
        %v2574 = vunpack.c.h.b16 %v1451
        %v2575 = vunpack.c.l.b16 %v1452
        %v2576 = vunpack.c.h.b16 %v1452
        %v2577 = vunpack.c.l.b16 %v1453
        %v2578 = vunpack.c.h.b16 %v1453
        %v2579 = vunpack.c.l.b16 %v1454
        %v2580 = vunpack.c.h.b16 %v1454
        %v2581 = vunpack.c.l.b16 %v1455
        %v2582 = vunpack.c.h.b16 %v1455
        %v2583 = vunpack.c.l.b16 %v1456
        %v2584 = vunpack.c.h.b16 %v1456
        %v2585 = vunpack.c.l.b16 %v1457
        %v2586 = vunpack.c.h.b16 %v1457
        %v2587 = vunpack.c.l.b16 %v1458
        %v2588 = vunpack.c.h.b16 %v1458
        %v2589 = vunpack.c.l.b16 %v1459
        %v2590 = vunpack.c.h.b16 %v1459
        %v2591 = vunpack.c.l.b16 %v1460
        %v2592 = vunpack.c.h.b16 %v1460
        %v2593 = vunpack.c.l.b16 %v1461
        %v2594 = vunpack.c.h.b16 %v1461
        %v2595 = vunpack.c.l.b16 %v1462
        %v2596 = vunpack.c.h.b16 %v1462
        %v2597 = vunpack.c.l.b16 %v1463
        %v2598 = vunpack.c.h.b16 %v1463
        %v2599 = vunpack.c.l.b16 %v1464
        %v2600 = vunpack.c.h.b16 %v1464
        %v2601 = vunpack.c.l.b16 %v1465
        %v2602 = vunpack.c.h.b16 %v1465
        %v2603 = vunpack.c.l.b16 %v1466
        %v2604 = vunpack.c.h.b16 %v1466
        %v2605 = vunpack.c.l.b16 %v1467
        %v2606 = vunpack.c.h.b16 %v1467
        %v2607 = vunpack.c.l.b16 %v1468
        %v2608 = vunpack.c.h.b16 %v1468
        %v2609 = vunpack.c.l.b16 %v1469
        %v2610 = vunpack.c.h.b16 %v1469
        %v2611 = vunpack.c.l.b16 %v1470
        %v2612 = vunpack.c.h.b16 %v1470
        %v2613 = vunpack.c.l.b16 %v1471
        %v2614 = vunpack.c.h.b16 %v1471
        %v2615 = vunpack.c.l.b16 %v1472
        %v2616 = vunpack.c.h.b16 %v1472
        %v2617 = vunpack.c.l.b16 %v1473
        %v2618 = vunpack.c.h.b16 %v1473
        %v2619 = vunpack.c.l.b16 %v1474
        %v2620 = vunpack.c.h.b16 %v1474
        %v2621 = vunpack.c.l.b16 %v1475
        %v2622 = vunpack.c.h.b16 %v1475
        %v2623 = vunpack.c.l.b16 %v1476
        %v2624 = vunpack.c.h.b16 %v1476
        %v2625 = vunpack.c.l.b16 %v1477
        %v2626 = vunpack.c.h.b16 %v1477
        %v2627 = vunpack.c.l.b16 %v1478
        %v2628 = vunpack.c.h.b16 %v1478
        %v2629 = vunpack.c.l.b16 %v1479
        %v2630 = vunpack.c.h.b16 %v1479
        %v2631 = vunpack.c.l.b16 %v1480
        %v2632 = vunpack.c.h.b16 %v1480
        %v2633 = vunpack.c.l.b16 %v1481
        %v2634 = vunpack.c.h.b16 %v1481
        %v2635 = vunpack.c.l.b16 %v1482
        %v2636 = vunpack.c.h.b16 %v1482
        %v2637 = vunpack.c.l.b16 %v1483
        %v2638 = vunpack.c.h.b16 %v1483
        %v2639 = vunpack.c.l.b16 %v1484
        %v2640 = vunpack.c.h.b16 %v1484
        %v2641 = vunpack.c.l.b16 %v1485
        %v2642 = vunpack.c.h.b16 %v1485
        %v2643 = vunpack.c.l.b16 %v1486
        %v2644 = vunpack.c.h.b16 %v1486
        %v2645 = vunpack.c.l.b16 %v1487
        %v2646 = vunpack.c.h.b16 %v1487
        %v2647 = vunpack.c.l.b16 %v1488
        %v2648 = vunpack.c.h.b16 %v1488
        %v2649 = vunpack.c.l.b16 %v1489
        %v2650 = vunpack.c.h.b16 %v1489
        %v2651 = vunpack.c.l.b16 %v1490
        %v2652 = vunpack.c.h.b16 %v1490
        %v2653 = vunpack.c.l.b16 %v1491
        %v2654 = vunpack.c.h.b16 %v1491
        %v2655 = vunpack.c.l.b16 %v1492
        %v2656 = vunpack.c.h.b16 %v1492
        %v2657 = vunpack.c.l.b16 %v1493
        %v2658 = vunpack.c.h.b16 %v1493
        %v2659 = vunpack.c.l.b16 %v1494
        %v2660 = vunpack.c.h.b16 %v1494
        %v2661 = vunpack.c.l.b16 %v1495
        %v2662 = vunpack.c.h.b16 %v1495
        %v2663 = vunpack.c.l.b16 %v1496
        %v2664 = vunpack.c.h.b16 %v1496
        %v2665 = vunpack.c.l.b16 %v1497
        %v2666 = vunpack.c.h.b16 %v1497
        %v2667 = vunpack.c.l.b16 %v1498
        %v2668 = vunpack.c.h.b16 %v1498
        %v2669 = vunpack.c.l.b16 %v1499
        %v2670 = vunpack.c.h.b16 %v1499
        %v2671 = vunpack.c.l.b16 %v1500
        %v2672 = vunpack.c.h.b16 %v1500
        %v2673 = vunpack.c.l.b16 %v1501
        %v2674 = vunpack.c.h.b16 %v1501
        %v2675 = vunpack.c.l.b16 %v1502
        %v2676 = vunpack.c.h.b16 %v1502
        %v2677 = vunpack.c.l.b16 %v1503
        %v2678 = vunpack.c.h.b16 %v1503
        %v2679 = vunpack.c.l.b16 %v1504
        %v2680 = vunpack.c.h.b16 %v1504
        %v2681 = vunpack.c.l.b16 %v1505
        %v2682 = vunpack.c.h.b16 %v1505
        %v2683 = vunpack.c.l.b16 %v1506
        %v2684 = vunpack.c.h.b16 %v1506
        %v2685 = vunpack.c.l.b16 %v1507
        %v2686 = vunpack.c.h.b16 %v1507
        %v2687 = vunpack.c.l.b16 %v1508
        %v2688 = vunpack.c.h.b16 %v1508
        %v2689 = vunpack.c.l.b16 %v1509
        %v2690 = vunpack.c.h.b16 %v1509
        %v2691 = vunpack.c.l.b16 %v1510
        %v2692 = vunpack.c.h.b16 %v1510
        %v2693 = vunpack.c.l.b16 %v1511
        %v2694 = vunpack.c.h.b16 %v1511
        %v2695 = vunpack.c.l.b16 %v1512
        %v2696 = vunpack.c.h.b16 %v1512
        %v2697 = vunpack.c.l.b16 %v1513
        %v2698 = vunpack.c.h.b16 %v1513
        %v2699 = vunpack.c.l.b16 %v1514
        %v2700 = vunpack.c.h.b16 %v1514
        %v2701 = vunpack.c.l.b16 %v1515
        %v2702 = vunpack.c.h.b16 %v1515
        %v2703 = vunpack.c.l.b16 %v1516
        %v2704 = vunpack.c.h.b16 %v1516
        %v2705 = vunpack.c.l.b16 %v1517
        %v2706 = vunpack.c.h.b16 %v1517
        %v2707 = vunpack.c.l.b16 %v1518
        %v2708 = vunpack.c.h.b16 %v1518
        %v2709 = vunpack.c.l.b16 %v1519
        %v2710 = vunpack.c.h.b16 %v1519
        %v2711 = vunpack.c.l.b16 %v1520
        %v2712 = vunpack.c.h.b16 %v1520
        %v2713 = vunpack.c.l.b16 %v1521
        %v2714 = vunpack.c.h.b16 %v1521
        %v2715 = vunpack.c.l.b16 %v1522
        %v2716 = vunpack.c.h.b16 %v1522
        %v2717 = vunpack.c.l.b16 %v1523
        %v2718 = vunpack.c.h.b16 %v1523
        %v2719 = vunpack.c.l.b16 %v1524
        %v2720 = vunpack.c.h.b16 %v1524
        %v2721 = vunpack.c.l.b16 %v1525
        %v2722 = vunpack.c.h.b16 %v1525
        %v2723 = vunpack.c.l.b16 %v1526
        %v2724 = vunpack.c.h.b16 %v1526
        %v2725 = vunpack.c.l.b16 %v1527
        %v2726 = vunpack.c.h.b16 %v1527
        %v2727 = vunpack.c.l.b16 %v1528
        %v2728 = vunpack.c.h.b16 %v1528
        %v2729 = vunpack.c.l.b16 %v1529
        %v2730 = vunpack.c.h.b16 %v1529
        %v2731 = vunpack.c.l.b16 %v1530
        %v2732 = vunpack.c.h.b16 %v1530
        %v2733 = vunpack.c.l.b16 %v1531
        %v2734 = vunpack.c.h.b16 %v1531
        %v2735 = vunpack.c.l.b16 %v1532
        %v2736 = vunpack.c.h.b16 %v1532
        %v2737 = vunpack.c.l.b16 %v1533
        %v2738 = vunpack.c.h.b16 %v1533
        %v2739 = vunpack.c.l.b16 %v1534
        %v2740 = vunpack.c.h.b16 %v1534
        %v2741 = vunpack.c.l.b16 %v1535
        %v2742 = vunpack.c.h.b16 %v1535
        %v2743 = vunpack.c.l.b16 %v1536
        %v2744 = vunpack.c.h.b16 %v1536
        %v2745 = vunpack.c.l.b16 %v1537
        %v2746 = vunpack.c.h.b16 %v1537
        %v2747 = vunpack.c.l.b16 %v1538
        %v2748 = vunpack.c.h.b16 %v1538
        %v2749 = vunpack.c.l.b16 %v1539
        %v2750 = vunpack.c.h.b16 %v1539
        %v2751 = vunpack.c.l.b16 %v1540
        %v2752 = vunpack.c.h.b16 %v1540
        %v2753 = vunpack.c.l.b16 %v1541
        %v2754 = vunpack.c.h.b16 %v1541
        %v2755 = vunpack.c.l.b16 %v1542
        %v2756 = vunpack.c.h.b16 %v1542
        %v2757 = vunpack.c.l.b16 %v1543
        %v2758 = vunpack.c.h.b16 %v1543
        %v2759 = vunpack.c.l.b16 %v1544
        %v2760 = vunpack.c.h.b16 %v1544
        %v2761 = vunpack.c.l.b16 %v1545
        %v2762 = vunpack.c.h.b16 %v1545
        %v2763 = vunpack.c.l.b16 %v1546
        %v2764 = vunpack.c.h.b16 %v1546
        %v2765 = vunpack.c.l.b16 %v1547
        %v2766 = vunpack.c.h.b16 %v1547
        %v2767 = vunpack.c.l.b16 %v1548
        %v2768 = vunpack.c.h.b16 %v1548
        %v2769 = vunpack.c.l.b16 %v1549
        %v2770 = vunpack.c.h.b16 %v1549
        %v2771 = vunpack.c.l.b16 %v1550
        %v2772 = vunpack.c.h.b16 %v1550
        %v2773 = vunpack.c.l.b16 %v1551
        %v2774 = vunpack.c.h.b16 %v1551
        %v2775 = vunpack.c.l.b16 %v1552
        %v2776 = vunpack.c.h.b16 %v1552
        %v2777 = vunpack.c.l.b16 %v1553
        %v2778 = vunpack.c.h.b16 %v1553
        %v2779 = vunpack.c.l.b16 %v1554
        %v2780 = vunpack.c.h.b16 %v1554
        %v2781 = vunpack.c.l.b16 %v1555
        %v2782 = vunpack.c.h.b16 %v1555
        %v2783 = vunpack.c.l.b16 %v1556
        %v2784 = vunpack.c.h.b16 %v1556
        %v2785 = vunpack.c.l.b16 %v1557
        %v2786 = vunpack.c.h.b16 %v1557
        %v2787 = vunpack.c.l.b16 %v1558
        %v2788 = vunpack.c.h.b16 %v1558
        %v2789 = vunpack.c.l.b16 %v1559
        %v2790 = vunpack.c.h.b16 %v1559
        %v2791 = vunpack.c.l.b16 %v1560
        %v2792 = vunpack.c.h.b16 %v1560
        %v2793 = vunpack.c.l.b16 %v1561
        %v2794 = vunpack.c.h.b16 %v1561
        %v2795 = vunpack.c.l.b16 %v1562
        %v2796 = vunpack.c.h.b16 %v1562
        %v2797 = vunpack.c.l.b16 %v1563
        %v2798 = vunpack.c.h.b16 %v1563
        %v2799 = vunpack.c.l.b16 %v1564
        %v2800 = vunpack.c.h.b16 %v1564
        %v2801 = vunpack.c.l.b16 %v1565
        %v2802 = vunpack.c.h.b16 %v1565
        %v2803 = vunpack.c.l.b16 %v1566
        %v2804 = vunpack.c.h.b16 %v1566
        %v2805 = vunpack.c.l.b16 %v1567
        %v2806 = vunpack.c.h.b16 %v1567
        %v2807 = vunpack.c.l.b16 %v1568
        %v2808 = vunpack.c.h.b16 %v1568
        %v2809 = vunpack.c.l.b16 %v1569
        %v2810 = vunpack.c.h.b16 %v1569
        %v2811 = vunpack.c.l.b16 %v1570
        %v2812 = vunpack.c.h.b16 %v1570
        %v2813 = vunpack.c.l.b16 %v1571
        %v2814 = vunpack.c.h.b16 %v1571
        %v2815 = vunpack.c.l.b16 %v1572
        %v2816 = vunpack.c.h.b16 %v1572
        %v2817 = vunpack.c.l.b16 %v1573
        %v2818 = vunpack.c.h.b16 %v1573
        %v2819 = vunpack.c.l.b16 %v1574
        %v2820 = vunpack.c.h.b16 %v1574
        %v2821 = vunpack.c.l.b16 %v1575
        %v2822 = vunpack.c.h.b16 %v1575
        %v2823 = vunpack.c.l.b16 %v1576
        %v2824 = vunpack.c.h.b16 %v1576
        %v2825 = vunpack.c.l.b16 %v1577
        %v2826 = vunpack.c.h.b16 %v1577
        %v2827 = vunpack.c.l.b16 %v1578
        %v2828 = vunpack.c.h.b16 %v1578
        %v2829 = vunpack.c.l.b16 %v1579
        %v2830 = vunpack.c.h.b16 %v1579
        %v2831 = vunpack.c.l.b16 %v1580
        %v2832 = vunpack.c.h.b16 %v1580
        %v2833 = vunpack.c.l.b16 %v1581
        %v2834 = vunpack.c.h.b16 %v1581
        %v2835 = vunpack.c.l.b16 %v1582
        %v2836 = vunpack.c.h.b16 %v1582
        %v2837 = vunpack.c.l.b16 %v1583
        %v2838 = vunpack.c.h.b16 %v1583
        %v2839 = vunpack.c.l.b16 %v1584
        %v2840 = vunpack.c.h.b16 %v1584
        %v2841 = vunpack.c.l.b16 %v1585
        %v2842 = vunpack.c.h.b16 %v1585
        %v2843 = vunpack.c.l.b16 %v1586
        %v2844 = vunpack.c.h.b16 %v1586
        %v2845 = vunpack.c.l.b16 %v1587
        %v2846 = vunpack.c.h.b16 %v1587
        %v2847 = vunpack.c.l.b16 %v1588
        %v2848 = vunpack.c.h.b16 %v1588
        %v2849 = vunpack.c.l.b16 %v1589
        %v2850 = vunpack.c.h.b16 %v1589
        %v2851 = vunpack.c.l.b16 %v1590
        %v2852 = vunpack.c.h.b16 %v1590
        %v2853 = vunpack.c.l.b16 %v1591
        %v2854 = vunpack.c.h.b16 %v1591
        %v2855 = vunpack.c.l.b16 %v1592
        %v2856 = vunpack.c.h.b16 %v1592
        %v2857 = vunpack.c.l.b16 %v1593
        %v2858 = vunpack.c.h.b16 %v1593
        %v2859 = vunpack.c.l.b16 %v1594
        %v2860 = vunpack.c.h.b16 %v1594
        %v2861 = vunpack.c.l.b16 %v1595
        %v2862 = vunpack.c.h.b16 %v1595
        %v2863 = vunpack.c.l.b16 %v1596
        %v2864 = vunpack.c.h.b16 %v1596
        %v2865 = vunpack.c.l.b16 %v1597
        %v2866 = vunpack.c.h.b16 %v1597
        %v2867 = vunpack.c.l.b16 %v1598
        %v2868 = vunpack.c.h.b16 %v1598
        %v2869 = vunpack.c.l.b16 %v1599
        %v2870 = vunpack.c.h.b16 %v1599
        %v2871 = vunpack.c.l.b16 %v1600
        %v2872 = vunpack.c.h.b16 %v1600
        %v2873 = vunpack.c.l.b16 %v1601
        %v2874 = vunpack.c.h.b16 %v1601
        %v2875 = vunpack.c.l.b16 %v1602
        %v2876 = vunpack.c.h.b16 %v1602
        %v2877 = vunpack.c.l.b16 %v1603
        %v2878 = vunpack.c.h.b16 %v1603
        %v2879 = vunpack.c.l.b16 %v1604
        %v2880 = vunpack.c.h.b16 %v1604
        %v2881 = vunpack.c.l.b16 %v1605
        %v2882 = vunpack.c.h.b16 %v1605
        %v2883 = vunpack.c.l.b16 %v1606
        %v2884 = vunpack.c.h.b16 %v1606
        %v2885 = vunpack.c.l.b16 %v1607
        %v2886 = vunpack.c.h.b16 %v1607
        %v2887 = vunpack.c.l.b16 %v1608
        %v2888 = vunpack.c.h.b16 %v1608
        %v2889 = vunpack.c.l.b16 %v1609
        %v2890 = vunpack.c.h.b16 %v1609
        %v2891 = vunpack.c.l.b16 %v1610
        %v2892 = vunpack.c.h.b16 %v1610
        %v2893 = vunpack.c.l.b16 %v1611
        %v2894 = vunpack.c.h.b16 %v1611
        %v2895 = vunpack.c.l.b16 %v1612
        %v2896 = vunpack.c.h.b16 %v1612
        %v2897 = vunpack.c.l.b16 %v1613
        %v2898 = vunpack.c.h.b16 %v1613
        %v2899 = vunpack.c.l.b16 %v1614
        %v2900 = vunpack.c.h.b16 %v1614
        %v2901 = vunpack.c.l.b16 %v1615
        %v2902 = vunpack.c.h.b16 %v1615
        %v2903 = vunpack.c.l.b16 %v1616
        %v2904 = vunpack.c.h.b16 %v1616
        %v2905 = vunpack.c.l.b16 %v1617
        %v2906 = vunpack.c.h.b16 %v1617
        %v2907 = vunpack.c.l.b16 %v1618
        %v2908 = vunpack.c.h.b16 %v1618
        %v2909 = vunpack.c.l.b16 %v1619
        %v2910 = vunpack.c.h.b16 %v1619
        %v2911 = vunpack.c.l.b16 %v1620
        %v2912 = vunpack.c.h.b16 %v1620
        %v2913 = vunpack.c.l.b16 %v1621
        %v2914 = vunpack.c.h.b16 %v1621
        %v2915 = vunpack.c.l.b16 %v1622
        %v2916 = vunpack.c.h.b16 %v1622
        %v2917 = vunpack.c.l.b16 %v1623
        %v2918 = vunpack.c.h.b16 %v1623
        %v2919 = vunpack.c.l.b16 %v1624
        %v2920 = vunpack.c.h.b16 %v1624
        %v2921 = vunpack.c.l.b16 %v1625
        %v2922 = vunpack.c.h.b16 %v1625
        %v2923 = vunpack.c.l.b16 %v1626
        %v2924 = vunpack.c.h.b16 %v1626
        %v2925 = vunpack.c.l.b16 %v1627
        %v2926 = vunpack.c.h.b16 %v1627
        %v2927 = vunpack.c.l.b16 %v1628
        %v2928 = vunpack.c.h.b16 %v1628
        %v2929 = vunpack.c.l.b16 %v1629
        %v2930 = vunpack.c.h.b16 %v1629
        %v2931 = vunpack.c.l.b16 %v1630
        %v2932 = vunpack.c.h.b16 %v1630
        %v2933 = vunpack.c.l.b16 %v1631
        %v2934 = vunpack.c.h.b16 %v1631
        %v2935 = vunpack.c.l.b16 %v1632
        %v2936 = vunpack.c.h.b16 %v1632
        %v2937 = vunpack.c.l.b16 %v1633
        %v2938 = vunpack.c.h.b16 %v1633
        %v2939 = vunpack.c.l.b16 %v1634
        %v2940 = vunpack.c.h.b16 %v1634
        %v2941 = vunpack.c.l.b16 %v1635
        %v2942 = vunpack.c.h.b16 %v1635
        %v2943 = vunpack.c.l.b16 %v1636
        %v2944 = vunpack.c.h.b16 %v1636
        %v2945 = vunpack.c.l.b16 %v1637
        %v2946 = vunpack.c.h.b16 %v1637
        %v2947 = vunpack.c.l.b16 %v1638
        %v2948 = vunpack.c.h.b16 %v1638
        %v2949 = vunpack.c.l.b16 %v1639
        %v2950 = vunpack.c.h.b16 %v1639
        %v2951 = vunpack.c.l.b16 %v1640
        %v2952 = vunpack.c.h.b16 %v1640
        %v2953 = vunpack.c.l.b16 %v1641
        %v2954 = vunpack.c.h.b16 %v1641
        %v2955 = vunpack.c.l.b16 %v1642
        %v2956 = vunpack.c.h.b16 %v1642
        %v2957 = vunpack.c.l.b16 %v1643
        %v2958 = vunpack.c.h.b16 %v1643
        %v2959 = vunpack.c.l.b16 %v1644
        %v2960 = vunpack.c.h.b16 %v1644
        %v2961 = vunpack.c.l.b16 %v1645
        %v2962 = vunpack.c.h.b16 %v1645
        %v2963 = vunpack.c.l.b16 %v1646
        %v2964 = vunpack.c.h.b16 %v1646
        %v2965 = vunpack.c.l.b16 %v1647
        %v2966 = vunpack.c.h.b16 %v1647
        %v2967 = vunpack.c.l.b16 %v1648
        %v2968 = vunpack.c.h.b16 %v1648
        %v2969 = vunpack.c.l.b16 %v1649
        %v2970 = vunpack.c.h.b16 %v1649
        %v2971 = vunpack.c.l.b16 %v1650
        %v2972 = vunpack.c.h.b16 %v1650
        %v2973 = vunpack.c.l.b16 %v1651
        %v2974 = vunpack.c.h.b16 %v1651
        %v2975 = vunpack.c.l.b16 %v1652
        %v2976 = vunpack.c.h.b16 %v1652
        %v2977 = vunpack.c.l.b16 %v1653
        %v2978 = vunpack.c.h.b16 %v1653
        %v2979 = vunpack.c.l.b16 %v1654
        %v2980 = vunpack.c.h.b16 %v1654
        %v2981 = vunpack.c.l.b16 %v1655
        %v2982 = vunpack.c.h.b16 %v1655
        %v2983 = vunpack.c.l.b16 %v1656
        %v2984 = vunpack.c.h.b16 %v1656
        %v2985 = vunpack.c.l.b16 %v1657
        %v2986 = vunpack.c.h.b16 %v1657
        %v2987 = vunpack.c.l.b16 %v1658
        %v2988 = vunpack.c.h.b16 %v1658
        %v2989 = vunpack.c.l.b16 %v1659
        %v2990 = vunpack.c.h.b16 %v1659
        %v2991 = vunpack.c.l.b16 %v1660
        %v2992 = vunpack.c.h.b16 %v1660
        %v2993 = vunpack.c.l.b16 %v1661
        %v2994 = vunpack.c.h.b16 %v1661
        %v2995 = vunpack.c.l.b16 %v1662
        %v2996 = vunpack.c.h.b16 %v1662
        %v2997 = vunpack.c.l.b16 %v1663
        %v2998 = vunpack.c.h.b16 %v1663
        %v2999 = vunpack.c.l.b16 %v1664
        %v3000 = vunpack.c.h.b16 %v1664
        %v3001 = vunpack.c.l.b16 %v1665
        %v3002 = vunpack.c.h.b16 %v1665
        %v3003 = vunpack.c.l.b16 %v1666
        %v3004 = vunpack.c.h.b16 %v1666
        %v3005 = vunpack.c.l.b16 %v1667
        %v3006 = vunpack.c.h.b16 %v1667
        %v3007 = vunpack.c.l.b16 %v1668
        %v3008 = vunpack.c.h.b16 %v1668
        %v3009 = vunpack.c.l.b16 %v1669
        %v3010 = vunpack.c.h.b16 %v1669
        %v3011 = vunpack.c.l.b16 %v1670
        %v3012 = vunpack.c.h.b16 %v1670
        %v3013 = vunpack.c.l.b16 %v1671
        %v3014 = vunpack.c.h.b16 %v1671
        %v3015 = vunpack.c.l.b16 %v1672
        %v3016 = vunpack.c.h.b16 %v1672
        %v3017 = vpack.c.b16 %v2135, %v2121
        %v3018 = vpack.c.b16 %v2136, %v2122
        %v3019 = vpack.c.b16 %v2137, %v2123
        %v3020 = vpack.c.b16 %v2138, %v2124
        %v3021 = vpack.c.b16 %v2139, %v2125
        %v3022 = vpack.c.b16 %v2140, %v2126
        %v3023 = vpack.c.b16 %v2141, %v2127
        %v3024 = vpack.c.b16 %v2142, %v2128
        %v3025 = vpack.c.b16 %v2143, %v2129
        %v3026 = vpack.c.b16 %v2144, %v2130
        %v3027 = vpack.c.b16 %v2145, %v2131
        %v3028 = vpack.c.b16 %v2146, %v2132
        %v3029 = vpack.c.b16 %v2147, %v2133
        %v3030 = vpack.c.b16 %v2148, %v2134
        %v3031 = vpack.c.b16 %v2163, %v2149
        %v3032 = vpack.c.b16 %v2164, %v2150
        %v3033 = vpack.c.b16 %v2165, %v2151
        %v3034 = vpack.c.b16 %v2166, %v2152
        %v3035 = vpack.c.b16 %v2167, %v2153
        %v3036 = vpack.c.b16 %v2168, %v2154
        %v3037 = vpack.c.b16 %v2169, %v2155
        %v3038 = vpack.c.b16 %v2170, %v2156
        %v3039 = vpack.c.b16 %v2171, %v2157
        %v3040 = vpack.c.b16 %v2172, %v2158
        %v3041 = vpack.c.b16 %v2173, %v2159
        %v3042 = vpack.c.b16 %v2174, %v2160
        %v3043 = vpack.c.b16 %v2175, %v2161
        %v3044 = vpack.c.b16 %v2176, %v2162
        %v3045 = vpack.c.b16 %v2191, %v2177
        %v3046 = vpack.c.b16 %v2192, %v2178
        %v3047 = vpack.c.b16 %v2193, %v2179
        %v3048 = vpack.c.b16 %v2194, %v2180
        %v3049 = vpack.c.b16 %v2195, %v2181
        %v3050 = vpack.c.b16 %v2196, %v2182
        %v3051 = vpack.c.b16 %v2197, %v2183
        %v3052 = vpack.c.b16 %v2198, %v2184
        %v3053 = vpack.c.b16 %v2199, %v2185
        %v3054 = vpack.c.b16 %v2200, %v2186
        %v3055 = vpack.c.b16 %v2201, %v2187
        %v3056 = vpack.c.b16 %v2202, %v2188
        %v3057 = vpack.c.b16 %v2203, %v2189
        %v3058 = vpack.c.b16 %v2204, %v2190
        %v3059 = vpack.c.b16 %v2219, %v2205
        %v3060 = vpack.c.b16 %v2220, %v2206
        %v3061 = vpack.c.b16 %v2221, %v2207
        %v3062 = vpack.c.b16 %v2222, %v2208
        %v3063 = vpack.c.b16 %v2223, %v2209
        %v3064 = vpack.c.b16 %v2224, %v2210
        %v3065 = vpack.c.b16 %v2225, %v2211
        %v3066 = vpack.c.b16 %v2226, %v2212
        %v3067 = vpack.c.b16 %v2227, %v2213
        %v3068 = vpack.c.b16 %v2228, %v2214
        %v3069 = vpack.c.b16 %v2229, %v2215
        %v3070 = vpack.c.b16 %v2230, %v2216
        %v3071 = vpack.c.b16 %v2231, %v2217
        %v3072 = vpack.c.b16 %v2232, %v2218
        %v3073 = vpack.c.b16 %v2247, %v2233
        %v3074 = vpack.c.b16 %v2248, %v2234
        %v3075 = vpack.c.b16 %v2249, %v2235
        %v3076 = vpack.c.b16 %v2250, %v2236
        %v3077 = vpack.c.b16 %v2251, %v2237
        %v3078 = vpack.c.b16 %v2252, %v2238
        %v3079 = vpack.c.b16 %v2253, %v2239
        %v3080 = vpack.c.b16 %v2254, %v2240
        %v3081 = vpack.c.b16 %v2255, %v2241
        %v3082 = vpack.c.b16 %v2256, %v2242
        %v3083 = vpack.c.b16 %v2257, %v2243
        %v3084 = vpack.c.b16 %v2258, %v2244
        %v3085 = vpack.c.b16 %v2259, %v2245
        %v3086 = vpack.c.b16 %v2260, %v2246
        %v3087 = vpack.c.b16 %v2275, %v2261
        %v3088 = vpack.c.b16 %v2276, %v2262
        %v3089 = vpack.c.b16 %v2277, %v2263
        %v3090 = vpack.c.b16 %v2278, %v2264
        %v3091 = vpack.c.b16 %v2279, %v2265
        %v3092 = vpack.c.b16 %v2280, %v2266
        %v3093 = vpack.c.b16 %v2281, %v2267
        %v3094 = vpack.c.b16 %v2282, %v2268
        %v3095 = vpack.c.b16 %v2283, %v2269
        %v3096 = vpack.c.b16 %v2284, %v2270
        %v3097 = vpack.c.b16 %v2285, %v2271
        %v3098 = vpack.c.b16 %v2286, %v2272
        %v3099 = vpack.c.b16 %v2287, %v2273
        %v3100 = vpack.c.b16 %v2288, %v2274
        %v3101 = vpack.c.b16 %v2303, %v2289
        %v3102 = vpack.c.b16 %v2304, %v2290
        %v3103 = vpack.c.b16 %v2305, %v2291
        %v3104 = vpack.c.b16 %v2306, %v2292
        %v3105 = vpack.c.b16 %v2307, %v2293
        %v3106 = vpack.c.b16 %v2308, %v2294
        %v3107 = vpack.c.b16 %v2309, %v2295
        %v3108 = vpack.c.b16 %v2310, %v2296
        %v3109 = vpack.c.b16 %v2311, %v2297
        %v3110 = vpack.c.b16 %v2312, %v2298
        %v3111 = vpack.c.b16 %v2313, %v2299
        %v3112 = vpack.c.b16 %v2314, %v2300
        %v3113 = vpack.c.b16 %v2315, %v2301
        %v3114 = vpack.c.b16 %v2316, %v2302
        %v3115 = vpack.c.b16 %v2331, %v2317
        %v3116 = vpack.c.b16 %v2332, %v2318
        %v3117 = vpack.c.b16 %v2333, %v2319
        %v3118 = vpack.c.b16 %v2334, %v2320
        %v3119 = vpack.c.b16 %v2335, %v2321
        %v3120 = vpack.c.b16 %v2336, %v2322
        %v3121 = vpack.c.b16 %v2337, %v2323
        %v3122 = vpack.c.b16 %v2338, %v2324
        %v3123 = vpack.c.b16 %v2339, %v2325
        %v3124 = vpack.c.b16 %v2340, %v2326
        %v3125 = vpack.c.b16 %v2341, %v2327
        %v3126 = vpack.c.b16 %v2342, %v2328
        %v3127 = vpack.c.b16 %v2343, %v2329
        %v3128 = vpack.c.b16 %v2344, %v2330
        %v3129 = vpack.c.b16 %v2359, %v2345
        %v3130 = vpack.c.b16 %v2360, %v2346
        %v3131 = vpack.c.b16 %v2361, %v2347
        %v3132 = vpack.c.b16 %v2362, %v2348
        %v3133 = vpack.c.b16 %v2363, %v2349
        %v3134 = vpack.c.b16 %v2364, %v2350
        %v3135 = vpack.c.b16 %v2365, %v2351
        %v3136 = vpack.c.b16 %v2366, %v2352
        %v3137 = vpack.c.b16 %v2367, %v2353
        %v3138 = vpack.c.b16 %v2368, %v2354
        %v3139 = vpack.c.b16 %v2369, %v2355
        %v3140 = vpack.c.b16 %v2370, %v2356
        %v3141 = vpack.c.b16 %v2371, %v2357
        %v3142 = vpack.c.b16 %v2372, %v2358
        %v3143 = vpack.c.b16 %v2387, %v2373
        %v3144 = vpack.c.b16 %v2388, %v2374
        %v3145 = vpack.c.b16 %v2389, %v2375
        %v3146 = vpack.c.b16 %v2390, %v2376
        %v3147 = vpack.c.b16 %v2391, %v2377
        %v3148 = vpack.c.b16 %v2392, %v2378
        %v3149 = vpack.c.b16 %v2393, %v2379
        %v3150 = vpack.c.b16 %v2394, %v2380
        %v3151 = vpack.c.b16 %v2395, %v2381
        %v3152 = vpack.c.b16 %v2396, %v2382
        %v3153 = vpack.c.b16 %v2397, %v2383
        %v3154 = vpack.c.b16 %v2398, %v2384
        %v3155 = vpack.c.b16 %v2399, %v2385
        %v3156 = vpack.c.b16 %v2400, %v2386
        %v3157 = vpack.c.b16 %v2415, %v2401
        %v3158 = vpack.c.b16 %v2416, %v2402
        %v3159 = vpack.c.b16 %v2417, %v2403
        %v3160 = vpack.c.b16 %v2418, %v2404
        %v3161 = vpack.c.b16 %v2419, %v2405
        %v3162 = vpack.c.b16 %v2420, %v2406
        %v3163 = vpack.c.b16 %v2421, %v2407
        %v3164 = vpack.c.b16 %v2422, %v2408
        %v3165 = vpack.c.b16 %v2423, %v2409
        %v3166 = vpack.c.b16 %v2424, %v2410
        %v3167 = vpack.c.b16 %v2425, %v2411
        %v3168 = vpack.c.b16 %v2426, %v2412
        %v3169 = vpack.c.b16 %v2427, %v2413
        %v3170 = vpack.c.b16 %v2428, %v2414
        %v3171 = vpack.c.b16 %v2443, %v2429
        %v3172 = vpack.c.b16 %v2444, %v2430
        %v3173 = vpack.c.b16 %v2445, %v2431
        %v3174 = vpack.c.b16 %v2446, %v2432
        %v3175 = vpack.c.b16 %v2447, %v2433
        %v3176 = vpack.c.b16 %v2448, %v2434
        %v3177 = vpack.c.b16 %v2449, %v2435
        %v3178 = vpack.c.b16 %v2450, %v2436
        %v3179 = vpack.c.b16 %v2451, %v2437
        %v3180 = vpack.c.b16 %v2452, %v2438
        %v3181 = vpack.c.b16 %v2453, %v2439
        %v3182 = vpack.c.b16 %v2454, %v2440
        %v3183 = vpack.c.b16 %v2455, %v2441
        %v3184 = vpack.c.b16 %v2456, %v2442
        %v3185 = vpack.c.b16 %v2471, %v2457
        %v3186 = vpack.c.b16 %v2472, %v2458
        %v3187 = vpack.c.b16 %v2473, %v2459
        %v3188 = vpack.c.b16 %v2474, %v2460
        %v3189 = vpack.c.b16 %v2475, %v2461
        %v3190 = vpack.c.b16 %v2476, %v2462
        %v3191 = vpack.c.b16 %v2477, %v2463
        %v3192 = vpack.c.b16 %v2478, %v2464
        %v3193 = vpack.c.b16 %v2479, %v2465
        %v3194 = vpack.c.b16 %v2480, %v2466
        %v3195 = vpack.c.b16 %v2481, %v2467
        %v3196 = vpack.c.b16 %v2482, %v2468
        %v3197 = vpack.c.b16 %v2483, %v2469
        %v3198 = vpack.c.b16 %v2484, %v2470
        %v3199 = vpack.c.b16 %v2499, %v2485
        %v3200 = vpack.c.b16 %v2500, %v2486
        %v3201 = vpack.c.b16 %v2501, %v2487
        %v3202 = vpack.c.b16 %v2502, %v2488
        %v3203 = vpack.c.b16 %v2503, %v2489
        %v3204 = vpack.c.b16 %v2504, %v2490
        %v3205 = vpack.c.b16 %v2505, %v2491
        %v3206 = vpack.c.b16 %v2506, %v2492
        %v3207 = vpack.c.b16 %v2507, %v2493
        %v3208 = vpack.c.b16 %v2508, %v2494
        %v3209 = vpack.c.b16 %v2509, %v2495
        %v3210 = vpack.c.b16 %v2510, %v2496
        %v3211 = vpack.c.b16 %v2511, %v2497
        %v3212 = vpack.c.b16 %v2512, %v2498
        %v3213 = vpack.c.b16 %v2527, %v2513
        %v3214 = vpack.c.b16 %v2528, %v2514
        %v3215 = vpack.c.b16 %v2529, %v2515
        %v3216 = vpack.c.b16 %v2530, %v2516
        %v3217 = vpack.c.b16 %v2531, %v2517
        %v3218 = vpack.c.b16 %v2532, %v2518
        %v3219 = vpack.c.b16 %v2533, %v2519
        %v3220 = vpack.c.b16 %v2534, %v2520
        %v3221 = vpack.c.b16 %v2535, %v2521
        %v3222 = vpack.c.b16 %v2536, %v2522
        %v3223 = vpack.c.b16 %v2537, %v2523
        %v3224 = vpack.c.b16 %v2538, %v2524
        %v3225 = vpack.c.b16 %v2539, %v2525
        %v3226 = vpack.c.b16 %v2540, %v2526
        %v3227 = vpack.c.b16 %v2555, %v2541
        %v3228 = vpack.c.b16 %v2556, %v2542
        %v3229 = vpack.c.b16 %v2557, %v2543
        %v3230 = vpack.c.b16 %v2558, %v2544
        %v3231 = vpack.c.b16 %v2559, %v2545
        %v3232 = vpack.c.b16 %v2560, %v2546
        %v3233 = vpack.c.b16 %v2561, %v2547
        %v3234 = vpack.c.b16 %v2562, %v2548
        %v3235 = vpack.c.b16 %v2563, %v2549
        %v3236 = vpack.c.b16 %v2564, %v2550
        %v3237 = vpack.c.b16 %v2565, %v2551
        %v3238 = vpack.c.b16 %v2566, %v2552
        %v3239 = vpack.c.b16 %v2567, %v2553
        %v3240 = vpack.c.b16 %v2568, %v2554
        %v3241 = vpack.c.b16 %v2583, %v2569
        %v3242 = vpack.c.b16 %v2584, %v2570
        %v3243 = vpack.c.b16 %v2585, %v2571
        %v3244 = vpack.c.b16 %v2586, %v2572
        %v3245 = vpack.c.b16 %v2587, %v2573
        %v3246 = vpack.c.b16 %v2588, %v2574
        %v3247 = vpack.c.b16 %v2589, %v2575
        %v3248 = vpack.c.b16 %v2590, %v2576
        %v3249 = vpack.c.b16 %v2591, %v2577
        %v3250 = vpack.c.b16 %v2592, %v2578
        %v3251 = vpack.c.b16 %v2593, %v2579
        %v3252 = vpack.c.b16 %v2594, %v2580
        %v3253 = vpack.c.b16 %v2595, %v2581
        %v3254 = vpack.c.b16 %v2596, %v2582
        %v3255 = vpack.c.b16 %v2611, %v2597
        %v3256 = vpack.c.b16 %v2612, %v2598
        %v3257 = vpack.c.b16 %v2613, %v2599
        %v3258 = vpack.c.b16 %v2614, %v2600
        %v3259 = vpack.c.b16 %v2615, %v2601
        %v3260 = vpack.c.b16 %v2616, %v2602
        %v3261 = vpack.c.b16 %v2617, %v2603
        %v3262 = vpack.c.b16 %v2618, %v2604
        %v3263 = vpack.c.b16 %v2619, %v2605
        %v3264 = vpack.c.b16 %v2620, %v2606
        %v3265 = vpack.c.b16 %v2621, %v2607
        %v3266 = vpack.c.b16 %v2622, %v2608
        %v3267 = vpack.c.b16 %v2623, %v2609
        %v3268 = vpack.c.b16 %v2624, %v2610
        %v3269 = vpack.c.b16 %v2639, %v2625
        %v3270 = vpack.c.b16 %v2640, %v2626
        %v3271 = vpack.c.b16 %v2641, %v2627
        %v3272 = vpack.c.b16 %v2642, %v2628
        %v3273 = vpack.c.b16 %v2643, %v2629
        %v3274 = vpack.c.b16 %v2644, %v2630
        %v3275 = vpack.c.b16 %v2645, %v2631
        %v3276 = vpack.c.b16 %v2646, %v2632
        %v3277 = vpack.c.b16 %v2647, %v2633
        %v3278 = vpack.c.b16 %v2648, %v2634
        %v3279 = vpack.c.b16 %v2649, %v2635
        %v3280 = vpack.c.b16 %v2650, %v2636
        %v3281 = vpack.c.b16 %v2651, %v2637
        %v3282 = vpack.c.b16 %v2652, %v2638
        %v3283 = vpack.c.b16 %v2667, %v2653
        %v3284 = vpack.c.b16 %v2668, %v2654
        %v3285 = vpack.c.b16 %v2669, %v2655
        %v3286 = vpack.c.b16 %v2670, %v2656
        %v3287 = vpack.c.b16 %v2671, %v2657
        %v3288 = vpack.c.b16 %v2672, %v2658
        %v3289 = vpack.c.b16 %v2673, %v2659
        %v3290 = vpack.c.b16 %v2674, %v2660
        %v3291 = vpack.c.b16 %v2675, %v2661
        %v3292 = vpack.c.b16 %v2676, %v2662
        %v3293 = vpack.c.b16 %v2677, %v2663
        %v3294 = vpack.c.b16 %v2678, %v2664
        %v3295 = vpack.c.b16 %v2679, %v2665
        %v3296 = vpack.c.b16 %v2680, %v2666
        %v3297 = vpack.c.b16 %v2695, %v2681
        %v3298 = vpack.c.b16 %v2696, %v2682
        %v3299 = vpack.c.b16 %v2697, %v2683
        %v3300 = vpack.c.b16 %v2698, %v2684
        %v3301 = vpack.c.b16 %v2699, %v2685
        %v3302 = vpack.c.b16 %v2700, %v2686
        %v3303 = vpack.c.b16 %v2701, %v2687
        %v3304 = vpack.c.b16 %v2702, %v2688
        %v3305 = vpack.c.b16 %v2703, %v2689
        %v3306 = vpack.c.b16 %v2704, %v2690
        %v3307 = vpack.c.b16 %v2705, %v2691
        %v3308 = vpack.c.b16 %v2706, %v2692
        %v3309 = vpack.c.b16 %v2707, %v2693
        %v3310 = vpack.c.b16 %v2708, %v2694
        %v3311 = vpack.c.b16 %v2723, %v2709
        %v3312 = vpack.c.b16 %v2724, %v2710
        %v3313 = vpack.c.b16 %v2725, %v2711
        %v3314 = vpack.c.b16 %v2726, %v2712
        %v3315 = vpack.c.b16 %v2727, %v2713
        %v3316 = vpack.c.b16 %v2728, %v2714
        %v3317 = vpack.c.b16 %v2729, %v2715
        %v3318 = vpack.c.b16 %v2730, %v2716
        %v3319 = vpack.c.b16 %v2731, %v2717
        %v3320 = vpack.c.b16 %v2732, %v2718
        %v3321 = vpack.c.b16 %v2733, %v2719
        %v3322 = vpack.c.b16 %v2734, %v2720
        %v3323 = vpack.c.b16 %v2735, %v2721
        %v3324 = vpack.c.b16 %v2736, %v2722
        %v3325 = vpack.c.b16 %v2751, %v2737
        %v3326 = vpack.c.b16 %v2752, %v2738
        %v3327 = vpack.c.b16 %v2753, %v2739
        %v3328 = vpack.c.b16 %v2754, %v2740
        %v3329 = vpack.c.b16 %v2755, %v2741
        %v3330 = vpack.c.b16 %v2756, %v2742
        %v3331 = vpack.c.b16 %v2757, %v2743
        %v3332 = vpack.c.b16 %v2758, %v2744
        %v3333 = vpack.c.b16 %v2759, %v2745
        %v3334 = vpack.c.b16 %v2760, %v2746
        %v3335 = vpack.c.b16 %v2761, %v2747
        %v3336 = vpack.c.b16 %v2762, %v2748
        %v3337 = vpack.c.b16 %v2763, %v2749
        %v3338 = vpack.c.b16 %v2764, %v2750
        %v3339 = vpack.c.b16 %v2779, %v2765
        %v3340 = vpack.c.b16 %v2780, %v2766
        %v3341 = vpack.c.b16 %v2781, %v2767
        %v3342 = vpack.c.b16 %v2782, %v2768
        %v3343 = vpack.c.b16 %v2783, %v2769
        %v3344 = vpack.c.b16 %v2784, %v2770
        %v3345 = vpack.c.b16 %v2785, %v2771
        %v3346 = vpack.c.b16 %v2786, %v2772
        %v3347 = vpack.c.b16 %v2787, %v2773
        %v3348 = vpack.c.b16 %v2788, %v2774
        %v3349 = vpack.c.b16 %v2789, %v2775
        %v3350 = vpack.c.b16 %v2790, %v2776
        %v3351 = vpack.c.b16 %v2791, %v2777
        %v3352 = vpack.c.b16 %v2792, %v2778
        %v3353 = vpack.c.b16 %v2807, %v2793
        %v3354 = vpack.c.b16 %v2808, %v2794
        %v3355 = vpack.c.b16 %v2809, %v2795
        %v3356 = vpack.c.b16 %v2810, %v2796
        %v3357 = vpack.c.b16 %v2811, %v2797
        %v3358 = vpack.c.b16 %v2812, %v2798
        %v3359 = vpack.c.b16 %v2813, %v2799
        %v3360 = vpack.c.b16 %v2814, %v2800
        %v3361 = vpack.c.b16 %v2815, %v2801
        %v3362 = vpack.c.b16 %v2816, %v2802
        %v3363 = vpack.c.b16 %v2817, %v2803
        %v3364 = vpack.c.b16 %v2818, %v2804
        %v3365 = vpack.c.b16 %v2819, %v2805
        %v3366 = vpack.c.b16 %v2820, %v2806
        %v3367 = vpack.c.b16 %v2835, %v2821
        %v3368 = vpack.c.b16 %v2836, %v2822
        %v3369 = vpack.c.b16 %v2837, %v2823
        %v3370 = vpack.c.b16 %v2838, %v2824
        %v3371 = vpack.c.b16 %v2839, %v2825
        %v3372 = vpack.c.b16 %v2840, %v2826
        %v3373 = vpack.c.b16 %v2841, %v2827
        %v3374 = vpack.c.b16 %v2842, %v2828
        %v3375 = vpack.c.b16 %v2843, %v2829
        %v3376 = vpack.c.b16 %v2844, %v2830
        %v3377 = vpack.c.b16 %v2845, %v2831
        %v3378 = vpack.c.b16 %v2846, %v2832
        %v3379 = vpack.c.b16 %v2847, %v2833
        %v3380 = vpack.c.b16 %v2848, %v2834
        %v3381 = vpack.c.b16 %v2863, %v2849
        %v3382 = vpack.c.b16 %v2864, %v2850
        %v3383 = vpack.c.b16 %v2865, %v2851
        %v3384 = vpack.c.b16 %v2866, %v2852
        %v3385 = vpack.c.b16 %v2867, %v2853
        %v3386 = vpack.c.b16 %v2868, %v2854
        %v3387 = vpack.c.b16 %v2869, %v2855
        %v3388 = vpack.c.b16 %v2870, %v2856
        %v3389 = vpack.c.b16 %v2871, %v2857
        %v3390 = vpack.c.b16 %v2872, %v2858
        %v3391 = vpack.c.b16 %v2873, %v2859
        %v3392 = vpack.c.b16 %v2874, %v2860
        %v3393 = vpack.c.b16 %v2875, %v2861
        %v3394 = vpack.c.b16 %v2876, %v2862
        %v3395 = vpack.c.b16 %v2891, %v2877
        %v3396 = vpack.c.b16 %v2892, %v2878
        %v3397 = vpack.c.b16 %v2893, %v2879
        %v3398 = vpack.c.b16 %v2894, %v2880
        %v3399 = vpack.c.b16 %v2895, %v2881
        %v3400 = vpack.c.b16 %v2896, %v2882
        %v3401 = vpack.c.b16 %v2897, %v2883
        %v3402 = vpack.c.b16 %v2898, %v2884
        %v3403 = vpack.c.b16 %v2899, %v2885
        %v3404 = vpack.c.b16 %v2900, %v2886
        %v3405 = vpack.c.b16 %v2901, %v2887
        %v3406 = vpack.c.b16 %v2902, %v2888
        %v3407 = vpack.c.b16 %v2903, %v2889
        %v3408 = vpack.c.b16 %v2904, %v2890
        %v3409 = vpack.c.b16 %v2919, %v2905
        %v3410 = vpack.c.b16 %v2920, %v2906
        %v3411 = vpack.c.b16 %v2921, %v2907
        %v3412 = vpack.c.b16 %v2922, %v2908
        %v3413 = vpack.c.b16 %v2923, %v2909
        %v3414 = vpack.c.b16 %v2924, %v2910
        %v3415 = vpack.c.b16 %v2925, %v2911
        %v3416 = vpack.c.b16 %v2926, %v2912
        %v3417 = vpack.c.b16 %v2927, %v2913
        %v3418 = vpack.c.b16 %v2928, %v2914
        %v3419 = vpack.c.b16 %v2929, %v2915
        %v3420 = vpack.c.b16 %v2930, %v2916
        %v3421 = vpack.c.b16 %v2931, %v2917
        %v3422 = vpack.c.b16 %v2932, %v2918
        %v3423 = vpack.c.b16 %v2947, %v2933
        %v3424 = vpack.c.b16 %v2948, %v2934
        %v3425 = vpack.c.b16 %v2949, %v2935
        %v3426 = vpack.c.b16 %v2950, %v2936
        %v3427 = vpack.c.b16 %v2951, %v2937
        %v3428 = vpack.c.b16 %v2952, %v2938
        %v3429 = vpack.c.b16 %v2953, %v2939
        %v3430 = vpack.c.b16 %v2954, %v2940
        %v3431 = vpack.c.b16 %v2955, %v2941
        %v3432 = vpack.c.b16 %v2956, %v2942
        %v3433 = vpack.c.b16 %v2957, %v2943
        %v3434 = vpack.c.b16 %v2958, %v2944
        %v3435 = vpack.c.b16 %v2959, %v2945
        %v3436 = vpack.c.b16 %v2960, %v2946
        %v3437 = vpack.c.b16 %v2975, %v2961
        %v3438 = vpack.c.b16 %v2976, %v2962
        %v3439 = vpack.c.b16 %v2977, %v2963
        %v3440 = vpack.c.b16 %v2978, %v2964
        %v3441 = vpack.c.b16 %v2979, %v2965
        %v3442 = vpack.c.b16 %v2980, %v2966
        %v3443 = vpack.c.b16 %v2981, %v2967
        %v3444 = vpack.c.b16 %v2982, %v2968
        %v3445 = vpack.c.b16 %v2983, %v2969
        %v3446 = vpack.c.b16 %v2984, %v2970
        %v3447 = vpack.c.b16 %v2985, %v2971
        %v3448 = vpack.c.b16 %v2986, %v2972
        %v3449 = vpack.c.b16 %v2987, %v2973
        %v3450 = vpack.c.b16 %v2988, %v2974
        %v3451 = vpack.c.b16 %v3003, %v2989
        %v3452 = vpack.c.b16 %v3004, %v2990
        %v3453 = vpack.c.b16 %v3005, %v2991
        %v3454 = vpack.c.b16 %v3006, %v2992
        %v3455 = vpack.c.b16 %v3007, %v2993
        %v3456 = vpack.c.b16 %v3008, %v2994
        %v3457 = vpack.c.b16 %v3009, %v2995
        %v3458 = vpack.c.b16 %v3010, %v2996
        %v3459 = vpack.c.b16 %v3011, %v2997
        %v3460 = vpack.c.b16 %v3012, %v2998
        %v3461 = vpack.c.b16 %v3013, %v2999
        %v3462 = vpack.c.b16 %v3014, %v3000
        %v3463 = vpack.c.b16 %v3015, %v3001
        %v3464 = vpack.c.b16 %v3016, %v3002
        %3913 = vmatpush.bf16.msra.mxu0 %v3115
        %3914 = vmatpush.bf16.msra.mxu0 %v3101
        %3915 = vmatpush.bf16.msra.mxu0 %v3087
        %3916 = vmatpush.bf16.msra.mxu0 %v3073
        %3917 = vmatpush.bf16.msra.mxu0 %v3059
        %3918 = vmatpush.bf16.msra.mxu0 %v3045
        %3919 = vmatpush.bf16.msra.mxu0 %v3031
        %3920 = vmatpush.bf16.msra.mxu0 %v3017
        %3921 = vmatmul.bf16.gmra.mxu0 %v1221
        %v3922 = vpop.f32.mrf.mxu0
        %v3923 = vadd.f32 0.0, %v3922
        %v3924 = vpop.f32.mrf.mxu0
        %v3925 = vadd.f32 0.0, %v3924
        %3926 = vdwg.mxu0
        %3927 = vmatpush.bf16.msra.mxu0 %v3227
        %3928 = vmatpush.bf16.msra.mxu0 %v3213
        %3929 = vmatpush.bf16.msra.mxu0 %v3199
        %3930 = vmatpush.bf16.msra.mxu0 %v3185
        %3931 = vmatpush.bf16.msra.mxu0 %v3171
        %3932 = vmatpush.bf16.msra.mxu0 %v3157
        %3933 = vmatpush.bf16.msra.mxu0 %v3143
        %3934 = vmatpush.bf16.msra.mxu0 %v3129
        %3935 = vmatmul.bf16.gmra.mxu0 %v1222
        %v3936 = vpop.f32.mrf.mxu0
        %v3937 = vadd.f32 %v3923, %v3936
        %v3938 = vpop.f32.mrf.mxu0
        %v3939 = vadd.f32 %v3925, %v3938
        %3940 = vdwg.mxu0
        %3941 = vmatpush.bf16.msra.mxu0 %v3339
        %3942 = vmatpush.bf16.msra.mxu0 %v3325
        %3943 = vmatpush.bf16.msra.mxu0 %v3311
        %3944 = vmatpush.bf16.msra.mxu0 %v3297
        %3945 = vmatpush.bf16.msra.mxu0 %v3283
        %3946 = vmatpush.bf16.msra.mxu0 %v3269
        %3947 = vmatpush.bf16.msra.mxu0 %v3255
        %3948 = vmatpush.bf16.msra.mxu0 %v3241
        %3949 = vmatmul.bf16.gmra.mxu0 %v1223
        %v3950 = vpop.f32.mrf.mxu0
        %v3951 = vadd.f32 %v3937, %v3950
        %v3952 = vpop.f32.mrf.mxu0
        %v3953 = vadd.f32 %v3939, %v3952
        %3954 = vdwg.mxu0
        %3955 = vmatpush.bf16.msra.mxu0 %v3451
        %3956 = vmatpush.bf16.msra.mxu0 %v3437
        %3957 = vmatpush.bf16.msra.mxu0 %v3423
        %3958 = vmatpush.bf16.msra.mxu0 %v3409
        %3959 = vmatpush.bf16.msra.mxu0 %v3395
        %3960 = vmatpush.bf16.msra.mxu0 %v3381
        %3961 = vmatpush.bf16.msra.mxu0 %v3367
        %3962 = vmatpush.bf16.msra.mxu0 %v3353
        %3963 = vmatmul.bf16.gmra.mxu0 %v1224
        %v3964 = vpop.f32.mrf.mxu0
        %v3965 = vadd.f32 %v3951, %v3964
        %v3966 = vpop.f32.mrf.mxu0
        %v3967 = vadd.f32 %v3953, %v3966
        %3968 = vdwg.mxu0
        %3969 = vmatpush.bf16.msra.mxu0 %v3116
        %3970 = vmatpush.bf16.msra.mxu0 %v3102
        %3971 = vmatpush.bf16.msra.mxu0 %v3088
        %3972 = vmatpush.bf16.msra.mxu0 %v3074
        %3973 = vmatpush.bf16.msra.mxu0 %v3060
        %3974 = vmatpush.bf16.msra.mxu0 %v3046
        %3975 = vmatpush.bf16.msra.mxu0 %v3032
        %3976 = vmatpush.bf16.msra.mxu0 %v3018
        %3977 = vmatmul.bf16.gmra.mxu0 %v1221
        %v3978 = vpop.f32.mrf.mxu0
        %v3979 = vadd.f32 0.0, %v3978
        %v3980 = vpop.f32.mrf.mxu0
        %v3981 = vadd.f32 0.0, %v3980
        %3982 = vdwg.mxu0
        %3983 = vmatpush.bf16.msra.mxu0 %v3228
        %3984 = vmatpush.bf16.msra.mxu0 %v3214
        %3985 = vmatpush.bf16.msra.mxu0 %v3200
        %3986 = vmatpush.bf16.msra.mxu0 %v3186
        %3987 = vmatpush.bf16.msra.mxu0 %v3172
        %3988 = vmatpush.bf16.msra.mxu0 %v3158
        %3989 = vmatpush.bf16.msra.mxu0 %v3144
        %3990 = vmatpush.bf16.msra.mxu0 %v3130
        %3991 = vmatmul.bf16.gmra.mxu0 %v1222
        %v3992 = vpop.f32.mrf.mxu0
        %v3993 = vadd.f32 %v3979, %v3992
        %v3994 = vpop.f32.mrf.mxu0
        %v3995 = vadd.f32 %v3981, %v3994
        %3996 = vdwg.mxu0
        %3997 = vmatpush.bf16.msra.mxu0 %v3340
        %3998 = vmatpush.bf16.msra.mxu0 %v3326
        %3999 = vmatpush.bf16.msra.mxu0 %v3312
        %4000 = vmatpush.bf16.msra.mxu0 %v3298
        %4001 = vmatpush.bf16.msra.mxu0 %v3284
        %4002 = vmatpush.bf16.msra.mxu0 %v3270
        %4003 = vmatpush.bf16.msra.mxu0 %v3256
        %4004 = vmatpush.bf16.msra.mxu0 %v3242
        %4005 = vmatmul.bf16.gmra.mxu0 %v1223
        %v4006 = vpop.f32.mrf.mxu0
        %v4007 = vadd.f32 %v3993, %v4006
        %v4008 = vpop.f32.mrf.mxu0
        %v4009 = vadd.f32 %v3995, %v4008
        %4010 = vdwg.mxu0
        %4011 = vmatpush.bf16.msra.mxu0 %v3452
        %4012 = vmatpush.bf16.msra.mxu0 %v3438
        %4013 = vmatpush.bf16.msra.mxu0 %v3424
        %4014 = vmatpush.bf16.msra.mxu0 %v3410
        %4015 = vmatpush.bf16.msra.mxu0 %v3396
        %4016 = vmatpush.bf16.msra.mxu0 %v3382
        %4017 = vmatpush.bf16.msra.mxu0 %v3368
        %4018 = vmatpush.bf16.msra.mxu0 %v3354
        %4019 = vmatmul.bf16.gmra.mxu0 %v1224
        %v4020 = vpop.f32.mrf.mxu0
        %v4021 = vadd.f32 %v4007, %v4020
        %v4022 = vpop.f32.mrf.mxu0
        %v4023 = vadd.f32 %v4009, %v4022
        %4024 = vdwg.mxu0
        %4025 = vmatpush.bf16.msra.mxu0 %v3117
        %4026 = vmatpush.bf16.msra.mxu0 %v3103
        %4027 = vmatpush.bf16.msra.mxu0 %v3089
        %4028 = vmatpush.bf16.msra.mxu0 %v3075
        %4029 = vmatpush.bf16.msra.mxu0 %v3061
        %4030 = vmatpush.bf16.msra.mxu0 %v3047
        %4031 = vmatpush.bf16.msra.mxu0 %v3033
        %4032 = vmatpush.bf16.msra.mxu0 %v3019
        %4033 = vmatmul.bf16.gmra.mxu0 %v1221
        %v4034 = vpop.f32.mrf.mxu0
        %v4035 = vadd.f32 0.0, %v4034
        %v4036 = vpop.f32.mrf.mxu0
        %v4037 = vadd.f32 0.0, %v4036
        %4038 = vdwg.mxu0
        %4039 = vmatpush.bf16.msra.mxu0 %v3229
        %4040 = vmatpush.bf16.msra.mxu0 %v3215
        %4041 = vmatpush.bf16.msra.mxu0 %v3201
        %4042 = vmatpush.bf16.msra.mxu0 %v3187
        %4043 = vmatpush.bf16.msra.mxu0 %v3173
        %4044 = vmatpush.bf16.msra.mxu0 %v3159
        %4045 = vmatpush.bf16.msra.mxu0 %v3145
        %4046 = vmatpush.bf16.msra.mxu0 %v3131
        %4047 = vmatmul.bf16.gmra.mxu0 %v1222
        %v4048 = vpop.f32.mrf.mxu0
        %v4049 = vadd.f32 %v4035, %v4048
        %v4050 = vpop.f32.mrf.mxu0
        %v4051 = vadd.f32 %v4037, %v4050
        %4052 = vdwg.mxu0
        %4053 = vmatpush.bf16.msra.mxu0 %v3341
        %4054 = vmatpush.bf16.msra.mxu0 %v3327
        %4055 = vmatpush.bf16.msra.mxu0 %v3313
        %4056 = vmatpush.bf16.msra.mxu0 %v3299
        %4057 = vmatpush.bf16.msra.mxu0 %v3285
        %4058 = vmatpush.bf16.msra.mxu0 %v3271
        %4059 = vmatpush.bf16.msra.mxu0 %v3257
        %4060 = vmatpush.bf16.msra.mxu0 %v3243
        %4061 = vmatmul.bf16.gmra.mxu0 %v1223
        %v4062 = vpop.f32.mrf.mxu0
        %v4063 = vadd.f32 %v4049, %v4062
        %v4064 = vpop.f32.mrf.mxu0
        %v4065 = vadd.f32 %v4051, %v4064
        %4066 = vdwg.mxu0
        %4067 = vmatpush.bf16.msra.mxu0 %v3453
        %4068 = vmatpush.bf16.msra.mxu0 %v3439
        %4069 = vmatpush.bf16.msra.mxu0 %v3425
        %4070 = vmatpush.bf16.msra.mxu0 %v3411
        %4071 = vmatpush.bf16.msra.mxu0 %v3397
        %4072 = vmatpush.bf16.msra.mxu0 %v3383
        %4073 = vmatpush.bf16.msra.mxu0 %v3369
        %4074 = vmatpush.bf16.msra.mxu0 %v3355
        %4075 = vmatmul.bf16.gmra.mxu0 %v1224
        %v4076 = vpop.f32.mrf.mxu0
        %v4077 = vadd.f32 %v4063, %v4076
        %v4078 = vpop.f32.mrf.mxu0
        %v4079 = vadd.f32 %v4065, %v4078
        %4080 = vdwg.mxu0
        %4081 = vmatpush.bf16.msra.mxu0 %v3118
        %4082 = vmatpush.bf16.msra.mxu0 %v3104
        %4083 = vmatpush.bf16.msra.mxu0 %v3090
        %4084 = vmatpush.bf16.msra.mxu0 %v3076
        %4085 = vmatpush.bf16.msra.mxu0 %v3062
        %4086 = vmatpush.bf16.msra.mxu0 %v3048
        %4087 = vmatpush.bf16.msra.mxu0 %v3034
        %4088 = vmatpush.bf16.msra.mxu0 %v3020
        %4089 = vmatmul.bf16.gmra.mxu0 %v1221
        %v4090 = vpop.f32.mrf.mxu0
        %v4091 = vadd.f32 0.0, %v4090
        %v4092 = vpop.f32.mrf.mxu0
        %v4093 = vadd.f32 0.0, %v4092
        %4094 = vdwg.mxu0
        %4095 = vmatpush.bf16.msra.mxu0 %v3230
        %4096 = vmatpush.bf16.msra.mxu0 %v3216
        %4097 = vmatpush.bf16.msra.mxu0 %v3202
        %4098 = vmatpush.bf16.msra.mxu0 %v3188
        %4099 = vmatpush.bf16.msra.mxu0 %v3174
        %4100 = vmatpush.bf16.msra.mxu0 %v3160
        %4101 = vmatpush.bf16.msra.mxu0 %v3146
        %4102 = vmatpush.bf16.msra.mxu0 %v3132
        %4103 = vmatmul.bf16.gmra.mxu0 %v1222
        %v4104 = vpop.f32.mrf.mxu0
        %v4105 = vadd.f32 %v4091, %v4104
        %v4106 = vpop.f32.mrf.mxu0
        %v4107 = vadd.f32 %v4093, %v4106
        %4108 = vdwg.mxu0
        %4109 = vmatpush.bf16.msra.mxu0 %v3342
        %4110 = vmatpush.bf16.msra.mxu0 %v3328
        %4111 = vmatpush.bf16.msra.mxu0 %v3314
        %4112 = vmatpush.bf16.msra.mxu0 %v3300
        %4113 = vmatpush.bf16.msra.mxu0 %v3286
        %4114 = vmatpush.bf16.msra.mxu0 %v3272
        %4115 = vmatpush.bf16.msra.mxu0 %v3258
        %4116 = vmatpush.bf16.msra.mxu0 %v3244
        %4117 = vmatmul.bf16.gmra.mxu0 %v1223
        %v4118 = vpop.f32.mrf.mxu0
        %v4119 = vadd.f32 %v4105, %v4118
        %v4120 = vpop.f32.mrf.mxu0
        %v4121 = vadd.f32 %v4107, %v4120
        %4122 = vdwg.mxu0
        %4123 = vmatpush.bf16.msra.mxu0 %v3454
        %4124 = vmatpush.bf16.msra.mxu0 %v3440
        %4125 = vmatpush.bf16.msra.mxu0 %v3426
        %4126 = vmatpush.bf16.msra.mxu0 %v3412
        %4127 = vmatpush.bf16.msra.mxu0 %v3398
        %4128 = vmatpush.bf16.msra.mxu0 %v3384
        %4129 = vmatpush.bf16.msra.mxu0 %v3370
        %4130 = vmatpush.bf16.msra.mxu0 %v3356
        %4131 = vmatmul.bf16.gmra.mxu0 %v1224
        %v4132 = vpop.f32.mrf.mxu0
        %v4133 = vadd.f32 %v4119, %v4132
        %v4134 = vpop.f32.mrf.mxu0
        %v4135 = vadd.f32 %v4121, %v4134
        %4136 = vdwg.mxu0
        %4137 = vmatpush.bf16.msra.mxu0 %v3119
        %4138 = vmatpush.bf16.msra.mxu0 %v3105
        %4139 = vmatpush.bf16.msra.mxu0 %v3091
        %4140 = vmatpush.bf16.msra.mxu0 %v3077
        %4141 = vmatpush.bf16.msra.mxu0 %v3063
        %4142 = vmatpush.bf16.msra.mxu0 %v3049
        %4143 = vmatpush.bf16.msra.mxu0 %v3035
        %4144 = vmatpush.bf16.msra.mxu0 %v3021
        %4145 = vmatmul.bf16.gmra.mxu0 %v1221
        %v4146 = vpop.f32.mrf.mxu0
        %v4147 = vadd.f32 0.0, %v4146
        %v4148 = vpop.f32.mrf.mxu0
        %v4149 = vadd.f32 0.0, %v4148
        %4150 = vdwg.mxu0
        %4151 = vmatpush.bf16.msra.mxu0 %v3231
        %4152 = vmatpush.bf16.msra.mxu0 %v3217
        %4153 = vmatpush.bf16.msra.mxu0 %v3203
        %4154 = vmatpush.bf16.msra.mxu0 %v3189
        %4155 = vmatpush.bf16.msra.mxu0 %v3175
        %4156 = vmatpush.bf16.msra.mxu0 %v3161
        %4157 = vmatpush.bf16.msra.mxu0 %v3147
        %4158 = vmatpush.bf16.msra.mxu0 %v3133
        %4159 = vmatmul.bf16.gmra.mxu0 %v1222
        %v4160 = vpop.f32.mrf.mxu0
        %v4161 = vadd.f32 %v4147, %v4160
        %v4162 = vpop.f32.mrf.mxu0
        %v4163 = vadd.f32 %v4149, %v4162
        %4164 = vdwg.mxu0
        %4165 = vmatpush.bf16.msra.mxu0 %v3343
        %4166 = vmatpush.bf16.msra.mxu0 %v3329
        %4167 = vmatpush.bf16.msra.mxu0 %v3315
        %4168 = vmatpush.bf16.msra.mxu0 %v3301
        %4169 = vmatpush.bf16.msra.mxu0 %v3287
        %4170 = vmatpush.bf16.msra.mxu0 %v3273
        %4171 = vmatpush.bf16.msra.mxu0 %v3259
        %4172 = vmatpush.bf16.msra.mxu0 %v3245
        %4173 = vmatmul.bf16.gmra.mxu0 %v1223
        %v4174 = vpop.f32.mrf.mxu0
        %v4175 = vadd.f32 %v4161, %v4174
        %v4176 = vpop.f32.mrf.mxu0
        %v4177 = vadd.f32 %v4163, %v4176
        %4178 = vdwg.mxu0
        %4179 = vmatpush.bf16.msra.mxu0 %v3455
        %4180 = vmatpush.bf16.msra.mxu0 %v3441
        %4181 = vmatpush.bf16.msra.mxu0 %v3427
        %4182 = vmatpush.bf16.msra.mxu0 %v3413
        %4183 = vmatpush.bf16.msra.mxu0 %v3399
        %4184 = vmatpush.bf16.msra.mxu0 %v3385
        %4185 = vmatpush.bf16.msra.mxu0 %v3371
        %4186 = vmatpush.bf16.msra.mxu0 %v3357
        %4187 = vmatmul.bf16.gmra.mxu0 %v1224
        %v4188 = vpop.f32.mrf.mxu0
        %v4189 = vadd.f32 %v4175, %v4188
        %v4190 = vpop.f32.mrf.mxu0
        %v4191 = vadd.f32 %v4177, %v4190
        %4192 = vdwg.mxu0
        %4193 = vmatpush.bf16.msra.mxu0 %v3120
        %4194 = vmatpush.bf16.msra.mxu0 %v3106
        %4195 = vmatpush.bf16.msra.mxu0 %v3092
        %4196 = vmatpush.bf16.msra.mxu0 %v3078
        %4197 = vmatpush.bf16.msra.mxu0 %v3064
        %4198 = vmatpush.bf16.msra.mxu0 %v3050
        %4199 = vmatpush.bf16.msra.mxu0 %v3036
        %4200 = vmatpush.bf16.msra.mxu0 %v3022
        %4201 = vmatmul.bf16.gmra.mxu0 %v1221
        %v4202 = vpop.f32.mrf.mxu0
        %v4203 = vadd.f32 0.0, %v4202
        %v4204 = vpop.f32.mrf.mxu0
        %v4205 = vadd.f32 0.0, %v4204
        %4206 = vdwg.mxu0
        %4207 = vmatpush.bf16.msra.mxu0 %v3232
        %4208 = vmatpush.bf16.msra.mxu0 %v3218
        %4209 = vmatpush.bf16.msra.mxu0 %v3204
        %4210 = vmatpush.bf16.msra.mxu0 %v3190
        %4211 = vmatpush.bf16.msra.mxu0 %v3176
        %4212 = vmatpush.bf16.msra.mxu0 %v3162
        %4213 = vmatpush.bf16.msra.mxu0 %v3148
        %4214 = vmatpush.bf16.msra.mxu0 %v3134
        %4215 = vmatmul.bf16.gmra.mxu0 %v1222
        %v4216 = vpop.f32.mrf.mxu0
        %v4217 = vadd.f32 %v4203, %v4216
        %v4218 = vpop.f32.mrf.mxu0
        %v4219 = vadd.f32 %v4205, %v4218
        %4220 = vdwg.mxu0
        %4221 = vmatpush.bf16.msra.mxu0 %v3344
        %4222 = vmatpush.bf16.msra.mxu0 %v3330
        %4223 = vmatpush.bf16.msra.mxu0 %v3316
        %4224 = vmatpush.bf16.msra.mxu0 %v3302
        %4225 = vmatpush.bf16.msra.mxu0 %v3288
        %4226 = vmatpush.bf16.msra.mxu0 %v3274
        %4227 = vmatpush.bf16.msra.mxu0 %v3260
        %4228 = vmatpush.bf16.msra.mxu0 %v3246
        %4229 = vmatmul.bf16.gmra.mxu0 %v1223
        %v4230 = vpop.f32.mrf.mxu0
        %v4231 = vadd.f32 %v4217, %v4230
        %v4232 = vpop.f32.mrf.mxu0
        %v4233 = vadd.f32 %v4219, %v4232
        %4234 = vdwg.mxu0
        %4235 = vmatpush.bf16.msra.mxu0 %v3456
        %4236 = vmatpush.bf16.msra.mxu0 %v3442
        %4237 = vmatpush.bf16.msra.mxu0 %v3428
        %4238 = vmatpush.bf16.msra.mxu0 %v3414
        %4239 = vmatpush.bf16.msra.mxu0 %v3400
        %4240 = vmatpush.bf16.msra.mxu0 %v3386
        %4241 = vmatpush.bf16.msra.mxu0 %v3372
        %4242 = vmatpush.bf16.msra.mxu0 %v3358
        %4243 = vmatmul.bf16.gmra.mxu0 %v1224
        %v4244 = vpop.f32.mrf.mxu0
        %v4245 = vadd.f32 %v4231, %v4244
        %v4246 = vpop.f32.mrf.mxu0
        %v4247 = vadd.f32 %v4233, %v4246
        %4248 = vdwg.mxu0
        %4249 = vmatpush.bf16.msra.mxu0 %v3121
        %4250 = vmatpush.bf16.msra.mxu0 %v3107
        %4251 = vmatpush.bf16.msra.mxu0 %v3093
        %4252 = vmatpush.bf16.msra.mxu0 %v3079
        %4253 = vmatpush.bf16.msra.mxu0 %v3065
        %4254 = vmatpush.bf16.msra.mxu0 %v3051
        %4255 = vmatpush.bf16.msra.mxu0 %v3037
        %4256 = vmatpush.bf16.msra.mxu0 %v3023
        %4257 = vmatmul.bf16.gmra.mxu0 %v1221
        %v4258 = vpop.f32.mrf.mxu0
        %v4259 = vadd.f32 0.0, %v4258
        %v4260 = vpop.f32.mrf.mxu0
        %v4261 = vadd.f32 0.0, %v4260
        %4262 = vdwg.mxu0
        %4263 = vmatpush.bf16.msra.mxu0 %v3233
        %4264 = vmatpush.bf16.msra.mxu0 %v3219
        %4265 = vmatpush.bf16.msra.mxu0 %v3205
        %4266 = vmatpush.bf16.msra.mxu0 %v3191
        %4267 = vmatpush.bf16.msra.mxu0 %v3177
        %4268 = vmatpush.bf16.msra.mxu0 %v3163
        %4269 = vmatpush.bf16.msra.mxu0 %v3149
        %4270 = vmatpush.bf16.msra.mxu0 %v3135
        %4271 = vmatmul.bf16.gmra.mxu0 %v1222
        %v4272 = vpop.f32.mrf.mxu0
        %v4273 = vadd.f32 %v4259, %v4272
        %v4274 = vpop.f32.mrf.mxu0
        %v4275 = vadd.f32 %v4261, %v4274
        %4276 = vdwg.mxu0
        %4277 = vmatpush.bf16.msra.mxu0 %v3345
        %4278 = vmatpush.bf16.msra.mxu0 %v3331
        %4279 = vmatpush.bf16.msra.mxu0 %v3317
        %4280 = vmatpush.bf16.msra.mxu0 %v3303
        %4281 = vmatpush.bf16.msra.mxu0 %v3289
        %4282 = vmatpush.bf16.msra.mxu0 %v3275
        %4283 = vmatpush.bf16.msra.mxu0 %v3261
        %4284 = vmatpush.bf16.msra.mxu0 %v3247
        %4285 = vmatmul.bf16.gmra.mxu0 %v1223
        %v4286 = vpop.f32.mrf.mxu0
        %v4287 = vadd.f32 %v4273, %v4286
        %v4288 = vpop.f32.mrf.mxu0
        %v4289 = vadd.f32 %v4275, %v4288
        %4290 = vdwg.mxu0
        %4291 = vmatpush.bf16.msra.mxu0 %v3457
        %4292 = vmatpush.bf16.msra.mxu0 %v3443
        %4293 = vmatpush.bf16.msra.mxu0 %v3429
        %4294 = vmatpush.bf16.msra.mxu0 %v3415
        %4295 = vmatpush.bf16.msra.mxu0 %v3401
        %4296 = vmatpush.bf16.msra.mxu0 %v3387
        %4297 = vmatpush.bf16.msra.mxu0 %v3373
        %4298 = vmatpush.bf16.msra.mxu0 %v3359
        %4299 = vmatmul.bf16.gmra.mxu0 %v1224
        %v4300 = vpop.f32.mrf.mxu0
        %v4301 = vadd.f32 %v4287, %v4300
        %v4302 = vpop.f32.mrf.mxu0
        %v4303 = vadd.f32 %v4289, %v4302
        %4304 = vdwg.mxu0
        %4305 = vmatpush.bf16.msra.mxu0 %v3122
        %4306 = vmatpush.bf16.msra.mxu0 %v3108
        %4307 = vmatpush.bf16.msra.mxu0 %v3094
        %4308 = vmatpush.bf16.msra.mxu0 %v3080
        %4309 = vmatpush.bf16.msra.mxu0 %v3066
        %4310 = vmatpush.bf16.msra.mxu0 %v3052
        %4311 = vmatpush.bf16.msra.mxu0 %v3038
        %4312 = vmatpush.bf16.msra.mxu0 %v3024
        %4313 = vmatmul.bf16.gmra.mxu0 %v1221
        %v4314 = vpop.f32.mrf.mxu0
        %v4315 = vadd.f32 0.0, %v4314
        %v4316 = vpop.f32.mrf.mxu0
        %v4317 = vadd.f32 0.0, %v4316
        %4318 = vdwg.mxu0
        %4319 = vmatpush.bf16.msra.mxu0 %v3234
        %4320 = vmatpush.bf16.msra.mxu0 %v3220
        %4321 = vmatpush.bf16.msra.mxu0 %v3206
        %4322 = vmatpush.bf16.msra.mxu0 %v3192
        %4323 = vmatpush.bf16.msra.mxu0 %v3178
        %4324 = vmatpush.bf16.msra.mxu0 %v3164
        %4325 = vmatpush.bf16.msra.mxu0 %v3150
        %4326 = vmatpush.bf16.msra.mxu0 %v3136
        %4327 = vmatmul.bf16.gmra.mxu0 %v1222
        %v4328 = vpop.f32.mrf.mxu0
        %v4329 = vadd.f32 %v4315, %v4328
        %v4330 = vpop.f32.mrf.mxu0
        %v4331 = vadd.f32 %v4317, %v4330
        %4332 = vdwg.mxu0
        %4333 = vmatpush.bf16.msra.mxu0 %v3346
        %4334 = vmatpush.bf16.msra.mxu0 %v3332
        %4335 = vmatpush.bf16.msra.mxu0 %v3318
        %4336 = vmatpush.bf16.msra.mxu0 %v3304
        %4337 = vmatpush.bf16.msra.mxu0 %v3290
        %4338 = vmatpush.bf16.msra.mxu0 %v3276
        %4339 = vmatpush.bf16.msra.mxu0 %v3262
        %4340 = vmatpush.bf16.msra.mxu0 %v3248
        %4341 = vmatmul.bf16.gmra.mxu0 %v1223
        %v4342 = vpop.f32.mrf.mxu0
        %v4343 = vadd.f32 %v4329, %v4342
        %v4344 = vpop.f32.mrf.mxu0
        %v4345 = vadd.f32 %v4331, %v4344
        %4346 = vdwg.mxu0
        %4347 = vmatpush.bf16.msra.mxu0 %v3458
        %4348 = vmatpush.bf16.msra.mxu0 %v3444
        %4349 = vmatpush.bf16.msra.mxu0 %v3430
        %4350 = vmatpush.bf16.msra.mxu0 %v3416
        %4351 = vmatpush.bf16.msra.mxu0 %v3402
        %4352 = vmatpush.bf16.msra.mxu0 %v3388
        %4353 = vmatpush.bf16.msra.mxu0 %v3374
        %4354 = vmatpush.bf16.msra.mxu0 %v3360
        %4355 = vmatmul.bf16.gmra.mxu0 %v1224
        %v4356 = vpop.f32.mrf.mxu0
        %v4357 = vadd.f32 %v4343, %v4356
        %v4358 = vpop.f32.mrf.mxu0
        %v4359 = vadd.f32 %v4345, %v4358
        %4360 = vdwg.mxu0
        %4361 = vmatpush.bf16.msra.mxu0 %v3123
        %4362 = vmatpush.bf16.msra.mxu0 %v3109
        %4363 = vmatpush.bf16.msra.mxu0 %v3095
        %4364 = vmatpush.bf16.msra.mxu0 %v3081
        %4365 = vmatpush.bf16.msra.mxu0 %v3067
        %4366 = vmatpush.bf16.msra.mxu0 %v3053
        %4367 = vmatpush.bf16.msra.mxu0 %v3039
        %4368 = vmatpush.bf16.msra.mxu0 %v3025
        %4369 = vmatmul.bf16.gmra.mxu0 %v1221
        %v4370 = vpop.f32.mrf.mxu0
        %v4371 = vadd.f32 0.0, %v4370
        %v4372 = vpop.f32.mrf.mxu0
        %v4373 = vadd.f32 0.0, %v4372
        %4374 = vdwg.mxu0
        %4375 = vmatpush.bf16.msra.mxu0 %v3235
        %4376 = vmatpush.bf16.msra.mxu0 %v3221
        %4377 = vmatpush.bf16.msra.mxu0 %v3207
        %4378 = vmatpush.bf16.msra.mxu0 %v3193
        %4379 = vmatpush.bf16.msra.mxu0 %v3179
        %4380 = vmatpush.bf16.msra.mxu0 %v3165
        %4381 = vmatpush.bf16.msra.mxu0 %v3151
        %4382 = vmatpush.bf16.msra.mxu0 %v3137
        %4383 = vmatmul.bf16.gmra.mxu0 %v1222
        %v4384 = vpop.f32.mrf.mxu0
        %v4385 = vadd.f32 %v4371, %v4384
        %v4386 = vpop.f32.mrf.mxu0
        %v4387 = vadd.f32 %v4373, %v4386
        %4388 = vdwg.mxu0
        %4389 = vmatpush.bf16.msra.mxu0 %v3347
        %4390 = vmatpush.bf16.msra.mxu0 %v3333
        %4391 = vmatpush.bf16.msra.mxu0 %v3319
        %4392 = vmatpush.bf16.msra.mxu0 %v3305
        %4393 = vmatpush.bf16.msra.mxu0 %v3291
        %4394 = vmatpush.bf16.msra.mxu0 %v3277
        %4395 = vmatpush.bf16.msra.mxu0 %v3263
        %4396 = vmatpush.bf16.msra.mxu0 %v3249
        %4397 = vmatmul.bf16.gmra.mxu0 %v1223
        %v4398 = vpop.f32.mrf.mxu0
        %v4399 = vadd.f32 %v4385, %v4398
        %v4400 = vpop.f32.mrf.mxu0
        %v4401 = vadd.f32 %v4387, %v4400
        %4402 = vdwg.mxu0
        %4403 = vmatpush.bf16.msra.mxu0 %v3459
        %4404 = vmatpush.bf16.msra.mxu0 %v3445
        %4405 = vmatpush.bf16.msra.mxu0 %v3431
        %4406 = vmatpush.bf16.msra.mxu0 %v3417
        %4407 = vmatpush.bf16.msra.mxu0 %v3403
        %4408 = vmatpush.bf16.msra.mxu0 %v3389
        %4409 = vmatpush.bf16.msra.mxu0 %v3375
        %4410 = vmatpush.bf16.msra.mxu0 %v3361
        %4411 = vmatmul.bf16.gmra.mxu0 %v1224
        %v4412 = vpop.f32.mrf.mxu0
        %v4413 = vadd.f32 %v4399, %v4412
        %v4414 = vpop.f32.mrf.mxu0
        %v4415 = vadd.f32 %v4401, %v4414
        %4416 = vdwg.mxu0
        %4417 = vmatpush.bf16.msra.mxu0 %v3124
        %4418 = vmatpush.bf16.msra.mxu0 %v3110
        %4419 = vmatpush.bf16.msra.mxu0 %v3096
        %4420 = vmatpush.bf16.msra.mxu0 %v3082
        %4421 = vmatpush.bf16.msra.mxu0 %v3068
        %4422 = vmatpush.bf16.msra.mxu0 %v3054
        %4423 = vmatpush.bf16.msra.mxu0 %v3040
        %4424 = vmatpush.bf16.msra.mxu0 %v3026
        %4425 = vmatmul.bf16.gmra.mxu0 %v1221
        %v4426 = vpop.f32.mrf.mxu0
        %v4427 = vadd.f32 0.0, %v4426
        %v4428 = vpop.f32.mrf.mxu0
        %v4429 = vadd.f32 0.0, %v4428
        %4430 = vdwg.mxu0
        %4431 = vmatpush.bf16.msra.mxu0 %v3236
        %4432 = vmatpush.bf16.msra.mxu0 %v3222
        %4433 = vmatpush.bf16.msra.mxu0 %v3208
        %4434 = vmatpush.bf16.msra.mxu0 %v3194
        %4435 = vmatpush.bf16.msra.mxu0 %v3180
        %4436 = vmatpush.bf16.msra.mxu0 %v3166
        %4437 = vmatpush.bf16.msra.mxu0 %v3152
        %4438 = vmatpush.bf16.msra.mxu0 %v3138
        %4439 = vmatmul.bf16.gmra.mxu0 %v1222
        %v4440 = vpop.f32.mrf.mxu0
        %v4441 = vadd.f32 %v4427, %v4440
        %v4442 = vpop.f32.mrf.mxu0
        %v4443 = vadd.f32 %v4429, %v4442
        %4444 = vdwg.mxu0
        %4445 = vmatpush.bf16.msra.mxu0 %v3348
        %4446 = vmatpush.bf16.msra.mxu0 %v3334
        %4447 = vmatpush.bf16.msra.mxu0 %v3320
        %4448 = vmatpush.bf16.msra.mxu0 %v3306
        %4449 = vmatpush.bf16.msra.mxu0 %v3292
        %4450 = vmatpush.bf16.msra.mxu0 %v3278
        %4451 = vmatpush.bf16.msra.mxu0 %v3264
        %4452 = vmatpush.bf16.msra.mxu0 %v3250
        %4453 = vmatmul.bf16.gmra.mxu0 %v1223
        %v4454 = vpop.f32.mrf.mxu0
        %v4455 = vadd.f32 %v4441, %v4454
        %v4456 = vpop.f32.mrf.mxu0
        %v4457 = vadd.f32 %v4443, %v4456
        %4458 = vdwg.mxu0
        %4459 = vmatpush.bf16.msra.mxu0 %v3460
        %4460 = vmatpush.bf16.msra.mxu0 %v3446
        %4461 = vmatpush.bf16.msra.mxu0 %v3432
        %4462 = vmatpush.bf16.msra.mxu0 %v3418
        %4463 = vmatpush.bf16.msra.mxu0 %v3404
        %4464 = vmatpush.bf16.msra.mxu0 %v3390
        %4465 = vmatpush.bf16.msra.mxu0 %v3376
        %4466 = vmatpush.bf16.msra.mxu0 %v3362
        %4467 = vmatmul.bf16.gmra.mxu0 %v1224
        %v4468 = vpop.f32.mrf.mxu0
        %v4469 = vadd.f32 %v4455, %v4468
        %v4470 = vpop.f32.mrf.mxu0
        %v4471 = vadd.f32 %v4457, %v4470
        %4472 = vdwg.mxu0
        %4473 = vmatpush.bf16.msra.mxu0 %v3125
        %4474 = vmatpush.bf16.msra.mxu0 %v3111
        %4475 = vmatpush.bf16.msra.mxu0 %v3097
        %4476 = vmatpush.bf16.msra.mxu0 %v3083
        %4477 = vmatpush.bf16.msra.mxu0 %v3069
        %4478 = vmatpush.bf16.msra.mxu0 %v3055
        %4479 = vmatpush.bf16.msra.mxu0 %v3041
        %4480 = vmatpush.bf16.msra.mxu0 %v3027
        %4481 = vmatmul.bf16.gmra.mxu0 %v1221
        %v4482 = vpop.f32.mrf.mxu0
        %v4483 = vadd.f32 0.0, %v4482
        %v4484 = vpop.f32.mrf.mxu0
        %v4485 = vadd.f32 0.0, %v4484
        %4486 = vdwg.mxu0
        %4487 = vmatpush.bf16.msra.mxu0 %v3237
        %4488 = vmatpush.bf16.msra.mxu0 %v3223
        %4489 = vmatpush.bf16.msra.mxu0 %v3209
        %4490 = vmatpush.bf16.msra.mxu0 %v3195
        %4491 = vmatpush.bf16.msra.mxu0 %v3181
        %4492 = vmatpush.bf16.msra.mxu0 %v3167
        %4493 = vmatpush.bf16.msra.mxu0 %v3153
        %4494 = vmatpush.bf16.msra.mxu0 %v3139
        %4495 = vmatmul.bf16.gmra.mxu0 %v1222
        %v4496 = vpop.f32.mrf.mxu0
        %v4497 = vadd.f32 %v4483, %v4496
        %v4498 = vpop.f32.mrf.mxu0
        %v4499 = vadd.f32 %v4485, %v4498
        %4500 = vdwg.mxu0
        %4501 = vmatpush.bf16.msra.mxu0 %v3349
        %4502 = vmatpush.bf16.msra.mxu0 %v3335
        %4503 = vmatpush.bf16.msra.mxu0 %v3321
        %4504 = vmatpush.bf16.msra.mxu0 %v3307
        %4505 = vmatpush.bf16.msra.mxu0 %v3293
        %4506 = vmatpush.bf16.msra.mxu0 %v3279
        %4507 = vmatpush.bf16.msra.mxu0 %v3265
        %4508 = vmatpush.bf16.msra.mxu0 %v3251
        %4509 = vmatmul.bf16.gmra.mxu0 %v1223
        %v4510 = vpop.f32.mrf.mxu0
        %v4511 = vadd.f32 %v4497, %v4510
        %v4512 = vpop.f32.mrf.mxu0
        %v4513 = vadd.f32 %v4499, %v4512
        %4514 = vdwg.mxu0
        %4515 = vmatpush.bf16.msra.mxu0 %v3461
        %4516 = vmatpush.bf16.msra.mxu0 %v3447
        %4517 = vmatpush.bf16.msra.mxu0 %v3433
        %4518 = vmatpush.bf16.msra.mxu0 %v3419
        %4519 = vmatpush.bf16.msra.mxu0 %v3405
        %4520 = vmatpush.bf16.msra.mxu0 %v3391
        %4521 = vmatpush.bf16.msra.mxu0 %v3377
        %4522 = vmatpush.bf16.msra.mxu0 %v3363
        %4523 = vmatmul.bf16.gmra.mxu0 %v1224
        %v4524 = vpop.f32.mrf.mxu0
        %v4525 = vadd.f32 %v4511, %v4524
        %v4526 = vpop.f32.mrf.mxu0
        %v4527 = vadd.f32 %v4513, %v4526
        %4528 = vdwg.mxu0
        %4529 = vmatpush.bf16.msra.mxu0 %v3126
        %4530 = vmatpush.bf16.msra.mxu0 %v3112
        %4531 = vmatpush.bf16.msra.mxu0 %v3098
        %4532 = vmatpush.bf16.msra.mxu0 %v3084
        %4533 = vmatpush.bf16.msra.mxu0 %v3070
        %4534 = vmatpush.bf16.msra.mxu0 %v3056
        %4535 = vmatpush.bf16.msra.mxu0 %v3042
        %4536 = vmatpush.bf16.msra.mxu0 %v3028
        %4537 = vmatmul.bf16.gmra.mxu0 %v1221
        %v4538 = vpop.f32.mrf.mxu0
        %v4539 = vadd.f32 0.0, %v4538
        %v4540 = vpop.f32.mrf.mxu0
        %v4541 = vadd.f32 0.0, %v4540
        %4542 = vdwg.mxu0
        %4543 = vmatpush.bf16.msra.mxu0 %v3238
        %4544 = vmatpush.bf16.msra.mxu0 %v3224
        %4545 = vmatpush.bf16.msra.mxu0 %v3210
        %4546 = vmatpush.bf16.msra.mxu0 %v3196
        %4547 = vmatpush.bf16.msra.mxu0 %v3182
        %4548 = vmatpush.bf16.msra.mxu0 %v3168
        %4549 = vmatpush.bf16.msra.mxu0 %v3154
        %4550 = vmatpush.bf16.msra.mxu0 %v3140
        %4551 = vmatmul.bf16.gmra.mxu0 %v1222
        %v4552 = vpop.f32.mrf.mxu0
        %v4553 = vadd.f32 %v4539, %v4552
        %v4554 = vpop.f32.mrf.mxu0
        %v4555 = vadd.f32 %v4541, %v4554
        %4556 = vdwg.mxu0
        %4557 = vmatpush.bf16.msra.mxu0 %v3350
        %4558 = vmatpush.bf16.msra.mxu0 %v3336
        %4559 = vmatpush.bf16.msra.mxu0 %v3322
        %4560 = vmatpush.bf16.msra.mxu0 %v3308
        %4561 = vmatpush.bf16.msra.mxu0 %v3294
        %4562 = vmatpush.bf16.msra.mxu0 %v3280
        %4563 = vmatpush.bf16.msra.mxu0 %v3266
        %4564 = vmatpush.bf16.msra.mxu0 %v3252
        %4565 = vmatmul.bf16.gmra.mxu0 %v1223
        %v4566 = vpop.f32.mrf.mxu0
        %v4567 = vadd.f32 %v4553, %v4566
        %v4568 = vpop.f32.mrf.mxu0
        %v4569 = vadd.f32 %v4555, %v4568
        %4570 = vdwg.mxu0
        %4571 = vmatpush.bf16.msra.mxu0 %v3462
        %4572 = vmatpush.bf16.msra.mxu0 %v3448
        %4573 = vmatpush.bf16.msra.mxu0 %v3434
        %4574 = vmatpush.bf16.msra.mxu0 %v3420
        %4575 = vmatpush.bf16.msra.mxu0 %v3406
        %4576 = vmatpush.bf16.msra.mxu0 %v3392
        %4577 = vmatpush.bf16.msra.mxu0 %v3378
        %4578 = vmatpush.bf16.msra.mxu0 %v3364
        %4579 = vmatmul.bf16.gmra.mxu0 %v1224
        %v4580 = vpop.f32.mrf.mxu0
        %v4581 = vadd.f32 %v4567, %v4580
        %v4582 = vpop.f32.mrf.mxu0
        %v4583 = vadd.f32 %v4569, %v4582
        %4584 = vdwg.mxu0
        %4585 = vmatpush.bf16.msra.mxu0 %v3127
        %4586 = vmatpush.bf16.msra.mxu0 %v3113
        %4587 = vmatpush.bf16.msra.mxu0 %v3099
        %4588 = vmatpush.bf16.msra.mxu0 %v3085
        %4589 = vmatpush.bf16.msra.mxu0 %v3071
        %4590 = vmatpush.bf16.msra.mxu0 %v3057
        %4591 = vmatpush.bf16.msra.mxu0 %v3043
        %4592 = vmatpush.bf16.msra.mxu0 %v3029
        %4593 = vmatmul.bf16.gmra.mxu0 %v1221
        %v4594 = vpop.f32.mrf.mxu0
        %v4595 = vadd.f32 0.0, %v4594
        %v4596 = vpop.f32.mrf.mxu0
        %v4597 = vadd.f32 0.0, %v4596
        %4598 = vdwg.mxu0
        %4599 = vmatpush.bf16.msra.mxu0 %v3239
        %4600 = vmatpush.bf16.msra.mxu0 %v3225
        %4601 = vmatpush.bf16.msra.mxu0 %v3211
        %4602 = vmatpush.bf16.msra.mxu0 %v3197
        %4603 = vmatpush.bf16.msra.mxu0 %v3183
        %4604 = vmatpush.bf16.msra.mxu0 %v3169
        %4605 = vmatpush.bf16.msra.mxu0 %v3155
        %4606 = vmatpush.bf16.msra.mxu0 %v3141
        %4607 = vmatmul.bf16.gmra.mxu0 %v1222
        %v4608 = vpop.f32.mrf.mxu0
        %v4609 = vadd.f32 %v4595, %v4608
        %v4610 = vpop.f32.mrf.mxu0
        %v4611 = vadd.f32 %v4597, %v4610
        %4612 = vdwg.mxu0
        %4613 = vmatpush.bf16.msra.mxu0 %v3351
        %4614 = vmatpush.bf16.msra.mxu0 %v3337
        %4615 = vmatpush.bf16.msra.mxu0 %v3323
        %4616 = vmatpush.bf16.msra.mxu0 %v3309
        %4617 = vmatpush.bf16.msra.mxu0 %v3295
        %4618 = vmatpush.bf16.msra.mxu0 %v3281
        %4619 = vmatpush.bf16.msra.mxu0 %v3267
        %4620 = vmatpush.bf16.msra.mxu0 %v3253
        %4621 = vmatmul.bf16.gmra.mxu0 %v1223
        %v4622 = vpop.f32.mrf.mxu0
        %v4623 = vadd.f32 %v4609, %v4622
        %v4624 = vpop.f32.mrf.mxu0
        %v4625 = vadd.f32 %v4611, %v4624
        %4626 = vdwg.mxu0
        %4627 = vmatpush.bf16.msra.mxu0 %v3463
        %4628 = vmatpush.bf16.msra.mxu0 %v3449
        %4629 = vmatpush.bf16.msra.mxu0 %v3435
        %4630 = vmatpush.bf16.msra.mxu0 %v3421
        %4631 = vmatpush.bf16.msra.mxu0 %v3407
        %4632 = vmatpush.bf16.msra.mxu0 %v3393
        %4633 = vmatpush.bf16.msra.mxu0 %v3379
        %4634 = vmatpush.bf16.msra.mxu0 %v3365
        %4635 = vmatmul.bf16.gmra.mxu0 %v1224
        %v4636 = vpop.f32.mrf.mxu0
        %v4637 = vadd.f32 %v4623, %v4636
        %v4638 = vpop.f32.mrf.mxu0
        %v4639 = vadd.f32 %v4625, %v4638
        %4640 = vdwg.mxu0
        %4641 = vmatpush.bf16.msra.mxu0 %v3128
        %4642 = vmatpush.bf16.msra.mxu0 %v3114
        %4643 = vmatpush.bf16.msra.mxu0 %v3100
        %4644 = vmatpush.bf16.msra.mxu0 %v3086
        %4645 = vmatpush.bf16.msra.mxu0 %v3072
        %4646 = vmatpush.bf16.msra.mxu0 %v3058
        %4647 = vmatpush.bf16.msra.mxu0 %v3044
        %4648 = vmatpush.bf16.msra.mxu0 %v3030
        %4649 = vmatmul.bf16.gmra.mxu0 %v1221
        %v4650 = vpop.f32.mrf.mxu0
        %v4651 = vadd.f32 0.0, %v4650
        %v4652 = vpop.f32.mrf.mxu0
        %v4653 = vadd.f32 0.0, %v4652
        %4654 = vdwg.mxu0
        %4655 = vmatpush.bf16.msra.mxu0 %v3240
        %4656 = vmatpush.bf16.msra.mxu0 %v3226
        %4657 = vmatpush.bf16.msra.mxu0 %v3212
        %4658 = vmatpush.bf16.msra.mxu0 %v3198
        %4659 = vmatpush.bf16.msra.mxu0 %v3184
        %4660 = vmatpush.bf16.msra.mxu0 %v3170
        %4661 = vmatpush.bf16.msra.mxu0 %v3156
        %4662 = vmatpush.bf16.msra.mxu0 %v3142
        %4663 = vmatmul.bf16.gmra.mxu0 %v1222
        %v4664 = vpop.f32.mrf.mxu0
        %v4665 = vadd.f32 %v4651, %v4664
        %v4666 = vpop.f32.mrf.mxu0
        %v4667 = vadd.f32 %v4653, %v4666
        %4668 = vdwg.mxu0
        %4669 = vmatpush.bf16.msra.mxu0 %v3352
        %4670 = vmatpush.bf16.msra.mxu0 %v3338
        %4671 = vmatpush.bf16.msra.mxu0 %v3324
        %4672 = vmatpush.bf16.msra.mxu0 %v3310
        %4673 = vmatpush.bf16.msra.mxu0 %v3296
        %4674 = vmatpush.bf16.msra.mxu0 %v3282
        %4675 = vmatpush.bf16.msra.mxu0 %v3268
        %4676 = vmatpush.bf16.msra.mxu0 %v3254
        %4677 = vmatmul.bf16.gmra.mxu0 %v1223
        %v4678 = vpop.f32.mrf.mxu0
        %v4679 = vadd.f32 %v4665, %v4678
        %v4680 = vpop.f32.mrf.mxu0
        %v4681 = vadd.f32 %v4667, %v4680
        %4682 = vdwg.mxu0
        %4683 = vmatpush.bf16.msra.mxu0 %v3464
        %4684 = vmatpush.bf16.msra.mxu0 %v3450
        %4685 = vmatpush.bf16.msra.mxu0 %v3436
        %4686 = vmatpush.bf16.msra.mxu0 %v3422
        %4687 = vmatpush.bf16.msra.mxu0 %v3408
        %4688 = vmatpush.bf16.msra.mxu0 %v3394
        %4689 = vmatpush.bf16.msra.mxu0 %v3380
        %4690 = vmatpush.bf16.msra.mxu0 %v3366
        %4691 = vmatmul.bf16.gmra.mxu0 %v1224
        %v4692 = vpop.f32.mrf.mxu0
        %v4693 = vadd.f32 %v4679, %v4692
        %v4694 = vpop.f32.mrf.mxu0
        %v4695 = vadd.f32 %v4681, %v4694
        %4696 = vdwg.mxu0
        // Predicated region
        $region132: #{decoder_forward.3} parent=71 // pred_check
          %p4697 = pneg %p752
        $region133: #{decoder_forward.3} parent=71 // pred_check_branch
          %4699 = sbr.rel (%p4697) target = $region135
        $region134: #{decoder_forward.3} parent=71 // pred_region
          %4700 = vst [vmem:[#allocation5] sm:$0xff] %v3965
          %4701 = vst [vmem:[#allocation5 + $0x8] sm:$0xff] %v4021
          %4702 = vst [vmem:[#allocation5 + $0x10] sm:$0xff] %v4077
          %4703 = vst [vmem:[#allocation5 + $0x18] sm:$0xff] %v4133
          %4704 = vst [vmem:[#allocation5 + $0x20] sm:$0xff] %v4189
          %4705 = vst [vmem:[#allocation5 + $0x28] sm:$0xff] %v4245
          %4706 = vst [vmem:[#allocation5 + $0x30] sm:$0xff] %v4301
          %4707 = vst [vmem:[#allocation5 + $0x38] sm:$0xff] %v4357
          %4708 = vst [vmem:[#allocation5 + $0x40] sm:$0xff] %v4413
          %4709 = vst [vmem:[#allocation5 + $0x48] sm:$0xff] %v4469
          %4710 = vst [vmem:[#allocation5 + $0x50] sm:$0xff] %v4525
          %4711 = vst [vmem:[#allocation5 + $0x58] sm:$0xff] %v4581
          %4712 = vst [vmem:[#allocation5 + $0x60] sm:$0xff] %v4637
          %4713 = vst [vmem:[#allocation5 + $0x68] sm:$0xff] %v4693
          %4714 = vst [vmem:[#allocation5 + $0x70] sm:$0xff] %v3967
          %4715 = vst [vmem:[#allocation5 + $0x78] sm:$0xff] %v4023
          %4716 = vst [vmem:[#allocation5 + $0x80] sm:$0xff] %v4079
          %4717 = vst [vmem:[#allocation5 + $0x88] sm:$0xff] %v4135
          %4718 = vst [vmem:[#allocation5 + $0x90] sm:$0xff] %v4191
          %4719 = vst [vmem:[#allocation5 + $0x98] sm:$0xff] %v4247
          %4720 = vst [vmem:[#allocation5 + $0xa0] sm:$0xff] %v4303
          %4721 = vst [vmem:[#allocation5 + $0xa8] sm:$0xff] %v4359
          %4722 = vst [vmem:[#allocation5 + $0xb0] sm:$0xff] %v4415
          %4723 = vst [vmem:[#allocation5 + $0xb8] sm:$0xff] %v4471
          %4724 = vst [vmem:[#allocation5 + $0xc0] sm:$0xff] %v4527
          %4725 = vst [vmem:[#allocation5 + $0xc8] sm:$0xff] %v4583
          %4726 = vst [vmem:[#allocation5 + $0xd0] sm:$0xff] %v4639
          %4727 = vst [vmem:[#allocation5 + $0xd8] sm:$0xff] %v4695
        $region135: #{decoder_forward.3} parent=71 // pred_fallthru
          _
        %p4728 = scmp.gt.s32.totalorder %s36, 0
        // Predicated region
        $region136: #{decoder_forward.3} parent=71 // pred_check
          %p4729 = pneg %p4728
        $region137: #{decoder_forward.3} parent=71 // pred_check_branch
          %4731 = sbr.rel (%p4729) target = $region139
        $region138: #{decoder_forward.3} parent=71 // pred_region
          %v4732 = vld [vmem:[#allocation5] sm:$0xff]
          %v4733 = vld [vmem:[#allocation5 + $0x8] sm:$0xff]
          %v4734 = vld [vmem:[#allocation5 + $0x10] sm:$0xff]
          %v4735 = vld [vmem:[#allocation5 + $0x18] sm:$0xff]
          %v4736 = vld [vmem:[#allocation5 + $0x20] sm:$0xff]
          %v4737 = vld [vmem:[#allocation5 + $0x28] sm:$0xff]
          %v4738 = vld [vmem:[#allocation5 + $0x30] sm:$0xff]
          %v4739 = vld [vmem:[#allocation5 + $0x38] sm:$0xff]
          %v4740 = vld [vmem:[#allocation5 + $0x40] sm:$0xff]
          %v4741 = vld [vmem:[#allocation5 + $0x48] sm:$0xff]
          %v4742 = vld [vmem:[#allocation5 + $0x50] sm:$0xff]
          %v4743 = vld [vmem:[#allocation5 + $0x58] sm:$0xff]
          %v4744 = vld [vmem:[#allocation5 + $0x60] sm:$0xff]
          %v4745 = vld [vmem:[#allocation5 + $0x68] sm:$0xff]
          %v4746 = vld [vmem:[#allocation5 + $0x70] sm:$0xff]
          %v4747 = vld [vmem:[#allocation5 + $0x78] sm:$0xff]
          %v4748 = vld [vmem:[#allocation5 + $0x80] sm:$0xff]
          %v4749 = vld [vmem:[#allocation5 + $0x88] sm:$0xff]
          %v4750 = vld [vmem:[#allocation5 + $0x90] sm:$0xff]
          %v4751 = vld [vmem:[#allocation5 + $0x98] sm:$0xff]
          %v4752 = vld [vmem:[#allocation5 + $0xa0] sm:$0xff]
          %v4753 = vld [vmem:[#allocation5 + $0xa8] sm:$0xff]
          %v4754 = vld [vmem:[#allocation5 + $0xb0] sm:$0xff]
          %v4755 = vld [vmem:[#allocation5 + $0xb8] sm:$0xff]
          %v4756 = vld [vmem:[#allocation5 + $0xc0] sm:$0xff]
          %v4757 = vld [vmem:[#allocation5 + $0xc8] sm:$0xff]
          %v4758 = vld [vmem:[#allocation5 + $0xd0] sm:$0xff]
          %v4759 = vld [vmem:[#allocation5 + $0xd8] sm:$0xff]
          %v4760 = vadd.f32 %v4732, %v3965
          %v4761 = vadd.f32 %v4733, %v4021
          %v4762 = vadd.f32 %v4734, %v4077
          %v4763 = vadd.f32 %v4735, %v4133
          %v4764 = vadd.f32 %v4736, %v4189
          %v4765 = vadd.f32 %v4737, %v4245
          %v4766 = vadd.f32 %v4738, %v4301
          %v4767 = vadd.f32 %v4739, %v4357
          %v4768 = vadd.f32 %v4740, %v4413
          %v4769 = vadd.f32 %v4741, %v4469
          %v4770 = vadd.f32 %v4742, %v4525
          %v4771 = vadd.f32 %v4743, %v4581
          %v4772 = vadd.f32 %v4744, %v4637
          %v4773 = vadd.f32 %v4745, %v4693
          %v4774 = vadd.f32 %v4746, %v3967
          %v4775 = vadd.f32 %v4747, %v4023
          %v4776 = vadd.f32 %v4748, %v4079
          %v4777 = vadd.f32 %v4749, %v4135
          %v4778 = vadd.f32 %v4750, %v4191
          %v4779 = vadd.f32 %v4751, %v4247
          %v4780 = vadd.f32 %v4752, %v4303
          %v4781 = vadd.f32 %v4753, %v4359
          %v4782 = vadd.f32 %v4754, %v4415
          %v4783 = vadd.f32 %v4755, %v4471
          %v4784 = vadd.f32 %v4756, %v4527
          %v4785 = vadd.f32 %v4757, %v4583
          %v4786 = vadd.f32 %v4758, %v4639
          %v4787 = vadd.f32 %v4759, %v4695
          %4788 = vst [vmem:[#allocation5] sm:$0xff] %v4760
          %4789 = vst [vmem:[#allocation5 + $0x8] sm:$0xff] %v4761
          %4790 = vst [vmem:[#allocation5 + $0x10] sm:$0xff] %v4762
          %4791 = vst [vmem:[#allocation5 + $0x18] sm:$0xff] %v4763
          %4792 = vst [vmem:[#allocation5 + $0x20] sm:$0xff] %v4764
          %4793 = vst [vmem:[#allocation5 + $0x28] sm:$0xff] %v4765
          %4794 = vst [vmem:[#allocation5 + $0x30] sm:$0xff] %v4766
          %4795 = vst [vmem:[#allocation5 + $0x38] sm:$0xff] %v4767
          %4796 = vst [vmem:[#allocation5 + $0x40] sm:$0xff] %v4768
          %4797 = vst [vmem:[#allocation5 + $0x48] sm:$0xff] %v4769
          %4798 = vst [vmem:[#allocation5 + $0x50] sm:$0xff] %v4770
          %4799 = vst [vmem:[#allocation5 + $0x58] sm:$0xff] %v4771
          %4800 = vst [vmem:[#allocation5 + $0x60] sm:$0xff] %v4772
          %4801 = vst [vmem:[#allocation5 + $0x68] sm:$0xff] %v4773
          %4802 = vst [vmem:[#allocation5 + $0x70] sm:$0xff] %v4774
          %4803 = vst [vmem:[#allocation5 + $0x78] sm:$0xff] %v4775
          %4804 = vst [vmem:[#allocation5 + $0x80] sm:$0xff] %v4776
          %4805 = vst [vmem:[#allocation5 + $0x88] sm:$0xff] %v4777
          %4806 = vst [vmem:[#allocation5 + $0x90] sm:$0xff] %v4778
          %4807 = vst [vmem:[#allocation5 + $0x98] sm:$0xff] %v4779
          %4808 = vst [vmem:[#allocation5 + $0xa0] sm:$0xff] %v4780
          %4809 = vst [vmem:[#allocation5 + $0xa8] sm:$0xff] %v4781
          %4810 = vst [vmem:[#allocation5 + $0xb0] sm:$0xff] %v4782
          %4811 = vst [vmem:[#allocation5 + $0xb8] sm:$0xff] %v4783
          %4812 = vst [vmem:[#allocation5 + $0xc0] sm:$0xff] %v4784
          %4813 = vst [vmem:[#allocation5 + $0xc8] sm:$0xff] %v4785
          %4814 = vst [vmem:[#allocation5 + $0xd0] sm:$0xff] %v4786
          %4815 = vst [vmem:[#allocation5 + $0xd8] sm:$0xff] %v4787
        $region139: #{decoder_forward.3} parent=71 // pred_fallthru
          _
        %p4816 = scmp.eq.s32.totalorder %s36, 7
        // Predicated region
        $region140: #{decoder_forward.3} parent=71 // pred_check
          %p4817 = pneg %p4816
        $region141: #{decoder_forward.3} parent=71 // pred_check_branch
          %4819 = sbr.rel (%p4817) target = $region143
        $region142: #{decoder_forward.3} parent=71 // pred_region
          %v4820 = vld [vmem:[#allocation5] sm:$0xff]
          %v4821 = vld [vmem:[#allocation5 + $0x8] sm:$0xff]
          %v4822 = vld [vmem:[#allocation5 + $0x10] sm:$0xff]
          %v4823 = vld [vmem:[#allocation5 + $0x18] sm:$0xff]
          %v4824 = vld [vmem:[#allocation5 + $0x20] sm:$0xff]
          %v4825 = vld [vmem:[#allocation5 + $0x28] sm:$0xff]
          %v4826 = vld [vmem:[#allocation5 + $0x30] sm:$0xff]
          %v4827 = vld [vmem:[#allocation5 + $0x38] sm:$0xff]
          %v4828 = vld [vmem:[#allocation5 + $0x40] sm:$0xff]
          %v4829 = vld [vmem:[#allocation5 + $0x48] sm:$0xff]
          %v4830 = vld [vmem:[#allocation5 + $0x50] sm:$0xff]
          %v4831 = vld [vmem:[#allocation5 + $0x58] sm:$0xff]
          %v4832 = vld [vmem:[#allocation5 + $0x60] sm:$0xff]
          %v4833 = vld [vmem:[#allocation5 + $0x68] sm:$0xff]
          %v4834 = vld [vmem:[#allocation5 + $0x70] sm:$0xff]
          %v4835 = vld [vmem:[#allocation5 + $0x78] sm:$0xff]
          %v4836 = vld [vmem:[#allocation5 + $0x80] sm:$0xff]
          %v4837 = vld [vmem:[#allocation5 + $0x88] sm:$0xff]
          %v4838 = vld [vmem:[#allocation5 + $0x90] sm:$0xff]
          %v4839 = vld [vmem:[#allocation5 + $0x98] sm:$0xff]
          %v4840 = vld [vmem:[#allocation5 + $0xa0] sm:$0xff]
          %v4841 = vld [vmem:[#allocation5 + $0xa8] sm:$0xff]
          %v4842 = vld [vmem:[#allocation5 + $0xb0] sm:$0xff]
          %v4843 = vld [vmem:[#allocation5 + $0xb8] sm:$0xff]
          %v4844 = vld [vmem:[#allocation5 + $0xc0] sm:$0xff]
          %v4845 = vld [vmem:[#allocation5 + $0xc8] sm:$0xff]
          %v4846 = vld [vmem:[#allocation5 + $0xd0] sm:$0xff]
          %v4847 = vld [vmem:[#allocation5 + $0xd8] sm:$0xff]
          %v4848 = vld [vmem:[#allocation13] sm:$0xff]
          %v4849 = vld [vmem:[#allocation13 + $0x8] sm:$0x3f]
          %v4852 = vperm.slane %v4848, 0
          %v4853 = vperm.slane %v4848, 1
          %v4854 = vperm.slane %v4848, 2
          %v4855 = vperm.slane %v4848, 3
          %v4856 = vperm.slane %v4848, 4
          %v4857 = vperm.slane %v4848, 5
          %v4858 = vperm.slane %v4848, 6
          %v4859 = vperm.slane %v4848, 7
          %v4860 = vperm.slane %v4849, 0
          %v4861 = vperm.slane %v4849, 1
          %v4862 = vperm.slane %v4849, 2
          %v4863 = vperm.slane %v4849, 3
          %v4864 = vperm.slane %v4849, 4
          %v4865 = vperm.slane %v4849, 5
          %v4880 = vadd.f32 %v4820, %v4852
          %v4881 = vadd.f32 %v4821, %v4853
          %v4882 = vadd.f32 %v4822, %v4854
          %v4883 = vadd.f32 %v4823, %v4855
          %v4884 = vadd.f32 %v4824, %v4856
          %v4885 = vadd.f32 %v4825, %v4857
          %v4886 = vadd.f32 %v4826, %v4858
          %v4887 = vadd.f32 %v4827, %v4859
          %v4888 = vadd.f32 %v4828, %v4860
          %v4889 = vadd.f32 %v4829, %v4861
          %v4890 = vadd.f32 %v4830, %v4862
          %v4891 = vadd.f32 %v4831, %v4863
          %v4892 = vadd.f32 %v4832, %v4864
          %v4893 = vadd.f32 %v4833, %v4865
          %v4894 = vadd.f32 %v4834, %v4852
          %v4895 = vadd.f32 %v4835, %v4853
          %v4896 = vadd.f32 %v4836, %v4854
          %v4897 = vadd.f32 %v4837, %v4855
          %v4898 = vadd.f32 %v4838, %v4856
          %v4899 = vadd.f32 %v4839, %v4857
          %v4900 = vadd.f32 %v4840, %v4858
          %v4901 = vadd.f32 %v4841, %v4859
          %v4902 = vadd.f32 %v4842, %v4860
          %v4903 = vadd.f32 %v4843, %v4861
          %v4904 = vadd.f32 %v4844, %v4862
          %v4905 = vadd.f32 %v4845, %v4863
          %v4906 = vadd.f32 %v4846, %v4864
          %v4907 = vadd.f32 %v4847, %v4865
          %v4908 = vld [vmem:[#allocation14] sm:$0xff]
          %v4909 = vld [vmem:[#allocation14 + $0x8] sm:$0x3f]
          %v4910 = vld [vmem:[#allocation16] sm:$0xff]
          %v4911 = vld [vmem:[#allocation16 + $0x8] sm:$0x3f]
          %v4912 = vadd.f32 %v4880, %v4881
          %v4913 = vadd.f32 %v4912, %v4882
          %v4914 = vadd.f32 %v4913, %v4883
          %v4915 = vadd.f32 %v4914, %v4884
          %v4916 = vadd.f32 %v4915, %v4885
          %v4917 = vadd.f32 %v4916, %v4886
          %v4918 = vadd.f32 %v4917, %v4887
          %v4919 = vadd.f32 %v4918, %v4888
          %v4920 = vadd.f32 %v4919, %v4889
          %v4921 = vadd.f32 %v4920, %v4890
          %v4922 = vadd.f32 %v4921, %v4891
          %v4923 = vadd.f32 %v4922, %v4892
          %v4924 = vadd.f32 %v4923, %v4893
          %4925 = vadd.xlane.f32.xlu0 %v4924
          %v4926 = vpop.xlane.xlu0 %4925
          %v4927 = vadd.f32 %v4894, %v4895
          %v4928 = vadd.f32 %v4927, %v4896
          %v4929 = vadd.f32 %v4928, %v4897
          %v4930 = vadd.f32 %v4929, %v4898
          %v4931 = vadd.f32 %v4930, %v4899
          %v4932 = vadd.f32 %v4931, %v4900
          %v4933 = vadd.f32 %v4932, %v4901
          %v4934 = vadd.f32 %v4933, %v4902
          %v4935 = vadd.f32 %v4934, %v4903
          %v4936 = vadd.f32 %v4935, %v4904
          %v4937 = vadd.f32 %v4936, %v4905
          %v4938 = vadd.f32 %v4937, %v4906
          %v4939 = vadd.f32 %v4938, %v4907
          %4940 = vadd.xlane.f32.xlu0 %v4939
          %v4941 = vpop.xlane.xlu0 %4940
          %v4942 = vrcp.pop 1792.0
          %v4943 = vmul.f32 1792.0, %v4942
          %v4944 = vsub.f32 1.0, %v4943
          %v4945 = vmul.f32 %v4942, %v4944
          %v4946 = vadd.f32 %v4942, %v4945
          %vm4947 = vweird.f32 %v4942
          %v4948 = vsel %vm4947, %v4942, %v4946
          %v4949 = vmul.f32 %v4926, %v4948
          %v4950 = vmul.f32 %v4941, %v4948
          %v4951 = vsub.f32 %v4880, %v4949
          %v4952 = vsub.f32 %v4881, %v4949
          %v4953 = vsub.f32 %v4882, %v4949
          %v4954 = vsub.f32 %v4883, %v4949
          %v4955 = vsub.f32 %v4884, %v4949
          %v4956 = vsub.f32 %v4885, %v4949
          %v4957 = vsub.f32 %v4886, %v4949
          %v4958 = vsub.f32 %v4887, %v4949
          %v4959 = vsub.f32 %v4888, %v4949
          %v4960 = vsub.f32 %v4889, %v4949
          %v4961 = vsub.f32 %v4890, %v4949
          %v4962 = vsub.f32 %v4891, %v4949
          %v4963 = vsub.f32 %v4892, %v4949
          %v4964 = vsub.f32 %v4893, %v4949
          %v4965 = vsub.f32 %v4894, %v4950
          %v4966 = vsub.f32 %v4895, %v4950
          %v4967 = vsub.f32 %v4896, %v4950
          %v4968 = vsub.f32 %v4897, %v4950
          %v4969 = vsub.f32 %v4898, %v4950
          %v4970 = vsub.f32 %v4899, %v4950
          %v4971 = vsub.f32 %v4900, %v4950
          %v4972 = vsub.f32 %v4901, %v4950
          %v4973 = vsub.f32 %v4902, %v4950
          %v4974 = vsub.f32 %v4903, %v4950
          %v4975 = vsub.f32 %v4904, %v4950
          %v4976 = vsub.f32 %v4905, %v4950
          %v4977 = vsub.f32 %v4906, %v4950
          %v4978 = vsub.f32 %v4907, %v4950
          %v4979 = vmul.f32 %v4951, %v4951
          %v4980 = vmul.f32 %v4952, %v4952
          %v4981 = vmul.f32 %v4953, %v4953
          %v4982 = vmul.f32 %v4954, %v4954
          %v4983 = vmul.f32 %v4955, %v4955
          %v4984 = vmul.f32 %v4956, %v4956
          %v4985 = vmul.f32 %v4957, %v4957
          %v4986 = vmul.f32 %v4958, %v4958
          %v4987 = vmul.f32 %v4959, %v4959
          %v4988 = vmul.f32 %v4960, %v4960
          %v4989 = vmul.f32 %v4961, %v4961
          %v4990 = vmul.f32 %v4962, %v4962
          %v4991 = vmul.f32 %v4963, %v4963
          %v4992 = vmul.f32 %v4964, %v4964
          %v4993 = vmul.f32 %v4965, %v4965
          %v4994 = vmul.f32 %v4966, %v4966
          %v4995 = vmul.f32 %v4967, %v4967
          %v4996 = vmul.f32 %v4968, %v4968
          %v4997 = vmul.f32 %v4969, %v4969
          %v4998 = vmul.f32 %v4970, %v4970
          %v4999 = vmul.f32 %v4971, %v4971
          %v5000 = vmul.f32 %v4972, %v4972
          %v5001 = vmul.f32 %v4973, %v4973
          %v5002 = vmul.f32 %v4974, %v4974
          %v5003 = vmul.f32 %v4975, %v4975
          %v5004 = vmul.f32 %v4976, %v4976
          %v5005 = vmul.f32 %v4977, %v4977
          %v5006 = vmul.f32 %v4978, %v4978
          %v5007 = vadd.f32 %v4979, %v4980
          %v5008 = vadd.f32 %v5007, %v4981
          %v5009 = vadd.f32 %v5008, %v4982
          %v5010 = vadd.f32 %v5009, %v4983
          %v5011 = vadd.f32 %v5010, %v4984
          %v5012 = vadd.f32 %v5011, %v4985
          %v5013 = vadd.f32 %v5012, %v4986
          %v5014 = vadd.f32 %v5013, %v4987
          %v5015 = vadd.f32 %v5014, %v4988
          %v5016 = vadd.f32 %v5015, %v4989
          %v5017 = vadd.f32 %v5016, %v4990
          %v5018 = vadd.f32 %v5017, %v4991
          %v5019 = vadd.f32 %v5018, %v4992
          %5020 = vadd.xlane.f32.xlu0 %v5019
          %v5021 = vpop.xlane.xlu0 %5020
          %v5022 = vadd.f32 %v4993, %v4994
          %v5023 = vadd.f32 %v5022, %v4995
          %v5024 = vadd.f32 %v5023, %v4996
          %v5025 = vadd.f32 %v5024, %v4997
          %v5026 = vadd.f32 %v5025, %v4998
          %v5027 = vadd.f32 %v5026, %v4999
          %v5028 = vadd.f32 %v5027, %v5000
          %v5029 = vadd.f32 %v5028, %v5001
          %v5030 = vadd.f32 %v5029, %v5002
          %v5031 = vadd.f32 %v5030, %v5003
          %v5032 = vadd.f32 %v5031, %v5004
          %v5033 = vadd.f32 %v5032, %v5005
          %v5034 = vadd.f32 %v5033, %v5006
          %5035 = vadd.xlane.f32.xlu0 %v5034
          %v5036 = vpop.xlane.xlu0 %5035
          %v5037 = vmul.f32 %v5021, %v4948
          %v5038 = vmul.f32 %v5036, %v4948
          %v5039 = vadd.f32 %v5037, 1e-05
          %v5040 = vadd.f32 %v5038, 1e-05
          %v5041 = vrsqrt.pop %v5039
          %v5042 = vmul.f32 %v5041, %v5039
          %v5043 = vmul.f32 %v5042, %v5041
          %v5044 = vmul.f32 0.5, %v5043
          %v5045 = vsub.f32 1.5, %v5044
          %v5046 = vmul.f32 %v5041, %v5045
          %vm5047 = vweird.f32 %v5039
          %vm5048 = vweird.f32 %v5041
          %vm5049 = vmor %vm5047, %vm5048
          %v5050 = vsel %vm5049, %v5041, %v5046
          %v5051 = vrsqrt.pop %v5040
          %v5052 = vmul.f32 %v5051, %v5040
          %v5053 = vmul.f32 %v5052, %v5051
          %v5054 = vmul.f32 0.5, %v5053
          %v5055 = vsub.f32 1.5, %v5054
          %v5056 = vmul.f32 %v5051, %v5055
          %vm5057 = vweird.f32 %v5040
          %vm5058 = vweird.f32 %v5051
          %vm5059 = vmor %vm5057, %vm5058
          %v5060 = vsel %vm5059, %v5051, %v5056
          %v5061 = vmul.f32 %v4951, %v5050
          %v5062 = vmul.f32 %v4952, %v5050
          %v5063 = vmul.f32 %v4953, %v5050
          %v5064 = vmul.f32 %v4954, %v5050
          %v5065 = vmul.f32 %v4955, %v5050
          %v5066 = vmul.f32 %v4956, %v5050
          %v5067 = vmul.f32 %v4957, %v5050
          %v5068 = vmul.f32 %v4958, %v5050
          %v5069 = vmul.f32 %v4959, %v5050
          %v5070 = vmul.f32 %v4960, %v5050
          %v5071 = vmul.f32 %v4961, %v5050
          %v5072 = vmul.f32 %v4962, %v5050
          %v5073 = vmul.f32 %v4963, %v5050
          %v5074 = vmul.f32 %v4964, %v5050
          %v5075 = vmul.f32 %v4965, %v5060
          %v5076 = vmul.f32 %v4966, %v5060
          %v5077 = vmul.f32 %v4967, %v5060
          %v5078 = vmul.f32 %v4968, %v5060
          %v5079 = vmul.f32 %v4969, %v5060
          %v5080 = vmul.f32 %v4970, %v5060
          %v5081 = vmul.f32 %v4971, %v5060
          %v5082 = vmul.f32 %v4972, %v5060
          %v5083 = vmul.f32 %v4973, %v5060
          %v5084 = vmul.f32 %v4974, %v5060
          %v5085 = vmul.f32 %v4975, %v5060
          %v5086 = vmul.f32 %v4976, %v5060
          %v5087 = vmul.f32 %v4977, %v5060
          %v5088 = vmul.f32 %v4978, %v5060
          %v5091 = vperm.slane %v4908, 0
          %v5092 = vperm.slane %v4908, 1
          %v5093 = vperm.slane %v4908, 2
          %v5094 = vperm.slane %v4908, 3
          %v5095 = vperm.slane %v4908, 4
          %v5096 = vperm.slane %v4908, 5
          %v5097 = vperm.slane %v4908, 6
          %v5098 = vperm.slane %v4908, 7
          %v5099 = vperm.slane %v4909, 0
          %v5100 = vperm.slane %v4909, 1
          %v5101 = vperm.slane %v4909, 2
          %v5102 = vperm.slane %v4909, 3
          %v5103 = vperm.slane %v4909, 4
          %v5104 = vperm.slane %v4909, 5
          %v5119 = vmul.f32 %v5061, %v5091
          %v5120 = vmul.f32 %v5062, %v5092
          %v5121 = vmul.f32 %v5063, %v5093
          %v5122 = vmul.f32 %v5064, %v5094
          %v5123 = vmul.f32 %v5065, %v5095
          %v5124 = vmul.f32 %v5066, %v5096
          %v5125 = vmul.f32 %v5067, %v5097
          %v5126 = vmul.f32 %v5068, %v5098
          %v5127 = vmul.f32 %v5069, %v5099
          %v5128 = vmul.f32 %v5070, %v5100
          %v5129 = vmul.f32 %v5071, %v5101
          %v5130 = vmul.f32 %v5072, %v5102
          %v5131 = vmul.f32 %v5073, %v5103
          %v5132 = vmul.f32 %v5074, %v5104
          %v5133 = vmul.f32 %v5075, %v5091
          %v5134 = vmul.f32 %v5076, %v5092
          %v5135 = vmul.f32 %v5077, %v5093
          %v5136 = vmul.f32 %v5078, %v5094
          %v5137 = vmul.f32 %v5079, %v5095
          %v5138 = vmul.f32 %v5080, %v5096
          %v5139 = vmul.f32 %v5081, %v5097
          %v5140 = vmul.f32 %v5082, %v5098
          %v5141 = vmul.f32 %v5083, %v5099
          %v5142 = vmul.f32 %v5084, %v5100
          %v5143 = vmul.f32 %v5085, %v5101
          %v5144 = vmul.f32 %v5086, %v5102
          %v5145 = vmul.f32 %v5087, %v5103
          %v5146 = vmul.f32 %v5088, %v5104
          %v5149 = vperm.slane %v4910, 0
          %v5150 = vperm.slane %v4910, 1
          %v5151 = vperm.slane %v4910, 2
          %v5152 = vperm.slane %v4910, 3
          %v5153 = vperm.slane %v4910, 4
          %v5154 = vperm.slane %v4910, 5
          %v5155 = vperm.slane %v4910, 6
          %v5156 = vperm.slane %v4910, 7
          %v5157 = vperm.slane %v4911, 0
          %v5158 = vperm.slane %v4911, 1
          %v5159 = vperm.slane %v4911, 2
          %v5160 = vperm.slane %v4911, 3
          %v5161 = vperm.slane %v4911, 4
          %v5162 = vperm.slane %v4911, 5
          %v5177 = vadd.f32 %v5119, %v5149
          %v5178 = vadd.f32 %v5120, %v5150
          %v5179 = vadd.f32 %v5121, %v5151
          %v5180 = vadd.f32 %v5122, %v5152
          %v5181 = vadd.f32 %v5123, %v5153
          %v5182 = vadd.f32 %v5124, %v5154
          %v5183 = vadd.f32 %v5125, %v5155
          %v5184 = vadd.f32 %v5126, %v5156
          %v5185 = vadd.f32 %v5127, %v5157
          %v5186 = vadd.f32 %v5128, %v5158
          %v5187 = vadd.f32 %v5129, %v5159
          %v5188 = vadd.f32 %v5130, %v5160
          %v5189 = vadd.f32 %v5131, %v5161
          %v5190 = vadd.f32 %v5132, %v5162
          %v5191 = vadd.f32 %v5133, %v5149
          %v5192 = vadd.f32 %v5134, %v5150
          %v5193 = vadd.f32 %v5135, %v5151
          %v5194 = vadd.f32 %v5136, %v5152
          %v5195 = vadd.f32 %v5137, %v5153
          %v5196 = vadd.f32 %v5138, %v5154
          %v5197 = vadd.f32 %v5139, %v5155
          %v5198 = vadd.f32 %v5140, %v5156
          %v5199 = vadd.f32 %v5141, %v5157
          %v5200 = vadd.f32 %v5142, %v5158
          %v5201 = vadd.f32 %v5143, %v5159
          %v5202 = vadd.f32 %v5144, %v5160
          %v5203 = vadd.f32 %v5145, %v5161
          %v5204 = vadd.f32 %v5146, %v5162
          %v5205 = vxor.u32 %v5177, 2147483648
          %v5206 = vxor.u32 %v5178, 2147483648
          %v5207 = vxor.u32 %v5179, 2147483648
          %v5208 = vxor.u32 %v5180, 2147483648
          %v5209 = vxor.u32 %v5181, 2147483648
          %v5210 = vxor.u32 %v5182, 2147483648
          %v5211 = vxor.u32 %v5183, 2147483648
          %v5212 = vxor.u32 %v5184, 2147483648
          %v5213 = vxor.u32 %v5185, 2147483648
          %v5214 = vxor.u32 %v5186, 2147483648
          %v5215 = vxor.u32 %v5187, 2147483648
          %v5216 = vxor.u32 %v5188, 2147483648
          %v5217 = vxor.u32 %v5189, 2147483648
          %v5218 = vxor.u32 %v5190, 2147483648
          %v5219 = vxor.u32 %v5191, 2147483648
          %v5220 = vxor.u32 %v5192, 2147483648
          %v5221 = vxor.u32 %v5193, 2147483648
          %v5222 = vxor.u32 %v5194, 2147483648
          %v5223 = vxor.u32 %v5195, 2147483648
          %v5224 = vxor.u32 %v5196, 2147483648
          %v5225 = vxor.u32 %v5197, 2147483648
          %v5226 = vxor.u32 %v5198, 2147483648
          %v5227 = vxor.u32 %v5199, 2147483648
          %v5228 = vxor.u32 %v5200, 2147483648
          %v5229 = vxor.u32 %v5201, 2147483648
          %v5230 = vxor.u32 %v5202, 2147483648
          %v5231 = vxor.u32 %v5203, 2147483648
          %v5232 = vxor.u32 %v5204, 2147483648
          %v5233 = vmul.f32 %v5205, 1.442695
          %v5234 = vpow.pop %v5233
          %v5235 = vmul.f32 %v5206, 1.442695
          %v5236 = vpow.pop %v5235
          %v5237 = vmul.f32 %v5207, 1.442695
          %v5238 = vpow.pop %v5237
          %v5239 = vmul.f32 %v5208, 1.442695
          %v5240 = vpow.pop %v5239
          %v5241 = vmul.f32 %v5209, 1.442695
          %v5242 = vpow.pop %v5241
          %v5243 = vmul.f32 %v5210, 1.442695
          %v5244 = vpow.pop %v5243
          %v5245 = vmul.f32 %v5211, 1.442695
          %v5246 = vpow.pop %v5245
          %v5247 = vmul.f32 %v5212, 1.442695
          %v5248 = vpow.pop %v5247
          %v5249 = vmul.f32 %v5213, 1.442695
          %v5250 = vpow.pop %v5249
          %v5251 = vmul.f32 %v5214, 1.442695
          %v5252 = vpow.pop %v5251
          %v5253 = vmul.f32 %v5215, 1.442695
          %v5254 = vpow.pop %v5253
          %v5255 = vmul.f32 %v5216, 1.442695
          %v5256 = vpow.pop %v5255
          %v5257 = vmul.f32 %v5217, 1.442695
          %v5258 = vpow.pop %v5257
          %v5259 = vmul.f32 %v5218, 1.442695
          %v5260 = vpow.pop %v5259
          %v5261 = vmul.f32 %v5219, 1.442695
          %v5262 = vpow.pop %v5261
          %v5263 = vmul.f32 %v5220, 1.442695
          %v5264 = vpow.pop %v5263
          %v5265 = vmul.f32 %v5221, 1.442695
          %v5266 = vpow.pop %v5265
          %v5267 = vmul.f32 %v5222, 1.442695
          %v5268 = vpow.pop %v5267
          %v5269 = vmul.f32 %v5223, 1.442695
          %v5270 = vpow.pop %v5269
          %v5271 = vmul.f32 %v5224, 1.442695
          %v5272 = vpow.pop %v5271
          %v5273 = vmul.f32 %v5225, 1.442695
          %v5274 = vpow.pop %v5273
          %v5275 = vmul.f32 %v5226, 1.442695
          %v5276 = vpow.pop %v5275
          %v5277 = vmul.f32 %v5227, 1.442695
          %v5278 = vpow.pop %v5277
          %v5279 = vmul.f32 %v5228, 1.442695
          %v5280 = vpow.pop %v5279
          %v5281 = vmul.f32 %v5229, 1.442695
          %v5282 = vpow.pop %v5281
          %v5283 = vmul.f32 %v5230, 1.442695
          %v5284 = vpow.pop %v5283
          %v5285 = vmul.f32 %v5231, 1.442695
          %v5286 = vpow.pop %v5285
          %v5287 = vmul.f32 %v5232, 1.442695
          %v5288 = vpow.pop %v5287
          %v5289 = vadd.f32 %v5234, 1.0
          %v5290 = vadd.f32 %v5236, 1.0
          %v5291 = vadd.f32 %v5238, 1.0
          %v5292 = vadd.f32 %v5240, 1.0
          %v5293 = vadd.f32 %v5242, 1.0
          %v5294 = vadd.f32 %v5244, 1.0
          %v5295 = vadd.f32 %v5246, 1.0
          %v5296 = vadd.f32 %v5248, 1.0
          %v5297 = vadd.f32 %v5250, 1.0
          %v5298 = vadd.f32 %v5252, 1.0
          %v5299 = vadd.f32 %v5254, 1.0
          %v5300 = vadd.f32 %v5256, 1.0
          %v5301 = vadd.f32 %v5258, 1.0
          %v5302 = vadd.f32 %v5260, 1.0
          %v5303 = vadd.f32 %v5262, 1.0
          %v5304 = vadd.f32 %v5264, 1.0
          %v5305 = vadd.f32 %v5266, 1.0
          %v5306 = vadd.f32 %v5268, 1.0
          %v5307 = vadd.f32 %v5270, 1.0
          %v5308 = vadd.f32 %v5272, 1.0
          %v5309 = vadd.f32 %v5274, 1.0
          %v5310 = vadd.f32 %v5276, 1.0
          %v5311 = vadd.f32 %v5278, 1.0
          %v5312 = vadd.f32 %v5280, 1.0
          %v5313 = vadd.f32 %v5282, 1.0
          %v5314 = vadd.f32 %v5284, 1.0
          %v5315 = vadd.f32 %v5286, 1.0
          %v5316 = vadd.f32 %v5288, 1.0
          %v5317 = vrcp.pop %v5289
          %v5318 = vmul.f32 %v5289, %v5317
          %v5319 = vsub.f32 1.0, %v5318
          %v5320 = vmul.f32 %v5317, %v5319
          %v5321 = vadd.f32 %v5317, %v5320
          %vm5322 = vweird.f32 %v5289
          %vm5323 = vweird.f32 %v5317
          %vm5324 = vmor %vm5322, %vm5323
          %v5325 = vsel %vm5324, %v5317, %v5321
          %v5326 = vand.u32 2147483647, %v5289
          %vm5327 = vcmp.eq.f32.partialorder %v5326, 8.507059e+37
          %v5328 = vand.u32 %v5289, 2147483648
          %v5329 = vor.u32 1.1754944e-38, %v5328
          %v5330 = vsel %vm5327, %v5329, %v5325
          %v5331 = vmul.f32 1.0, %v5330
          %v5332 = vrcp.pop %v5290
          %v5333 = vmul.f32 %v5290, %v5332
          %v5334 = vsub.f32 1.0, %v5333
          %v5335 = vmul.f32 %v5332, %v5334
          %v5336 = vadd.f32 %v5332, %v5335
          %vm5337 = vweird.f32 %v5290
          %vm5338 = vweird.f32 %v5332
          %vm5339 = vmor %vm5337, %vm5338
          %v5340 = vsel %vm5339, %v5332, %v5336
          %v5341 = vand.u32 2147483647, %v5290
          %vm5342 = vcmp.eq.f32.partialorder %v5341, 8.507059e+37
          %v5343 = vand.u32 %v5290, 2147483648
          %v5344 = vor.u32 1.1754944e-38, %v5343
          %v5345 = vsel %vm5342, %v5344, %v5340
          %v5346 = vmul.f32 1.0, %v5345
          %v5347 = vrcp.pop %v5291
          %v5348 = vmul.f32 %v5291, %v5347
          %v5349 = vsub.f32 1.0, %v5348
          %v5350 = vmul.f32 %v5347, %v5349
          %v5351 = vadd.f32 %v5347, %v5350
          %vm5352 = vweird.f32 %v5291
          %vm5353 = vweird.f32 %v5347
          %vm5354 = vmor %vm5352, %vm5353
          %v5355 = vsel %vm5354, %v5347, %v5351
          %v5356 = vand.u32 2147483647, %v5291
          %vm5357 = vcmp.eq.f32.partialorder %v5356, 8.507059e+37
          %v5358 = vand.u32 %v5291, 2147483648
          %v5359 = vor.u32 1.1754944e-38, %v5358
          %v5360 = vsel %vm5357, %v5359, %v5355
          %v5361 = vmul.f32 1.0, %v5360
          %v5362 = vrcp.pop %v5292
          %v5363 = vmul.f32 %v5292, %v5362
          %v5364 = vsub.f32 1.0, %v5363
          %v5365 = vmul.f32 %v5362, %v5364
          %v5366 = vadd.f32 %v5362, %v5365
          %vm5367 = vweird.f32 %v5292
          %vm5368 = vweird.f32 %v5362
          %vm5369 = vmor %vm5367, %vm5368
          %v5370 = vsel %vm5369, %v5362, %v5366
          %v5371 = vand.u32 2147483647, %v5292
          %vm5372 = vcmp.eq.f32.partialorder %v5371, 8.507059e+37
          %v5373 = vand.u32 %v5292, 2147483648
          %v5374 = vor.u32 1.1754944e-38, %v5373
          %v5375 = vsel %vm5372, %v5374, %v5370
          %v5376 = vmul.f32 1.0, %v5375
          %v5377 = vrcp.pop %v5293
          %v5378 = vmul.f32 %v5293, %v5377
          %v5379 = vsub.f32 1.0, %v5378
          %v5380 = vmul.f32 %v5377, %v5379
          %v5381 = vadd.f32 %v5377, %v5380
          %vm5382 = vweird.f32 %v5293
          %vm5383 = vweird.f32 %v5377
          %vm5384 = vmor %vm5382, %vm5383
          %v5385 = vsel %vm5384, %v5377, %v5381
          %v5386 = vand.u32 2147483647, %v5293
          %vm5387 = vcmp.eq.f32.partialorder %v5386, 8.507059e+37
          %v5388 = vand.u32 %v5293, 2147483648
          %v5389 = vor.u32 1.1754944e-38, %v5388
          %v5390 = vsel %vm5387, %v5389, %v5385
          %v5391 = vmul.f32 1.0, %v5390
          %v5392 = vrcp.pop %v5294
          %v5393 = vmul.f32 %v5294, %v5392
          %v5394 = vsub.f32 1.0, %v5393
          %v5395 = vmul.f32 %v5392, %v5394
          %v5396 = vadd.f32 %v5392, %v5395
          %vm5397 = vweird.f32 %v5294
          %vm5398 = vweird.f32 %v5392
          %vm5399 = vmor %vm5397, %vm5398
          %v5400 = vsel %vm5399, %v5392, %v5396
          %v5401 = vand.u32 2147483647, %v5294
          %vm5402 = vcmp.eq.f32.partialorder %v5401, 8.507059e+37
          %v5403 = vand.u32 %v5294, 2147483648
          %v5404 = vor.u32 1.1754944e-38, %v5403
          %v5405 = vsel %vm5402, %v5404, %v5400
          %v5406 = vmul.f32 1.0, %v5405
          %v5407 = vrcp.pop %v5295
          %v5408 = vmul.f32 %v5295, %v5407
          %v5409 = vsub.f32 1.0, %v5408
          %v5410 = vmul.f32 %v5407, %v5409
          %v5411 = vadd.f32 %v5407, %v5410
          %vm5412 = vweird.f32 %v5295
          %vm5413 = vweird.f32 %v5407
          %vm5414 = vmor %vm5412, %vm5413
          %v5415 = vsel %vm5414, %v5407, %v5411
          %v5416 = vand.u32 2147483647, %v5295
          %vm5417 = vcmp.eq.f32.partialorder %v5416, 8.507059e+37
          %v5418 = vand.u32 %v5295, 2147483648
          %v5419 = vor.u32 1.1754944e-38, %v5418
          %v5420 = vsel %vm5417, %v5419, %v5415
          %v5421 = vmul.f32 1.0, %v5420
          %v5422 = vrcp.pop %v5296
          %v5423 = vmul.f32 %v5296, %v5422
          %v5424 = vsub.f32 1.0, %v5423
          %v5425 = vmul.f32 %v5422, %v5424
          %v5426 = vadd.f32 %v5422, %v5425
          %vm5427 = vweird.f32 %v5296
          %vm5428 = vweird.f32 %v5422
          %vm5429 = vmor %vm5427, %vm5428
          %v5430 = vsel %vm5429, %v5422, %v5426
          %v5431 = vand.u32 2147483647, %v5296
          %vm5432 = vcmp.eq.f32.partialorder %v5431, 8.507059e+37
          %v5433 = vand.u32 %v5296, 2147483648
          %v5434 = vor.u32 1.1754944e-38, %v5433
          %v5435 = vsel %vm5432, %v5434, %v5430
          %v5436 = vmul.f32 1.0, %v5435
          %v5437 = vrcp.pop %v5297
          %v5438 = vmul.f32 %v5297, %v5437
          %v5439 = vsub.f32 1.0, %v5438
          %v5440 = vmul.f32 %v5437, %v5439
          %v5441 = vadd.f32 %v5437, %v5440
          %vm5442 = vweird.f32 %v5297
          %vm5443 = vweird.f32 %v5437
          %vm5444 = vmor %vm5442, %vm5443
          %v5445 = vsel %vm5444, %v5437, %v5441
          %v5446 = vand.u32 2147483647, %v5297
          %vm5447 = vcmp.eq.f32.partialorder %v5446, 8.507059e+37
          %v5448 = vand.u32 %v5297, 2147483648
          %v5449 = vor.u32 1.1754944e-38, %v5448
          %v5450 = vsel %vm5447, %v5449, %v5445
          %v5451 = vmul.f32 1.0, %v5450
          %v5452 = vrcp.pop %v5298
          %v5453 = vmul.f32 %v5298, %v5452
          %v5454 = vsub.f32 1.0, %v5453
          %v5455 = vmul.f32 %v5452, %v5454
          %v5456 = vadd.f32 %v5452, %v5455
          %vm5457 = vweird.f32 %v5298
          %vm5458 = vweird.f32 %v5452
          %vm5459 = vmor %vm5457, %vm5458
          %v5460 = vsel %vm5459, %v5452, %v5456
          %v5461 = vand.u32 2147483647, %v5298
          %vm5462 = vcmp.eq.f32.partialorder %v5461, 8.507059e+37
          %v5463 = vand.u32 %v5298, 2147483648
          %v5464 = vor.u32 1.1754944e-38, %v5463
          %v5465 = vsel %vm5462, %v5464, %v5460
          %v5466 = vmul.f32 1.0, %v5465
          %v5467 = vrcp.pop %v5299
          %v5468 = vmul.f32 %v5299, %v5467
          %v5469 = vsub.f32 1.0, %v5468
          %v5470 = vmul.f32 %v5467, %v5469
          %v5471 = vadd.f32 %v5467, %v5470
          %vm5472 = vweird.f32 %v5299
          %vm5473 = vweird.f32 %v5467
          %vm5474 = vmor %vm5472, %vm5473
          %v5475 = vsel %vm5474, %v5467, %v5471
          %v5476 = vand.u32 2147483647, %v5299
          %vm5477 = vcmp.eq.f32.partialorder %v5476, 8.507059e+37
          %v5478 = vand.u32 %v5299, 2147483648
          %v5479 = vor.u32 1.1754944e-38, %v5478
          %v5480 = vsel %vm5477, %v5479, %v5475
          %v5481 = vmul.f32 1.0, %v5480
          %v5482 = vrcp.pop %v5300
          %v5483 = vmul.f32 %v5300, %v5482
          %v5484 = vsub.f32 1.0, %v5483
          %v5485 = vmul.f32 %v5482, %v5484
          %v5486 = vadd.f32 %v5482, %v5485
          %vm5487 = vweird.f32 %v5300
          %vm5488 = vweird.f32 %v5482
          %vm5489 = vmor %vm5487, %vm5488
          %v5490 = vsel %vm5489, %v5482, %v5486
          %v5491 = vand.u32 2147483647, %v5300
          %vm5492 = vcmp.eq.f32.partialorder %v5491, 8.507059e+37
          %v5493 = vand.u32 %v5300, 2147483648
          %v5494 = vor.u32 1.1754944e-38, %v5493
          %v5495 = vsel %vm5492, %v5494, %v5490
          %v5496 = vmul.f32 1.0, %v5495
          %v5497 = vrcp.pop %v5301
          %v5498 = vmul.f32 %v5301, %v5497
          %v5499 = vsub.f32 1.0, %v5498
          %v5500 = vmul.f32 %v5497, %v5499
          %v5501 = vadd.f32 %v5497, %v5500
          %vm5502 = vweird.f32 %v5301
          %vm5503 = vweird.f32 %v5497
          %vm5504 = vmor %vm5502, %vm5503
          %v5505 = vsel %vm5504, %v5497, %v5501
          %v5506 = vand.u32 2147483647, %v5301
          %vm5507 = vcmp.eq.f32.partialorder %v5506, 8.507059e+37
          %v5508 = vand.u32 %v5301, 2147483648
          %v5509 = vor.u32 1.1754944e-38, %v5508
          %v5510 = vsel %vm5507, %v5509, %v5505
          %v5511 = vmul.f32 1.0, %v5510
          %v5512 = vrcp.pop %v5302
          %v5513 = vmul.f32 %v5302, %v5512
          %v5514 = vsub.f32 1.0, %v5513
          %v5515 = vmul.f32 %v5512, %v5514
          %v5516 = vadd.f32 %v5512, %v5515
          %vm5517 = vweird.f32 %v5302
          %vm5518 = vweird.f32 %v5512
          %vm5519 = vmor %vm5517, %vm5518
          %v5520 = vsel %vm5519, %v5512, %v5516
          %v5521 = vand.u32 2147483647, %v5302
          %vm5522 = vcmp.eq.f32.partialorder %v5521, 8.507059e+37
          %v5523 = vand.u32 %v5302, 2147483648
          %v5524 = vor.u32 1.1754944e-38, %v5523
          %v5525 = vsel %vm5522, %v5524, %v5520
          %v5526 = vmul.f32 1.0, %v5525
          %v5527 = vrcp.pop %v5303
          %v5528 = vmul.f32 %v5303, %v5527
          %v5529 = vsub.f32 1.0, %v5528
          %v5530 = vmul.f32 %v5527, %v5529
          %v5531 = vadd.f32 %v5527, %v5530
          %vm5532 = vweird.f32 %v5303
          %vm5533 = vweird.f32 %v5527
          %vm5534 = vmor %vm5532, %vm5533
          %v5535 = vsel %vm5534, %v5527, %v5531
          %v5536 = vand.u32 2147483647, %v5303
          %vm5537 = vcmp.eq.f32.partialorder %v5536, 8.507059e+37
          %v5538 = vand.u32 %v5303, 2147483648
          %v5539 = vor.u32 1.1754944e-38, %v5538
          %v5540 = vsel %vm5537, %v5539, %v5535
          %v5541 = vmul.f32 1.0, %v5540
          %v5542 = vrcp.pop %v5304
          %v5543 = vmul.f32 %v5304, %v5542
          %v5544 = vsub.f32 1.0, %v5543
          %v5545 = vmul.f32 %v5542, %v5544
          %v5546 = vadd.f32 %v5542, %v5545
          %vm5547 = vweird.f32 %v5304
          %vm5548 = vweird.f32 %v5542
          %vm5549 = vmor %vm5547, %vm5548
          %v5550 = vsel %vm5549, %v5542, %v5546
          %v5551 = vand.u32 2147483647, %v5304
          %vm5552 = vcmp.eq.f32.partialorder %v5551, 8.507059e+37
          %v5553 = vand.u32 %v5304, 2147483648
          %v5554 = vor.u32 1.1754944e-38, %v5553
          %v5555 = vsel %vm5552, %v5554, %v5550
          %v5556 = vmul.f32 1.0, %v5555
          %v5557 = vrcp.pop %v5305
          %v5558 = vmul.f32 %v5305, %v5557
          %v5559 = vsub.f32 1.0, %v5558
          %v5560 = vmul.f32 %v5557, %v5559
          %v5561 = vadd.f32 %v5557, %v5560
          %vm5562 = vweird.f32 %v5305
          %vm5563 = vweird.f32 %v5557
          %vm5564 = vmor %vm5562, %vm5563
          %v5565 = vsel %vm5564, %v5557, %v5561
          %v5566 = vand.u32 2147483647, %v5305
          %vm5567 = vcmp.eq.f32.partialorder %v5566, 8.507059e+37
          %v5568 = vand.u32 %v5305, 2147483648
          %v5569 = vor.u32 1.1754944e-38, %v5568
          %v5570 = vsel %vm5567, %v5569, %v5565
          %v5571 = vmul.f32 1.0, %v5570
          %v5572 = vrcp.pop %v5306
          %v5573 = vmul.f32 %v5306, %v5572
          %v5574 = vsub.f32 1.0, %v5573
          %v5575 = vmul.f32 %v5572, %v5574
          %v5576 = vadd.f32 %v5572, %v5575
          %vm5577 = vweird.f32 %v5306
          %vm5578 = vweird.f32 %v5572
          %vm5579 = vmor %vm5577, %vm5578
          %v5580 = vsel %vm5579, %v5572, %v5576
          %v5581 = vand.u32 2147483647, %v5306
          %vm5582 = vcmp.eq.f32.partialorder %v5581, 8.507059e+37
          %v5583 = vand.u32 %v5306, 2147483648
          %v5584 = vor.u32 1.1754944e-38, %v5583
          %v5585 = vsel %vm5582, %v5584, %v5580
          %v5586 = vmul.f32 1.0, %v5585
          %v5587 = vrcp.pop %v5307
          %v5588 = vmul.f32 %v5307, %v5587
          %v5589 = vsub.f32 1.0, %v5588
          %v5590 = vmul.f32 %v5587, %v5589
          %v5591 = vadd.f32 %v5587, %v5590
          %vm5592 = vweird.f32 %v5307
          %vm5593 = vweird.f32 %v5587
          %vm5594 = vmor %vm5592, %vm5593
          %v5595 = vsel %vm5594, %v5587, %v5591
          %v5596 = vand.u32 2147483647, %v5307
          %vm5597 = vcmp.eq.f32.partialorder %v5596, 8.507059e+37
          %v5598 = vand.u32 %v5307, 2147483648
          %v5599 = vor.u32 1.1754944e-38, %v5598
          %v5600 = vsel %vm5597, %v5599, %v5595
          %v5601 = vmul.f32 1.0, %v5600
          %v5602 = vrcp.pop %v5308
          %v5603 = vmul.f32 %v5308, %v5602
          %v5604 = vsub.f32 1.0, %v5603
          %v5605 = vmul.f32 %v5602, %v5604
          %v5606 = vadd.f32 %v5602, %v5605
          %vm5607 = vweird.f32 %v5308
          %vm5608 = vweird.f32 %v5602
          %vm5609 = vmor %vm5607, %vm5608
          %v5610 = vsel %vm5609, %v5602, %v5606
          %v5611 = vand.u32 2147483647, %v5308
          %vm5612 = vcmp.eq.f32.partialorder %v5611, 8.507059e+37
          %v5613 = vand.u32 %v5308, 2147483648
          %v5614 = vor.u32 1.1754944e-38, %v5613
          %v5615 = vsel %vm5612, %v5614, %v5610
          %v5616 = vmul.f32 1.0, %v5615
          %v5617 = vrcp.pop %v5309
          %v5618 = vmul.f32 %v5309, %v5617
          %v5619 = vsub.f32 1.0, %v5618
          %v5620 = vmul.f32 %v5617, %v5619
          %v5621 = vadd.f32 %v5617, %v5620
          %vm5622 = vweird.f32 %v5309
          %vm5623 = vweird.f32 %v5617
          %vm5624 = vmor %vm5622, %vm5623
          %v5625 = vsel %vm5624, %v5617, %v5621
          %v5626 = vand.u32 2147483647, %v5309
          %vm5627 = vcmp.eq.f32.partialorder %v5626, 8.507059e+37
          %v5628 = vand.u32 %v5309, 2147483648
          %v5629 = vor.u32 1.1754944e-38, %v5628
          %v5630 = vsel %vm5627, %v5629, %v5625
          %v5631 = vmul.f32 1.0, %v5630
          %v5632 = vrcp.pop %v5310
          %v5633 = vmul.f32 %v5310, %v5632
          %v5634 = vsub.f32 1.0, %v5633
          %v5635 = vmul.f32 %v5632, %v5634
          %v5636 = vadd.f32 %v5632, %v5635
          %vm5637 = vweird.f32 %v5310
          %vm5638 = vweird.f32 %v5632
          %vm5639 = vmor %vm5637, %vm5638
          %v5640 = vsel %vm5639, %v5632, %v5636
          %v5641 = vand.u32 2147483647, %v5310
          %vm5642 = vcmp.eq.f32.partialorder %v5641, 8.507059e+37
          %v5643 = vand.u32 %v5310, 2147483648
          %v5644 = vor.u32 1.1754944e-38, %v5643
          %v5645 = vsel %vm5642, %v5644, %v5640
          %v5646 = vmul.f32 1.0, %v5645
          %v5647 = vrcp.pop %v5311
          %v5648 = vmul.f32 %v5311, %v5647
          %v5649 = vsub.f32 1.0, %v5648
          %v5650 = vmul.f32 %v5647, %v5649
          %v5651 = vadd.f32 %v5647, %v5650
          %vm5652 = vweird.f32 %v5311
          %vm5653 = vweird.f32 %v5647
          %vm5654 = vmor %vm5652, %vm5653
          %v5655 = vsel %vm5654, %v5647, %v5651
          %v5656 = vand.u32 2147483647, %v5311
          %vm5657 = vcmp.eq.f32.partialorder %v5656, 8.507059e+37
          %v5658 = vand.u32 %v5311, 2147483648
          %v5659 = vor.u32 1.1754944e-38, %v5658
          %v5660 = vsel %vm5657, %v5659, %v5655
          %v5661 = vmul.f32 1.0, %v5660
          %v5662 = vrcp.pop %v5312
          %v5663 = vmul.f32 %v5312, %v5662
          %v5664 = vsub.f32 1.0, %v5663
          %v5665 = vmul.f32 %v5662, %v5664
          %v5666 = vadd.f32 %v5662, %v5665
          %vm5667 = vweird.f32 %v5312
          %vm5668 = vweird.f32 %v5662
          %vm5669 = vmor %vm5667, %vm5668
          %v5670 = vsel %vm5669, %v5662, %v5666
          %v5671 = vand.u32 2147483647, %v5312
          %vm5672 = vcmp.eq.f32.partialorder %v5671, 8.507059e+37
          %v5673 = vand.u32 %v5312, 2147483648
          %v5674 = vor.u32 1.1754944e-38, %v5673
          %v5675 = vsel %vm5672, %v5674, %v5670
          %v5676 = vmul.f32 1.0, %v5675
          %v5677 = vrcp.pop %v5313
          %v5678 = vmul.f32 %v5313, %v5677
          %v5679 = vsub.f32 1.0, %v5678
          %v5680 = vmul.f32 %v5677, %v5679
          %v5681 = vadd.f32 %v5677, %v5680
          %vm5682 = vweird.f32 %v5313
          %vm5683 = vweird.f32 %v5677
          %vm5684 = vmor %vm5682, %vm5683
          %v5685 = vsel %vm5684, %v5677, %v5681
          %v5686 = vand.u32 2147483647, %v5313
          %vm5687 = vcmp.eq.f32.partialorder %v5686, 8.507059e+37
          %v5688 = vand.u32 %v5313, 2147483648
          %v5689 = vor.u32 1.1754944e-38, %v5688
          %v5690 = vsel %vm5687, %v5689, %v5685
          %v5691 = vmul.f32 1.0, %v5690
          %v5692 = vrcp.pop %v5314
          %v5693 = vmul.f32 %v5314, %v5692
          %v5694 = vsub.f32 1.0, %v5693
          %v5695 = vmul.f32 %v5692, %v5694
          %v5696 = vadd.f32 %v5692, %v5695
          %vm5697 = vweird.f32 %v5314
          %vm5698 = vweird.f32 %v5692
          %vm5699 = vmor %vm5697, %vm5698
          %v5700 = vsel %vm5699, %v5692, %v5696
          %v5701 = vand.u32 2147483647, %v5314
          %vm5702 = vcmp.eq.f32.partialorder %v5701, 8.507059e+37
          %v5703 = vand.u32 %v5314, 2147483648
          %v5704 = vor.u32 1.1754944e-38, %v5703
          %v5705 = vsel %vm5702, %v5704, %v5700
          %v5706 = vmul.f32 1.0, %v5705
          %v5707 = vrcp.pop %v5315
          %v5708 = vmul.f32 %v5315, %v5707
          %v5709 = vsub.f32 1.0, %v5708
          %v5710 = vmul.f32 %v5707, %v5709
          %v5711 = vadd.f32 %v5707, %v5710
          %vm5712 = vweird.f32 %v5315
          %vm5713 = vweird.f32 %v5707
          %vm5714 = vmor %vm5712, %vm5713
          %v5715 = vsel %vm5714, %v5707, %v5711
          %v5716 = vand.u32 2147483647, %v5315
          %vm5717 = vcmp.eq.f32.partialorder %v5716, 8.507059e+37
          %v5718 = vand.u32 %v5315, 2147483648
          %v5719 = vor.u32 1.1754944e-38, %v5718
          %v5720 = vsel %vm5717, %v5719, %v5715
          %v5721 = vmul.f32 1.0, %v5720
          %v5722 = vrcp.pop %v5316
          %v5723 = vmul.f32 %v5316, %v5722
          %v5724 = vsub.f32 1.0, %v5723
          %v5725 = vmul.f32 %v5722, %v5724
          %v5726 = vadd.f32 %v5722, %v5725
          %vm5727 = vweird.f32 %v5316
          %vm5728 = vweird.f32 %v5722
          %vm5729 = vmor %vm5727, %vm5728
          %v5730 = vsel %vm5729, %v5722, %v5726
          %v5731 = vand.u32 2147483647, %v5316
          %vm5732 = vcmp.eq.f32.partialorder %v5731, 8.507059e+37
          %v5733 = vand.u32 %v5316, 2147483648
          %v5734 = vor.u32 1.1754944e-38, %v5733
          %v5735 = vsel %vm5732, %v5734, %v5730
          %v5736 = vmul.f32 1.0, %v5735
          %v5737 = vmul.f32 %v5177, %v5331
          %v5738 = vmul.f32 %v5178, %v5346
          %v5739 = vmul.f32 %v5179, %v5361
          %v5740 = vmul.f32 %v5180, %v5376
          %v5741 = vmul.f32 %v5181, %v5391
          %v5742 = vmul.f32 %v5182, %v5406
          %v5743 = vmul.f32 %v5183, %v5421
          %v5744 = vmul.f32 %v5184, %v5436
          %v5745 = vmul.f32 %v5185, %v5451
          %v5746 = vmul.f32 %v5186, %v5466
          %v5747 = vmul.f32 %v5187, %v5481
          %v5748 = vmul.f32 %v5188, %v5496
          %v5749 = vmul.f32 %v5189, %v5511
          %v5750 = vmul.f32 %v5190, %v5526
          %v5751 = vmul.f32 %v5191, %v5541
          %v5752 = vmul.f32 %v5192, %v5556
          %v5753 = vmul.f32 %v5193, %v5571
          %v5754 = vmul.f32 %v5194, %v5586
          %v5755 = vmul.f32 %v5195, %v5601
          %v5756 = vmul.f32 %v5196, %v5616
          %v5757 = vmul.f32 %v5197, %v5631
          %v5758 = vmul.f32 %v5198, %v5646
          %v5759 = vmul.f32 %v5199, %v5661
          %v5760 = vmul.f32 %v5200, %v5676
          %v5761 = vmul.f32 %v5201, %v5691
          %v5762 = vmul.f32 %v5202, %v5706
          %v5763 = vmul.f32 %v5203, %v5721
          %v5764 = vmul.f32 %v5204, %v5736
          %v5765 = vpack.c.bf16 %v5738, %v5737
          %v5766 = vpack.c.bf16 %v5740, %v5739
          %v5767 = vpack.c.bf16 %v5742, %v5741
          %v5768 = vpack.c.bf16 %v5752, %v5751
          %v5769 = vpack.c.bf16 %v5754, %v5753
          %v5770 = vpack.c.bf16 %v5756, %v5755
          %5771 = vst [vmem:[%s743] sm:$0xff] %v5765
          %5772 = vst [vmem:[%s743 + $0x8] sm:$0xff] %v5766
          %5773 = vst [vmem:[%s743 + $0x10] sm:$0xff] %v5767
          %5774 = vst [vmem:[%s743 + $0x18] sm:$0xff] %v5768
          %5775 = vst [vmem:[%s743 + $0x20] sm:$0xff] %v5769
          %5776 = vst [vmem:[%s743 + $0x28] sm:$0xff] %v5770
          %v5777 = vpack.c.bf16 %v5757, %v5743
          %v5778 = vpack.c.bf16 %v5758, %v5744
          %v5779 = vpack.c.bf16 %v5759, %v5745
          %v5780 = vpack.c.bf16 %v5760, %v5746
          %v5781 = vpack.c.bf16 %v5761, %v5747
          %v5782 = vpack.c.bf16 %v5762, %v5748
          %v5783 = vpack.c.bf16 %v5763, %v5749
          %v5784 = vpack.c.bf16 %v5764, %v5750
          %v5785 = vld [vmem:[#allocation17] sm:$0xf]
          %v5786 = vld [vmem:[#allocation17 + $0x4] sm:$0xf]
          %v5787 = vld [vmem:[#allocation17 + $0x8] sm:$0xf]
          %v5788 = vld [vmem:[#allocation17 + $0xc] sm:$0xf]
          %v5789 = vld [vmem:[#allocation17 + $0x10] sm:$0xf]
          %v5790 = vld [vmem:[#allocation17 + $0x14] sm:$0xf]
          %v5791 = vld [vmem:[#allocation17 + $0x18] sm:$0xf]
          %v5792 = vld [vmem:[#allocation17 + $0x1c] sm:$0xf]
          %v5793 = vld [vmem:[#allocation17 + $0x20] sm:$0xf]
          %v5794 = vld [vmem:[#allocation17 + $0x24] sm:$0xf]
          %v5795 = vld [vmem:[#allocation17 + $0x28] sm:$0xf]
          %v5796 = vld [vmem:[#allocation17 + $0x2c] sm:$0xf]
          %v5797 = vld [vmem:[#allocation17 + $0x30] sm:$0xf]
          %v5798 = vld [vmem:[#allocation17 + $0x34] sm:$0xf]
          %v5799 = vld [vmem:[#allocation17 + $0x38] sm:$0xf]
          %v5800 = vld [vmem:[#allocation17 + $0x3c] sm:$0xf]
          %v5801 = vld [vmem:[#allocation17 + $0x40] sm:$0xf]
          %v5802 = vld [vmem:[#allocation17 + $0x44] sm:$0xf]
          %v5803 = vld [vmem:[#allocation17 + $0x48] sm:$0xf]
          %v5804 = vld [vmem:[#allocation17 + $0x4c] sm:$0xf]
          %v5805 = vld [vmem:[#allocation17 + $0x50] sm:$0xf]
          %v5806 = vld [vmem:[#allocation17 + $0x54] sm:$0xf]
          %v5807 = vld [vmem:[#allocation17 + $0x58] sm:$0xf]
          %v5808 = vld [vmem:[#allocation17 + $0x5c] sm:$0xf]
          %v5809 = vld [vmem:[#allocation17 + $0x60] sm:$0xf]
          %v5810 = vld [vmem:[#allocation17 + $0x64] sm:$0xf]
          %v5811 = vld [vmem:[#allocation17 + $0x68] sm:$0xf]
          %v5812 = vld [vmem:[#allocation17 + $0x6c] sm:$0xf]
          %v5813 = vld [vmem:[#allocation17 + $0x70] sm:$0xf]
          %v5814 = vld [vmem:[#allocation17 + $0x74] sm:$0xf]
          %v5815 = vld [vmem:[#allocation17 + $0x78] sm:$0xf]
          %v5816 = vld [vmem:[#allocation17 + $0x7c] sm:$0xf]
          %v5817 = vld [vmem:[#allocation17 + $0x80] sm:$0xf]
          %v5818 = vld [vmem:[#allocation17 + $0x84] sm:$0xf]
          %v5819 = vld [vmem:[#allocation17 + $0x88] sm:$0xf]
          %v5820 = vld [vmem:[#allocation17 + $0x8c] sm:$0xf]
          %v5821 = vld [vmem:[#allocation17 + $0x90] sm:$0xf]
          %v5822 = vld [vmem:[#allocation17 + $0x94] sm:$0xf]
          %v5823 = vld [vmem:[#allocation17 + $0x98] sm:$0xf]
          %v5824 = vld [vmem:[#allocation17 + $0x9c] sm:$0xf]
          %v5825 = vld [vmem:[#allocation17 + $0xa0] sm:$0xf]
          %v5826 = vld [vmem:[#allocation17 + $0xa4] sm:$0xf]
          %v5827 = vld [vmem:[#allocation17 + $0xa8] sm:$0xf]
          %v5828 = vld [vmem:[#allocation17 + $0xac] sm:$0xf]
          %v5829 = vld [vmem:[#allocation17 + $0xb0] sm:$0xf]
          %v5830 = vld [vmem:[#allocation17 + $0xb4] sm:$0xf]
          %v5831 = vld [vmem:[#allocation17 + $0xb8] sm:$0xf]
          %v5832 = vld [vmem:[#allocation17 + $0xbc] sm:$0xf]
          %v5833 = vld [vmem:[#allocation17 + $0xc0] sm:$0xf]
          %v5834 = vld [vmem:[#allocation17 + $0xc4] sm:$0xf]
          %v5835 = vld [vmem:[#allocation17 + $0xc8] sm:$0xf]
          %v5836 = vld [vmem:[#allocation17 + $0xcc] sm:$0xf]
          %v5837 = vld [vmem:[#allocation17 + $0xd0] sm:$0xf]
          %v5838 = vld [vmem:[#allocation17 + $0xd4] sm:$0xf]
          %v5839 = vld [vmem:[#allocation17 + $0xd8] sm:$0xf]
          %v5840 = vld [vmem:[#allocation17 + $0xdc] sm:$0xf]
          %v5841 = vld [vmem:[#allocation17 + $0xe0] sm:$0xf]
          %v5842 = vld [vmem:[#allocation17 + $0xe4] sm:$0xf]
          %v5843 = vld [vmem:[#allocation17 + $0xe8] sm:$0xf]
          %v5844 = vld [vmem:[#allocation17 + $0xec] sm:$0xf]
          %v5845 = vld [vmem:[#allocation17 + $0xf0] sm:$0xf]
          %v5846 = vld [vmem:[#allocation17 + $0xf4] sm:$0xf]
          %v5847 = vld [vmem:[#allocation17 + $0xf8] sm:$0xf]
          %v5848 = vld [vmem:[#allocation17 + $0xfc] sm:$0xf]
          %v5849 = vld [vmem:[#allocation17 + $0x100] sm:$0xf]
          %v5850 = vld [vmem:[#allocation17 + $0x104] sm:$0xf]
          %v5851 = vld [vmem:[#allocation17 + $0x108] sm:$0xf]
          %v5852 = vld [vmem:[#allocation17 + $0x10c] sm:$0xf]
          %v5853 = vld [vmem:[#allocation17 + $0x110] sm:$0xf]
          %v5854 = vld [vmem:[#allocation17 + $0x114] sm:$0xf]
          %v5855 = vld [vmem:[#allocation17 + $0x118] sm:$0xf]
          %v5856 = vld [vmem:[#allocation17 + $0x11c] sm:$0xf]
          %v5857 = vld [vmem:[#allocation17 + $0x120] sm:$0xf]
          %v5858 = vld [vmem:[#allocation17 + $0x124] sm:$0xf]
          %v5859 = vld [vmem:[#allocation17 + $0x128] sm:$0xf]
          %v5860 = vld [vmem:[#allocation17 + $0x12c] sm:$0xf]
          %v5861 = vld [vmem:[#allocation17 + $0x130] sm:$0xf]
          %v5862 = vld [vmem:[#allocation17 + $0x134] sm:$0xf]
          %v5863 = vld [vmem:[#allocation17 + $0x138] sm:$0xf]
          %v5864 = vld [vmem:[#allocation17 + $0x13c] sm:$0xf]
          %v5865 = vld [vmem:[#allocation17 + $0x140] sm:$0xf]
          %v5866 = vld [vmem:[#allocation17 + $0x144] sm:$0xf]
          %v5867 = vld [vmem:[#allocation17 + $0x148] sm:$0xf]
          %v5868 = vld [vmem:[#allocation17 + $0x14c] sm:$0xf]
          %v5869 = vld [vmem:[#allocation17 + $0x150] sm:$0xf]
          %v5870 = vld [vmem:[#allocation17 + $0x154] sm:$0xf]
          %v5871 = vld [vmem:[#allocation17 + $0x158] sm:$0xf]
          %v5872 = vld [vmem:[#allocation17 + $0x15c] sm:$0xf]
          %v5873 = vld [vmem:[#allocation17 + $0x160] sm:$0xf]
          %v5874 = vld [vmem:[#allocation17 + $0x164] sm:$0xf]
          %v5875 = vld [vmem:[#allocation17 + $0x168] sm:$0xf]
          %v5876 = vld [vmem:[#allocation17 + $0x16c] sm:$0xf]
          %v5877 = vld [vmem:[#allocation17 + $0x170] sm:$0xf]
          %v5878 = vld [vmem:[#allocation17 + $0x174] sm:$0xf]
          %v5879 = vld [vmem:[#allocation17 + $0x178] sm:$0xf]
          %v5880 = vld [vmem:[#allocation17 + $0x17c] sm:$0xf]
          %v5881 = vld [vmem:[#allocation17 + $0x180] sm:$0xf]
          %v5882 = vld [vmem:[#allocation17 + $0x184] sm:$0xf]
          %v5883 = vld [vmem:[#allocation17 + $0x188] sm:$0xf]
          %v5884 = vld [vmem:[#allocation17 + $0x18c] sm:$0xf]
          %v5885 = vld [vmem:[#allocation17 + $0x190] sm:$0xf]
          %v5886 = vld [vmem:[#allocation17 + $0x194] sm:$0xf]
          %v5887 = vld [vmem:[#allocation17 + $0x198] sm:$0xf]
          %v5888 = vld [vmem:[#allocation17 + $0x19c] sm:$0xf]
          %v5889 = vld [vmem:[#allocation17 + $0x1a0] sm:$0xf]
          %v5890 = vld [vmem:[#allocation17 + $0x1a4] sm:$0xf]
          %v5891 = vld [vmem:[#allocation17 + $0x1a8] sm:$0xf]
          %v5892 = vld [vmem:[#allocation17 + $0x1ac] sm:$0xf]
          %v5893 = vld [vmem:[#allocation17 + $0x1b0] sm:$0xf]
          %v5894 = vld [vmem:[#allocation17 + $0x1b4] sm:$0xf]
          %v5895 = vld [vmem:[#allocation17 + $0x1b8] sm:$0xf]
          %v5896 = vld [vmem:[#allocation17 + $0x1bc] sm:$0xf]
          %v5897 = vld [vmem:[#allocation17 + $0x1c0] sm:$0xf]
          %v5898 = vld [vmem:[#allocation17 + $0x1c4] sm:$0xf]
          %v5899 = vld [vmem:[#allocation17 + $0x1c8] sm:$0xf]
          %v5900 = vld [vmem:[#allocation17 + $0x1cc] sm:$0xf]
          %v5901 = vld [vmem:[#allocation17 + $0x1d0] sm:$0xf]
          %v5902 = vld [vmem:[#allocation17 + $0x1d4] sm:$0xf]
          %v5903 = vld [vmem:[#allocation17 + $0x1d8] sm:$0xf]
          %v5904 = vld [vmem:[#allocation17 + $0x1dc] sm:$0xf]
          %v5905 = vld [vmem:[#allocation17 + $0x1e0] sm:$0xf]
          %v5906 = vld [vmem:[#allocation17 + $0x1e4] sm:$0xf]
          %v5907 = vld [vmem:[#allocation17 + $0x1e8] sm:$0xf]
          %v5908 = vld [vmem:[#allocation17 + $0x1ec] sm:$0xf]
          %v5909 = vld [vmem:[#allocation17 + $0x1f0] sm:$0xf]
          %v5910 = vld [vmem:[#allocation17 + $0x1f4] sm:$0xf]
          %v5911 = vld [vmem:[#allocation17 + $0x1f8] sm:$0xf]
          %v5912 = vld [vmem:[#allocation17 + $0x1fc] sm:$0xf]
          %v5913 = vld [vmem:[#allocation19] sm:$0x1]
          %v5915 = vperm.slane %v5913, 0
          %v6045 = vunpack.c.l.b16 %v5785
          %v6046 = vunpack.c.l.b16 %v5786
          %v6047 = vunpack.c.l.b16 %v5787
          %v6048 = vunpack.c.l.b16 %v5788
          %v6049 = vunpack.c.l.b16 %v5789
          %v6050 = vunpack.c.l.b16 %v5790
          %v6051 = vunpack.c.l.b16 %v5791
          %v6052 = vunpack.c.l.b16 %v5792
          %v6053 = vunpack.c.l.b16 %v5793
          %v6054 = vunpack.c.l.b16 %v5794
          %v6055 = vunpack.c.l.b16 %v5795
          %v6056 = vunpack.c.l.b16 %v5796
          %v6057 = vunpack.c.l.b16 %v5797
          %v6058 = vunpack.c.l.b16 %v5798
          %v6059 = vunpack.c.l.b16 %v5799
          %v6060 = vunpack.c.l.b16 %v5800
          %v6061 = vunpack.c.l.b16 %v5801
          %v6062 = vunpack.c.l.b16 %v5802
          %v6063 = vunpack.c.l.b16 %v5803
          %v6064 = vunpack.c.l.b16 %v5804
          %v6065 = vunpack.c.l.b16 %v5805
          %v6066 = vunpack.c.l.b16 %v5806
          %v6067 = vunpack.c.l.b16 %v5807
          %v6068 = vunpack.c.l.b16 %v5808
          %v6069 = vunpack.c.l.b16 %v5809
          %v6070 = vunpack.c.l.b16 %v5810
          %v6071 = vunpack.c.l.b16 %v5811
          %v6072 = vunpack.c.l.b16 %v5812
          %v6073 = vunpack.c.l.b16 %v5813
          %v6074 = vunpack.c.l.b16 %v5814
          %v6075 = vunpack.c.l.b16 %v5815
          %v6076 = vunpack.c.l.b16 %v5816
          %v6077 = vunpack.c.l.b16 %v5817
          %v6078 = vunpack.c.l.b16 %v5818
          %v6079 = vunpack.c.l.b16 %v5819
          %v6080 = vunpack.c.l.b16 %v5820
          %v6081 = vunpack.c.l.b16 %v5821
          %v6082 = vunpack.c.l.b16 %v5822
          %v6083 = vunpack.c.l.b16 %v5823
          %v6084 = vunpack.c.l.b16 %v5824
          %v6085 = vunpack.c.l.b16 %v5825
          %v6086 = vunpack.c.l.b16 %v5826
          %v6087 = vunpack.c.l.b16 %v5827
          %v6088 = vunpack.c.l.b16 %v5828
          %v6089 = vunpack.c.l.b16 %v5829
          %v6090 = vunpack.c.l.b16 %v5830
          %v6091 = vunpack.c.l.b16 %v5831
          %v6092 = vunpack.c.l.b16 %v5832
          %v6093 = vunpack.c.l.b16 %v5833
          %v6094 = vunpack.c.l.b16 %v5834
          %v6095 = vunpack.c.l.b16 %v5835
          %v6096 = vunpack.c.l.b16 %v5836
          %v6097 = vunpack.c.l.b16 %v5837
          %v6098 = vunpack.c.l.b16 %v5838
          %v6099 = vunpack.c.l.b16 %v5839
          %v6100 = vunpack.c.l.b16 %v5840
          %v6101 = vunpack.c.l.b16 %v5841
          %v6102 = vunpack.c.l.b16 %v5842
          %v6103 = vunpack.c.l.b16 %v5843
          %v6104 = vunpack.c.l.b16 %v5844
          %v6105 = vunpack.c.l.b16 %v5845
          %v6106 = vunpack.c.l.b16 %v5846
          %v6107 = vunpack.c.l.b16 %v5847
          %v6108 = vunpack.c.l.b16 %v5848
          %v6109 = vunpack.c.l.b16 %v5849
          %v6110 = vunpack.c.l.b16 %v5850
          %v6111 = vunpack.c.l.b16 %v5851
          %v6112 = vunpack.c.l.b16 %v5852
          %v6113 = vunpack.c.l.b16 %v5853
          %v6114 = vunpack.c.l.b16 %v5854
          %v6115 = vunpack.c.l.b16 %v5855
          %v6116 = vunpack.c.l.b16 %v5856
          %v6117 = vunpack.c.l.b16 %v5857
          %v6118 = vunpack.c.l.b16 %v5858
          %v6119 = vunpack.c.l.b16 %v5859
          %v6120 = vunpack.c.l.b16 %v5860
          %v6121 = vunpack.c.l.b16 %v5861
          %v6122 = vunpack.c.l.b16 %v5862
          %v6123 = vunpack.c.l.b16 %v5863
          %v6124 = vunpack.c.l.b16 %v5864
          %v6125 = vunpack.c.l.b16 %v5865
          %v6126 = vunpack.c.l.b16 %v5866
          %v6127 = vunpack.c.l.b16 %v5867
          %v6128 = vunpack.c.l.b16 %v5868
          %v6129 = vunpack.c.l.b16 %v5869
          %v6130 = vunpack.c.l.b16 %v5870
          %v6131 = vunpack.c.l.b16 %v5871
          %v6132 = vunpack.c.l.b16 %v5872
          %v6133 = vunpack.c.l.b16 %v5873
          %v6134 = vunpack.c.l.b16 %v5874
          %v6135 = vunpack.c.l.b16 %v5875
          %v6136 = vunpack.c.l.b16 %v5876
          %v6137 = vunpack.c.l.b16 %v5877
          %v6138 = vunpack.c.l.b16 %v5878
          %v6139 = vunpack.c.l.b16 %v5879
          %v6140 = vunpack.c.l.b16 %v5880
          %v6141 = vunpack.c.l.b16 %v5881
          %v6142 = vunpack.c.l.b16 %v5882
          %v6143 = vunpack.c.l.b16 %v5883
          %v6144 = vunpack.c.l.b16 %v5884
          %v6145 = vunpack.c.l.b16 %v5885
          %v6146 = vunpack.c.l.b16 %v5886
          %v6147 = vunpack.c.l.b16 %v5887
          %v6148 = vunpack.c.l.b16 %v5888
          %v6149 = vunpack.c.l.b16 %v5889
          %v6150 = vunpack.c.l.b16 %v5890
          %v6151 = vunpack.c.l.b16 %v5891
          %v6152 = vunpack.c.l.b16 %v5892
          %v6153 = vunpack.c.l.b16 %v5893
          %v6154 = vunpack.c.l.b16 %v5894
          %v6155 = vunpack.c.l.b16 %v5895
          %v6156 = vunpack.c.l.b16 %v5896
          %v6157 = vunpack.c.l.b16 %v5897
          %v6158 = vunpack.c.l.b16 %v5898
          %v6159 = vunpack.c.l.b16 %v5899
          %v6160 = vunpack.c.l.b16 %v5900
          %v6161 = vunpack.c.l.b16 %v5901
          %v6162 = vunpack.c.l.b16 %v5902
          %v6163 = vunpack.c.l.b16 %v5903
          %v6164 = vunpack.c.l.b16 %v5904
          %v6165 = vunpack.c.l.b16 %v5905
          %v6166 = vunpack.c.l.b16 %v5906
          %v6167 = vunpack.c.l.b16 %v5907
          %v6168 = vunpack.c.l.b16 %v5908
          %v6169 = vunpack.c.l.b16 %v5909
          %v6170 = vunpack.c.l.b16 %v5910
          %v6171 = vunpack.c.l.b16 %v5911
          %v6172 = vunpack.c.l.b16 %v5912
          %v6173 = vpack.c.b16 %v6046, %v6045
          %v6174 = vpack.c.b16 %v6048, %v6047
          %v6175 = vpack.c.b16 %v6050, %v6049
          %v6176 = vpack.c.b16 %v6052, %v6051
          %v6177 = vpack.c.b16 %v6054, %v6053
          %v6178 = vpack.c.b16 %v6056, %v6055
          %v6179 = vpack.c.b16 %v6058, %v6057
          %v6180 = vpack.c.b16 %v6060, %v6059
          %v6181 = vpack.c.b16 %v6062, %v6061
          %v6182 = vpack.c.b16 %v6064, %v6063
          %v6183 = vpack.c.b16 %v6066, %v6065
          %v6184 = vpack.c.b16 %v6068, %v6067
          %v6185 = vpack.c.b16 %v6070, %v6069
          %v6186 = vpack.c.b16 %v6072, %v6071
          %v6187 = vpack.c.b16 %v6074, %v6073
          %v6188 = vpack.c.b16 %v6076, %v6075
          %v6189 = vpack.c.b16 %v6078, %v6077
          %v6190 = vpack.c.b16 %v6080, %v6079
          %v6191 = vpack.c.b16 %v6082, %v6081
          %v6192 = vpack.c.b16 %v6084, %v6083
          %v6193 = vpack.c.b16 %v6086, %v6085
          %v6194 = vpack.c.b16 %v6088, %v6087
          %v6195 = vpack.c.b16 %v6090, %v6089
          %v6196 = vpack.c.b16 %v6092, %v6091
          %v6197 = vpack.c.b16 %v6094, %v6093
          %v6198 = vpack.c.b16 %v6096, %v6095
          %v6199 = vpack.c.b16 %v6098, %v6097
          %v6200 = vpack.c.b16 %v6100, %v6099
          %v6201 = vpack.c.b16 %v6102, %v6101
          %v6202 = vpack.c.b16 %v6104, %v6103
          %v6203 = vpack.c.b16 %v6106, %v6105
          %v6204 = vpack.c.b16 %v6108, %v6107
          %v6205 = vpack.c.b16 %v6110, %v6109
          %v6206 = vpack.c.b16 %v6112, %v6111
          %v6207 = vpack.c.b16 %v6114, %v6113
          %v6208 = vpack.c.b16 %v6116, %v6115
          %v6209 = vpack.c.b16 %v6118, %v6117
          %v6210 = vpack.c.b16 %v6120, %v6119
          %v6211 = vpack.c.b16 %v6122, %v6121
          %v6212 = vpack.c.b16 %v6124, %v6123
          %v6213 = vpack.c.b16 %v6126, %v6125
          %v6214 = vpack.c.b16 %v6128, %v6127
          %v6215 = vpack.c.b16 %v6130, %v6129
          %v6216 = vpack.c.b16 %v6132, %v6131
          %v6217 = vpack.c.b16 %v6134, %v6133
          %v6218 = vpack.c.b16 %v6136, %v6135
          %v6219 = vpack.c.b16 %v6138, %v6137
          %v6220 = vpack.c.b16 %v6140, %v6139
          %v6221 = vpack.c.b16 %v6142, %v6141
          %v6222 = vpack.c.b16 %v6144, %v6143
          %v6223 = vpack.c.b16 %v6146, %v6145
          %v6224 = vpack.c.b16 %v6148, %v6147
          %v6225 = vpack.c.b16 %v6150, %v6149
          %v6226 = vpack.c.b16 %v6152, %v6151
          %v6227 = vpack.c.b16 %v6154, %v6153
          %v6228 = vpack.c.b16 %v6156, %v6155
          %v6229 = vpack.c.b16 %v6158, %v6157
          %v6230 = vpack.c.b16 %v6160, %v6159
          %v6231 = vpack.c.b16 %v6162, %v6161
          %v6232 = vpack.c.b16 %v6164, %v6163
          %v6233 = vpack.c.b16 %v6166, %v6165
          %v6234 = vpack.c.b16 %v6168, %v6167
          %v6235 = vpack.c.b16 %v6170, %v6169
          %v6236 = vpack.c.b16 %v6172, %v6171
          %6301 = vmatpush.bf16.msra.mxu0 %v6180
          %6302 = vmatpush.bf16.msra.mxu0 %v6179
          %6303 = vmatpush.bf16.msra.mxu0 %v6178
          %6304 = vmatpush.bf16.msra.mxu0 %v6177
          %6305 = vmatpush.bf16.msra.mxu0 %v6176
          %6306 = vmatpush.bf16.msra.mxu0 %v6175
          %6307 = vmatpush.bf16.msra.mxu0 %v6174
          %6308 = vmatpush.bf16.msra.mxu0 %v6173
          %6309 = vmatmul.bf16.gmra.mxu0 %v5777
          %v6310 = vpop.f32.mrf.mxu0
          %v6311 = vadd.f32 %v5915, %v6310
          %v6312 = vpop.f32.mrf.mxu0
          %v6313 = vadd.f32 %v5915, %v6312
          %6314 = vdwg.mxu0
          %6315 = vmatpush.bf16.msra.mxu0 %v6188
          %6316 = vmatpush.bf16.msra.mxu0 %v6187
          %6317 = vmatpush.bf16.msra.mxu0 %v6186
          %6318 = vmatpush.bf16.msra.mxu0 %v6185
          %6319 = vmatpush.bf16.msra.mxu0 %v6184
          %6320 = vmatpush.bf16.msra.mxu0 %v6183
          %6321 = vmatpush.bf16.msra.mxu0 %v6182
          %6322 = vmatpush.bf16.msra.mxu0 %v6181
          %6323 = vmatmul.bf16.gmra.mxu0 %v5778
          %v6324 = vpop.f32.mrf.mxu0
          %v6325 = vadd.f32 %v6311, %v6324
          %v6326 = vpop.f32.mrf.mxu0
          %v6327 = vadd.f32 %v6313, %v6326
          %6328 = vdwg.mxu0
          %6329 = vmatpush.bf16.msra.mxu0 %v6196
          %6330 = vmatpush.bf16.msra.mxu0 %v6195
          %6331 = vmatpush.bf16.msra.mxu0 %v6194
          %6332 = vmatpush.bf16.msra.mxu0 %v6193
          %6333 = vmatpush.bf16.msra.mxu0 %v6192
          %6334 = vmatpush.bf16.msra.mxu0 %v6191
          %6335 = vmatpush.bf16.msra.mxu0 %v6190
          %6336 = vmatpush.bf16.msra.mxu0 %v6189
          %6337 = vmatmul.bf16.gmra.mxu0 %v5779
          %v6338 = vpop.f32.mrf.mxu0
          %v6339 = vadd.f32 %v6325, %v6338
          %v6340 = vpop.f32.mrf.mxu0
          %v6341 = vadd.f32 %v6327, %v6340
          %6342 = vdwg.mxu0
          %6343 = vmatpush.bf16.msra.mxu0 %v6204
          %6344 = vmatpush.bf16.msra.mxu0 %v6203
          %6345 = vmatpush.bf16.msra.mxu0 %v6202
          %6346 = vmatpush.bf16.msra.mxu0 %v6201
          %6347 = vmatpush.bf16.msra.mxu0 %v6200
          %6348 = vmatpush.bf16.msra.mxu0 %v6199
          %6349 = vmatpush.bf16.msra.mxu0 %v6198
          %6350 = vmatpush.bf16.msra.mxu0 %v6197
          %6351 = vmatmul.bf16.gmra.mxu0 %v5780
          %v6352 = vpop.f32.mrf.mxu0
          %v6353 = vadd.f32 %v6339, %v6352
          %v6354 = vpop.f32.mrf.mxu0
          %v6355 = vadd.f32 %v6341, %v6354
          %6356 = vdwg.mxu0
          %6357 = vmatpush.bf16.msra.mxu0 %v6212
          %6358 = vmatpush.bf16.msra.mxu0 %v6211
          %6359 = vmatpush.bf16.msra.mxu0 %v6210
          %6360 = vmatpush.bf16.msra.mxu0 %v6209
          %6361 = vmatpush.bf16.msra.mxu0 %v6208
          %6362 = vmatpush.bf16.msra.mxu0 %v6207
          %6363 = vmatpush.bf16.msra.mxu0 %v6206
          %6364 = vmatpush.bf16.msra.mxu0 %v6205
          %6365 = vmatmul.bf16.gmra.mxu0 %v5781
          %v6366 = vpop.f32.mrf.mxu0
          %v6367 = vadd.f32 %v6353, %v6366
          %v6368 = vpop.f32.mrf.mxu0
          %v6369 = vadd.f32 %v6355, %v6368
          %6370 = vdwg.mxu0
          %6371 = vmatpush.bf16.msra.mxu0 %v6220
          %6372 = vmatpush.bf16.msra.mxu0 %v6219
          %6373 = vmatpush.bf16.msra.mxu0 %v6218
          %6374 = vmatpush.bf16.msra.mxu0 %v6217
          %6375 = vmatpush.bf16.msra.mxu0 %v6216
          %6376 = vmatpush.bf16.msra.mxu0 %v6215
          %6377 = vmatpush.bf16.msra.mxu0 %v6214
          %6378 = vmatpush.bf16.msra.mxu0 %v6213
          %6379 = vmatmul.bf16.gmra.mxu0 %v5782
          %v6380 = vpop.f32.mrf.mxu0
          %v6381 = vadd.f32 %v6367, %v6380
          %v6382 = vpop.f32.mrf.mxu0
          %v6383 = vadd.f32 %v6369, %v6382
          %6384 = vdwg.mxu0
          %6385 = vmatpush.bf16.msra.mxu0 %v6228
          %6386 = vmatpush.bf16.msra.mxu0 %v6227
          %6387 = vmatpush.bf16.msra.mxu0 %v6226
          %6388 = vmatpush.bf16.msra.mxu0 %v6225
          %6389 = vmatpush.bf16.msra.mxu0 %v6224
          %6390 = vmatpush.bf16.msra.mxu0 %v6223
          %6391 = vmatpush.bf16.msra.mxu0 %v6222
          %6392 = vmatpush.bf16.msra.mxu0 %v6221
          %6393 = vmatmul.bf16.gmra.mxu0 %v5783
          %v6394 = vpop.f32.mrf.mxu0
          %v6395 = vadd.f32 %v6381, %v6394
          %v6396 = vpop.f32.mrf.mxu0
          %v6397 = vadd.f32 %v6383, %v6396
          %6398 = vdwg.mxu0
          %6399 = vmatpush.bf16.msra.mxu0 %v6236
          %6400 = vmatpush.bf16.msra.mxu0 %v6235
          %6401 = vmatpush.bf16.msra.mxu0 %v6234
          %6402 = vmatpush.bf16.msra.mxu0 %v6233
          %6403 = vmatpush.bf16.msra.mxu0 %v6232
          %6404 = vmatpush.bf16.msra.mxu0 %v6231
          %6405 = vmatpush.bf16.msra.mxu0 %v6230
          %6406 = vmatpush.bf16.msra.mxu0 %v6229
          %6407 = vmatmul.bf16.gmra.mxu0 %v5784
          %v6408 = vpop.f32.mrf.mxu0
          %v6409 = vadd.f32 %v6395, %v6408
          %v6410 = vpop.f32.mrf.mxu0
          %v6411 = vadd.f32 %v6397, %v6410
          %6412 = vdwg.mxu0
          %v6413 = vld [vmem:[#allocation20] sm:$0x1]
          %v6414 = vld [vmem:[#allocation22] sm:$0x1]
          %v6415 = vlaneseq
          %v6416 = vand.u32 %v6415, 127
          %vm6417 = vcmp.lt.s32.totalorder %v6416, 32
          %v6418 = vsel %vm6417, %v6409, 0.0
          %v6419 = vsel %vm6417, %v6411, 0.0
          %6420 = vadd.xlane.f32.xlu0 %v6418
          %v6421 = vpop.xlane.xlu0 %6420
          %6422 = vadd.xlane.f32.xlu0 %v6419
          %v6423 = vpop.xlane.xlu0 %6422
          %v6424 = vmul.f32 %v6421, 0.03125
          %v6425 = vmul.f32 %v6423, 0.03125
          %v6426 = vsub.f32 %v6409, %v6424
          %v6427 = vsub.f32 %v6411, %v6425
          %v6428 = vsel %vm6417, %v6426, 0.0
          %v6429 = vsel %vm6417, %v6427, 0.0
          %v6430 = vmul.f32 %v6428, %v6428
          %v6431 = vmul.f32 %v6429, %v6429
          %6432 = vadd.xlane.f32.xlu0 %v6430
          %v6433 = vpop.xlane.xlu0 %6432
          %6434 = vadd.xlane.f32.xlu0 %v6431
          %v6435 = vpop.xlane.xlu0 %6434
          %v6436 = vmul.f32 %v6433, 0.03125
          %v6437 = vmul.f32 %v6435, 0.03125
          %v6438 = vadd.f32 %v6436, 1e-05
          %v6439 = vadd.f32 %v6437, 1e-05
          %v6440 = vrsqrt.pop %v6438
          %v6441 = vmul.f32 %v6440, %v6438
          %v6442 = vmul.f32 %v6441, %v6440
          %v6443 = vmul.f32 0.5, %v6442
          %v6444 = vsub.f32 1.5, %v6443
          %v6445 = vmul.f32 %v6440, %v6444
          %vm6446 = vweird.f32 %v6438
          %vm6447 = vweird.f32 %v6440
          %vm6448 = vmor %vm6446, %vm6447
          %v6449 = vsel %vm6448, %v6440, %v6445
          %v6450 = vrsqrt.pop %v6439
          %v6451 = vmul.f32 %v6450, %v6439
          %v6452 = vmul.f32 %v6451, %v6450
          %v6453 = vmul.f32 0.5, %v6452
          %v6454 = vsub.f32 1.5, %v6453
          %v6455 = vmul.f32 %v6450, %v6454
          %vm6456 = vweird.f32 %v6439
          %vm6457 = vweird.f32 %v6450
          %vm6458 = vmor %vm6456, %vm6457
          %v6459 = vsel %vm6458, %v6450, %v6455
          %v6460 = vmul.f32 %v6426, %v6449
          %v6461 = vmul.f32 %v6427, %v6459
          %v6463 = vperm.slane %v6413, 0
          %v6465 = vmul.f32 %v6460, %v6463
          %v6466 = vmul.f32 %v6461, %v6463
          %v6468 = vperm.slane %v6414, 0
          %v6470 = vadd.f32 %v6465, %v6468
          %v6471 = vadd.f32 %v6466, %v6468
          %v6472 = vsel %vm6417, %v6470, 0.0
          %v6473 = vsel %vm6417, %v6471, 0.0
          %6474 = vst [vmem:[%s749] sm:$0xff] %v6472
          %6475 = vst [vmem:[%s749 + $0x8] sm:$0xff] %v6473
        $region143: #{decoder_forward.3} parent=71 // pred_fallthru
          _
        %s6476 = smul.u32 2, %s35
        %p6477 = scmp.lt.s32.totalorder %s6476, 1
        %s6478 = scalar_select %p6477, %s6476, 1
        %s6479 = smul.addr %s6478, 6
        %s6480 = smul.addr %s6479, 4
        %s6481 = scalar_lea.vmem %s13, %s6480
        %s6482 = smul.u32 2, %s35
        %p6483 = scmp.lt.s32.totalorder %s6482, 1
        %s6484 = scalar_select %p6483, %s6482, 1
        %s6485 = smul.addr %s6484, 8
        %s6486 = scalar_lea.vmem %s14, %s6485
        // Predicated region
        $region144: #{decoder_forward.3} parent=71 // pred_check
          %p6487 = pneg %p354
        $region145: #{decoder_forward.3} parent=71 // pred_check_branch
          %6489 = sbr.rel (%p6487) target = $region147
        $region146: #{decoder_forward.3} parent=71 // pred_region
          %s6490 = smul.u32 2, %s35
        $region147: #{decoder_forward.3} parent=71 // pred_fallthru
          _
        // Predicated region
        $region148: #{decoder_forward.3} parent=71 // pred_check
          %p6491 = pneg %p380
        $region149: #{decoder_forward.3} parent=71 // pred_check_branch
          %6493 = sbr.rel (%p6491) target = $region151
        $region150: #{decoder_forward.3} parent=71 // pred_region
          %s6494 = smul.u32 2, %s35
        $region151: #{decoder_forward.3} parent=71 // pred_fallthru
          _
        // Predicated region
        $region152: #{decoder_forward.3} parent=71 // pred_check
          %p6495 = pneg %p354
        $region153: #{decoder_forward.3} parent=71 // pred_check_branch
          %6497 = sbr.rel (%p6495) target = $region155
        $region154: #{decoder_forward.3} parent=71 // pred_region
          %s6498 = smul.u32 2, %s35
          %p6499 = scmp.lt.s32.totalorder %s6498, 1
          %s6500 = scalar_select %p6499, %s6498, 1
          %s6501 = smul.addr %s6500, 6
          %s6502 = smul.addr %s6501, 4
          %s6503 = scalar_lea.vmem %s13, %s6502
        $region155: #{decoder_forward.3} parent=71 // pred_fallthru
          _
        // Predicated region
        $region156: #{decoder_forward.3} parent=71 // pred_check
          %p6504 = pneg %p380
        $region157: #{decoder_forward.3} parent=71 // pred_check_branch
          %6506 = sbr.rel (%p6504) target = $region159
        $region158: #{decoder_forward.3} parent=71 // pred_region
          %s6507 = smul.u32 2, %s35
          %p6508 = scmp.lt.s32.totalorder %s6507, 1
          %s6509 = scalar_select %p6508, %s6507, 1
          %s6510 = smul.addr %s6509, 8
          %s6511 = scalar_lea.vmem %s14, %s6510
        $region159: #{decoder_forward.3} parent=71 // pred_fallthru
          _
      $region72: #{decoder_forward.3} parent=5 // pred_fallthru
        _
      %p6512 = scmp.le.s32.totalorder 2, %s26
      // Predicated region
      $region160: #{decoder_forward.3} parent=5 // pred_check
        %p6513 = pneg %p6512
      $region161: #{decoder_forward.3} parent=5 // pred_check_branch
        %6515 = sbr.rel (%p6513) target = $region163
      $region162: #{decoder_forward.3} parent=5 // pred_region
        %s6516 = ssub.s32 %s26, 2
      $region163: #{decoder_forward.3} parent=5 // pred_fallthru
        _
    $region6: #{decoder_forward.3} parent=1 // loop_footer
      %s30 = sadd.s32 1, %s26
    $region7: #{decoder_forward.3} parent=1 // loop_footer_branch
      %25 = sbr.rel target = $region3
    $region8: #{decoder_forward.3} parent=1 // loop_exit
      _
    %6517 = vsyncpa [#allocation7], 1
    %s6518 = scalar_lea.sflag [#allocation7], 1
    %6519 = vsyncpa %s6518, 1
    %6520 = vsyncpa [#allocation9], 1
    %6521 = vsyncpa [#allocation15], 1
    %6522 = vsyncpa [#allocation18], 1
    %6523 = vsyncpa [#allocation21], 1

</llo_original>
